<compile_context>
chip_gen: v7x
topology: tpu7x:2x2x1
jax: 0.10.0
libtpu: 0.0.40
codegen_flags: <defaults>
</compile_context>

<pallas_src>
import jax
import jax.numpy as jnp
from jax.experimental import pallas as pl
from jax.experimental.pallas import tpu as pltpu


def dgn_kernel(x_ref, mask_ref,
               w_e1_ref, b_e1_ref, w_e2_ref, b_e2_ref,
               w_fused_ref, b_fused_ref, w_qh2_ref,
               out_ref):
    """One batch tile (B_TILE elements) per grid step; everything fits in VMEM."""
    bt, n, _ = mask_ref.shape
    h_dim = w_qh2_ref.shape[0]        # hidden_dim
    a_pad = w_qh2_ref.shape[1]        # lane-padded num_actions (128)

    xb = x_ref[...]                   # (M, DIN), M = bt * n

    # ---- Encoder: Linear(DIN,512) -> ReLU -> Linear(512,H) -> ReLU ----
    e1 = jnp.maximum(
        jnp.dot(xb, w_e1_ref[...], preferred_element_type=jnp.float32)
        + b_e1_ref[...], 0.0)                                   # (M, 512)
    h1 = jnp.maximum(
        jnp.dot(e1, w_e2_ref[...], preferred_element_type=jnp.float32)
        + b_e2_ref[...], 0.0)                                   # (M, H)

    # ---- Fused projection: [Q-head(h1 path, padded to 128) | V | Q | K] ----
    proj = (jnp.dot(h1, w_fused_ref[...], preferred_element_type=jnp.float32)
            + b_fused_ref[...])                                 # (M, 128 + 3H)
    q_head_h1 = proj[:, :a_pad]                                 # no ReLU (incl. b_qn)
    v = jnp.maximum(proj[:, a_pad:a_pad + h_dim], 0.0)
    q = jnp.maximum(proj[:, a_pad + h_dim:a_pad + 2 * h_dim], 0.0)
    k = jnp.maximum(proj[:, a_pad + 2 * h_dim:a_pad + 3 * h_dim], 0.0)

    # ---- AttModel (att_1): batched over the batch tile ----
    q3 = q.reshape(bt, n, h_dim)
    k3 = k.reshape(bt, n, h_dim)
    v3 = v.reshape(bt, n, h_dim)
    m = mask_ref[...]                                           # (bt, n, n)

    scores = jnp.einsum("bnh,bmh->bnm", q3, k3,
                        preferred_element_type=jnp.float32)     # (bt, n, n)
    hmat = jnp.clip(scores * m, 0.0, 9.0e13) - 9.0e15 * (1.0 - m)

    # softmax over dim=2 (last axis), numerically stable
    hmax = jnp.max(hmat, axis=-1, keepdims=True)
    e = jnp.exp(hmat - hmax)
    att = e * pl.reciprocal(jnp.sum(e, axis=-1, keepdims=True), approx=True)

    h2 = jnp.einsum("bnm,bmh->bnh", att, v3,
                    preferred_element_type=jnp.float32)         # (bt, n, H)
    h2 = h2.reshape(bt * n, h_dim)                              # (M, H)

    # ---- Q head: h1-path already in q_head_h1; add h2-path (lane-padded) ----
    out_ref[...] = q_head_h1 + jnp.dot(h2, w_qh2_ref[...],
                                       preferred_element_type=jnp.float32)


def dgn_forward(x, mask, params, *, b_tile=None):
    B, N, DIN = x.shape
    H = params["w_e2"].shape[1]
    A = params["b_qn"].shape[-1]
    A_PAD = 128  # lane-dense output head (unmasked vst); sliced back in the wrapper

    # Pick the batch tile: target M = b_tile*N around the MXU row count
    # (128 on v5e, 256 on v6e/v7x).  Must divide B.
    if b_tile is None:
        b_tile = min(B, 32)
        while B % b_tile:
            b_tile -= 1
    assert B % b_tile == 0
    n_tiles = B // b_tile
    M = b_tile * N

    # ---- Pack / pad weights (done once, outside the kernel) ----
    w_qn, b_qn = params["w_qn"], params["b_qn"]                 # (2H, A), (1, A)
    w_qh1 = jnp.zeros((H, A_PAD), jnp.float32).at[:, :A].set(w_qn[:H])
    w_qh2 = jnp.zeros((H, A_PAD), jnp.float32).at[:, :A].set(w_qn[H:])
    b_qh = jnp.zeros((1, A_PAD), jnp.float32).at[:, :A].set(b_qn)
    # Fused [Q-head-h1 (128, lane-aligned slice) | V (H) | Q (H) | K (H)]
    w_fused = jnp.concatenate(
        [w_qh1, params["wv"], params["wq"], params["wk"]], axis=1)   # (H, 128+3H)
    b_fused = jnp.concatenate(
        [b_qh, params["bv"], params["bq"], params["bk"]], axis=1)    # (1, 128+3H)

    weights = [params["w_e1"], params["b_e1"],
               params["w_e2"], params["b_e2"],
               w_fused, b_fused, w_qh2]

    # Flatten the batch/agent dims so the kernel's big matmuls have M = b_tile*N rows.
    x_flat = x.reshape(B * N, DIN)

    def full_spec(arr):
        nd = arr.ndim
        return pl.BlockSpec(arr.shape, lambda b, _nd=nd: (0,) * _nd)

    in_specs = (
        [pl.BlockSpec((M, DIN), lambda b: (b, 0)),
         pl.BlockSpec((b_tile, N, N), lambda b: (b, 0, 0))]
        + [full_spec(w) for w in weights]
    )

    out_flat = pl.pallas_call(
        dgn_kernel,
        out_shape=jax.ShapeDtypeStruct((B * N, A_PAD), jnp.float32),
        grid_spec=pltpu.PrefetchScalarGridSpec(
            num_scalar_prefetch=0,
            grid=(n_tiles,),
            in_specs=in_specs,
            out_specs=pl.BlockSpec((M, A_PAD), lambda b: (b, 0)),
        ),
        compiler_params=pltpu.CompilerParams(
            dimension_semantics=("parallel",)),
    )(x_flat, mask, *weights)

    return out_flat[:, :A].reshape(B, N, A)


def dgn_reference(x, mask, p):
    """Plain-JAX reference mirroring the torch forward."""
    e1 = jax.nn.relu(x @ p["w_e1"] + p["b_e1"][0])
    h1 = jax.nn.relu(e1 @ p["w_e2"] + p["b_e2"][0])
    v = jax.nn.relu(h1 @ p["wv"] + p["bv"][0])
    q = jax.nn.relu(h1 @ p["wq"] + p["bq"][0])
    k = jax.nn.relu(h1 @ p["wk"] + p["bk"][0])
    scores = jnp.einsum("bnh,bmh->bnm", q, k)
    h = jnp.clip(scores * mask, 0.0, 9.0e13) - 9.0e15 * (1.0 - mask)
    att = jax.nn.softmax(h, axis=2)
    h2 = jnp.einsum("bnm,bmh->bnh", att, v)
    hcat = jnp.concatenate([h1, h2], axis=-1)
    return hcat @ p["w_qn"] + p["b_qn"][0]


if __name__ == "__main__":
    # 64 batch elements -> 2 grid steps of a 32-element tile (M = 256 matmul rows).
    B, N, DIN, ENC_HID, H, A = 64, 8, 32, 512, 32, 8

    key = jax.random.PRNGKey(0)
    keys = jax.random.split(key, 16)

    def init(k, shape, scale=0.1):
        return (scale * jax.random.normal(k, shape)).astype(jnp.float32)

    params = {
        "w_e1": init(keys[0], (DIN, ENC_HID)),
        "b_e1": init(keys[1], (1, ENC_HID)),
        "w_e2": init(keys[2], (ENC_HID, H)),
        "b_e2": init(keys[3], (1, H)),
        "wv": init(keys[4], (H, H)),
        "bv": init(keys[5], (1, H)),
        "wq": init(keys[6], (H, H)),
        "bq": init(keys[7], (1, H)),
        "wk": init(keys[8], (H, H)),
        "bk": init(keys[9], (1, H)),
        "w_qn": init(keys[10], (2 * H, A)),
        "b_qn": init(keys[11], (1, A)),
    }
    # TODO(synk): CNNLayer / image-observation Encoder path not exercised here
    # (vector observations chosen); AttModel.fcout and att_2 are unused in the
    # torch forward and therefore omitted.

    x = jax.random.normal(keys[12], (B, N, DIN), dtype=jnp.float32)
    mask = (jax.random.uniform(keys[13], (B, N, N)) > 0.4).astype(jnp.float32)
    # ensure self-connections so every row of the softmax has support
    mask = jnp.maximum(mask, jnp.eye(N, dtype=jnp.float32)[None, :, :])

    out = dgn_forward(x, mask, params)
    out = jax.block_until_ready(out)

    ref = dgn_reference(x, mask, params)
    assert out.shape == (B, N, A)
    # tolerance slightly relaxed (1e-3) for the approx EUP reciprocal in the softmax
    assert jnp.allclose(out, ref, atol=1e-3, rtol=1e-3), (
        f"max abs err {jnp.max(jnp.abs(out - ref))}")

    print("KERNEL_OK")
</pallas_src>

<mosaic_0001>
module attributes {stable_mosaic.version = 11 : i64} {
  func.func @dgn_kernel(%arg0: i32, %arg1: memref<256x32xf32, #tpu.memory_space<vmem>>, %arg2: memref<32x8x8xf32, #tpu.memory_space<vmem>>, %arg3: memref<32x512xf32, #tpu.memory_space<vmem>>, %arg4: memref<1x512xf32, #tpu.memory_space<vmem>>, %arg5: memref<512x32xf32, #tpu.memory_space<vmem>>, %arg6: memref<1x32xf32, #tpu.memory_space<vmem>>, %arg7: memref<32x224xf32, #tpu.memory_space<vmem>>, %arg8: memref<1x224xf32, #tpu.memory_space<vmem>>, %arg9: memref<32x128xf32, #tpu.memory_space<vmem>>, %arg10: memref<256x128xf32, #tpu.memory_space<vmem>>) attributes {dimension_semantics = [#tpu.dimension_semantics<parallel>], iteration_bounds = array<i64: 2>, scalar_prefetch = 0 : i64, scratch_operands = 0 : i64, tpu.core_type = #tpu.core_type<tc>, window_params = [{transform_indices = @transform_0, window_bounds = array<i64: 256, 32>}, {transform_indices = @transform_1, window_bounds = array<i64: 32, 8, 8>}, {pipeline_mode = #tpu.pipeline_mode<synchronous>, transform_indices = @transform_2, window_bounds = array<i64: 32, 512>}, {pipeline_mode = #tpu.pipeline_mode<synchronous>, transform_indices = @transform_3, window_bounds = array<i64: 1, 512>}, {pipeline_mode = #tpu.pipeline_mode<synchronous>, transform_indices = @transform_4, window_bounds = array<i64: 512, 32>}, {pipeline_mode = #tpu.pipeline_mode<synchronous>, transform_indices = @transform_5, window_bounds = array<i64: 1, 32>}, {pipeline_mode = #tpu.pipeline_mode<synchronous>, transform_indices = @transform_6, window_bounds = array<i64: 32, 224>}, {pipeline_mode = #tpu.pipeline_mode<synchronous>, transform_indices = @transform_7, window_bounds = array<i64: 1, 224>}, {pipeline_mode = #tpu.pipeline_mode<synchronous>, transform_indices = @transform_8, window_bounds = array<i64: 32, 128>}, {transform_indices = @transform_9, window_bounds = array<i64: 256, 128>}]} {
    %c0 = arith.constant 0 : index
    %c0_0 = arith.constant 0 : index
    %0 = vector.load %arg1[%c0, %c0_0] : memref<256x32xf32, #tpu.memory_space<vmem>>, vector<256x32xf32>
    %c0_1 = arith.constant 0 : index
    %c0_2 = arith.constant 0 : index
    %1 = vector.load %arg3[%c0_1, %c0_2] : memref<32x512xf32, #tpu.memory_space<vmem>>, vector<32x512xf32>
    %cst = arith.constant dense<0.000000e+00> : vector<256x512xf32>
    %2 = tpu.matmul %0, %1, %cst {dimension_numbers = #tpu.dot_dimension_numbers<[1], [0], [0], [1], [0, 0, 1, 1], [], []>} : vector<256x32xf32>, vector<32x512xf32>, vector<256x512xf32> -> vector<256x512xf32>
    %c0_3 = arith.constant 0 : index
    %c0_4 = arith.constant 0 : index
    %3 = vector.load %arg4[%c0_3, %c0_4] : memref<1x512xf32, #tpu.memory_space<vmem>>, vector<1x512xf32>
    %4 = vector.broadcast %3 : vector<1x512xf32> to vector<256x512xf32>
    %5 = arith.addf %2, %4 : vector<256x512xf32>
    %cst_5 = arith.constant 0.000000e+00 : f32
    %6 = vector.broadcast %cst_5 : f32 to vector<256x512xf32>
    %7 = arith.maximumf %5, %6 : vector<256x512xf32>
    %c0_6 = arith.constant 0 : index
    %c0_7 = arith.constant 0 : index
    %8 = vector.load %arg5[%c0_6, %c0_7] : memref<512x32xf32, #tpu.memory_space<vmem>>, vector<512x32xf32>
    %cst_8 = arith.constant dense<0.000000e+00> : vector<256x32xf32>
    %9 = tpu.matmul %7, %8, %cst_8 {dimension_numbers = #tpu.dot_dimension_numbers<[1], [0], [0], [1], [0, 0, 1, 1], [], []>} : vector<256x512xf32>, vector<512x32xf32>, vector<256x32xf32> -> vector<256x32xf32>
    %c0_9 = arith.constant 0 : index
    %c0_10 = arith.constant 0 : index
    %10 = vector.load %arg6[%c0_9, %c0_10] : memref<1x32xf32, #tpu.memory_space<vmem>>, vector<1x32xf32>
    %11 = vector.broadcast %10 : vector<1x32xf32> to vector<256x32xf32>
    %12 = arith.addf %9, %11 : vector<256x32xf32>
    %cst_11 = arith.constant 0.000000e+00 : f32
    %13 = vector.broadcast %cst_11 : f32 to vector<256x32xf32>
    %14 = arith.maximumf %12, %13 : vector<256x32xf32>
    %c0_12 = arith.constant 0 : index
    %c0_13 = arith.constant 0 : index
    %15 = vector.load %arg7[%c0_12, %c0_13] : memref<32x224xf32, #tpu.memory_space<vmem>>, vector<32x224xf32>
    %cst_14 = arith.constant dense<0.000000e+00> : vector<256x224xf32>
    %16 = tpu.matmul %14, %15, %cst_14 {dimension_numbers = #tpu.dot_dimension_numbers<[1], [0], [0], [1], [0, 0, 1, 1], [], []>} : vector<256x32xf32>, vector<32x224xf32>, vector<256x224xf32> -> vector<256x224xf32>
    %c0_15 = arith.constant 0 : index
    %c0_16 = arith.constant 0 : index
    %17 = vector.load %arg8[%c0_15, %c0_16] : memref<1x224xf32, #tpu.memory_space<vmem>>, vector<1x224xf32>
    %18 = vector.broadcast %17 : vector<1x224xf32> to vector<256x224xf32>
    %19 = arith.addf %16, %18 : vector<256x224xf32>
    %20 = vector.extract_strided_slice %19 {offsets = [0, 0], sizes = [256, 128], strides = [1, 1]} : vector<256x224xf32> to vector<256x128xf32>
    %21 = vector.extract_strided_slice %19 {offsets = [0, 128], sizes = [256, 32], strides = [1, 1]} : vector<256x224xf32> to vector<256x32xf32>
    %cst_17 = arith.constant 0.000000e+00 : f32
    %22 = vector.broadcast %cst_17 : f32 to vector<256x32xf32>
    %23 = arith.maximumf %21, %22 : vector<256x32xf32>
    %24 = vector.extract_strided_slice %19 {offsets = [0, 160], sizes = [256, 32], strides = [1, 1]} : vector<256x224xf32> to vector<256x32xf32>
    %cst_18 = arith.constant 0.000000e+00 : f32
    %25 = vector.broadcast %cst_18 : f32 to vector<256x32xf32>
    %26 = arith.maximumf %24, %25 : vector<256x32xf32>
    %27 = vector.extract_strided_slice %19 {offsets = [0, 192], sizes = [256, 32], strides = [1, 1]} : vector<256x224xf32> to vector<256x32xf32>
    %cst_19 = arith.constant 0.000000e+00 : f32
    %28 = vector.broadcast %cst_19 : f32 to vector<256x32xf32>
    %29 = arith.maximumf %27, %28 : vector<256x32xf32>
    %30 = vector.shape_cast %26 : vector<256x32xf32> to vector<32x8x32xf32>
    %31 = vector.shape_cast %29 : vector<256x32xf32> to vector<32x8x32xf32>
    %32 = vector.shape_cast %23 : vector<256x32xf32> to vector<32x8x32xf32>
    %c0_20 = arith.constant 0 : index
    %c0_21 = arith.constant 0 : index
    %c0_22 = arith.constant 0 : index
    %33 = vector.load %arg2[%c0_20, %c0_21, %c0_22] : memref<32x8x8xf32, #tpu.memory_space<vmem>>, vector<32x8x8xf32>
    "tpu.trace_start"() <{level = 10 : i32, message = "bnh,bmh->bnm"}> : () -> ()
    %cst_23 = arith.constant dense<0.000000e+00> : vector<32x8x8xf32>
    %34 = tpu.matmul %30, %31, %cst_23 {dimension_numbers = #tpu.dot_dimension_numbers<[2], [2], [1], [1], [0, 0, 0, 1, 1, 1], [0], [0]>} : vector<32x8x32xf32>, vector<32x8x32xf32>, vector<32x8x8xf32> -> vector<32x8x8xf32>
    "tpu.trace_stop"() : () -> ()
    %35 = arith.mulf %34, %33 : vector<32x8x8xf32>
    %cst_24 = arith.constant 0.000000e+00 : f32
    %cst_25 = arith.constant 8.99999995E+13 : f32
    %36 = vector.broadcast %cst_24 : f32 to vector<32x8x8xf32>
    %37 = arith.maximumf %36, %35 : vector<32x8x8xf32>
    %38 = vector.broadcast %cst_25 : f32 to vector<32x8x8xf32>
    %39 = arith.minimumf %38, %37 : vector<32x8x8xf32>
    %cst_26 = arith.constant 1.000000e+00 : f32
    %40 = vector.broadcast %cst_26 : f32 to vector<32x8x8xf32>
    %41 = arith.subf %40, %33 : vector<32x8x8xf32>
    %cst_27 = arith.constant 9.000000e+15 : f32
    %42 = vector.broadcast %cst_27 : f32 to vector<32x8x8xf32>
    %43 = arith.mulf %42, %41 : vector<32x8x8xf32>
    %44 = arith.subf %39, %43 : vector<32x8x8xf32>
    %cst_28 = arith.constant dense<0xFF800000> : vector<32x8xf32>
    %45 = vector.multi_reduction <maximumf>, %44, %cst_28 [2] : vector<32x8x8xf32> to vector<32x8xf32>
    %46 = vector.shape_cast %45 : vector<32x8xf32> to vector<32x8x1xf32>
    %47 = vector.broadcast %46 : vector<32x8x1xf32> to vector<32x8x8xf32>
    %48 = arith.subf %44, %47 : vector<32x8x8xf32>
    %49 = math.exp %48 : vector<32x8x8xf32>
    %cst_29 = arith.constant dense<0.000000e+00> : vector<32x8xf32>
    %50 = vector.multi_reduction <add>, %49, %cst_29 [2] : vector<32x8x8xf32> to vector<32x8xf32>
    %51 = vector.shape_cast %50 : vector<32x8xf32> to vector<32x8x1xf32>
    %52 = tpu.reciprocal %51 {approx = true} : vector<32x8x1xf32> -> vector<32x8x1xf32>
    %53 = vector.broadcast %52 : vector<32x8x1xf32> to vector<32x8x8xf32>
    %54 = arith.mulf %49, %53 : vector<32x8x8xf32>
    "tpu.trace_start"() <{level = 10 : i32, message = "bnm,bmh->bnh"}> : () -> ()
    %cst_30 = arith.constant dense<0.000000e+00> : vector<32x8x32xf32>
    %55 = tpu.matmul %54, %32, %cst_30 {dimension_numbers = #tpu.dot_dimension_numbers<[2], [1], [1], [2], [0, 0, 0, 1, 1, 2], [0], [0]>} : vector<32x8x8xf32>, vector<32x8x32xf32>, vector<32x8x32xf32> -> vector<32x8x32xf32>
    "tpu.trace_stop"() : () -> ()
    %56 = vector.shape_cast %55 : vector<32x8x32xf32> to vector<256x32xf32>
    %c0_31 = arith.constant 0 : index
    %c0_32 = arith.constant 0 : index
    %57 = vector.load %arg9[%c0_31, %c0_32] : memref<32x128xf32, #tpu.memory_space<vmem>>, vector<32x128xf32>
    %cst_33 = arith.constant dense<0.000000e+00> : vector<256x128xf32>
    %58 = tpu.matmul %56, %57, %cst_33 {dimension_numbers = #tpu.dot_dimension_numbers<[1], [0], [0], [1], [0, 0, 1, 1], [], []>} : vector<256x32xf32>, vector<32x128xf32>, vector<256x128xf32> -> vector<256x128xf32>
    %59 = arith.addf %20, %58 : vector<256x128xf32>
    %c0_34 = arith.constant 0 : index
    %c0_35 = arith.constant 0 : index
    %60 = vector.load %arg10[%c0_34, %c0_35] : memref<256x128xf32, #tpu.memory_space<vmem>>, vector<256x128xf32>
    tpu.vector_store %arg10[%c0_34, %c0_35], %59 {strides = array<i32>} : memref<256x128xf32, #tpu.memory_space<vmem>>, vector<256x128xf32>,
    return
  }
  func.func @transform_0(%arg0: i32) -> (i32, i32) {
    %c0_i32 = arith.constant 0 : i32
    %c0_i32_0 = arith.constant 0 : i32
    return %arg0, %c0_i32 : i32, i32
  }
  func.func @transform_1(%arg0: i32) -> (i32, i32, i32) {
    %c0_i32 = arith.constant 0 : i32
    %c0_i32_0 = arith.constant 0 : i32
    %c0_i32_1 = arith.constant 0 : i32
    return %arg0, %c0_i32, %c0_i32_0 : i32, i32, i32
  }
  func.func @transform_2(%arg0: i32) -> (i32, i32) {
    %c0_i32 = arith.constant 0 : i32
    %c0_i32_0 = arith.constant 0 : i32
    %c0_i32_1 = arith.constant 0 : i32
    return %c0_i32, %c0_i32_0 : i32, i32
  }
  func.func @transform_3(%arg0: i32) -> (i32, i32) {
    %c0_i32 = arith.constant 0 : i32
    %c0_i32_0 = arith.constant 0 : i32
    %c0_i32_1 = arith.constant 0 : i32
    return %c0_i32, %c0_i32_0 : i32, i32
  }
  func.func @transform_4(%arg0: i32) -> (i32, i32) {
    %c0_i32 = arith.constant 0 : i32
    %c0_i32_0 = arith.constant 0 : i32
    %c0_i32_1 = arith.constant 0 : i32
    return %c0_i32, %c0_i32_0 : i32, i32
  }
  func.func @transform_5(%arg0: i32) -> (i32, i32) {
    %c0_i32 = arith.constant 0 : i32
    %c0_i32_0 = arith.constant 0 : i32
    %c0_i32_1 = arith.constant 0 : i32
    return %c0_i32, %c0_i32_0 : i32, i32
  }
  func.func @transform_6(%arg0: i32) -> (i32, i32) {
    %c0_i32 = arith.constant 0 : i32
    %c0_i32_0 = arith.constant 0 : i32
    %c0_i32_1 = arith.constant 0 : i32
    return %c0_i32, %c0_i32_0 : i32, i32
  }
  func.func @transform_7(%arg0: i32) -> (i32, i32) {
    %c0_i32 = arith.constant 0 : i32
    %c0_i32_0 = arith.constant 0 : i32
    %c0_i32_1 = arith.constant 0 : i32
    return %c0_i32, %c0_i32_0 : i32, i32
  }
  func.func @transform_8(%arg0: i32) -> (i32, i32) {
    %c0_i32 = arith.constant 0 : i32
    %c0_i32_0 = arith.constant 0 : i32
    %c0_i32_1 = arith.constant 0 : i32
    return %c0_i32, %c0_i32_0 : i32, i32
  }
  func.func @transform_9(%arg0: i32) -> (i32, i32) {
    %c0_i32 = arith.constant 0 : i32
    %c0_i32_0 = arith.constant 0 : i32
    return %arg0, %c0_i32 : i32, i32
  }
}

</mosaic_0001>

<llo_original>
// kernel: tpu_custom_call.1
$region0: #{tpu_custom_call.1}
  #allocation0 [shape = 'u32[]', space=smem, size = 0x4, offset = 0x4, fixed_abs, tag = 'smem constant byte address 0x4 - core index']
  #allocation1 [shape = 'u32[144,128]{1,0:T(1,128)}', space=vmem, size = 0x12000, scoped, tag = 'internal scratch']
  %s0 = inlined_call_operand.vmem [shape: f32[512,32], index: 0, kind: input, shape index: {}]
  %s1 = inlined_call_operand.vmem [shape: f32[64,8,8], index: 1, kind: input, shape index: {}]
  %s2 = inlined_call_operand.vmem [shape: f32[32,512], index: 2, kind: input, shape index: {}]
  %s3 = inlined_call_operand.vmem [shape: f32[1,512], index: 3, kind: input, shape index: {}]
  %s4 = inlined_call_operand.vmem [shape: f32[512,32], index: 4, kind: input, shape index: {}]
  %s5 = inlined_call_operand.vmem [shape: f32[1,32], index: 5, kind: input, shape index: {}]
  %s6 = inlined_call_operand.vmem [shape: f32[32,224], index: 6, kind: input, shape index: {}]
  %s7 = inlined_call_operand.vmem [shape: f32[1,224], index: 7, kind: input, shape index: {}]
  %s8 = inlined_call_operand.vmem [shape: f32[32,128], index: 8, kind: input, shape index: {}]
  %s9 = inlined_call_operand.hbm [shape: f32[512,128], index: 9, kind: output, shape index: {}]
  %s10 = sld [smem:[#allocation0]]
  $region69: #{tpu_custom_call.1} parent=0
    _
  %s12 = ssub.s32 1, %s10
  %s13 = scalar_select 0, %s12, %s10
  $region1: #{tpu_custom_call.1} parent=0
    #allocation2 [shape = 'u8[262144]{0}', space=vmem, size = 0x40000, scoped, tag = 'output window, operand 0']
    #allocation3 [shape = 's32[2]{0}', space=sflag, size = 0x8, scoped, tag = 'scoped memory for tpu_custom_call.1']
    %14 = vsyncpa [#allocation3], 0
    %s15 = scalar_lea.sflag [#allocation3], 1
    %16 = vsyncpa %s15, 0
    loop: start=0, step=1, limit=4
    $region2: #{tpu_custom_call.1} parent=1 // loop_pre_header
      _
    $region3: #{tpu_custom_call.1} parent=1 // loop_header
      %s18 = sphi 0, %s22
      %p19 = scmp.ge.s32.totalorder %s18, 4
      %s28 = sphi 0, %s30
      %s31 = sphi 0, %s28
      %s32 = sphi 0, %s31
      %s48 = sphi 0, %s32
      %s54 = sphi 0, %s56
      %s57 = sphi 0, %s54
      %s58 = sphi 0, %s57
      %s74 = sphi 0, %s58
      %s78 = sphi 0, %s78
      %s80 = sphi 0, %s78
      %s81 = sphi 0, %s80
      %s95 = sphi 0, %s81
      %s99 = sphi 0, %s99
      %s101 = sphi 0, %s99
      %s102 = sphi 0, %s101
      %s116 = sphi 0, %s102
      %s120 = sphi 0, %s120
      %s122 = sphi 0, %s120
      %s123 = sphi 0, %s122
      %s137 = sphi 0, %s123
      %s141 = sphi 0, %s141
      %s143 = sphi 0, %s141
      %s144 = sphi 0, %s143
      %s158 = sphi 0, %s144
      %s162 = sphi 0, %s162
      %s164 = sphi 0, %s162
      %s165 = sphi 0, %s164
      %s179 = sphi 0, %s165
      %s183 = sphi 0, %s183
      %s185 = sphi 0, %s183
      %s186 = sphi 0, %s185
      %s200 = sphi 0, %s186
      %s204 = sphi 0, %s204
      %s206 = sphi 0, %s204
      %s207 = sphi 0, %s206
      %s221 = sphi 0, %s207
      %s227 = sphi 0, %s229
      %s230 = sphi 0, %s227
      %s231 = sphi 0, %s230
      %s247 = sphi 0, %s231
    $region4: #{tpu_custom_call.1} parent=1 // loop_header_branch
      %21 = sbr.rel (%p19) target = $region8
    $region5: #{tpu_custom_call.1} parent=1 // loop_body
      %s23 = ssub.s32 %s18, 1
      %s24 = ssub.s32 %s18, 2
      %s25 = sadd.s32 %s18, 1
      %s26 = ssub.s32 %s18, %s25
      %p27 = scmp.eq.s32.totalorder %s26, 0
      %s29 = sadd.s32 %s28, 1
      %s30 = scalar_select %p27, %s28, %s29
      %p33 = pneg %p27
      %p34 = scmp.eq.s32.totalorder %s18, 1
      %p35 = por %p33, %p34
      %p36 = scmp.ne.s32.totalorder %s28, %s31
      %p37 = scmp.eq.s32.totalorder %s18, 0
      %p38 = por %p36, %p37
      %p39 = scmp.ne.s32.totalorder %s28, %s31
      %p40 = scmp.eq.s32.totalorder %s23, 1
      %p41 = por %p39, %p40
      %p42 = scmp.ne.s32.totalorder %s31, %s32
      %p43 = scmp.eq.s32.totalorder %s23, 0
      %p44 = por %p42, %p43
      %p45 = scmp.ne.s32.totalorder %s31, %s32
      %p46 = scmp.eq.s32.totalorder %s24, 1
      %p47 = por %p45, %p46
      %p49 = scmp.ne.s32.totalorder %s32, %s48
      %p50 = scmp.eq.s32.totalorder %s24, 0
      %p51 = por %p49, %p50
      %s52 = ssub.s32 %s18, %s25
      %p53 = scmp.eq.s32.totalorder %s52, 0
      %s55 = sadd.s32 %s54, 1
      %s56 = scalar_select %p53, %s54, %s55
      %p59 = pneg %p53
      %p60 = scmp.eq.s32.totalorder %s18, 1
      %p61 = por %p59, %p60
      %p62 = scmp.ne.s32.totalorder %s54, %s57
      %p63 = scmp.eq.s32.totalorder %s18, 0
      %p64 = por %p62, %p63
      %p65 = scmp.ne.s32.totalorder %s54, %s57
      %p66 = scmp.eq.s32.totalorder %s23, 1
      %p67 = por %p65, %p66
      %p68 = scmp.ne.s32.totalorder %s57, %s58
      %p69 = scmp.eq.s32.totalorder %s23, 0
      %p70 = por %p68, %p69
      %p71 = scmp.ne.s32.totalorder %s57, %s58
      %p72 = scmp.eq.s32.totalorder %s24, 1
      %p73 = por %p71, %p72
      %p75 = scmp.ne.s32.totalorder %s58, %s74
      %p76 = scmp.eq.s32.totalorder %s24, 0
      %p77 = por %p75, %p76
      %s79 = sadd.s32 %s78, 1
      %p82 = scmp.eq.s32.totalorder %s18, 1
      %p83 = scmp.ne.s32.totalorder %s78, %s80
      %p84 = scmp.eq.s32.totalorder %s18, 0
      %p85 = por %p83, %p84
      %p86 = scmp.ne.s32.totalorder %s78, %s80
      %p87 = scmp.eq.s32.totalorder %s23, 1
      %p88 = por %p86, %p87
      %p89 = scmp.ne.s32.totalorder %s80, %s81
      %p90 = scmp.eq.s32.totalorder %s23, 0
      %p91 = por %p89, %p90
      %p92 = scmp.ne.s32.totalorder %s80, %s81
      %p93 = scmp.eq.s32.totalorder %s24, 1
      %p94 = por %p92, %p93
      %p96 = scmp.ne.s32.totalorder %s81, %s95
      %p97 = scmp.eq.s32.totalorder %s24, 0
      %p98 = por %p96, %p97
      %s100 = sadd.s32 %s99, 1
      %p103 = scmp.eq.s32.totalorder %s18, 1
      %p104 = scmp.ne.s32.totalorder %s99, %s101
      %p105 = scmp.eq.s32.totalorder %s18, 0
      %p106 = por %p104, %p105
      %p107 = scmp.ne.s32.totalorder %s99, %s101
      %p108 = scmp.eq.s32.totalorder %s23, 1
      %p109 = por %p107, %p108
      %p110 = scmp.ne.s32.totalorder %s101, %s102
      %p111 = scmp.eq.s32.totalorder %s23, 0
      %p112 = por %p110, %p111
      %p113 = scmp.ne.s32.totalorder %s101, %s102
      %p114 = scmp.eq.s32.totalorder %s24, 1
      %p115 = por %p113, %p114
      %p117 = scmp.ne.s32.totalorder %s102, %s116
      %p118 = scmp.eq.s32.totalorder %s24, 0
      %p119 = por %p117, %p118
      %s121 = sadd.s32 %s120, 1
      %p124 = scmp.eq.s32.totalorder %s18, 1
      %p125 = scmp.ne.s32.totalorder %s120, %s122
      %p126 = scmp.eq.s32.totalorder %s18, 0
      %p127 = por %p125, %p126
      %p128 = scmp.ne.s32.totalorder %s120, %s122
      %p129 = scmp.eq.s32.totalorder %s23, 1
      %p130 = por %p128, %p129
      %p131 = scmp.ne.s32.totalorder %s122, %s123
      %p132 = scmp.eq.s32.totalorder %s23, 0
      %p133 = por %p131, %p132
      %p134 = scmp.ne.s32.totalorder %s122, %s123
      %p135 = scmp.eq.s32.totalorder %s24, 1
      %p136 = por %p134, %p135
      %p138 = scmp.ne.s32.totalorder %s123, %s137
      %p139 = scmp.eq.s32.totalorder %s24, 0
      %p140 = por %p138, %p139
      %s142 = sadd.s32 %s141, 1
      %p145 = scmp.eq.s32.totalorder %s18, 1
      %p146 = scmp.ne.s32.totalorder %s141, %s143
      %p147 = scmp.eq.s32.totalorder %s18, 0
      %p148 = por %p146, %p147
      %p149 = scmp.ne.s32.totalorder %s141, %s143
      %p150 = scmp.eq.s32.totalorder %s23, 1
      %p151 = por %p149, %p150
      %p152 = scmp.ne.s32.totalorder %s143, %s144
      %p153 = scmp.eq.s32.totalorder %s23, 0
      %p154 = por %p152, %p153
      %p155 = scmp.ne.s32.totalorder %s143, %s144
      %p156 = scmp.eq.s32.totalorder %s24, 1
      %p157 = por %p155, %p156
      %p159 = scmp.ne.s32.totalorder %s144, %s158
      %p160 = scmp.eq.s32.totalorder %s24, 0
      %p161 = por %p159, %p160
      %s163 = sadd.s32 %s162, 1
      %p166 = scmp.eq.s32.totalorder %s18, 1
      %p167 = scmp.ne.s32.totalorder %s162, %s164
      %p168 = scmp.eq.s32.totalorder %s18, 0
      %p169 = por %p167, %p168
      %p170 = scmp.ne.s32.totalorder %s162, %s164
      %p171 = scmp.eq.s32.totalorder %s23, 1
      %p172 = por %p170, %p171
      %p173 = scmp.ne.s32.totalorder %s164, %s165
      %p174 = scmp.eq.s32.totalorder %s23, 0
      %p175 = por %p173, %p174
      %p176 = scmp.ne.s32.totalorder %s164, %s165
      %p177 = scmp.eq.s32.totalorder %s24, 1
      %p178 = por %p176, %p177
      %p180 = scmp.ne.s32.totalorder %s165, %s179
      %p181 = scmp.eq.s32.totalorder %s24, 0
      %p182 = por %p180, %p181
      %s184 = sadd.s32 %s183, 1
      %p187 = scmp.eq.s32.totalorder %s18, 1
      %p188 = scmp.ne.s32.totalorder %s183, %s185
      %p189 = scmp.eq.s32.totalorder %s18, 0
      %p190 = por %p188, %p189
      %p191 = scmp.ne.s32.totalorder %s183, %s185
      %p192 = scmp.eq.s32.totalorder %s23, 1
      %p193 = por %p191, %p192
      %p194 = scmp.ne.s32.totalorder %s185, %s186
      %p195 = scmp.eq.s32.totalorder %s23, 0
      %p196 = por %p194, %p195
      %p197 = scmp.ne.s32.totalorder %s185, %s186
      %p198 = scmp.eq.s32.totalorder %s24, 1
      %p199 = por %p197, %p198
      %p201 = scmp.ne.s32.totalorder %s186, %s200
      %p202 = scmp.eq.s32.totalorder %s24, 0
      %p203 = por %p201, %p202
      %s205 = sadd.s32 %s204, 1
      %p208 = scmp.eq.s32.totalorder %s18, 1
      %p209 = scmp.ne.s32.totalorder %s204, %s206
      %p210 = scmp.eq.s32.totalorder %s18, 0
      %p211 = por %p209, %p210
      %p212 = scmp.ne.s32.totalorder %s204, %s206
      %p213 = scmp.eq.s32.totalorder %s23, 1
      %p214 = por %p212, %p213
      %p215 = scmp.ne.s32.totalorder %s206, %s207
      %p216 = scmp.eq.s32.totalorder %s23, 0
      %p217 = por %p215, %p216
      %p218 = scmp.ne.s32.totalorder %s206, %s207
      %p219 = scmp.eq.s32.totalorder %s24, 1
      %p220 = por %p218, %p219
      %p222 = scmp.ne.s32.totalorder %s207, %s221
      %p223 = scmp.eq.s32.totalorder %s24, 0
      %p224 = por %p222, %p223
      %s225 = ssub.s32 %s18, %s25
      %p226 = scmp.eq.s32.totalorder %s225, 0
      %s228 = sadd.s32 %s227, 1
      %s229 = scalar_select %p226, %s227, %s228
      %p232 = pneg %p226
      %p233 = scmp.eq.s32.totalorder %s18, 1
      %p234 = por %p232, %p233
      %p235 = scmp.ne.s32.totalorder %s227, %s230
      %p236 = scmp.eq.s32.totalorder %s18, 0
      %p237 = por %p235, %p236
      %p238 = scmp.ne.s32.totalorder %s227, %s230
      %p239 = scmp.eq.s32.totalorder %s23, 1
      %p240 = por %p238, %p239
      %p241 = scmp.ne.s32.totalorder %s230, %s231
      %p242 = scmp.eq.s32.totalorder %s23, 0
      %p243 = por %p241, %p242
      %p244 = scmp.ne.s32.totalorder %s230, %s231
      %p245 = scmp.eq.s32.totalorder %s24, 1
      %p246 = por %p244, %p245
      %p248 = scmp.ne.s32.totalorder %s231, %s247
      %p249 = scmp.eq.s32.totalorder %s24, 0
      %p250 = por %p248, %p249
      %p251 = scmp.le.s32.totalorder 1, %s18
      %p252 = scmp.lt.s32.totalorder %s18, 3
      %p253 = pnand %p251, %p252
      %p254 = pneg %p253
      // Predicated region
      $region9: #{tpu_custom_call.1} parent=5 // pred_check
        _
      $region10: #{tpu_custom_call.1} parent=5 // pred_check_branch
        %256 = sbr.rel (%p253) target = $region12
      $region11: #{tpu_custom_call.1} parent=5 // pred_region
        %s257 = ssub.s32 %s18, 1
        // Predicated region
        $region13: #{tpu_custom_call.1} parent=11 // pred_check
          %p258 = pneg %p91
        $region14: #{tpu_custom_call.1} parent=11 // pred_check_branch
          %260 = sbr.rel (%p258) target = $region16
        $region15: #{tpu_custom_call.1} parent=11 // pred_region
          _
        $region16: #{tpu_custom_call.1} parent=11 // pred_fallthru
          _
        // Predicated region
        $region17: #{tpu_custom_call.1} parent=11 // pred_check
          %p261 = pneg %p112
        $region18: #{tpu_custom_call.1} parent=11 // pred_check_branch
          %263 = sbr.rel (%p261) target = $region20
        $region19: #{tpu_custom_call.1} parent=11 // pred_region
          _
        $region20: #{tpu_custom_call.1} parent=11 // pred_fallthru
          _
        // Predicated region
        $region21: #{tpu_custom_call.1} parent=11 // pred_check
          %p264 = pneg %p133
        $region22: #{tpu_custom_call.1} parent=11 // pred_check_branch
          %266 = sbr.rel (%p264) target = $region24
        $region23: #{tpu_custom_call.1} parent=11 // pred_region
          _
        $region24: #{tpu_custom_call.1} parent=11 // pred_fallthru
          _
        // Predicated region
        $region25: #{tpu_custom_call.1} parent=11 // pred_check
          %p267 = pneg %p154
        $region26: #{tpu_custom_call.1} parent=11 // pred_check_branch
          %269 = sbr.rel (%p267) target = $region28
        $region27: #{tpu_custom_call.1} parent=11 // pred_region
          _
        $region28: #{tpu_custom_call.1} parent=11 // pred_fallthru
          _
        // Predicated region
        $region29: #{tpu_custom_call.1} parent=11 // pred_check
          %p270 = pneg %p175
        $region30: #{tpu_custom_call.1} parent=11 // pred_check_branch
          %272 = sbr.rel (%p270) target = $region32
        $region31: #{tpu_custom_call.1} parent=11 // pred_region
          _
        $region32: #{tpu_custom_call.1} parent=11 // pred_fallthru
          _
        // Predicated region
        $region33: #{tpu_custom_call.1} parent=11 // pred_check
          %p273 = pneg %p196
        $region34: #{tpu_custom_call.1} parent=11 // pred_check_branch
          %275 = sbr.rel (%p273) target = $region36
        $region35: #{tpu_custom_call.1} parent=11 // pred_region
          _
        $region36: #{tpu_custom_call.1} parent=11 // pred_fallthru
          _
        // Predicated region
        $region37: #{tpu_custom_call.1} parent=11 // pred_check
          %p276 = pneg %p217
        $region38: #{tpu_custom_call.1} parent=11 // pred_check_branch
          %278 = sbr.rel (%p276) target = $region40
        $region39: #{tpu_custom_call.1} parent=11 // pred_region
          _
        $region40: #{tpu_custom_call.1} parent=11 // pred_fallthru
          _
      $region12: #{tpu_custom_call.1} parent=5 // pred_fallthru
        _
      %p279 = scmp.lt.s32.totalorder %s18, 2
      // Predicated region
      $region41: #{tpu_custom_call.1} parent=5 // pred_check
        %p280 = pneg %p279
      $region42: #{tpu_custom_call.1} parent=5 // pred_check_branch
        %282 = sbr.rel (%p280) target = $region44
      $region43: #{tpu_custom_call.1} parent=5 // pred_region
        // Predicated region
        $region45: #{tpu_custom_call.1} parent=43 // pred_check
          %p283 = pneg %p38
        $region46: #{tpu_custom_call.1} parent=43 // pred_check_branch
          %285 = sbr.rel (%p283) target = $region48
        $region47: #{tpu_custom_call.1} parent=43 // pred_region
          %s286 = smul.u32 32, %s18
          %p287 = scmp.lt.s32.totalorder %s286, 63
          %s288 = scalar_select %p287, %s286, 63
          %s289 = smul.addr %s288, 8
          %s290 = scalar_lea.vmem %s0, %s289
          %s291 = smul.u32 32, %s18
        $region48: #{tpu_custom_call.1} parent=43 // pred_fallthru
          _
        // Predicated region
        $region49: #{tpu_custom_call.1} parent=43 // pred_check
          %p292 = pneg %p64
        $region50: #{tpu_custom_call.1} parent=43 // pred_check_branch
          %294 = sbr.rel (%p292) target = $region52
        $region51: #{tpu_custom_call.1} parent=43 // pred_region
          %s295 = smul.u32 32, %s18
          %p296 = scmp.lt.s32.totalorder %s295, 63
          %s297 = scalar_select %p296, %s295, 63
          %s298 = smul.addr %s297, 8
          %s299 = scalar_lea.vmem %s1, %s298
          %s300 = smul.u32 32, %s18
        $region52: #{tpu_custom_call.1} parent=43 // pred_fallthru
          _
      $region44: #{tpu_custom_call.1} parent=5 // pred_fallthru
        _
      %p301 = scmp.le.s32.totalorder 1, %s18
      %p302 = scmp.lt.s32.totalorder %s18, 3
      %p303 = pnand %p301, %p302
      %p304 = pneg %p303
      // Predicated region
      $region53: #{tpu_custom_call.1} parent=5 // pred_check
        _
      $region54: #{tpu_custom_call.1} parent=5 // pred_check_branch
        %306 = sbr.rel (%p303) target = $region56
      $region55: #{tpu_custom_call.1} parent=5 // pred_region
        %s307 = ssub.s32 %s18, 1
        %s308 = smul.u32 32, %s23
        %p309 = scmp.lt.s32.totalorder %s308, 63
        %s310 = scalar_select %p309, %s308, 63
        %s311 = smul.addr %s310, 8
        %s312 = scalar_lea.vmem %s0, %s311
        %p313 = pneg %p44
        %p314 = pneg %p41
        %s315 = smul.u32 32, %s23
        %p316 = scmp.lt.s32.totalorder %s315, 63
        %s317 = scalar_select %p316, %s315, 63
        %s318 = smul.addr %s317, 8
        %s319 = scalar_lea.vmem %s1, %s318
        %p320 = pneg %p70
        %p321 = pneg %p67
        %p322 = pneg %p91
        %p323 = pneg %p88
        %p324 = pneg %p112
        %p325 = pneg %p109
        %p326 = pneg %p133
        %p327 = pneg %p130
        %p328 = pneg %p154
        %p329 = pneg %p151
        %p330 = pneg %p175
        %p331 = pneg %p172
        %p332 = pneg %p196
        %p333 = pneg %p193
        %p334 = pneg %p217
        %p335 = pneg %p214
        %p336 = pneg %p243
        %p337 = pneg %p240
        %s338 = sand.u32 %s230, 1
        %s339 = scalar_lea.sflag [#allocation3], %s338
        %s340 = sand.u32 %s230, 1
        %s341 = smul.addr %s340, 256
        %s342 = scalar_lea.vmem [#allocation2], %s341
        %s343 = smul.u32 32, %s23
        %p344 = scmp.lt.s32.totalorder %s343, 63
        %s345 = scalar_select %p344, %s343, 63
        %s346 = smul.addr %s345, 8
        %s347 = scalar_lea.vmem %s0, %s346
        %s348 = smul.u32 32, %s23
        %s349 = smul.u32 32, %s23
        %p350 = scmp.lt.s32.totalorder %s349, 63
        %s351 = scalar_select %p350, %s349, 63
        %s352 = smul.addr %s351, 8
        %s353 = scalar_lea.vmem %s1, %s352
        %s354 = smul.u32 32, %s23
        %s355 = smul.u32 32, %s23
        %v356 = vld [vmem:[%s347] sm:$0xff]
        %v357 = vld [vmem:[%s347 + $0x8] sm:$0xff]
        %v358 = vld [vmem:[%s347 + $0x10] sm:$0xff]
        %v359 = vld [vmem:[%s347 + $0x18] sm:$0xff]
        %v360 = vld [vmem:[%s347 + $0x20] sm:$0xff]
        %v361 = vld [vmem:[%s347 + $0x28] sm:$0xff]
        %v362 = vld [vmem:[%s347 + $0x30] sm:$0xff]
        %v363 = vld [vmem:[%s347 + $0x38] sm:$0xff]
        %v364 = vld [vmem:[%s347 + $0x40] sm:$0xff]
        %v365 = vld [vmem:[%s347 + $0x48] sm:$0xff]
        %v366 = vld [vmem:[%s347 + $0x50] sm:$0xff]
        %v367 = vld [vmem:[%s347 + $0x58] sm:$0xff]
        %v368 = vld [vmem:[%s347 + $0x60] sm:$0xff]
        %v369 = vld [vmem:[%s347 + $0x68] sm:$0xff]
        %v370 = vld [vmem:[%s347 + $0x70] sm:$0xff]
        %v371 = vld [vmem:[%s347 + $0x78] sm:$0xff]
        %v372 = vld [vmem:[%s347 + $0x80] sm:$0xff]
        %v373 = vld [vmem:[%s347 + $0x88] sm:$0xff]
        %v374 = vld [vmem:[%s347 + $0x90] sm:$0xff]
        %v375 = vld [vmem:[%s347 + $0x98] sm:$0xff]
        %v376 = vld [vmem:[%s347 + $0xa0] sm:$0xff]
        %v377 = vld [vmem:[%s347 + $0xa8] sm:$0xff]
        %v378 = vld [vmem:[%s347 + $0xb0] sm:$0xff]
        %v379 = vld [vmem:[%s347 + $0xb8] sm:$0xff]
        %v380 = vld [vmem:[%s347 + $0xc0] sm:$0xff]
        %v381 = vld [vmem:[%s347 + $0xc8] sm:$0xff]
        %v382 = vld [vmem:[%s347 + $0xd0] sm:$0xff]
        %v383 = vld [vmem:[%s347 + $0xd8] sm:$0xff]
        %v384 = vld [vmem:[%s347 + $0xe0] sm:$0xff]
        %v385 = vld [vmem:[%s347 + $0xe8] sm:$0xff]
        %v386 = vld [vmem:[%s347 + $0xf0] sm:$0xff]
        %v387 = vld [vmem:[%s347 + $0xf8] sm:$0xff]
        %v388 = vld [vmem:[%s2] sm:$0xff]
        %v389 = vld [vmem:[%s2 + $0x8] sm:$0xff]
        %v390 = vld [vmem:[%s2 + $0x10] sm:$0xff]
        %v391 = vld [vmem:[%s2 + $0x18] sm:$0xff]
        %v392 = vld [vmem:[%s2 + $0x20] sm:$0xff]
        %v393 = vld [vmem:[%s2 + $0x28] sm:$0xff]
        %v394 = vld [vmem:[%s2 + $0x30] sm:$0xff]
        %v395 = vld [vmem:[%s2 + $0x38] sm:$0xff]
        %v396 = vld [vmem:[%s2 + $0x40] sm:$0xff]
        %v397 = vld [vmem:[%s2 + $0x48] sm:$0xff]
        %v398 = vld [vmem:[%s2 + $0x50] sm:$0xff]
        %v399 = vld [vmem:[%s2 + $0x58] sm:$0xff]
        %v400 = vld [vmem:[%s2 + $0x60] sm:$0xff]
        %v401 = vld [vmem:[%s2 + $0x68] sm:$0xff]
        %v402 = vld [vmem:[%s2 + $0x70] sm:$0xff]
        %v403 = vld [vmem:[%s2 + $0x78] sm:$0xff]
        %v404 = vld [vmem:[%s3] sm:$0xf]
        %v406 = vlaneseq
        %v407 = vshrl.u32 %v406, 7
        %v408 = vsub.s32 0, %v407
        %v409 = vrot.slane %v404, %v408
        %v410 = vlaneseq
        %v411 = vshrl.u32 %v410, 7
        %v412 = vsub.s32 1, %v411
        %v413 = vrot.slane %v404, %v412
        %v414 = vlaneseq
        %v415 = vshrl.u32 %v414, 7
        %v416 = vsub.s32 2, %v415
        %v417 = vrot.slane %v404, %v416
        %v418 = vlaneseq
        %v419 = vshrl.u32 %v418, 7
        %v420 = vsub.s32 3, %v419
        %v421 = vrot.slane %v404, %v420
        %vm426 = vcmask 261120
        %v428 = vsel %vm426, %v356, 0
        %v431 = vsel %vm426, %v357, 0
        %v434 = vsel %vm426, %v358, 0
        %v437 = vsel %vm426, %v359, 0
        %v440 = vsel %vm426, %v360, 0
        %v443 = vsel %vm426, %v361, 0
        %v446 = vsel %vm426, %v362, 0
        %v449 = vsel %vm426, %v363, 0
        %v452 = vsel %vm426, %v364, 0
        %v455 = vsel %vm426, %v365, 0
        %v458 = vsel %vm426, %v366, 0
        %v461 = vsel %vm426, %v367, 0
        %v464 = vsel %vm426, %v368, 0
        %v467 = vsel %vm426, %v369, 0
        %v470 = vsel %vm426, %v370, 0
        %v473 = vsel %vm426, %v371, 0
        %v476 = vsel %vm426, %v372, 0
        %v479 = vsel %vm426, %v373, 0
        %v482 = vsel %vm426, %v374, 0
        %v485 = vsel %vm426, %v375, 0
        %v488 = vsel %vm426, %v376, 0
        %v491 = vsel %vm426, %v377, 0
        %v494 = vsel %vm426, %v378, 0
        %v497 = vsel %vm426, %v379, 0
        %v500 = vsel %vm426, %v380, 0
        %v503 = vsel %vm426, %v381, 0
        %v506 = vsel %vm426, %v382, 0
        %v509 = vsel %vm426, %v383, 0
        %v512 = vsel %vm426, %v384, 0
        %v515 = vsel %vm426, %v385, 0
        %v518 = vsel %vm426, %v386, 0
        %v521 = vsel %vm426, %v387, 0
        %523 = vmatprep.subr.mxu0 %v389
        %524 = vmatpush1.msra.mxu0 %v388
        %525 = vmatprep.subr.mxu0 %v393
        %526 = vmatpush1.msra.mxu0 %v392
        %527 = vmatprep.subr.mxu0 %v397
        %528 = vmatpush1.msra.mxu0 %v396
        %529 = vmatprep.subr.mxu0 %v401
        %530 = vmatpush1.msra.mxu0 %v400
        %531 = vmatprep.subr.mxu0 0.0
        %532 = vmatpush1.msra.mxu0 0.0
        %533 = vmatprep.subr.mxu0 0.0
        %534 = vmatpush1.msra.mxu0 0.0
        %535 = vmatprep.subr.mxu0 0.0
        %536 = vmatpush1.msra.mxu0 0.0
        %537 = vmatprep.subr.mxu0 0.0
        %538 = vmatpush1.msra.mxu0 0.0
        %539 = vmatprep.subr.mxu0 0.0
        %540 = vmatpush1.msra.mxu0 0.0
        %541 = vmatprep.subr.mxu0 0.0
        %542 = vmatpush1.msra.mxu0 0.0
        %543 = vmatprep.subr.mxu0 0.0
        %544 = vmatpush1.msra.mxu0 0.0
        %545 = vmatprep.subr.mxu0 0.0
        %546 = vmatpush1.msra.mxu0 0.0
        %547 = vmatprep.subr.mxu0 0.0
        %548 = vmatpush1.msra.mxu0 0.0
        %549 = vmatprep.subr.mxu0 0.0
        %550 = vmatpush1.msra.mxu0 0.0
        %551 = vmatprep.subr.mxu0 0.0
        %552 = vmatpush1.msra.mxu0 0.0
        %553 = vmatprep.subr.mxu0 0.0
        %554 = vmatpush1.msra.mxu0 0.0
        %555 = vmatprep.subr.mxu0 0.0
        %556 = vmatpush1.msra.mxu0 0.0
        %557 = vmatprep.subr.mxu0 0.0
        %558 = vmatpush1.msra.mxu0 0.0
        %559 = vmatprep.subr.mxu0 0.0
        %560 = vmatpush1.msra.mxu0 0.0
        %561 = vmatprep.subr.mxu0 0.0
        %562 = vmatpush1.msra.mxu0 0.0
        %563 = vmatprep.subr.mxu0 0.0
        %564 = vmatpush1.msra.mxu0 0.0
        %565 = vmatprep.subr.mxu0 0.0
        %566 = vmatpush1.msra.mxu0 0.0
        %567 = vmatprep.subr.mxu0 0.0
        %568 = vmatpush1.msra.mxu0 0.0
        %569 = vmatprep.subr.mxu0 0.0
        %570 = vmatpush1.msra.mxu0 0.0
        %571 = vmatprep.subr.mxu0 0.0
        %572 = vmatpush1.msra.mxu0 0.0
        %573 = vmatprep.subr.mxu0 0.0
        %574 = vmatpush1.msra.mxu0 0.0
        %575 = vmatprep.subr.mxu0 0.0
        %576 = vmatpush1.msra.mxu0 0.0
        %577 = vmatprep.subr.mxu0 0.0
        %578 = vmatpush1.msra.mxu0 0.0
        %579 = vmatprep.subr.mxu0 0.0
        %580 = vmatpush1.msra.mxu0 0.0
        %581 = vmatprep.subr.mxu0 0.0
        %582 = vmatpush1.msra.mxu0 0.0
        %583 = vmatprep.subr.mxu0 0.0
        %584 = vmatpush1.msra.mxu0 0.0
        %585 = vmatprep.subr.mxu0 0.0
        %586 = vmatpush1.msra.mxu0 0.0
        %587 = vmatprep.mubr.f32.mxu0 0.0
        %588 = vmatmul.mubr.f32.gmra.mrb[0].mxu0 %v428
        %v589 = vpop.f32.mrb[0].mxu0
        %v590 = vadd.f32 %v409, %v589
        %v591 = vpop.f32.mrb[0].mxu0
        %v592 = vadd.f32 %v413, %v591
        %593 = vmatprep.mubr.f32.mxu0 0.0
        %594 = vmatmul.mubr.f32.gmra.mrb[0].mxu0 %v431
        %v595 = vpop.f32.mrb[0].mxu0
        %v596 = vadd.f32 %v409, %v595
        %v597 = vpop.f32.mrb[0].mxu0
        %v598 = vadd.f32 %v413, %v597
        %599 = vmatprep.mubr.f32.mxu0 0.0
        %600 = vmatmul.mubr.f32.gmra.mrb[0].mxu0 %v434
        %v601 = vpop.f32.mrb[0].mxu0
        %v602 = vadd.f32 %v409, %v601
        %v603 = vpop.f32.mrb[0].mxu0
        %v604 = vadd.f32 %v413, %v603
        %605 = vmatprep.mubr.f32.mxu0 0.0
        %606 = vmatmul.mubr.f32.gmra.mrb[0].mxu0 %v437
        %v607 = vpop.f32.mrb[0].mxu0
        %v608 = vadd.f32 %v409, %v607
        %v609 = vpop.f32.mrb[0].mxu0
        %v610 = vadd.f32 %v413, %v609
        %611 = vmatprep.mubr.f32.mxu0 0.0
        %612 = vmatmul.mubr.f32.gmra.mrb[0].mxu0 %v440
        %v613 = vpop.f32.mrb[0].mxu0
        %v614 = vadd.f32 %v409, %v613
        %v615 = vpop.f32.mrb[0].mxu0
        %v616 = vadd.f32 %v413, %v615
        %617 = vmatprep.mubr.f32.mxu0 0.0
        %618 = vmatmul.mubr.f32.gmra.mrb[0].mxu0 %v443
        %v619 = vpop.f32.mrb[0].mxu0
        %v620 = vadd.f32 %v409, %v619
        %v621 = vpop.f32.mrb[0].mxu0
        %v622 = vadd.f32 %v413, %v621
        %623 = vmatprep.mubr.f32.mxu0 0.0
        %624 = vmatmul.mubr.f32.gmra.mrb[0].mxu0 %v446
        %v625 = vpop.f32.mrb[0].mxu0
        %v626 = vadd.f32 %v409, %v625
        %v627 = vpop.f32.mrb[0].mxu0
        %v628 = vadd.f32 %v413, %v627
        %629 = vmatprep.mubr.f32.mxu0 0.0
        %630 = vmatmul.mubr.f32.gmra.mrb[0].mxu0 %v449
        %v631 = vpop.f32.mrb[0].mxu0
        %v632 = vadd.f32 %v409, %v631
        %v633 = vpop.f32.mrb[0].mxu0
        %v634 = vadd.f32 %v413, %v633
        %635 = vmatprep.mubr.f32.mxu0 0.0
        %636 = vmatmul.mubr.f32.gmra.mrb[0].mxu0 %v452
        %v637 = vpop.f32.mrb[0].mxu0
        %v638 = vadd.f32 %v409, %v637
        %v639 = vpop.f32.mrb[0].mxu0
        %v640 = vadd.f32 %v413, %v639
        %641 = vmatprep.mubr.f32.mxu0 0.0
        %642 = vmatmul.mubr.f32.gmra.mrb[0].mxu0 %v455
        %v643 = vpop.f32.mrb[0].mxu0
        %v644 = vadd.f32 %v409, %v643
        %v645 = vpop.f32.mrb[0].mxu0
        %v646 = vadd.f32 %v413, %v645
        %647 = vmatprep.mubr.f32.mxu0 0.0
        %648 = vmatmul.mubr.f32.gmra.mrb[0].mxu0 %v458
        %v649 = vpop.f32.mrb[0].mxu0
        %v650 = vadd.f32 %v409, %v649
        %v651 = vpop.f32.mrb[0].mxu0
        %v652 = vadd.f32 %v413, %v651
        %653 = vmatprep.mubr.f32.mxu0 0.0
        %654 = vmatmul.mubr.f32.gmra.mrb[0].mxu0 %v461
        %v655 = vpop.f32.mrb[0].mxu0
        %v656 = vadd.f32 %v409, %v655
        %v657 = vpop.f32.mrb[0].mxu0
        %v658 = vadd.f32 %v413, %v657
        %659 = vmatprep.mubr.f32.mxu0 0.0
        %660 = vmatmul.mubr.f32.gmra.mrb[0].mxu0 %v464
        %v661 = vpop.f32.mrb[0].mxu0
        %v662 = vadd.f32 %v409, %v661
        %v663 = vpop.f32.mrb[0].mxu0
        %v664 = vadd.f32 %v413, %v663
        %665 = vmatprep.mubr.f32.mxu0 0.0
        %666 = vmatmul.mubr.f32.gmra.mrb[0].mxu0 %v467
        %v667 = vpop.f32.mrb[0].mxu0
        %v668 = vadd.f32 %v409, %v667
        %v669 = vpop.f32.mrb[0].mxu0
        %v670 = vadd.f32 %v413, %v669
        %671 = vmatprep.mubr.f32.mxu0 0.0
        %672 = vmatmul.mubr.f32.gmra.mrb[0].mxu0 %v470
        %v673 = vpop.f32.mrb[0].mxu0
        %v674 = vadd.f32 %v409, %v673
        %v675 = vpop.f32.mrb[0].mxu0
        %v676 = vadd.f32 %v413, %v675
        %677 = vmatprep.mubr.f32.mxu0 0.0
        %678 = vmatmul.mubr.f32.gmra.mrb[0].mxu0 %v473
        %v679 = vpop.f32.mrb[0].mxu0
        %v680 = vadd.f32 %v409, %v679
        %v681 = vpop.f32.mrb[0].mxu0
        %v682 = vadd.f32 %v413, %v681
        %683 = vmatprep.mubr.f32.mxu0 0.0
        %684 = vmatmul.mubr.f32.gmra.mrb[0].mxu0 %v476
        %v685 = vpop.f32.mrb[0].mxu0
        %v686 = vadd.f32 %v409, %v685
        %v687 = vpop.f32.mrb[0].mxu0
        %v688 = vadd.f32 %v413, %v687
        %689 = vmatprep.mubr.f32.mxu0 0.0
        %690 = vmatmul.mubr.f32.gmra.mrb[0].mxu0 %v479
        %v691 = vpop.f32.mrb[0].mxu0
        %v692 = vadd.f32 %v409, %v691
        %v693 = vpop.f32.mrb[0].mxu0
        %v694 = vadd.f32 %v413, %v693
        %695 = vmatprep.mubr.f32.mxu0 0.0
        %696 = vmatmul.mubr.f32.gmra.mrb[0].mxu0 %v482
        %v697 = vpop.f32.mrb[0].mxu0
        %v698 = vadd.f32 %v409, %v697
        %v699 = vpop.f32.mrb[0].mxu0
        %v700 = vadd.f32 %v413, %v699
        %701 = vmatprep.mubr.f32.mxu0 0.0
        %702 = vmatmul.mubr.f32.gmra.mrb[0].mxu0 %v485
        %v703 = vpop.f32.mrb[0].mxu0
        %v704 = vadd.f32 %v409, %v703
        %v705 = vpop.f32.mrb[0].mxu0
        %v706 = vadd.f32 %v413, %v705
        %707 = vmatprep.mubr.f32.mxu0 0.0
        %708 = vmatmul.mubr.f32.gmra.mrb[0].mxu0 %v488
        %v709 = vpop.f32.mrb[0].mxu0
        %v710 = vadd.f32 %v409, %v709
        %v711 = vpop.f32.mrb[0].mxu0
        %v712 = vadd.f32 %v413, %v711
        %713 = vmatprep.mubr.f32.mxu0 0.0
        %714 = vmatmul.mubr.f32.gmra.mrb[0].mxu0 %v491
        %v715 = vpop.f32.mrb[0].mxu0
        %v716 = vadd.f32 %v409, %v715
        %v717 = vpop.f32.mrb[0].mxu0
        %v718 = vadd.f32 %v413, %v717
        %719 = vmatprep.mubr.f32.mxu0 0.0
        %720 = vmatmul.mubr.f32.gmra.mrb[0].mxu0 %v494
        %v721 = vpop.f32.mrb[0].mxu0
        %v722 = vadd.f32 %v409, %v721
        %v723 = vpop.f32.mrb[0].mxu0
        %v724 = vadd.f32 %v413, %v723
        %725 = vmatprep.mubr.f32.mxu0 0.0
        %726 = vmatmul.mubr.f32.gmra.mrb[0].mxu0 %v497
        %v727 = vpop.f32.mrb[0].mxu0
        %v728 = vadd.f32 %v409, %v727
        %v729 = vpop.f32.mrb[0].mxu0
        %v730 = vadd.f32 %v413, %v729
        %731 = vmatprep.mubr.f32.mxu0 0.0
        %732 = vmatmul.mubr.f32.gmra.mrb[0].mxu0 %v500
        %v733 = vpop.f32.mrb[0].mxu0
        %v734 = vadd.f32 %v409, %v733
        %v735 = vpop.f32.mrb[0].mxu0
        %v736 = vadd.f32 %v413, %v735
        %737 = vmatprep.mubr.f32.mxu0 0.0
        %738 = vmatmul.mubr.f32.gmra.mrb[0].mxu0 %v503
        %v739 = vpop.f32.mrb[0].mxu0
        %v740 = vadd.f32 %v409, %v739
        %v741 = vpop.f32.mrb[0].mxu0
        %v742 = vadd.f32 %v413, %v741
        %743 = vmatprep.mubr.f32.mxu0 0.0
        %744 = vmatmul.mubr.f32.gmra.mrb[0].mxu0 %v506
        %v745 = vpop.f32.mrb[0].mxu0
        %v746 = vadd.f32 %v409, %v745
        %v747 = vpop.f32.mrb[0].mxu0
        %v748 = vadd.f32 %v413, %v747
        %749 = vmatprep.mubr.f32.mxu0 0.0
        %750 = vmatmul.mubr.f32.gmra.mrb[0].mxu0 %v509
        %v751 = vpop.f32.mrb[0].mxu0
        %v752 = vadd.f32 %v409, %v751
        %v753 = vpop.f32.mrb[0].mxu0
        %v754 = vadd.f32 %v413, %v753
        %755 = vmatprep.mubr.f32.mxu0 0.0
        %756 = vmatmul.mubr.f32.gmra.mrb[0].mxu0 %v512
        %v757 = vpop.f32.mrb[0].mxu0
        %v758 = vadd.f32 %v409, %v757
        %v759 = vpop.f32.mrb[0].mxu0
        %v760 = vadd.f32 %v413, %v759
        %761 = vmatprep.mubr.f32.mxu0 0.0
        %762 = vmatmul.mubr.f32.gmra.mrb[0].mxu0 %v515
        %v763 = vpop.f32.mrb[0].mxu0
        %v764 = vadd.f32 %v409, %v763
        %v765 = vpop.f32.mrb[0].mxu0
        %v766 = vadd.f32 %v413, %v765
        %767 = vmatprep.mubr.f32.mxu0 0.0
        %768 = vmatmul.mubr.f32.gmra.mrb[0].mxu0 %v518
        %v769 = vpop.f32.mrb[0].mxu0
        %v770 = vadd.f32 %v409, %v769
        %v771 = vpop.f32.mrb[0].mxu0
        %v772 = vadd.f32 %v413, %v771
        %773 = vmatprep.mubr.f32.mxu0 0.0
        %774 = vmatmul.mubr.f32.gmra.mrb[0].mxu0 %v521
        %v775 = vpop.f32.mrb[0].mxu0
        %v776 = vadd.f32 %v409, %v775
        %v777 = vpop.f32.mrb[0].mxu0
        %v778 = vadd.f32 %v413, %v777
        %779 = vdwg.mxu0
        %780 = vmatprep.subr.mxu0 %v391
        %781 = vmatpush1.msra.mxu0 %v390
        %782 = vmatprep.subr.mxu0 %v395
        %783 = vmatpush1.msra.mxu0 %v394
        %784 = vmatprep.subr.mxu0 %v399
        %785 = vmatpush1.msra.mxu0 %v398
        %786 = vmatprep.subr.mxu0 %v403
        %787 = vmatpush1.msra.mxu0 %v402
        %788 = vmatprep.subr.mxu0 0.0
        %789 = vmatpush1.msra.mxu0 0.0
        %790 = vmatprep.subr.mxu0 0.0
        %791 = vmatpush1.msra.mxu0 0.0
        %792 = vmatprep.subr.mxu0 0.0
        %793 = vmatpush1.msra.mxu0 0.0
        %794 = vmatprep.subr.mxu0 0.0
        %795 = vmatpush1.msra.mxu0 0.0
        %796 = vmatprep.subr.mxu0 0.0
        %797 = vmatpush1.msra.mxu0 0.0
        %798 = vmatprep.subr.mxu0 0.0
        %799 = vmatpush1.msra.mxu0 0.0
        %800 = vmatprep.subr.mxu0 0.0
        %801 = vmatpush1.msra.mxu0 0.0
        %802 = vmatprep.subr.mxu0 0.0
        %803 = vmatpush1.msra.mxu0 0.0
        %804 = vmatprep.subr.mxu0 0.0
        %805 = vmatpush1.msra.mxu0 0.0
        %806 = vmatprep.subr.mxu0 0.0
        %807 = vmatpush1.msra.mxu0 0.0
        %808 = vmatprep.subr.mxu0 0.0
        %809 = vmatpush1.msra.mxu0 0.0
        %810 = vmatprep.subr.mxu0 0.0
        %811 = vmatpush1.msra.mxu0 0.0
        %812 = vmatprep.subr.mxu0 0.0
        %813 = vmatpush1.msra.mxu0 0.0
        %814 = vmatprep.subr.mxu0 0.0
        %815 = vmatpush1.msra.mxu0 0.0
        %816 = vmatprep.subr.mxu0 0.0
        %817 = vmatpush1.msra.mxu0 0.0
        %818 = vmatprep.subr.mxu0 0.0
        %819 = vmatpush1.msra.mxu0 0.0
        %820 = vmatprep.subr.mxu0 0.0
        %821 = vmatpush1.msra.mxu0 0.0
        %822 = vmatprep.subr.mxu0 0.0
        %823 = vmatpush1.msra.mxu0 0.0
        %824 = vmatprep.subr.mxu0 0.0
        %825 = vmatpush1.msra.mxu0 0.0
        %826 = vmatprep.subr.mxu0 0.0
        %827 = vmatpush1.msra.mxu0 0.0
        %828 = vmatprep.subr.mxu0 0.0
        %829 = vmatpush1.msra.mxu0 0.0
        %830 = vmatprep.subr.mxu0 0.0
        %831 = vmatpush1.msra.mxu0 0.0
        %832 = vmatprep.subr.mxu0 0.0
        %833 = vmatpush1.msra.mxu0 0.0
        %834 = vmatprep.subr.mxu0 0.0
        %835 = vmatpush1.msra.mxu0 0.0
        %836 = vmatprep.subr.mxu0 0.0
        %837 = vmatpush1.msra.mxu0 0.0
        %838 = vmatprep.subr.mxu0 0.0
        %839 = vmatpush1.msra.mxu0 0.0
        %840 = vmatprep.subr.mxu0 0.0
        %841 = vmatpush1.msra.mxu0 0.0
        %842 = vmatprep.subr.mxu0 0.0
        %843 = vmatpush1.msra.mxu0 0.0
        %844 = vmatprep.mubr.f32.mxu0 0.0
        %845 = vmatmul.mubr.f32.gmra.mrb[0].mxu0 %v428
        %v846 = vpop.f32.mrb[0].mxu0
        %v847 = vadd.f32 %v417, %v846
        %v848 = vpop.f32.mrb[0].mxu0
        %v849 = vadd.f32 %v421, %v848
        %850 = vmatprep.mubr.f32.mxu0 0.0
        %851 = vmatmul.mubr.f32.gmra.mrb[0].mxu0 %v431
        %v852 = vpop.f32.mrb[0].mxu0
        %v853 = vadd.f32 %v417, %v852
        %v854 = vpop.f32.mrb[0].mxu0
        %v855 = vadd.f32 %v421, %v854
        %856 = vmatprep.mubr.f32.mxu0 0.0
        %857 = vmatmul.mubr.f32.gmra.mrb[0].mxu0 %v434
        %v858 = vpop.f32.mrb[0].mxu0
        %v859 = vadd.f32 %v417, %v858
        %v860 = vpop.f32.mrb[0].mxu0
        %v861 = vadd.f32 %v421, %v860
        %862 = vmatprep.mubr.f32.mxu0 0.0
        %863 = vmatmul.mubr.f32.gmra.mrb[0].mxu0 %v437
        %v864 = vpop.f32.mrb[0].mxu0
        %v865 = vadd.f32 %v417, %v864
        %v866 = vpop.f32.mrb[0].mxu0
        %v867 = vadd.f32 %v421, %v866
        %868 = vmatprep.mubr.f32.mxu0 0.0
        %869 = vmatmul.mubr.f32.gmra.mrb[0].mxu0 %v440
        %v870 = vpop.f32.mrb[0].mxu0
        %v871 = vadd.f32 %v417, %v870
        %v872 = vpop.f32.mrb[0].mxu0
        %v873 = vadd.f32 %v421, %v872
        %874 = vmatprep.mubr.f32.mxu0 0.0
        %875 = vmatmul.mubr.f32.gmra.mrb[0].mxu0 %v443
        %v876 = vpop.f32.mrb[0].mxu0
        %v877 = vadd.f32 %v417, %v876
        %v878 = vpop.f32.mrb[0].mxu0
        %v879 = vadd.f32 %v421, %v878
        %880 = vmatprep.mubr.f32.mxu0 0.0
        %881 = vmatmul.mubr.f32.gmra.mrb[0].mxu0 %v446
        %v882 = vpop.f32.mrb[0].mxu0
        %v883 = vadd.f32 %v417, %v882
        %v884 = vpop.f32.mrb[0].mxu0
        %v885 = vadd.f32 %v421, %v884
        %886 = vmatprep.mubr.f32.mxu0 0.0
        %887 = vmatmul.mubr.f32.gmra.mrb[0].mxu0 %v449
        %v888 = vpop.f32.mrb[0].mxu0
        %v889 = vadd.f32 %v417, %v888
        %v890 = vpop.f32.mrb[0].mxu0
        %v891 = vadd.f32 %v421, %v890
        %892 = vmatprep.mubr.f32.mxu0 0.0
        %893 = vmatmul.mubr.f32.gmra.mrb[0].mxu0 %v452
        %v894 = vpop.f32.mrb[0].mxu0
        %v895 = vadd.f32 %v417, %v894
        %v896 = vpop.f32.mrb[0].mxu0
        %v897 = vadd.f32 %v421, %v896
        %898 = vmatprep.mubr.f32.mxu0 0.0
        %899 = vmatmul.mubr.f32.gmra.mrb[0].mxu0 %v455
        %v900 = vpop.f32.mrb[0].mxu0
        %v901 = vadd.f32 %v417, %v900
        %v902 = vpop.f32.mrb[0].mxu0
        %v903 = vadd.f32 %v421, %v902
        %904 = vmatprep.mubr.f32.mxu0 0.0
        %905 = vmatmul.mubr.f32.gmra.mrb[0].mxu0 %v458
        %v906 = vpop.f32.mrb[0].mxu0
        %v907 = vadd.f32 %v417, %v906
        %v908 = vpop.f32.mrb[0].mxu0
        %v909 = vadd.f32 %v421, %v908
        %910 = vmatprep.mubr.f32.mxu0 0.0
        %911 = vmatmul.mubr.f32.gmra.mrb[0].mxu0 %v461
        %v912 = vpop.f32.mrb[0].mxu0
        %v913 = vadd.f32 %v417, %v912
        %v914 = vpop.f32.mrb[0].mxu0
        %v915 = vadd.f32 %v421, %v914
        %916 = vmatprep.mubr.f32.mxu0 0.0
        %917 = vmatmul.mubr.f32.gmra.mrb[0].mxu0 %v464
        %v918 = vpop.f32.mrb[0].mxu0
        %v919 = vadd.f32 %v417, %v918
        %v920 = vpop.f32.mrb[0].mxu0
        %v921 = vadd.f32 %v421, %v920
        %922 = vmatprep.mubr.f32.mxu0 0.0
        %923 = vmatmul.mubr.f32.gmra.mrb[0].mxu0 %v467
        %v924 = vpop.f32.mrb[0].mxu0
        %v925 = vadd.f32 %v417, %v924
        %v926 = vpop.f32.mrb[0].mxu0
        %v927 = vadd.f32 %v421, %v926
        %928 = vmatprep.mubr.f32.mxu0 0.0
        %929 = vmatmul.mubr.f32.gmra.mrb[0].mxu0 %v470
        %v930 = vpop.f32.mrb[0].mxu0
        %v931 = vadd.f32 %v417, %v930
        %v932 = vpop.f32.mrb[0].mxu0
        %v933 = vadd.f32 %v421, %v932
        %934 = vmatprep.mubr.f32.mxu0 0.0
        %935 = vmatmul.mubr.f32.gmra.mrb[0].mxu0 %v473
        %v936 = vpop.f32.mrb[0].mxu0
        %v937 = vadd.f32 %v417, %v936
        %v938 = vpop.f32.mrb[0].mxu0
        %v939 = vadd.f32 %v421, %v938
        %940 = vmatprep.mubr.f32.mxu0 0.0
        %941 = vmatmul.mubr.f32.gmra.mrb[0].mxu0 %v476
        %v942 = vpop.f32.mrb[0].mxu0
        %v943 = vadd.f32 %v417, %v942
        %v944 = vpop.f32.mrb[0].mxu0
        %v945 = vadd.f32 %v421, %v944
        %946 = vmatprep.mubr.f32.mxu0 0.0
        %947 = vmatmul.mubr.f32.gmra.mrb[0].mxu0 %v479
        %v948 = vpop.f32.mrb[0].mxu0
        %v949 = vadd.f32 %v417, %v948
        %v950 = vpop.f32.mrb[0].mxu0
        %v951 = vadd.f32 %v421, %v950
        %952 = vmatprep.mubr.f32.mxu0 0.0
        %953 = vmatmul.mubr.f32.gmra.mrb[0].mxu0 %v482
        %v954 = vpop.f32.mrb[0].mxu0
        %v955 = vadd.f32 %v417, %v954
        %v956 = vpop.f32.mrb[0].mxu0
        %v957 = vadd.f32 %v421, %v956
        %958 = vmatprep.mubr.f32.mxu0 0.0
        %959 = vmatmul.mubr.f32.gmra.mrb[0].mxu0 %v485
        %v960 = vpop.f32.mrb[0].mxu0
        %v961 = vadd.f32 %v417, %v960
        %v962 = vpop.f32.mrb[0].mxu0
        %v963 = vadd.f32 %v421, %v962
        %964 = vmatprep.mubr.f32.mxu0 0.0
        %965 = vmatmul.mubr.f32.gmra.mrb[0].mxu0 %v488
        %v966 = vpop.f32.mrb[0].mxu0
        %v967 = vadd.f32 %v417, %v966
        %v968 = vpop.f32.mrb[0].mxu0
        %v969 = vadd.f32 %v421, %v968
        %970 = vmatprep.mubr.f32.mxu0 0.0
        %971 = vmatmul.mubr.f32.gmra.mrb[0].mxu0 %v491
        %v972 = vpop.f32.mrb[0].mxu0
        %v973 = vadd.f32 %v417, %v972
        %v974 = vpop.f32.mrb[0].mxu0
        %v975 = vadd.f32 %v421, %v974
        %976 = vmatprep.mubr.f32.mxu0 0.0
        %977 = vmatmul.mubr.f32.gmra.mrb[0].mxu0 %v494
        %v978 = vpop.f32.mrb[0].mxu0
        %v979 = vadd.f32 %v417, %v978
        %v980 = vpop.f32.mrb[0].mxu0
        %v981 = vadd.f32 %v421, %v980
        %982 = vmatprep.mubr.f32.mxu0 0.0
        %983 = vmatmul.mubr.f32.gmra.mrb[0].mxu0 %v497
        %v984 = vpop.f32.mrb[0].mxu0
        %v985 = vadd.f32 %v417, %v984
        %v986 = vpop.f32.mrb[0].mxu0
        %v987 = vadd.f32 %v421, %v986
        %988 = vmatprep.mubr.f32.mxu0 0.0
        %989 = vmatmul.mubr.f32.gmra.mrb[0].mxu0 %v500
        %v990 = vpop.f32.mrb[0].mxu0
        %v991 = vadd.f32 %v417, %v990
        %v992 = vpop.f32.mrb[0].mxu0
        %v993 = vadd.f32 %v421, %v992
        %994 = vmatprep.mubr.f32.mxu0 0.0
        %995 = vmatmul.mubr.f32.gmra.mrb[0].mxu0 %v503
        %v996 = vpop.f32.mrb[0].mxu0
        %v997 = vadd.f32 %v417, %v996
        %v998 = vpop.f32.mrb[0].mxu0
        %v999 = vadd.f32 %v421, %v998
        %1000 = vmatprep.mubr.f32.mxu0 0.0
        %1001 = vmatmul.mubr.f32.gmra.mrb[0].mxu0 %v506
        %v1002 = vpop.f32.mrb[0].mxu0
        %v1003 = vadd.f32 %v417, %v1002
        %v1004 = vpop.f32.mrb[0].mxu0
        %v1005 = vadd.f32 %v421, %v1004
        %1006 = vmatprep.mubr.f32.mxu0 0.0
        %1007 = vmatmul.mubr.f32.gmra.mrb[0].mxu0 %v509
        %v1008 = vpop.f32.mrb[0].mxu0
        %v1009 = vadd.f32 %v417, %v1008
        %v1010 = vpop.f32.mrb[0].mxu0
        %v1011 = vadd.f32 %v421, %v1010
        %1012 = vmatprep.mubr.f32.mxu0 0.0
        %1013 = vmatmul.mubr.f32.gmra.mrb[0].mxu0 %v512
        %v1014 = vpop.f32.mrb[0].mxu0
        %v1015 = vadd.f32 %v417, %v1014
        %v1016 = vpop.f32.mrb[0].mxu0
        %v1017 = vadd.f32 %v421, %v1016
        %1018 = vmatprep.mubr.f32.mxu0 0.0
        %1019 = vmatmul.mubr.f32.gmra.mrb[0].mxu0 %v515
        %v1020 = vpop.f32.mrb[0].mxu0
        %v1021 = vadd.f32 %v417, %v1020
        %v1022 = vpop.f32.mrb[0].mxu0
        %v1023 = vadd.f32 %v421, %v1022
        %1024 = vmatprep.mubr.f32.mxu0 0.0
        %1025 = vmatmul.mubr.f32.gmra.mrb[0].mxu0 %v518
        %v1026 = vpop.f32.mrb[0].mxu0
        %v1027 = vadd.f32 %v417, %v1026
        %v1028 = vpop.f32.mrb[0].mxu0
        %v1029 = vadd.f32 %v421, %v1028
        %1030 = vmatprep.mubr.f32.mxu0 0.0
        %1031 = vmatmul.mubr.f32.gmra.mrb[0].mxu0 %v521
        %v1032 = vpop.f32.mrb[0].mxu0
        %v1033 = vadd.f32 %v417, %v1032
        %v1034 = vpop.f32.mrb[0].mxu0
        %v1035 = vadd.f32 %v421, %v1034
        %1036 = vdwg.mxu0
        %v1037 = vmax.f32 %v590, 0.0
        %v1038 = vmax.f32 %v592, 0.0
        %v1039 = vmax.f32 %v847, 0.0
        %v1040 = vmax.f32 %v849, 0.0
        %v1041 = vmax.f32 %v596, 0.0
        %v1042 = vmax.f32 %v598, 0.0
        %v1043 = vmax.f32 %v853, 0.0
        %v1044 = vmax.f32 %v855, 0.0
        %v1045 = vmax.f32 %v602, 0.0
        %v1046 = vmax.f32 %v604, 0.0
        %v1047 = vmax.f32 %v859, 0.0
        %v1048 = vmax.f32 %v861, 0.0
        %v1049 = vmax.f32 %v608, 0.0
        %v1050 = vmax.f32 %v610, 0.0
        %v1051 = vmax.f32 %v865, 0.0
        %v1052 = vmax.f32 %v867, 0.0
        %v1053 = vmax.f32 %v614, 0.0
        %v1054 = vmax.f32 %v616, 0.0
        %v1055 = vmax.f32 %v871, 0.0
        %v1056 = vmax.f32 %v873, 0.0
        %v1057 = vmax.f32 %v620, 0.0
        %v1058 = vmax.f32 %v622, 0.0
        %v1059 = vmax.f32 %v877, 0.0
        %v1060 = vmax.f32 %v879, 0.0
        %v1061 = vmax.f32 %v626, 0.0
        %v1062 = vmax.f32 %v628, 0.0
        %v1063 = vmax.f32 %v883, 0.0
        %v1064 = vmax.f32 %v885, 0.0
        %v1065 = vmax.f32 %v632, 0.0
        %v1066 = vmax.f32 %v634, 0.0
        %v1067 = vmax.f32 %v889, 0.0
        %v1068 = vmax.f32 %v891, 0.0
        %v1069 = vmax.f32 %v638, 0.0
        %v1070 = vmax.f32 %v640, 0.0
        %v1071 = vmax.f32 %v895, 0.0
        %v1072 = vmax.f32 %v897, 0.0
        %v1073 = vmax.f32 %v644, 0.0
        %v1074 = vmax.f32 %v646, 0.0
        %v1075 = vmax.f32 %v901, 0.0
        %v1076 = vmax.f32 %v903, 0.0
        %v1077 = vmax.f32 %v650, 0.0
        %v1078 = vmax.f32 %v652, 0.0
        %v1079 = vmax.f32 %v907, 0.0
        %v1080 = vmax.f32 %v909, 0.0
        %v1081 = vmax.f32 %v656, 0.0
        %v1082 = vmax.f32 %v658, 0.0
        %v1083 = vmax.f32 %v913, 0.0
        %v1084 = vmax.f32 %v915, 0.0
        %v1085 = vmax.f32 %v662, 0.0
        %v1086 = vmax.f32 %v664, 0.0
        %v1087 = vmax.f32 %v919, 0.0
        %v1088 = vmax.f32 %v921, 0.0
        %v1089 = vmax.f32 %v668, 0.0
        %v1090 = vmax.f32 %v670, 0.0
        %v1091 = vmax.f32 %v925, 0.0
        %v1092 = vmax.f32 %v927, 0.0
        %v1093 = vmax.f32 %v674, 0.0
        %v1094 = vmax.f32 %v676, 0.0
        %v1095 = vmax.f32 %v931, 0.0
        %v1096 = vmax.f32 %v933, 0.0
        %v1097 = vmax.f32 %v680, 0.0
        %v1098 = vmax.f32 %v682, 0.0
        %v1099 = vmax.f32 %v937, 0.0
        %v1100 = vmax.f32 %v939, 0.0
        %v1101 = vmax.f32 %v686, 0.0
        %v1102 = vmax.f32 %v688, 0.0
        %v1103 = vmax.f32 %v943, 0.0
        %v1104 = vmax.f32 %v945, 0.0
        %v1105 = vmax.f32 %v692, 0.0
        %v1106 = vmax.f32 %v694, 0.0
        %v1107 = vmax.f32 %v949, 0.0
        %v1108 = vmax.f32 %v951, 0.0
        %v1109 = vmax.f32 %v698, 0.0
        %v1110 = vmax.f32 %v700, 0.0
        %v1111 = vmax.f32 %v955, 0.0
        %v1112 = vmax.f32 %v957, 0.0
        %v1113 = vmax.f32 %v704, 0.0
        %v1114 = vmax.f32 %v706, 0.0
        %v1115 = vmax.f32 %v961, 0.0
        %v1116 = vmax.f32 %v963, 0.0
        %v1117 = vmax.f32 %v710, 0.0
        %v1118 = vmax.f32 %v712, 0.0
        %v1119 = vmax.f32 %v967, 0.0
        %v1120 = vmax.f32 %v969, 0.0
        %v1121 = vmax.f32 %v716, 0.0
        %v1122 = vmax.f32 %v718, 0.0
        %v1123 = vmax.f32 %v973, 0.0
        %v1124 = vmax.f32 %v975, 0.0
        %v1125 = vmax.f32 %v722, 0.0
        %v1126 = vmax.f32 %v724, 0.0
        %v1127 = vmax.f32 %v979, 0.0
        %v1128 = vmax.f32 %v981, 0.0
        %v1129 = vmax.f32 %v728, 0.0
        %v1130 = vmax.f32 %v730, 0.0
        %v1131 = vmax.f32 %v985, 0.0
        %v1132 = vmax.f32 %v987, 0.0
        %v1133 = vmax.f32 %v734, 0.0
        %v1134 = vmax.f32 %v736, 0.0
        %v1135 = vmax.f32 %v991, 0.0
        %v1136 = vmax.f32 %v993, 0.0
        %v1137 = vmax.f32 %v740, 0.0
        %v1138 = vmax.f32 %v742, 0.0
        %v1139 = vmax.f32 %v997, 0.0
        %v1140 = vmax.f32 %v999, 0.0
        %v1141 = vmax.f32 %v746, 0.0
        %v1142 = vmax.f32 %v748, 0.0
        %v1143 = vmax.f32 %v1003, 0.0
        %v1144 = vmax.f32 %v1005, 0.0
        %v1145 = vmax.f32 %v752, 0.0
        %v1146 = vmax.f32 %v754, 0.0
        %v1147 = vmax.f32 %v1009, 0.0
        %v1148 = vmax.f32 %v1011, 0.0
        %v1149 = vmax.f32 %v758, 0.0
        %v1150 = vmax.f32 %v760, 0.0
        %v1151 = vmax.f32 %v1015, 0.0
        %v1152 = vmax.f32 %v1017, 0.0
        %v1153 = vmax.f32 %v764, 0.0
        %v1154 = vmax.f32 %v766, 0.0
        %v1155 = vmax.f32 %v1021, 0.0
        %v1156 = vmax.f32 %v1023, 0.0
        %v1157 = vmax.f32 %v770, 0.0
        %v1158 = vmax.f32 %v772, 0.0
        %v1159 = vmax.f32 %v1027, 0.0
        %v1160 = vmax.f32 %v1029, 0.0
        %v1161 = vmax.f32 %v776, 0.0
        %v1162 = vmax.f32 %v778, 0.0
        %v1163 = vmax.f32 %v1033, 0.0
        %v1164 = vmax.f32 %v1035, 0.0
        %v1165 = vld [vmem:[%s4] sm:$0xff]
        %v1166 = vld [vmem:[%s4 + $0x8] sm:$0xff]
        %v1167 = vld [vmem:[%s4 + $0x10] sm:$0xff]
        %v1168 = vld [vmem:[%s4 + $0x18] sm:$0xff]
        %v1169 = vld [vmem:[%s4 + $0x20] sm:$0xff]
        %v1170 = vld [vmem:[%s4 + $0x28] sm:$0xff]
        %v1171 = vld [vmem:[%s4 + $0x30] sm:$0xff]
        %v1172 = vld [vmem:[%s4 + $0x38] sm:$0xff]
        %v1173 = vld [vmem:[%s4 + $0x40] sm:$0xff]
        %v1174 = vld [vmem:[%s4 + $0x48] sm:$0xff]
        %v1175 = vld [vmem:[%s4 + $0x50] sm:$0xff]
        %v1176 = vld [vmem:[%s4 + $0x58] sm:$0xff]
        %v1177 = vld [vmem:[%s4 + $0x60] sm:$0xff]
        %v1178 = vld [vmem:[%s4 + $0x68] sm:$0xff]
        %v1179 = vld [vmem:[%s4 + $0x70] sm:$0xff]
        %v1180 = vld [vmem:[%s4 + $0x78] sm:$0xff]
        %v1181 = vld [vmem:[%s4 + $0x80] sm:$0xff]
        %v1182 = vld [vmem:[%s4 + $0x88] sm:$0xff]
        %v1183 = vld [vmem:[%s4 + $0x90] sm:$0xff]
        %v1184 = vld [vmem:[%s4 + $0x98] sm:$0xff]
        %v1185 = vld [vmem:[%s4 + $0xa0] sm:$0xff]
        %v1186 = vld [vmem:[%s4 + $0xa8] sm:$0xff]
        %v1187 = vld [vmem:[%s4 + $0xb0] sm:$0xff]
        %v1188 = vld [vmem:[%s4 + $0xb8] sm:$0xff]
        %v1189 = vld [vmem:[%s4 + $0xc0] sm:$0xff]
        %v1190 = vld [vmem:[%s4 + $0xc8] sm:$0xff]
        %v1191 = vld [vmem:[%s4 + $0xd0] sm:$0xff]
        %v1192 = vld [vmem:[%s4 + $0xd8] sm:$0xff]
        %v1193 = vld [vmem:[%s4 + $0xe0] sm:$0xff]
        %v1194 = vld [vmem:[%s4 + $0xe8] sm:$0xff]
        %v1195 = vld [vmem:[%s4 + $0xf0] sm:$0xff]
        %v1196 = vld [vmem:[%s4 + $0xf8] sm:$0xff]
        %v1197 = vld [vmem:[%s4 + $0x100] sm:$0xff]
        %v1198 = vld [vmem:[%s4 + $0x108] sm:$0xff]
        %v1199 = vld [vmem:[%s4 + $0x110] sm:$0xff]
        %v1200 = vld [vmem:[%s4 + $0x118] sm:$0xff]
        %v1201 = vld [vmem:[%s4 + $0x120] sm:$0xff]
        %v1202 = vld [vmem:[%s4 + $0x128] sm:$0xff]
        %v1203 = vld [vmem:[%s4 + $0x130] sm:$0xff]
        %v1204 = vld [vmem:[%s4 + $0x138] sm:$0xff]
        %v1205 = vld [vmem:[%s4 + $0x140] sm:$0xff]
        %v1206 = vld [vmem:[%s4 + $0x148] sm:$0xff]
        %v1207 = vld [vmem:[%s4 + $0x150] sm:$0xff]
        %v1208 = vld [vmem:[%s4 + $0x158] sm:$0xff]
        %v1209 = vld [vmem:[%s4 + $0x160] sm:$0xff]
        %v1210 = vld [vmem:[%s4 + $0x168] sm:$0xff]
        %v1211 = vld [vmem:[%s4 + $0x170] sm:$0xff]
        %v1212 = vld [vmem:[%s4 + $0x178] sm:$0xff]
        %v1213 = vld [vmem:[%s4 + $0x180] sm:$0xff]
        %v1214 = vld [vmem:[%s4 + $0x188] sm:$0xff]
        %v1215 = vld [vmem:[%s4 + $0x190] sm:$0xff]
        %v1216 = vld [vmem:[%s4 + $0x198] sm:$0xff]
        %v1217 = vld [vmem:[%s4 + $0x1a0] sm:$0xff]
        %v1218 = vld [vmem:[%s4 + $0x1a8] sm:$0xff]
        %v1219 = vld [vmem:[%s4 + $0x1b0] sm:$0xff]
        %v1220 = vld [vmem:[%s4 + $0x1b8] sm:$0xff]
        %v1221 = vld [vmem:[%s4 + $0x1c0] sm:$0xff]
        %v1222 = vld [vmem:[%s4 + $0x1c8] sm:$0xff]
        %v1223 = vld [vmem:[%s4 + $0x1d0] sm:$0xff]
        %v1224 = vld [vmem:[%s4 + $0x1d8] sm:$0xff]
        %v1225 = vld [vmem:[%s4 + $0x1e0] sm:$0xff]
        %v1226 = vld [vmem:[%s4 + $0x1e8] sm:$0xff]
        %v1227 = vld [vmem:[%s4 + $0x1f0] sm:$0xff]
        %v1228 = vld [vmem:[%s4 + $0x1f8] sm:$0xff]
        %v1229 = vld [vmem:[%s5] sm:$0x1]
        %v1231 = vlaneseq
        %v1232 = vshrl.u32 %v1231, 7
        %v1233 = vsub.s32 0, %v1232
        %v1234 = vrot.slane %v1229, %v1233
        %1236 = vmatprep.subr.mxu0 0.0
        %1237 = vmatpush1.msra.mxu0 %v1165
        %1238 = vmatprep.subr.mxu0 0.0
        %1239 = vmatpush1.msra.mxu0 %v1166
        %1240 = vmatprep.subr.mxu0 0.0
        %1241 = vmatpush1.msra.mxu0 %v1167
        %1242 = vmatprep.subr.mxu0 0.0
        %1243 = vmatpush1.msra.mxu0 %v1168
        %1244 = vmatprep.subr.mxu0 0.0
        %1245 = vmatpush1.msra.mxu0 %v1169
        %1246 = vmatprep.subr.mxu0 0.0
        %1247 = vmatpush1.msra.mxu0 %v1170
        %1248 = vmatprep.subr.mxu0 0.0
        %1249 = vmatpush1.msra.mxu0 %v1171
        %1250 = vmatprep.subr.mxu0 0.0
        %1251 = vmatpush1.msra.mxu0 %v1172
        %1252 = vmatprep.subr.mxu0 0.0
        %1253 = vmatpush1.msra.mxu0 %v1173
        %1254 = vmatprep.subr.mxu0 0.0
        %1255 = vmatpush1.msra.mxu0 %v1174
        %1256 = vmatprep.subr.mxu0 0.0
        %1257 = vmatpush1.msra.mxu0 %v1175
        %1258 = vmatprep.subr.mxu0 0.0
        %1259 = vmatpush1.msra.mxu0 %v1176
        %1260 = vmatprep.subr.mxu0 0.0
        %1261 = vmatpush1.msra.mxu0 %v1177
        %1262 = vmatprep.subr.mxu0 0.0
        %1263 = vmatpush1.msra.mxu0 %v1178
        %1264 = vmatprep.subr.mxu0 0.0
        %1265 = vmatpush1.msra.mxu0 %v1179
        %1266 = vmatprep.subr.mxu0 0.0
        %1267 = vmatpush1.msra.mxu0 %v1180
        %1268 = vmatprep.subr.mxu0 0.0
        %1269 = vmatpush1.msra.mxu0 %v1181
        %1270 = vmatprep.subr.mxu0 0.0
        %1271 = vmatpush1.msra.mxu0 %v1182
        %1272 = vmatprep.subr.mxu0 0.0
        %1273 = vmatpush1.msra.mxu0 %v1183
        %1274 = vmatprep.subr.mxu0 0.0
        %1275 = vmatpush1.msra.mxu0 %v1184
        %1276 = vmatprep.subr.mxu0 0.0
        %1277 = vmatpush1.msra.mxu0 %v1185
        %1278 = vmatprep.subr.mxu0 0.0
        %1279 = vmatpush1.msra.mxu0 %v1186
        %1280 = vmatprep.subr.mxu0 0.0
        %1281 = vmatpush1.msra.mxu0 %v1187
        %1282 = vmatprep.subr.mxu0 0.0
        %1283 = vmatpush1.msra.mxu0 %v1188
        %1284 = vmatprep.subr.mxu0 0.0
        %1285 = vmatpush1.msra.mxu0 %v1189
        %1286 = vmatprep.subr.mxu0 0.0
        %1287 = vmatpush1.msra.mxu0 %v1190
        %1288 = vmatprep.subr.mxu0 0.0
        %1289 = vmatpush1.msra.mxu0 %v1191
        %1290 = vmatprep.subr.mxu0 0.0
        %1291 = vmatpush1.msra.mxu0 %v1192
        %1292 = vmatprep.subr.mxu0 0.0
        %1293 = vmatpush1.msra.mxu0 %v1193
        %1294 = vmatprep.subr.mxu0 0.0
        %1295 = vmatpush1.msra.mxu0 %v1194
        %1296 = vmatprep.subr.mxu0 0.0
        %1297 = vmatpush1.msra.mxu0 %v1195
        %1298 = vmatprep.subr.mxu0 0.0
        %1299 = vmatpush1.msra.mxu0 %v1196
        %1300 = vmatprep.mubr.f32.mxu0 %v1038
        %1301 = vmatmul.mubr.f32.gmra.mrb[0].mxu0 %v1037
        %v1302 = vpop.f32.mrb[0].mxu0
        %v1303 = vadd.f32 %v1234, %v1302
        %v1304 = vpop.f32.mrb[0].mxu0
        %1305 = vmatprep.mubr.f32.mxu0 %v1042
        %1306 = vmatmul.mubr.f32.gmra.mrb[0].mxu0 %v1041
        %v1307 = vpop.f32.mrb[0].mxu0
        %v1308 = vadd.f32 %v1234, %v1307
        %v1309 = vpop.f32.mrb[0].mxu0
        %1310 = vmatprep.mubr.f32.mxu0 %v1046
        %1311 = vmatmul.mubr.f32.gmra.mrb[0].mxu0 %v1045
        %v1312 = vpop.f32.mrb[0].mxu0
        %v1313 = vadd.f32 %v1234, %v1312
        %v1314 = vpop.f32.mrb[0].mxu0
        %1315 = vmatprep.mubr.f32.mxu0 %v1050
        %1316 = vmatmul.mubr.f32.gmra.mrb[0].mxu0 %v1049
        %v1317 = vpop.f32.mrb[0].mxu0
        %v1318 = vadd.f32 %v1234, %v1317
        %v1319 = vpop.f32.mrb[0].mxu0
        %1320 = vmatprep.mubr.f32.mxu0 %v1054
        %1321 = vmatmul.mubr.f32.gmra.mrb[0].mxu0 %v1053
        %v1322 = vpop.f32.mrb[0].mxu0
        %v1323 = vadd.f32 %v1234, %v1322
        %v1324 = vpop.f32.mrb[0].mxu0
        %1325 = vmatprep.mubr.f32.mxu0 %v1058
        %1326 = vmatmul.mubr.f32.gmra.mrb[0].mxu0 %v1057
        %v1327 = vpop.f32.mrb[0].mxu0
        %v1328 = vadd.f32 %v1234, %v1327
        %v1329 = vpop.f32.mrb[0].mxu0
        %1330 = vmatprep.mubr.f32.mxu0 %v1062
        %1331 = vmatmul.mubr.f32.gmra.mrb[0].mxu0 %v1061
        %v1332 = vpop.f32.mrb[0].mxu0
        %v1333 = vadd.f32 %v1234, %v1332
        %v1334 = vpop.f32.mrb[0].mxu0
        %1335 = vmatprep.mubr.f32.mxu0 %v1066
        %1336 = vmatmul.mubr.f32.gmra.mrb[0].mxu0 %v1065
        %v1337 = vpop.f32.mrb[0].mxu0
        %v1338 = vadd.f32 %v1234, %v1337
        %v1339 = vpop.f32.mrb[0].mxu0
        %1340 = vmatprep.mubr.f32.mxu0 %v1070
        %1341 = vmatmul.mubr.f32.gmra.mrb[0].mxu0 %v1069
        %v1342 = vpop.f32.mrb[0].mxu0
        %v1343 = vadd.f32 %v1234, %v1342
        %v1344 = vpop.f32.mrb[0].mxu0
        %1345 = vmatprep.mubr.f32.mxu0 %v1074
        %1346 = vmatmul.mubr.f32.gmra.mrb[0].mxu0 %v1073
        %v1347 = vpop.f32.mrb[0].mxu0
        %v1348 = vadd.f32 %v1234, %v1347
        %v1349 = vpop.f32.mrb[0].mxu0
        %1350 = vmatprep.mubr.f32.mxu0 %v1078
        %1351 = vmatmul.mubr.f32.gmra.mrb[0].mxu0 %v1077
        %v1352 = vpop.f32.mrb[0].mxu0
        %v1353 = vadd.f32 %v1234, %v1352
        %v1354 = vpop.f32.mrb[0].mxu0
        %1355 = vmatprep.mubr.f32.mxu0 %v1082
        %1356 = vmatmul.mubr.f32.gmra.mrb[0].mxu0 %v1081
        %v1357 = vpop.f32.mrb[0].mxu0
        %v1358 = vadd.f32 %v1234, %v1357
        %v1359 = vpop.f32.mrb[0].mxu0
        %1360 = vmatprep.mubr.f32.mxu0 %v1086
        %1361 = vmatmul.mubr.f32.gmra.mrb[0].mxu0 %v1085
        %v1362 = vpop.f32.mrb[0].mxu0
        %v1363 = vadd.f32 %v1234, %v1362
        %v1364 = vpop.f32.mrb[0].mxu0
        %1365 = vmatprep.mubr.f32.mxu0 %v1090
        %1366 = vmatmul.mubr.f32.gmra.mrb[0].mxu0 %v1089
        %v1367 = vpop.f32.mrb[0].mxu0
        %v1368 = vadd.f32 %v1234, %v1367
        %v1369 = vpop.f32.mrb[0].mxu0
        %1370 = vmatprep.mubr.f32.mxu0 %v1094
        %1371 = vmatmul.mubr.f32.gmra.mrb[0].mxu0 %v1093
        %v1372 = vpop.f32.mrb[0].mxu0
        %v1373 = vadd.f32 %v1234, %v1372
        %v1374 = vpop.f32.mrb[0].mxu0
        %1375 = vmatprep.mubr.f32.mxu0 %v1098
        %1376 = vmatmul.mubr.f32.gmra.mrb[0].mxu0 %v1097
        %v1377 = vpop.f32.mrb[0].mxu0
        %v1378 = vadd.f32 %v1234, %v1377
        %v1379 = vpop.f32.mrb[0].mxu0
        %1380 = vmatprep.mubr.f32.mxu0 %v1102
        %1381 = vmatmul.mubr.f32.gmra.mrb[0].mxu0 %v1101
        %v1382 = vpop.f32.mrb[0].mxu0
        %v1383 = vadd.f32 %v1234, %v1382
        %v1384 = vpop.f32.mrb[0].mxu0
        %1385 = vmatprep.mubr.f32.mxu0 %v1106
        %1386 = vmatmul.mubr.f32.gmra.mrb[0].mxu0 %v1105
        %v1387 = vpop.f32.mrb[0].mxu0
        %v1388 = vadd.f32 %v1234, %v1387
        %v1389 = vpop.f32.mrb[0].mxu0
        %1390 = vmatprep.mubr.f32.mxu0 %v1110
        %1391 = vmatmul.mubr.f32.gmra.mrb[0].mxu0 %v1109
        %v1392 = vpop.f32.mrb[0].mxu0
        %v1393 = vadd.f32 %v1234, %v1392
        %v1394 = vpop.f32.mrb[0].mxu0
        %1395 = vmatprep.mubr.f32.mxu0 %v1114
        %1396 = vmatmul.mubr.f32.gmra.mrb[0].mxu0 %v1113
        %v1397 = vpop.f32.mrb[0].mxu0
        %v1398 = vadd.f32 %v1234, %v1397
        %v1399 = vpop.f32.mrb[0].mxu0
        %1400 = vmatprep.mubr.f32.mxu0 %v1118
        %1401 = vmatmul.mubr.f32.gmra.mrb[0].mxu0 %v1117
        %v1402 = vpop.f32.mrb[0].mxu0
        %v1403 = vadd.f32 %v1234, %v1402
        %v1404 = vpop.f32.mrb[0].mxu0
        %1405 = vmatprep.mubr.f32.mxu0 %v1122
        %1406 = vmatmul.mubr.f32.gmra.mrb[0].mxu0 %v1121
        %v1407 = vpop.f32.mrb[0].mxu0
        %v1408 = vadd.f32 %v1234, %v1407
        %v1409 = vpop.f32.mrb[0].mxu0
        %1410 = vmatprep.mubr.f32.mxu0 %v1126
        %1411 = vmatmul.mubr.f32.gmra.mrb[0].mxu0 %v1125
        %v1412 = vpop.f32.mrb[0].mxu0
        %v1413 = vadd.f32 %v1234, %v1412
        %v1414 = vpop.f32.mrb[0].mxu0
        %1415 = vmatprep.mubr.f32.mxu0 %v1130
        %1416 = vmatmul.mubr.f32.gmra.mrb[0].mxu0 %v1129
        %v1417 = vpop.f32.mrb[0].mxu0
        %v1418 = vadd.f32 %v1234, %v1417
        %v1419 = vpop.f32.mrb[0].mxu0
        %1420 = vmatprep.mubr.f32.mxu0 %v1134
        %1421 = vmatmul.mubr.f32.gmra.mrb[0].mxu0 %v1133
        %v1422 = vpop.f32.mrb[0].mxu0
        %v1423 = vadd.f32 %v1234, %v1422
        %v1424 = vpop.f32.mrb[0].mxu0
        %1425 = vmatprep.mubr.f32.mxu0 %v1138
        %1426 = vmatmul.mubr.f32.gmra.mrb[0].mxu0 %v1137
        %v1427 = vpop.f32.mrb[0].mxu0
        %v1428 = vadd.f32 %v1234, %v1427
        %v1429 = vpop.f32.mrb[0].mxu0
        %1430 = vmatprep.mubr.f32.mxu0 %v1142
        %1431 = vmatmul.mubr.f32.gmra.mrb[0].mxu0 %v1141
        %v1432 = vpop.f32.mrb[0].mxu0
        %v1433 = vadd.f32 %v1234, %v1432
        %v1434 = vpop.f32.mrb[0].mxu0
        %1435 = vmatprep.mubr.f32.mxu0 %v1146
        %1436 = vmatmul.mubr.f32.gmra.mrb[0].mxu0 %v1145
        %v1437 = vpop.f32.mrb[0].mxu0
        %v1438 = vadd.f32 %v1234, %v1437
        %v1439 = vpop.f32.mrb[0].mxu0
        %1440 = vmatprep.mubr.f32.mxu0 %v1150
        %1441 = vmatmul.mubr.f32.gmra.mrb[0].mxu0 %v1149
        %v1442 = vpop.f32.mrb[0].mxu0
        %v1443 = vadd.f32 %v1234, %v1442
        %v1444 = vpop.f32.mrb[0].mxu0
        %1445 = vmatprep.mubr.f32.mxu0 %v1154
        %1446 = vmatmul.mubr.f32.gmra.mrb[0].mxu0 %v1153
        %v1447 = vpop.f32.mrb[0].mxu0
        %v1448 = vadd.f32 %v1234, %v1447
        %v1449 = vpop.f32.mrb[0].mxu0
        %1450 = vmatprep.mubr.f32.mxu0 %v1158
        %1451 = vmatmul.mubr.f32.gmra.mrb[0].mxu0 %v1157
        %v1452 = vpop.f32.mrb[0].mxu0
        %v1453 = vadd.f32 %v1234, %v1452
        %v1454 = vpop.f32.mrb[0].mxu0
        %1455 = vmatprep.mubr.f32.mxu0 %v1162
        %1456 = vmatmul.mubr.f32.gmra.mrb[0].mxu0 %v1161
        %v1457 = vpop.f32.mrb[0].mxu0
        %v1458 = vadd.f32 %v1234, %v1457
        %v1459 = vpop.f32.mrb[0].mxu0
        %1460 = vdwg.mxu0
        %1461 = vmatprep.subr.mxu0 0.0
        %1462 = vmatpush1.msra.mxu0 %v1197
        %1463 = vmatprep.subr.mxu0 0.0
        %1464 = vmatpush1.msra.mxu0 %v1198
        %1465 = vmatprep.subr.mxu0 0.0
        %1466 = vmatpush1.msra.mxu0 %v1199
        %1467 = vmatprep.subr.mxu0 0.0
        %1468 = vmatpush1.msra.mxu0 %v1200
        %1469 = vmatprep.subr.mxu0 0.0
        %1470 = vmatpush1.msra.mxu0 %v1201
        %1471 = vmatprep.subr.mxu0 0.0
        %1472 = vmatpush1.msra.mxu0 %v1202
        %1473 = vmatprep.subr.mxu0 0.0
        %1474 = vmatpush1.msra.mxu0 %v1203
        %1475 = vmatprep.subr.mxu0 0.0
        %1476 = vmatpush1.msra.mxu0 %v1204
        %1477 = vmatprep.subr.mxu0 0.0
        %1478 = vmatpush1.msra.mxu0 %v1205
        %1479 = vmatprep.subr.mxu0 0.0
        %1480 = vmatpush1.msra.mxu0 %v1206
        %1481 = vmatprep.subr.mxu0 0.0
        %1482 = vmatpush1.msra.mxu0 %v1207
        %1483 = vmatprep.subr.mxu0 0.0
        %1484 = vmatpush1.msra.mxu0 %v1208
        %1485 = vmatprep.subr.mxu0 0.0
        %1486 = vmatpush1.msra.mxu0 %v1209
        %1487 = vmatprep.subr.mxu0 0.0
        %1488 = vmatpush1.msra.mxu0 %v1210
        %1489 = vmatprep.subr.mxu0 0.0
        %1490 = vmatpush1.msra.mxu0 %v1211
        %1491 = vmatprep.subr.mxu0 0.0
        %1492 = vmatpush1.msra.mxu0 %v1212
        %1493 = vmatprep.subr.mxu0 0.0
        %1494 = vmatpush1.msra.mxu0 %v1213
        %1495 = vmatprep.subr.mxu0 0.0
        %1496 = vmatpush1.msra.mxu0 %v1214
        %1497 = vmatprep.subr.mxu0 0.0
        %1498 = vmatpush1.msra.mxu0 %v1215
        %1499 = vmatprep.subr.mxu0 0.0
        %1500 = vmatpush1.msra.mxu0 %v1216
        %1501 = vmatprep.subr.mxu0 0.0
        %1502 = vmatpush1.msra.mxu0 %v1217
        %1503 = vmatprep.subr.mxu0 0.0
        %1504 = vmatpush1.msra.mxu0 %v1218
        %1505 = vmatprep.subr.mxu0 0.0
        %1506 = vmatpush1.msra.mxu0 %v1219
        %1507 = vmatprep.subr.mxu0 0.0
        %1508 = vmatpush1.msra.mxu0 %v1220
        %1509 = vmatprep.subr.mxu0 0.0
        %1510 = vmatpush1.msra.mxu0 %v1221
        %1511 = vmatprep.subr.mxu0 0.0
        %1512 = vmatpush1.msra.mxu0 %v1222
        %1513 = vmatprep.subr.mxu0 0.0
        %1514 = vmatpush1.msra.mxu0 %v1223
        %1515 = vmatprep.subr.mxu0 0.0
        %1516 = vmatpush1.msra.mxu0 %v1224
        %1517 = vmatprep.subr.mxu0 0.0
        %1518 = vmatpush1.msra.mxu0 %v1225
        %1519 = vmatprep.subr.mxu0 0.0
        %1520 = vmatpush1.msra.mxu0 %v1226
        %1521 = vmatprep.subr.mxu0 0.0
        %1522 = vmatpush1.msra.mxu0 %v1227
        %1523 = vmatprep.subr.mxu0 0.0
        %1524 = vmatpush1.msra.mxu0 %v1228
        %1525 = vmatprep.mubr.f32.mxu0 %v1040
        %1526 = vmatmul.mubr.f32.gmra.mrb[0].mxu0 %v1039
        %v1527 = vpop.f32.mrb[0].mxu0
        %v1528 = vadd.f32 %v1303, %v1527
        %v1529 = vpop.f32.mrb[0].mxu0
        %1530 = vmatprep.mubr.f32.mxu0 %v1044
        %1531 = vmatmul.mubr.f32.gmra.mrb[0].mxu0 %v1043
        %v1532 = vpop.f32.mrb[0].mxu0
        %v1533 = vadd.f32 %v1308, %v1532
        %v1534 = vpop.f32.mrb[0].mxu0
        %1535 = vmatprep.mubr.f32.mxu0 %v1048
        %1536 = vmatmul.mubr.f32.gmra.mrb[0].mxu0 %v1047
        %v1537 = vpop.f32.mrb[0].mxu0
        %v1538 = vadd.f32 %v1313, %v1537
        %v1539 = vpop.f32.mrb[0].mxu0
        %1540 = vmatprep.mubr.f32.mxu0 %v1052
        %1541 = vmatmul.mubr.f32.gmra.mrb[0].mxu0 %v1051
        %v1542 = vpop.f32.mrb[0].mxu0
        %v1543 = vadd.f32 %v1318, %v1542
        %v1544 = vpop.f32.mrb[0].mxu0
        %1545 = vmatprep.mubr.f32.mxu0 %v1056
        %1546 = vmatmul.mubr.f32.gmra.mrb[0].mxu0 %v1055
        %v1547 = vpop.f32.mrb[0].mxu0
        %v1548 = vadd.f32 %v1323, %v1547
        %v1549 = vpop.f32.mrb[0].mxu0
        %1550 = vmatprep.mubr.f32.mxu0 %v1060
        %1551 = vmatmul.mubr.f32.gmra.mrb[0].mxu0 %v1059
        %v1552 = vpop.f32.mrb[0].mxu0
        %v1553 = vadd.f32 %v1328, %v1552
        %v1554 = vpop.f32.mrb[0].mxu0
        %1555 = vmatprep.mubr.f32.mxu0 %v1064
        %1556 = vmatmul.mubr.f32.gmra.mrb[0].mxu0 %v1063
        %v1557 = vpop.f32.mrb[0].mxu0
        %v1558 = vadd.f32 %v1333, %v1557
        %v1559 = vpop.f32.mrb[0].mxu0
        %1560 = vmatprep.mubr.f32.mxu0 %v1068
        %1561 = vmatmul.mubr.f32.gmra.mrb[0].mxu0 %v1067
        %v1562 = vpop.f32.mrb[0].mxu0
        %v1563 = vadd.f32 %v1338, %v1562
        %v1564 = vpop.f32.mrb[0].mxu0
        %1565 = vmatprep.mubr.f32.mxu0 %v1072
        %1566 = vmatmul.mubr.f32.gmra.mrb[0].mxu0 %v1071
        %v1567 = vpop.f32.mrb[0].mxu0
        %v1568 = vadd.f32 %v1343, %v1567
        %v1569 = vpop.f32.mrb[0].mxu0
        %1570 = vmatprep.mubr.f32.mxu0 %v1076
        %1571 = vmatmul.mubr.f32.gmra.mrb[0].mxu0 %v1075
        %v1572 = vpop.f32.mrb[0].mxu0
        %v1573 = vadd.f32 %v1348, %v1572
        %v1574 = vpop.f32.mrb[0].mxu0
        %1575 = vmatprep.mubr.f32.mxu0 %v1080
        %1576 = vmatmul.mubr.f32.gmra.mrb[0].mxu0 %v1079
        %v1577 = vpop.f32.mrb[0].mxu0
        %v1578 = vadd.f32 %v1353, %v1577
        %v1579 = vpop.f32.mrb[0].mxu0
        %1580 = vmatprep.mubr.f32.mxu0 %v1084
        %1581 = vmatmul.mubr.f32.gmra.mrb[0].mxu0 %v1083
        %v1582 = vpop.f32.mrb[0].mxu0
        %v1583 = vadd.f32 %v1358, %v1582
        %v1584 = vpop.f32.mrb[0].mxu0
        %1585 = vmatprep.mubr.f32.mxu0 %v1088
        %1586 = vmatmul.mubr.f32.gmra.mrb[0].mxu0 %v1087
        %v1587 = vpop.f32.mrb[0].mxu0
        %v1588 = vadd.f32 %v1363, %v1587
        %v1589 = vpop.f32.mrb[0].mxu0
        %1590 = vmatprep.mubr.f32.mxu0 %v1092
        %1591 = vmatmul.mubr.f32.gmra.mrb[0].mxu0 %v1091
        %v1592 = vpop.f32.mrb[0].mxu0
        %v1593 = vadd.f32 %v1368, %v1592
        %v1594 = vpop.f32.mrb[0].mxu0
        %1595 = vmatprep.mubr.f32.mxu0 %v1096
        %1596 = vmatmul.mubr.f32.gmra.mrb[0].mxu0 %v1095
        %v1597 = vpop.f32.mrb[0].mxu0
        %v1598 = vadd.f32 %v1373, %v1597
        %v1599 = vpop.f32.mrb[0].mxu0
        %1600 = vmatprep.mubr.f32.mxu0 %v1100
        %1601 = vmatmul.mubr.f32.gmra.mrb[0].mxu0 %v1099
        %v1602 = vpop.f32.mrb[0].mxu0
        %v1603 = vadd.f32 %v1378, %v1602
        %v1604 = vpop.f32.mrb[0].mxu0
        %1605 = vmatprep.mubr.f32.mxu0 %v1104
        %1606 = vmatmul.mubr.f32.gmra.mrb[0].mxu0 %v1103
        %v1607 = vpop.f32.mrb[0].mxu0
        %v1608 = vadd.f32 %v1383, %v1607
        %v1609 = vpop.f32.mrb[0].mxu0
        %1610 = vmatprep.mubr.f32.mxu0 %v1108
        %1611 = vmatmul.mubr.f32.gmra.mrb[0].mxu0 %v1107
        %v1612 = vpop.f32.mrb[0].mxu0
        %v1613 = vadd.f32 %v1388, %v1612
        %v1614 = vpop.f32.mrb[0].mxu0
        %1615 = vmatprep.mubr.f32.mxu0 %v1112
        %1616 = vmatmul.mubr.f32.gmra.mrb[0].mxu0 %v1111
        %v1617 = vpop.f32.mrb[0].mxu0
        %v1618 = vadd.f32 %v1393, %v1617
        %v1619 = vpop.f32.mrb[0].mxu0
        %1620 = vmatprep.mubr.f32.mxu0 %v1116
        %1621 = vmatmul.mubr.f32.gmra.mrb[0].mxu0 %v1115
        %v1622 = vpop.f32.mrb[0].mxu0
        %v1623 = vadd.f32 %v1398, %v1622
        %v1624 = vpop.f32.mrb[0].mxu0
        %1625 = vmatprep.mubr.f32.mxu0 %v1120
        %1626 = vmatmul.mubr.f32.gmra.mrb[0].mxu0 %v1119
        %v1627 = vpop.f32.mrb[0].mxu0
        %v1628 = vadd.f32 %v1403, %v1627
        %v1629 = vpop.f32.mrb[0].mxu0
        %1630 = vmatprep.mubr.f32.mxu0 %v1124
        %1631 = vmatmul.mubr.f32.gmra.mrb[0].mxu0 %v1123
        %v1632 = vpop.f32.mrb[0].mxu0
        %v1633 = vadd.f32 %v1408, %v1632
        %v1634 = vpop.f32.mrb[0].mxu0
        %1635 = vmatprep.mubr.f32.mxu0 %v1128
        %1636 = vmatmul.mubr.f32.gmra.mrb[0].mxu0 %v1127
        %v1637 = vpop.f32.mrb[0].mxu0
        %v1638 = vadd.f32 %v1413, %v1637
        %v1639 = vpop.f32.mrb[0].mxu0
        %1640 = vmatprep.mubr.f32.mxu0 %v1132
        %1641 = vmatmul.mubr.f32.gmra.mrb[0].mxu0 %v1131
        %v1642 = vpop.f32.mrb[0].mxu0
        %v1643 = vadd.f32 %v1418, %v1642
        %v1644 = vpop.f32.mrb[0].mxu0
        %1645 = vmatprep.mubr.f32.mxu0 %v1136
        %1646 = vmatmul.mubr.f32.gmra.mrb[0].mxu0 %v1135
        %v1647 = vpop.f32.mrb[0].mxu0
        %v1648 = vadd.f32 %v1423, %v1647
        %v1649 = vpop.f32.mrb[0].mxu0
        %1650 = vmatprep.mubr.f32.mxu0 %v1140
        %1651 = vmatmul.mubr.f32.gmra.mrb[0].mxu0 %v1139
        %v1652 = vpop.f32.mrb[0].mxu0
        %v1653 = vadd.f32 %v1428, %v1652
        %v1654 = vpop.f32.mrb[0].mxu0
        %1655 = vmatprep.mubr.f32.mxu0 %v1144
        %1656 = vmatmul.mubr.f32.gmra.mrb[0].mxu0 %v1143
        %v1657 = vpop.f32.mrb[0].mxu0
        %v1658 = vadd.f32 %v1433, %v1657
        %v1659 = vpop.f32.mrb[0].mxu0
        %1660 = vmatprep.mubr.f32.mxu0 %v1148
        %1661 = vmatmul.mubr.f32.gmra.mrb[0].mxu0 %v1147
        %v1662 = vpop.f32.mrb[0].mxu0
        %v1663 = vadd.f32 %v1438, %v1662
        %v1664 = vpop.f32.mrb[0].mxu0
        %1665 = vmatprep.mubr.f32.mxu0 %v1152
        %1666 = vmatmul.mubr.f32.gmra.mrb[0].mxu0 %v1151
        %v1667 = vpop.f32.mrb[0].mxu0
        %v1668 = vadd.f32 %v1443, %v1667
        %v1669 = vpop.f32.mrb[0].mxu0
        %1670 = vmatprep.mubr.f32.mxu0 %v1156
        %1671 = vmatmul.mubr.f32.gmra.mrb[0].mxu0 %v1155
        %v1672 = vpop.f32.mrb[0].mxu0
        %v1673 = vadd.f32 %v1448, %v1672
        %v1674 = vpop.f32.mrb[0].mxu0
        %1675 = vmatprep.mubr.f32.mxu0 %v1160
        %1676 = vmatmul.mubr.f32.gmra.mrb[0].mxu0 %v1159
        %v1677 = vpop.f32.mrb[0].mxu0
        %v1678 = vadd.f32 %v1453, %v1677
        %v1679 = vpop.f32.mrb[0].mxu0
        %1680 = vmatprep.mubr.f32.mxu0 %v1164
        %1681 = vmatmul.mubr.f32.gmra.mrb[0].mxu0 %v1163
        %v1682 = vpop.f32.mrb[0].mxu0
        %v1683 = vadd.f32 %v1458, %v1682
        %v1684 = vpop.f32.mrb[0].mxu0
        %1685 = vdwg.mxu0
        %v1686 = vmax.f32 %v1528, 0.0
        %v1687 = vmax.f32 %v1533, 0.0
        %v1688 = vmax.f32 %v1538, 0.0
        %v1689 = vmax.f32 %v1543, 0.0
        %v1690 = vmax.f32 %v1548, 0.0
        %v1691 = vmax.f32 %v1553, 0.0
        %v1692 = vmax.f32 %v1558, 0.0
        %v1693 = vmax.f32 %v1563, 0.0
        %v1694 = vmax.f32 %v1568, 0.0
        %v1695 = vmax.f32 %v1573, 0.0
        %v1696 = vmax.f32 %v1578, 0.0
        %v1697 = vmax.f32 %v1583, 0.0
        %v1698 = vmax.f32 %v1588, 0.0
        %v1699 = vmax.f32 %v1593, 0.0
        %v1700 = vmax.f32 %v1598, 0.0
        %v1701 = vmax.f32 %v1603, 0.0
        %v1702 = vmax.f32 %v1608, 0.0
        %v1703 = vmax.f32 %v1613, 0.0
        %v1704 = vmax.f32 %v1618, 0.0
        %v1705 = vmax.f32 %v1623, 0.0
        %v1706 = vmax.f32 %v1628, 0.0
        %v1707 = vmax.f32 %v1633, 0.0
        %v1708 = vmax.f32 %v1638, 0.0
        %v1709 = vmax.f32 %v1643, 0.0
        %v1710 = vmax.f32 %v1648, 0.0
        %v1711 = vmax.f32 %v1653, 0.0
        %v1712 = vmax.f32 %v1658, 0.0
        %v1713 = vmax.f32 %v1663, 0.0
        %v1714 = vmax.f32 %v1668, 0.0
        %v1715 = vmax.f32 %v1673, 0.0
        %v1716 = vmax.f32 %v1678, 0.0
        %v1717 = vmax.f32 %v1683, 0.0
        %v1718 = vld [vmem:[%s6] sm:$0xff]
        %v1719 = vld [vmem:[%s6 + $0x8] sm:$0xff]
        %v1720 = vld [vmem:[%s6 + $0x10] sm:$0xff]
        %v1721 = vld [vmem:[%s6 + $0x18] sm:$0xff]
        %v1722 = vld [vmem:[%s6 + $0x20] sm:$0xff]
        %v1723 = vld [vmem:[%s6 + $0x28] sm:$0xff]
        %v1724 = vld [vmem:[%s6 + $0x30] sm:$0xff]
        %v1725 = vld [vmem:[%s6 + $0x38] sm:$0xff]
        %v1726 = vld [vmem:[%s7] sm:$0x3]
        %v1728 = vlaneseq
        %v1729 = vshrl.u32 %v1728, 7
        %v1730 = vsub.s32 0, %v1729
        %v1731 = vrot.slane %v1726, %v1730
        %v1732 = vlaneseq
        %v1733 = vshrl.u32 %v1732, 7
        %v1734 = vsub.s32 1, %v1733
        %v1735 = vrot.slane %v1726, %v1734
        %v1739 = vsel %vm426, %v1686, 0
        %v1742 = vsel %vm426, %v1687, 0
        %v1745 = vsel %vm426, %v1688, 0
        %v1748 = vsel %vm426, %v1689, 0
        %v1751 = vsel %vm426, %v1690, 0
        %v1754 = vsel %vm426, %v1691, 0
        %v1757 = vsel %vm426, %v1692, 0
        %v1760 = vsel %vm426, %v1693, 0
        %v1763 = vsel %vm426, %v1694, 0
        %v1766 = vsel %vm426, %v1695, 0
        %v1769 = vsel %vm426, %v1696, 0
        %v1772 = vsel %vm426, %v1697, 0
        %v1775 = vsel %vm426, %v1698, 0
        %v1778 = vsel %vm426, %v1699, 0
        %v1781 = vsel %vm426, %v1700, 0
        %v1784 = vsel %vm426, %v1701, 0
        %v1787 = vsel %vm426, %v1702, 0
        %v1790 = vsel %vm426, %v1703, 0
        %v1793 = vsel %vm426, %v1704, 0
        %v1796 = vsel %vm426, %v1705, 0
        %v1799 = vsel %vm426, %v1706, 0
        %v1802 = vsel %vm426, %v1707, 0
        %v1805 = vsel %vm426, %v1708, 0
        %v1808 = vsel %vm426, %v1709, 0
        %v1811 = vsel %vm426, %v1710, 0
        %v1814 = vsel %vm426, %v1711, 0
        %v1817 = vsel %vm426, %v1712, 0
        %v1820 = vsel %vm426, %v1713, 0
        %v1823 = vsel %vm426, %v1714, 0
        %v1826 = vsel %vm426, %v1715, 0
        %v1829 = vsel %vm426, %v1716, 0
        %v1832 = vsel %vm426, %v1717, 0
        %1834 = vmatprep.subr.mxu0 %v1719
        %1835 = vmatpush1.msra.mxu0 %v1718
        %1836 = vmatprep.subr.mxu0 %v1721
        %1837 = vmatpush1.msra.mxu0 %v1720
        %1838 = vmatprep.subr.mxu0 %v1723
        %1839 = vmatpush1.msra.mxu0 %v1722
        %1840 = vmatprep.subr.mxu0 %v1725
        %1841 = vmatpush1.msra.mxu0 %v1724
        %1842 = vmatprep.subr.mxu0 0.0
        %1843 = vmatpush1.msra.mxu0 0.0
        %1844 = vmatprep.subr.mxu0 0.0
        %1845 = vmatpush1.msra.mxu0 0.0
        %1846 = vmatprep.subr.mxu0 0.0
        %1847 = vmatpush1.msra.mxu0 0.0
        %1848 = vmatprep.subr.mxu0 0.0
        %1849 = vmatpush1.msra.mxu0 0.0
        %1850 = vmatprep.subr.mxu0 0.0
        %1851 = vmatpush1.msra.mxu0 0.0
        %1852 = vmatprep.subr.mxu0 0.0
        %1853 = vmatpush1.msra.mxu0 0.0
        %1854 = vmatprep.subr.mxu0 0.0
        %1855 = vmatpush1.msra.mxu0 0.0
        %1856 = vmatprep.subr.mxu0 0.0
        %1857 = vmatpush1.msra.mxu0 0.0
        %1858 = vmatprep.subr.mxu0 0.0
        %1859 = vmatpush1.msra.mxu0 0.0
        %1860 = vmatprep.subr.mxu0 0.0
        %1861 = vmatpush1.msra.mxu0 0.0
        %1862 = vmatprep.subr.mxu0 0.0
        %1863 = vmatpush1.msra.mxu0 0.0
        %1864 = vmatprep.subr.mxu0 0.0
        %1865 = vmatpush1.msra.mxu0 0.0
        %1866 = vmatprep.subr.mxu0 0.0
        %1867 = vmatpush1.msra.mxu0 0.0
        %1868 = vmatprep.subr.mxu0 0.0
        %1869 = vmatpush1.msra.mxu0 0.0
        %1870 = vmatprep.subr.mxu0 0.0
        %1871 = vmatpush1.msra.mxu0 0.0
        %1872 = vmatprep.subr.mxu0 0.0
        %1873 = vmatpush1.msra.mxu0 0.0
        %1874 = vmatprep.subr.mxu0 0.0
        %1875 = vmatpush1.msra.mxu0 0.0
        %1876 = vmatprep.subr.mxu0 0.0
        %1877 = vmatpush1.msra.mxu0 0.0
        %1878 = vmatprep.subr.mxu0 0.0
        %1879 = vmatpush1.msra.mxu0 0.0
        %1880 = vmatprep.subr.mxu0 0.0
        %1881 = vmatpush1.msra.mxu0 0.0
        %1882 = vmatprep.subr.mxu0 0.0
        %1883 = vmatpush1.msra.mxu0 0.0
        %1884 = vmatprep.subr.mxu0 0.0
        %1885 = vmatpush1.msra.mxu0 0.0
        %1886 = vmatprep.subr.mxu0 0.0
        %1887 = vmatpush1.msra.mxu0 0.0
        %1888 = vmatprep.subr.mxu0 0.0
        %1889 = vmatpush1.msra.mxu0 0.0
        %1890 = vmatprep.subr.mxu0 0.0
        %1891 = vmatpush1.msra.mxu0 0.0
        %1892 = vmatprep.subr.mxu0 0.0
        %1893 = vmatpush1.msra.mxu0 0.0
        %1894 = vmatprep.subr.mxu0 0.0
        %1895 = vmatpush1.msra.mxu0 0.0
        %1896 = vmatprep.subr.mxu0 0.0
        %1897 = vmatpush1.msra.mxu0 0.0
        %1898 = vmatprep.mubr.f32.mxu0 0.0
        %1899 = vmatmul.mubr.f32.gmra.mrb[0].mxu0 %v1739
        %v1900 = vpop.f32.mrb[0].mxu0
        %v1901 = vadd.f32 %v1731, %v1900
        %v1902 = vpop.f32.mrb[0].mxu0
        %v1903 = vadd.f32 %v1735, %v1902
        %1904 = vmatprep.mubr.f32.mxu0 0.0
        %1905 = vmatmul.mubr.f32.gmra.mrb[0].mxu0 %v1742
        %v1906 = vpop.f32.mrb[0].mxu0
        %v1907 = vadd.f32 %v1731, %v1906
        %v1908 = vpop.f32.mrb[0].mxu0
        %v1909 = vadd.f32 %v1735, %v1908
        %1910 = vmatprep.mubr.f32.mxu0 0.0
        %1911 = vmatmul.mubr.f32.gmra.mrb[0].mxu0 %v1745
        %v1912 = vpop.f32.mrb[0].mxu0
        %v1913 = vadd.f32 %v1731, %v1912
        %v1914 = vpop.f32.mrb[0].mxu0
        %v1915 = vadd.f32 %v1735, %v1914
        %1916 = vmatprep.mubr.f32.mxu0 0.0
        %1917 = vmatmul.mubr.f32.gmra.mrb[0].mxu0 %v1748
        %v1918 = vpop.f32.mrb[0].mxu0
        %v1919 = vadd.f32 %v1731, %v1918
        %v1920 = vpop.f32.mrb[0].mxu0
        %v1921 = vadd.f32 %v1735, %v1920
        %1922 = vmatprep.mubr.f32.mxu0 0.0
        %1923 = vmatmul.mubr.f32.gmra.mrb[0].mxu0 %v1751
        %v1924 = vpop.f32.mrb[0].mxu0
        %v1925 = vadd.f32 %v1731, %v1924
        %v1926 = vpop.f32.mrb[0].mxu0
        %v1927 = vadd.f32 %v1735, %v1926
        %1928 = vmatprep.mubr.f32.mxu0 0.0
        %1929 = vmatmul.mubr.f32.gmra.mrb[0].mxu0 %v1754
        %v1930 = vpop.f32.mrb[0].mxu0
        %v1931 = vadd.f32 %v1731, %v1930
        %v1932 = vpop.f32.mrb[0].mxu0
        %v1933 = vadd.f32 %v1735, %v1932
        %1934 = vmatprep.mubr.f32.mxu0 0.0
        %1935 = vmatmul.mubr.f32.gmra.mrb[0].mxu0 %v1757
        %v1936 = vpop.f32.mrb[0].mxu0
        %v1937 = vadd.f32 %v1731, %v1936
        %v1938 = vpop.f32.mrb[0].mxu0
        %v1939 = vadd.f32 %v1735, %v1938
        %1940 = vmatprep.mubr.f32.mxu0 0.0
        %1941 = vmatmul.mubr.f32.gmra.mrb[0].mxu0 %v1760
        %v1942 = vpop.f32.mrb[0].mxu0
        %v1943 = vadd.f32 %v1731, %v1942
        %v1944 = vpop.f32.mrb[0].mxu0
        %v1945 = vadd.f32 %v1735, %v1944
        %1946 = vmatprep.mubr.f32.mxu0 0.0
        %1947 = vmatmul.mubr.f32.gmra.mrb[0].mxu0 %v1763
        %v1948 = vpop.f32.mrb[0].mxu0
        %v1949 = vadd.f32 %v1731, %v1948
        %v1950 = vpop.f32.mrb[0].mxu0
        %v1951 = vadd.f32 %v1735, %v1950
        %1952 = vmatprep.mubr.f32.mxu0 0.0
        %1953 = vmatmul.mubr.f32.gmra.mrb[0].mxu0 %v1766
        %v1954 = vpop.f32.mrb[0].mxu0
        %v1955 = vadd.f32 %v1731, %v1954
        %v1956 = vpop.f32.mrb[0].mxu0
        %v1957 = vadd.f32 %v1735, %v1956
        %1958 = vmatprep.mubr.f32.mxu0 0.0
        %1959 = vmatmul.mubr.f32.gmra.mrb[0].mxu0 %v1769
        %v1960 = vpop.f32.mrb[0].mxu0
        %v1961 = vadd.f32 %v1731, %v1960
        %v1962 = vpop.f32.mrb[0].mxu0
        %v1963 = vadd.f32 %v1735, %v1962
        %1964 = vmatprep.mubr.f32.mxu0 0.0
        %1965 = vmatmul.mubr.f32.gmra.mrb[0].mxu0 %v1772
        %v1966 = vpop.f32.mrb[0].mxu0
        %v1967 = vadd.f32 %v1731, %v1966
        %v1968 = vpop.f32.mrb[0].mxu0
        %v1969 = vadd.f32 %v1735, %v1968
        %1970 = vmatprep.mubr.f32.mxu0 0.0
        %1971 = vmatmul.mubr.f32.gmra.mrb[0].mxu0 %v1775
        %v1972 = vpop.f32.mrb[0].mxu0
        %v1973 = vadd.f32 %v1731, %v1972
        %v1974 = vpop.f32.mrb[0].mxu0
        %v1975 = vadd.f32 %v1735, %v1974
        %1976 = vmatprep.mubr.f32.mxu0 0.0
        %1977 = vmatmul.mubr.f32.gmra.mrb[0].mxu0 %v1778
        %v1978 = vpop.f32.mrb[0].mxu0
        %v1979 = vadd.f32 %v1731, %v1978
        %v1980 = vpop.f32.mrb[0].mxu0
        %v1981 = vadd.f32 %v1735, %v1980
        %1982 = vmatprep.mubr.f32.mxu0 0.0
        %1983 = vmatmul.mubr.f32.gmra.mrb[0].mxu0 %v1781
        %v1984 = vpop.f32.mrb[0].mxu0
        %v1985 = vadd.f32 %v1731, %v1984
        %v1986 = vpop.f32.mrb[0].mxu0
        %v1987 = vadd.f32 %v1735, %v1986
        %1988 = vmatprep.mubr.f32.mxu0 0.0
        %1989 = vmatmul.mubr.f32.gmra.mrb[0].mxu0 %v1784
        %v1990 = vpop.f32.mrb[0].mxu0
        %v1991 = vadd.f32 %v1731, %v1990
        %v1992 = vpop.f32.mrb[0].mxu0
        %v1993 = vadd.f32 %v1735, %v1992
        %1994 = vmatprep.mubr.f32.mxu0 0.0
        %1995 = vmatmul.mubr.f32.gmra.mrb[0].mxu0 %v1787
        %v1996 = vpop.f32.mrb[0].mxu0
        %v1997 = vadd.f32 %v1731, %v1996
        %v1998 = vpop.f32.mrb[0].mxu0
        %v1999 = vadd.f32 %v1735, %v1998
        %2000 = vmatprep.mubr.f32.mxu0 0.0
        %2001 = vmatmul.mubr.f32.gmra.mrb[0].mxu0 %v1790
        %v2002 = vpop.f32.mrb[0].mxu0
        %v2003 = vadd.f32 %v1731, %v2002
        %v2004 = vpop.f32.mrb[0].mxu0
        %v2005 = vadd.f32 %v1735, %v2004
        %2006 = vmatprep.mubr.f32.mxu0 0.0
        %2007 = vmatmul.mubr.f32.gmra.mrb[0].mxu0 %v1793
        %v2008 = vpop.f32.mrb[0].mxu0
        %v2009 = vadd.f32 %v1731, %v2008
        %v2010 = vpop.f32.mrb[0].mxu0
        %v2011 = vadd.f32 %v1735, %v2010
        %2012 = vmatprep.mubr.f32.mxu0 0.0
        %2013 = vmatmul.mubr.f32.gmra.mrb[0].mxu0 %v1796
        %v2014 = vpop.f32.mrb[0].mxu0
        %v2015 = vadd.f32 %v1731, %v2014
        %v2016 = vpop.f32.mrb[0].mxu0
        %v2017 = vadd.f32 %v1735, %v2016
        %2018 = vmatprep.mubr.f32.mxu0 0.0
        %2019 = vmatmul.mubr.f32.gmra.mrb[0].mxu0 %v1799
        %v2020 = vpop.f32.mrb[0].mxu0
        %v2021 = vadd.f32 %v1731, %v2020
        %v2022 = vpop.f32.mrb[0].mxu0
        %v2023 = vadd.f32 %v1735, %v2022
        %2024 = vmatprep.mubr.f32.mxu0 0.0
        %2025 = vmatmul.mubr.f32.gmra.mrb[0].mxu0 %v1802
        %v2026 = vpop.f32.mrb[0].mxu0
        %v2027 = vadd.f32 %v1731, %v2026
        %v2028 = vpop.f32.mrb[0].mxu0
        %v2029 = vadd.f32 %v1735, %v2028
        %2030 = vmatprep.mubr.f32.mxu0 0.0
        %2031 = vmatmul.mubr.f32.gmra.mrb[0].mxu0 %v1805
        %v2032 = vpop.f32.mrb[0].mxu0
        %v2033 = vadd.f32 %v1731, %v2032
        %v2034 = vpop.f32.mrb[0].mxu0
        %v2035 = vadd.f32 %v1735, %v2034
        %2036 = vmatprep.mubr.f32.mxu0 0.0
        %2037 = vmatmul.mubr.f32.gmra.mrb[0].mxu0 %v1808
        %v2038 = vpop.f32.mrb[0].mxu0
        %v2039 = vadd.f32 %v1731, %v2038
        %v2040 = vpop.f32.mrb[0].mxu0
        %v2041 = vadd.f32 %v1735, %v2040
        %2042 = vmatprep.mubr.f32.mxu0 0.0
        %2043 = vmatmul.mubr.f32.gmra.mrb[0].mxu0 %v1811
        %v2044 = vpop.f32.mrb[0].mxu0
        %v2045 = vadd.f32 %v1731, %v2044
        %v2046 = vpop.f32.mrb[0].mxu0
        %v2047 = vadd.f32 %v1735, %v2046
        %2048 = vmatprep.mubr.f32.mxu0 0.0
        %2049 = vmatmul.mubr.f32.gmra.mrb[0].mxu0 %v1814
        %v2050 = vpop.f32.mrb[0].mxu0
        %v2051 = vadd.f32 %v1731, %v2050
        %v2052 = vpop.f32.mrb[0].mxu0
        %v2053 = vadd.f32 %v1735, %v2052
        %2054 = vmatprep.mubr.f32.mxu0 0.0
        %2055 = vmatmul.mubr.f32.gmra.mrb[0].mxu0 %v1817
        %v2056 = vpop.f32.mrb[0].mxu0
        %v2057 = vadd.f32 %v1731, %v2056
        %v2058 = vpop.f32.mrb[0].mxu0
        %v2059 = vadd.f32 %v1735, %v2058
        %2060 = vmatprep.mubr.f32.mxu0 0.0
        %2061 = vmatmul.mubr.f32.gmra.mrb[0].mxu0 %v1820
        %v2062 = vpop.f32.mrb[0].mxu0
        %v2063 = vadd.f32 %v1731, %v2062
        %v2064 = vpop.f32.mrb[0].mxu0
        %v2065 = vadd.f32 %v1735, %v2064
        %2066 = vmatprep.mubr.f32.mxu0 0.0
        %2067 = vmatmul.mubr.f32.gmra.mrb[0].mxu0 %v1823
        %v2068 = vpop.f32.mrb[0].mxu0
        %v2069 = vadd.f32 %v1731, %v2068
        %v2070 = vpop.f32.mrb[0].mxu0
        %v2071 = vadd.f32 %v1735, %v2070
        %2072 = vmatprep.mubr.f32.mxu0 0.0
        %2073 = vmatmul.mubr.f32.gmra.mrb[0].mxu0 %v1826
        %v2074 = vpop.f32.mrb[0].mxu0
        %v2075 = vadd.f32 %v1731, %v2074
        %v2076 = vpop.f32.mrb[0].mxu0
        %v2077 = vadd.f32 %v1735, %v2076
        %2078 = vmatprep.mubr.f32.mxu0 0.0
        %2079 = vmatmul.mubr.f32.gmra.mrb[0].mxu0 %v1829
        %v2080 = vpop.f32.mrb[0].mxu0
        %v2081 = vadd.f32 %v1731, %v2080
        %v2082 = vpop.f32.mrb[0].mxu0
        %v2083 = vadd.f32 %v1735, %v2082
        %2084 = vmatprep.mubr.f32.mxu0 0.0
        %2085 = vmatmul.mubr.f32.gmra.mrb[0].mxu0 %v1832
        %v2086 = vpop.f32.mrb[0].mxu0
        %v2087 = vadd.f32 %v1731, %v2086
        %v2088 = vpop.f32.mrb[0].mxu0
        %v2089 = vadd.f32 %v1735, %v2088
        %2090 = vdwg.mxu0
        %v2091 = vmax.f32 %v1903, 0.0
        %v2092 = vmax.f32 %v1909, 0.0
        %v2093 = vmax.f32 %v1915, 0.0
        %v2094 = vmax.f32 %v1921, 0.0
        %v2095 = vmax.f32 %v1927, 0.0
        %v2096 = vmax.f32 %v1933, 0.0
        %v2097 = vmax.f32 %v1939, 0.0
        %v2098 = vmax.f32 %v1945, 0.0
        %v2099 = vmax.f32 %v1951, 0.0
        %v2100 = vmax.f32 %v1957, 0.0
        %v2101 = vmax.f32 %v1963, 0.0
        %v2102 = vmax.f32 %v1969, 0.0
        %v2103 = vmax.f32 %v1975, 0.0
        %v2104 = vmax.f32 %v1981, 0.0
        %v2105 = vmax.f32 %v1987, 0.0
        %v2106 = vmax.f32 %v1993, 0.0
        %v2107 = vmax.f32 %v1999, 0.0
        %v2108 = vmax.f32 %v2005, 0.0
        %v2109 = vmax.f32 %v2011, 0.0
        %v2110 = vmax.f32 %v2017, 0.0
        %v2111 = vmax.f32 %v2023, 0.0
        %v2112 = vmax.f32 %v2029, 0.0
        %v2113 = vmax.f32 %v2035, 0.0
        %v2114 = vmax.f32 %v2041, 0.0
        %v2115 = vmax.f32 %v2047, 0.0
        %v2116 = vmax.f32 %v2053, 0.0
        %v2117 = vmax.f32 %v2059, 0.0
        %v2118 = vmax.f32 %v2065, 0.0
        %v2119 = vmax.f32 %v2071, 0.0
        %v2120 = vmax.f32 %v2077, 0.0
        %v2121 = vmax.f32 %v2083, 0.0
        %v2122 = vmax.f32 %v2089, 0.0
        %v2123 = vld [vmem:[%s353] sm:$0xff]
        %v2124 = vld [vmem:[%s353 + $0x8] sm:$0xff]
        %v2125 = vld [vmem:[%s353 + $0x10] sm:$0xff]
        %v2126 = vld [vmem:[%s353 + $0x18] sm:$0xff]
        %v2127 = vld [vmem:[%s353 + $0x20] sm:$0xff]
        %v2128 = vld [vmem:[%s353 + $0x28] sm:$0xff]
        %v2129 = vld [vmem:[%s353 + $0x30] sm:$0xff]
        %v2130 = vld [vmem:[%s353 + $0x38] sm:$0xff]
        %v2131 = vld [vmem:[%s353 + $0x40] sm:$0xff]
        %v2132 = vld [vmem:[%s353 + $0x48] sm:$0xff]
        %v2133 = vld [vmem:[%s353 + $0x50] sm:$0xff]
        %v2134 = vld [vmem:[%s353 + $0x58] sm:$0xff]
        %v2135 = vld [vmem:[%s353 + $0x60] sm:$0xff]
        %v2136 = vld [vmem:[%s353 + $0x68] sm:$0xff]
        %v2137 = vld [vmem:[%s353 + $0x70] sm:$0xff]
        %v2138 = vld [vmem:[%s353 + $0x78] sm:$0xff]
        %v2139 = vld [vmem:[%s353 + $0x80] sm:$0xff]
        %v2140 = vld [vmem:[%s353 + $0x88] sm:$0xff]
        %v2141 = vld [vmem:[%s353 + $0x90] sm:$0xff]
        %v2142 = vld [vmem:[%s353 + $0x98] sm:$0xff]
        %v2143 = vld [vmem:[%s353 + $0xa0] sm:$0xff]
        %v2144 = vld [vmem:[%s353 + $0xa8] sm:$0xff]
        %v2145 = vld [vmem:[%s353 + $0xb0] sm:$0xff]
        %v2146 = vld [vmem:[%s353 + $0xb8] sm:$0xff]
        %v2147 = vld [vmem:[%s353 + $0xc0] sm:$0xff]
        %v2148 = vld [vmem:[%s353 + $0xc8] sm:$0xff]
        %v2149 = vld [vmem:[%s353 + $0xd0] sm:$0xff]
        %v2150 = vld [vmem:[%s353 + $0xd8] sm:$0xff]
        %v2151 = vld [vmem:[%s353 + $0xe0] sm:$0xff]
        %v2152 = vld [vmem:[%s353 + $0xe8] sm:$0xff]
        %v2153 = vld [vmem:[%s353 + $0xf0] sm:$0xff]
        %v2154 = vld [vmem:[%s353 + $0xf8] sm:$0xff]
        %2156 = vrot.lane.b32.xlu0 %v2091, 96
        %v2157 = vpop.permute.xlu0 %2156
        %2158 = vrot.lane.b32.xlu0 %v2091, 64
        %v2159 = vpop.permute.xlu0 %2158
        %v2160 = vsel %vm426, %v2157, 0
        %v2162 = vsel %vm426, %v2159, 0
        %2164 = vmatprep.subr.mxu0 0.0
        %2165 = vmatpush1.xpose.msra.mxu0 %v2162
        %2166 = vmatprep.subr.mxu0 0.0
        %2167 = vmatpush1.xpose.msra.mxu0 0.0
        %2168 = vmatprep.subr.mxu0 0.0
        %2169 = vmatpush1.xpose.msra.mxu0 0.0
        %2170 = vmatprep.subr.mxu0 0.0
        %2171 = vmatpush1.xpose.msra.mxu0 0.0
        %2172 = vmatprep.subr.mxu0 0.0
        %2173 = vmatpush1.xpose.msra.mxu0 0.0
        %2174 = vmatprep.subr.mxu0 0.0
        %2175 = vmatpush1.xpose.msra.mxu0 0.0
        %2176 = vmatprep.subr.mxu0 0.0
        %2177 = vmatpush1.xpose.msra.mxu0 0.0
        %2178 = vmatprep.subr.mxu0 0.0
        %2179 = vmatpush1.xpose.msra.mxu0 0.0
        %2180 = vmatprep.subr.mxu0 0.0
        %2181 = vmatpush1.xpose.msra.mxu0 0.0
        %2182 = vmatprep.subr.mxu0 0.0
        %2183 = vmatpush1.xpose.msra.mxu0 0.0
        %2184 = vmatprep.subr.mxu0 0.0
        %2185 = vmatpush1.xpose.msra.mxu0 0.0
        %2186 = vmatprep.subr.mxu0 0.0
        %2187 = vmatpush1.xpose.msra.mxu0 0.0
        %2188 = vmatprep.subr.mxu0 0.0
        %2189 = vmatpush1.xpose.msra.mxu0 0.0
        %2190 = vmatprep.subr.mxu0 0.0
        %2191 = vmatpush1.xpose.msra.mxu0 0.0
        %2192 = vmatprep.subr.mxu0 0.0
        %2193 = vmatpush1.xpose.msra.mxu0 0.0
        %2194 = vmatprep.subr.mxu0 0.0
        %2195 = vmatpush1.xpose.msra.mxu0 0.0
        %2196 = vmatprep.subr.mxu0 0.0
        %2197 = vmatpush1.xpose.msra.mxu0 0.0
        %2198 = vmatprep.subr.mxu0 0.0
        %2199 = vmatpush1.xpose.msra.mxu0 0.0
        %2200 = vmatprep.subr.mxu0 0.0
        %2201 = vmatpush1.xpose.msra.mxu0 0.0
        %2202 = vmatprep.subr.mxu0 0.0
        %2203 = vmatpush1.xpose.msra.mxu0 0.0
        %2204 = vmatprep.subr.mxu0 0.0
        %2205 = vmatpush1.xpose.msra.mxu0 0.0
        %2206 = vmatprep.subr.mxu0 0.0
        %2207 = vmatpush1.xpose.msra.mxu0 0.0
        %2208 = vmatprep.subr.mxu0 0.0
        %2209 = vmatpush1.xpose.msra.mxu0 0.0
        %2210 = vmatprep.subr.mxu0 0.0
        %2211 = vmatpush1.xpose.msra.mxu0 0.0
        %2212 = vmatprep.subr.mxu0 0.0
        %2213 = vmatpush1.xpose.msra.mxu0 0.0
        %2214 = vmatprep.subr.mxu0 0.0
        %2215 = vmatpush1.xpose.msra.mxu0 0.0
        %2216 = vmatprep.subr.mxu0 0.0
        %2217 = vmatpush1.xpose.msra.mxu0 0.0
        %2218 = vmatprep.subr.mxu0 0.0
        %2219 = vmatpush1.xpose.msra.mxu0 0.0
        %2220 = vmatprep.subr.mxu0 0.0
        %2221 = vmatpush1.xpose.msra.mxu0 0.0
        %2222 = vmatprep.subr.mxu0 0.0
        %2223 = vmatpush1.xpose.msra.mxu0 0.0
        %2224 = vmatprep.subr.mxu0 0.0
        %2225 = vmatpush1.xpose.msra.mxu0 0.0
        %2226 = vmatprep.subr.mxu0 0.0
        %2227 = vmatpush1.xpose.msra.mxu0 0.0
        %2228 = vmatprep.mubr.f32.mxu0 0.0
        %2229 = vmatmul.mubr.f32.gmra.mrb[0].mxu0 %v2160
        %v2230 = vpop.f32.mrb[0].mxu0
        %v2231 = vadd.f32 0.0, %v2230
        %v2232 = vpop.f32.mrb[0].mxu0
        %2233 = vdwg.mxu0
        %2235 = vrot.lane.b32.xlu0 %v2092, 96
        %v2236 = vpop.permute.xlu0 %2235
        %2237 = vrot.lane.b32.xlu0 %v2092, 64
        %v2238 = vpop.permute.xlu0 %2237
        %v2239 = vsel %vm426, %v2236, 0
        %v2241 = vsel %vm426, %v2238, 0
        %2243 = vmatprep.subr.mxu0 0.0
        %2244 = vmatpush1.xpose.msra.mxu0 %v2241
        %2245 = vmatprep.subr.mxu0 0.0
        %2246 = vmatpush1.xpose.msra.mxu0 0.0
        %2247 = vmatprep.subr.mxu0 0.0
        %2248 = vmatpush1.xpose.msra.mxu0 0.0
        %2249 = vmatprep.subr.mxu0 0.0
        %2250 = vmatpush1.xpose.msra.mxu0 0.0
        %2251 = vmatprep.subr.mxu0 0.0
        %2252 = vmatpush1.xpose.msra.mxu0 0.0
        %2253 = vmatprep.subr.mxu0 0.0
        %2254 = vmatpush1.xpose.msra.mxu0 0.0
        %2255 = vmatprep.subr.mxu0 0.0
        %2256 = vmatpush1.xpose.msra.mxu0 0.0
        %2257 = vmatprep.subr.mxu0 0.0
        %2258 = vmatpush1.xpose.msra.mxu0 0.0
        %2259 = vmatprep.subr.mxu0 0.0
        %2260 = vmatpush1.xpose.msra.mxu0 0.0
        %2261 = vmatprep.subr.mxu0 0.0
        %2262 = vmatpush1.xpose.msra.mxu0 0.0
        %2263 = vmatprep.subr.mxu0 0.0
        %2264 = vmatpush1.xpose.msra.mxu0 0.0
        %2265 = vmatprep.subr.mxu0 0.0
        %2266 = vmatpush1.xpose.msra.mxu0 0.0
        %2267 = vmatprep.subr.mxu0 0.0
        %2268 = vmatpush1.xpose.msra.mxu0 0.0
        %2269 = vmatprep.subr.mxu0 0.0
        %2270 = vmatpush1.xpose.msra.mxu0 0.0
        %2271 = vmatprep.subr.mxu0 0.0
        %2272 = vmatpush1.xpose.msra.mxu0 0.0
        %2273 = vmatprep.subr.mxu0 0.0
        %2274 = vmatpush1.xpose.msra.mxu0 0.0
        %2275 = vmatprep.subr.mxu0 0.0
        %2276 = vmatpush1.xpose.msra.mxu0 0.0
        %2277 = vmatprep.subr.mxu0 0.0
        %2278 = vmatpush1.xpose.msra.mxu0 0.0
        %2279 = vmatprep.subr.mxu0 0.0
        %2280 = vmatpush1.xpose.msra.mxu0 0.0
        %2281 = vmatprep.subr.mxu0 0.0
        %2282 = vmatpush1.xpose.msra.mxu0 0.0
        %2283 = vmatprep.subr.mxu0 0.0
        %2284 = vmatpush1.xpose.msra.mxu0 0.0
        %2285 = vmatprep.subr.mxu0 0.0
        %2286 = vmatpush1.xpose.msra.mxu0 0.0
        %2287 = vmatprep.subr.mxu0 0.0
        %2288 = vmatpush1.xpose.msra.mxu0 0.0
        %2289 = vmatprep.subr.mxu0 0.0
        %2290 = vmatpush1.xpose.msra.mxu0 0.0
        %2291 = vmatprep.subr.mxu0 0.0
        %2292 = vmatpush1.xpose.msra.mxu0 0.0
        %2293 = vmatprep.subr.mxu0 0.0
        %2294 = vmatpush1.xpose.msra.mxu0 0.0
        %2295 = vmatprep.subr.mxu0 0.0
        %2296 = vmatpush1.xpose.msra.mxu0 0.0
        %2297 = vmatprep.subr.mxu0 0.0
        %2298 = vmatpush1.xpose.msra.mxu0 0.0
        %2299 = vmatprep.subr.mxu0 0.0
        %2300 = vmatpush1.xpose.msra.mxu0 0.0
        %2301 = vmatprep.subr.mxu0 0.0
        %2302 = vmatpush1.xpose.msra.mxu0 0.0
        %2303 = vmatprep.subr.mxu0 0.0
        %2304 = vmatpush1.xpose.msra.mxu0 0.0
        %2305 = vmatprep.subr.mxu0 0.0
        %2306 = vmatpush1.xpose.msra.mxu0 0.0
        %2307 = vmatprep.mubr.f32.mxu0 0.0
        %2308 = vmatmul.mubr.f32.gmra.mrb[0].mxu0 %v2239
        %v2309 = vpop.f32.mrb[0].mxu0
        %v2310 = vadd.f32 0.0, %v2309
        %v2311 = vpop.f32.mrb[0].mxu0
        %2312 = vdwg.mxu0
        %2314 = vrot.lane.b32.xlu0 %v2093, 96
        %v2315 = vpop.permute.xlu0 %2314
        %2316 = vrot.lane.b32.xlu0 %v2093, 64
        %v2317 = vpop.permute.xlu0 %2316
        %v2318 = vsel %vm426, %v2315, 0
        %v2320 = vsel %vm426, %v2317, 0
        %2322 = vmatprep.subr.mxu0 0.0
        %2323 = vmatpush1.xpose.msra.mxu0 %v2320
        %2324 = vmatprep.subr.mxu0 0.0
        %2325 = vmatpush1.xpose.msra.mxu0 0.0
        %2326 = vmatprep.subr.mxu0 0.0
        %2327 = vmatpush1.xpose.msra.mxu0 0.0
        %2328 = vmatprep.subr.mxu0 0.0
        %2329 = vmatpush1.xpose.msra.mxu0 0.0
        %2330 = vmatprep.subr.mxu0 0.0
        %2331 = vmatpush1.xpose.msra.mxu0 0.0
        %2332 = vmatprep.subr.mxu0 0.0
        %2333 = vmatpush1.xpose.msra.mxu0 0.0
        %2334 = vmatprep.subr.mxu0 0.0
        %2335 = vmatpush1.xpose.msra.mxu0 0.0
        %2336 = vmatprep.subr.mxu0 0.0
        %2337 = vmatpush1.xpose.msra.mxu0 0.0
        %2338 = vmatprep.subr.mxu0 0.0
        %2339 = vmatpush1.xpose.msra.mxu0 0.0
        %2340 = vmatprep.subr.mxu0 0.0
        %2341 = vmatpush1.xpose.msra.mxu0 0.0
        %2342 = vmatprep.subr.mxu0 0.0
        %2343 = vmatpush1.xpose.msra.mxu0 0.0
        %2344 = vmatprep.subr.mxu0 0.0
        %2345 = vmatpush1.xpose.msra.mxu0 0.0
        %2346 = vmatprep.subr.mxu0 0.0
        %2347 = vmatpush1.xpose.msra.mxu0 0.0
        %2348 = vmatprep.subr.mxu0 0.0
        %2349 = vmatpush1.xpose.msra.mxu0 0.0
        %2350 = vmatprep.subr.mxu0 0.0
        %2351 = vmatpush1.xpose.msra.mxu0 0.0
        %2352 = vmatprep.subr.mxu0 0.0
        %2353 = vmatpush1.xpose.msra.mxu0 0.0
        %2354 = vmatprep.subr.mxu0 0.0
        %2355 = vmatpush1.xpose.msra.mxu0 0.0
        %2356 = vmatprep.subr.mxu0 0.0
        %2357 = vmatpush1.xpose.msra.mxu0 0.0
        %2358 = vmatprep.subr.mxu0 0.0
        %2359 = vmatpush1.xpose.msra.mxu0 0.0
        %2360 = vmatprep.subr.mxu0 0.0
        %2361 = vmatpush1.xpose.msra.mxu0 0.0
        %2362 = vmatprep.subr.mxu0 0.0
        %2363 = vmatpush1.xpose.msra.mxu0 0.0
        %2364 = vmatprep.subr.mxu0 0.0
        %2365 = vmatpush1.xpose.msra.mxu0 0.0
        %2366 = vmatprep.subr.mxu0 0.0
        %2367 = vmatpush1.xpose.msra.mxu0 0.0
        %2368 = vmatprep.subr.mxu0 0.0
        %2369 = vmatpush1.xpose.msra.mxu0 0.0
        %2370 = vmatprep.subr.mxu0 0.0
        %2371 = vmatpush1.xpose.msra.mxu0 0.0
        %2372 = vmatprep.subr.mxu0 0.0
        %2373 = vmatpush1.xpose.msra.mxu0 0.0
        %2374 = vmatprep.subr.mxu0 0.0
        %2375 = vmatpush1.xpose.msra.mxu0 0.0
        %2376 = vmatprep.subr.mxu0 0.0
        %2377 = vmatpush1.xpose.msra.mxu0 0.0
        %2378 = vmatprep.subr.mxu0 0.0
        %2379 = vmatpush1.xpose.msra.mxu0 0.0
        %2380 = vmatprep.subr.mxu0 0.0
        %2381 = vmatpush1.xpose.msra.mxu0 0.0
        %2382 = vmatprep.subr.mxu0 0.0
        %2383 = vmatpush1.xpose.msra.mxu0 0.0
        %2384 = vmatprep.subr.mxu0 0.0
        %2385 = vmatpush1.xpose.msra.mxu0 0.0
        %2386 = vmatprep.mubr.f32.mxu0 0.0
        %2387 = vmatmul.mubr.f32.gmra.mrb[0].mxu0 %v2318
        %v2388 = vpop.f32.mrb[0].mxu0
        %v2389 = vadd.f32 0.0, %v2388
        %v2390 = vpop.f32.mrb[0].mxu0
        %2391 = vdwg.mxu0
        %2393 = vrot.lane.b32.xlu0 %v2094, 96
        %v2394 = vpop.permute.xlu0 %2393
        %2395 = vrot.lane.b32.xlu0 %v2094, 64
        %v2396 = vpop.permute.xlu0 %2395
        %v2397 = vsel %vm426, %v2394, 0
        %v2399 = vsel %vm426, %v2396, 0
        %2401 = vmatprep.subr.mxu0 0.0
        %2402 = vmatpush1.xpose.msra.mxu0 %v2399
        %2403 = vmatprep.subr.mxu0 0.0
        %2404 = vmatpush1.xpose.msra.mxu0 0.0
        %2405 = vmatprep.subr.mxu0 0.0
        %2406 = vmatpush1.xpose.msra.mxu0 0.0
        %2407 = vmatprep.subr.mxu0 0.0
        %2408 = vmatpush1.xpose.msra.mxu0 0.0
        %2409 = vmatprep.subr.mxu0 0.0
        %2410 = vmatpush1.xpose.msra.mxu0 0.0
        %2411 = vmatprep.subr.mxu0 0.0
        %2412 = vmatpush1.xpose.msra.mxu0 0.0
        %2413 = vmatprep.subr.mxu0 0.0
        %2414 = vmatpush1.xpose.msra.mxu0 0.0
        %2415 = vmatprep.subr.mxu0 0.0
        %2416 = vmatpush1.xpose.msra.mxu0 0.0
        %2417 = vmatprep.subr.mxu0 0.0
        %2418 = vmatpush1.xpose.msra.mxu0 0.0
        %2419 = vmatprep.subr.mxu0 0.0
        %2420 = vmatpush1.xpose.msra.mxu0 0.0
        %2421 = vmatprep.subr.mxu0 0.0
        %2422 = vmatpush1.xpose.msra.mxu0 0.0
        %2423 = vmatprep.subr.mxu0 0.0
        %2424 = vmatpush1.xpose.msra.mxu0 0.0
        %2425 = vmatprep.subr.mxu0 0.0
        %2426 = vmatpush1.xpose.msra.mxu0 0.0
        %2427 = vmatprep.subr.mxu0 0.0
        %2428 = vmatpush1.xpose.msra.mxu0 0.0
        %2429 = vmatprep.subr.mxu0 0.0
        %2430 = vmatpush1.xpose.msra.mxu0 0.0
        %2431 = vmatprep.subr.mxu0 0.0
        %2432 = vmatpush1.xpose.msra.mxu0 0.0
        %2433 = vmatprep.subr.mxu0 0.0
        %2434 = vmatpush1.xpose.msra.mxu0 0.0
        %2435 = vmatprep.subr.mxu0 0.0
        %2436 = vmatpush1.xpose.msra.mxu0 0.0
        %2437 = vmatprep.subr.mxu0 0.0
        %2438 = vmatpush1.xpose.msra.mxu0 0.0
        %2439 = vmatprep.subr.mxu0 0.0
        %2440 = vmatpush1.xpose.msra.mxu0 0.0
        %2441 = vmatprep.subr.mxu0 0.0
        %2442 = vmatpush1.xpose.msra.mxu0 0.0
        %2443 = vmatprep.subr.mxu0 0.0
        %2444 = vmatpush1.xpose.msra.mxu0 0.0
        %2445 = vmatprep.subr.mxu0 0.0
        %2446 = vmatpush1.xpose.msra.mxu0 0.0
        %2447 = vmatprep.subr.mxu0 0.0
        %2448 = vmatpush1.xpose.msra.mxu0 0.0
        %2449 = vmatprep.subr.mxu0 0.0
        %2450 = vmatpush1.xpose.msra.mxu0 0.0
        %2451 = vmatprep.subr.mxu0 0.0
        %2452 = vmatpush1.xpose.msra.mxu0 0.0
        %2453 = vmatprep.subr.mxu0 0.0
        %2454 = vmatpush1.xpose.msra.mxu0 0.0
        %2455 = vmatprep.subr.mxu0 0.0
        %2456 = vmatpush1.xpose.msra.mxu0 0.0
        %2457 = vmatprep.subr.mxu0 0.0
        %2458 = vmatpush1.xpose.msra.mxu0 0.0
        %2459 = vmatprep.subr.mxu0 0.0
        %2460 = vmatpush1.xpose.msra.mxu0 0.0
        %2461 = vmatprep.subr.mxu0 0.0
        %2462 = vmatpush1.xpose.msra.mxu0 0.0
        %2463 = vmatprep.subr.mxu0 0.0
        %2464 = vmatpush1.xpose.msra.mxu0 0.0
        %2465 = vmatprep.mubr.f32.mxu0 0.0
        %2466 = vmatmul.mubr.f32.gmra.mrb[0].mxu0 %v2397
        %v2467 = vpop.f32.mrb[0].mxu0
        %v2468 = vadd.f32 0.0, %v2467
        %v2469 = vpop.f32.mrb[0].mxu0
        %2470 = vdwg.mxu0
        %2472 = vrot.lane.b32.xlu0 %v2095, 96
        %v2473 = vpop.permute.xlu0 %2472
        %2474 = vrot.lane.b32.xlu0 %v2095, 64
        %v2475 = vpop.permute.xlu0 %2474
        %v2476 = vsel %vm426, %v2473, 0
        %v2478 = vsel %vm426, %v2475, 0
        %2480 = vmatprep.subr.mxu0 0.0
        %2481 = vmatpush1.xpose.msra.mxu0 %v2478
        %2482 = vmatprep.subr.mxu0 0.0
        %2483 = vmatpush1.xpose.msra.mxu0 0.0
        %2484 = vmatprep.subr.mxu0 0.0
        %2485 = vmatpush1.xpose.msra.mxu0 0.0
        %2486 = vmatprep.subr.mxu0 0.0
        %2487 = vmatpush1.xpose.msra.mxu0 0.0
        %2488 = vmatprep.subr.mxu0 0.0
        %2489 = vmatpush1.xpose.msra.mxu0 0.0
        %2490 = vmatprep.subr.mxu0 0.0
        %2491 = vmatpush1.xpose.msra.mxu0 0.0
        %2492 = vmatprep.subr.mxu0 0.0
        %2493 = vmatpush1.xpose.msra.mxu0 0.0
        %2494 = vmatprep.subr.mxu0 0.0
        %2495 = vmatpush1.xpose.msra.mxu0 0.0
        %2496 = vmatprep.subr.mxu0 0.0
        %2497 = vmatpush1.xpose.msra.mxu0 0.0
        %2498 = vmatprep.subr.mxu0 0.0
        %2499 = vmatpush1.xpose.msra.mxu0 0.0
        %2500 = vmatprep.subr.mxu0 0.0
        %2501 = vmatpush1.xpose.msra.mxu0 0.0
        %2502 = vmatprep.subr.mxu0 0.0
        %2503 = vmatpush1.xpose.msra.mxu0 0.0
        %2504 = vmatprep.subr.mxu0 0.0
        %2505 = vmatpush1.xpose.msra.mxu0 0.0
        %2506 = vmatprep.subr.mxu0 0.0
        %2507 = vmatpush1.xpose.msra.mxu0 0.0
        %2508 = vmatprep.subr.mxu0 0.0
        %2509 = vmatpush1.xpose.msra.mxu0 0.0
        %2510 = vmatprep.subr.mxu0 0.0
        %2511 = vmatpush1.xpose.msra.mxu0 0.0
        %2512 = vmatprep.subr.mxu0 0.0
        %2513 = vmatpush1.xpose.msra.mxu0 0.0
        %2514 = vmatprep.subr.mxu0 0.0
        %2515 = vmatpush1.xpose.msra.mxu0 0.0
        %2516 = vmatprep.subr.mxu0 0.0
        %2517 = vmatpush1.xpose.msra.mxu0 0.0
        %2518 = vmatprep.subr.mxu0 0.0
        %2519 = vmatpush1.xpose.msra.mxu0 0.0
        %2520 = vmatprep.subr.mxu0 0.0
        %2521 = vmatpush1.xpose.msra.mxu0 0.0
        %2522 = vmatprep.subr.mxu0 0.0
        %2523 = vmatpush1.xpose.msra.mxu0 0.0
        %2524 = vmatprep.subr.mxu0 0.0
        %2525 = vmatpush1.xpose.msra.mxu0 0.0
        %2526 = vmatprep.subr.mxu0 0.0
        %2527 = vmatpush1.xpose.msra.mxu0 0.0
        %2528 = vmatprep.subr.mxu0 0.0
        %2529 = vmatpush1.xpose.msra.mxu0 0.0
        %2530 = vmatprep.subr.mxu0 0.0
        %2531 = vmatpush1.xpose.msra.mxu0 0.0
        %2532 = vmatprep.subr.mxu0 0.0
        %2533 = vmatpush1.xpose.msra.mxu0 0.0
        %2534 = vmatprep.subr.mxu0 0.0
        %2535 = vmatpush1.xpose.msra.mxu0 0.0
        %2536 = vmatprep.subr.mxu0 0.0
        %2537 = vmatpush1.xpose.msra.mxu0 0.0
        %2538 = vmatprep.subr.mxu0 0.0
        %2539 = vmatpush1.xpose.msra.mxu0 0.0
        %2540 = vmatprep.subr.mxu0 0.0
        %2541 = vmatpush1.xpose.msra.mxu0 0.0
        %2542 = vmatprep.subr.mxu0 0.0
        %2543 = vmatpush1.xpose.msra.mxu0 0.0
        %2544 = vmatprep.mubr.f32.mxu0 0.0
        %2545 = vmatmul.mubr.f32.gmra.mrb[0].mxu0 %v2476
        %v2546 = vpop.f32.mrb[0].mxu0
        %v2547 = vadd.f32 0.0, %v2546
        %v2548 = vpop.f32.mrb[0].mxu0
        %2549 = vdwg.mxu0
        %2551 = vrot.lane.b32.xlu0 %v2096, 96
        %v2552 = vpop.permute.xlu0 %2551
        %2553 = vrot.lane.b32.xlu0 %v2096, 64
        %v2554 = vpop.permute.xlu0 %2553
        %v2555 = vsel %vm426, %v2552, 0
        %v2557 = vsel %vm426, %v2554, 0
        %2559 = vmatprep.subr.mxu0 0.0
        %2560 = vmatpush1.xpose.msra.mxu0 %v2557
        %2561 = vmatprep.subr.mxu0 0.0
        %2562 = vmatpush1.xpose.msra.mxu0 0.0
        %2563 = vmatprep.subr.mxu0 0.0
        %2564 = vmatpush1.xpose.msra.mxu0 0.0
        %2565 = vmatprep.subr.mxu0 0.0
        %2566 = vmatpush1.xpose.msra.mxu0 0.0
        %2567 = vmatprep.subr.mxu0 0.0
        %2568 = vmatpush1.xpose.msra.mxu0 0.0
        %2569 = vmatprep.subr.mxu0 0.0
        %2570 = vmatpush1.xpose.msra.mxu0 0.0
        %2571 = vmatprep.subr.mxu0 0.0
        %2572 = vmatpush1.xpose.msra.mxu0 0.0
        %2573 = vmatprep.subr.mxu0 0.0
        %2574 = vmatpush1.xpose.msra.mxu0 0.0
        %2575 = vmatprep.subr.mxu0 0.0
        %2576 = vmatpush1.xpose.msra.mxu0 0.0
        %2577 = vmatprep.subr.mxu0 0.0
        %2578 = vmatpush1.xpose.msra.mxu0 0.0
        %2579 = vmatprep.subr.mxu0 0.0
        %2580 = vmatpush1.xpose.msra.mxu0 0.0
        %2581 = vmatprep.subr.mxu0 0.0
        %2582 = vmatpush1.xpose.msra.mxu0 0.0
        %2583 = vmatprep.subr.mxu0 0.0
        %2584 = vmatpush1.xpose.msra.mxu0 0.0
        %2585 = vmatprep.subr.mxu0 0.0
        %2586 = vmatpush1.xpose.msra.mxu0 0.0
        %2587 = vmatprep.subr.mxu0 0.0
        %2588 = vmatpush1.xpose.msra.mxu0 0.0
        %2589 = vmatprep.subr.mxu0 0.0
        %2590 = vmatpush1.xpose.msra.mxu0 0.0
        %2591 = vmatprep.subr.mxu0 0.0
        %2592 = vmatpush1.xpose.msra.mxu0 0.0
        %2593 = vmatprep.subr.mxu0 0.0
        %2594 = vmatpush1.xpose.msra.mxu0 0.0
        %2595 = vmatprep.subr.mxu0 0.0
        %2596 = vmatpush1.xpose.msra.mxu0 0.0
        %2597 = vmatprep.subr.mxu0 0.0
        %2598 = vmatpush1.xpose.msra.mxu0 0.0
        %2599 = vmatprep.subr.mxu0 0.0
        %2600 = vmatpush1.xpose.msra.mxu0 0.0
        %2601 = vmatprep.subr.mxu0 0.0
        %2602 = vmatpush1.xpose.msra.mxu0 0.0
        %2603 = vmatprep.subr.mxu0 0.0
        %2604 = vmatpush1.xpose.msra.mxu0 0.0
        %2605 = vmatprep.subr.mxu0 0.0
        %2606 = vmatpush1.xpose.msra.mxu0 0.0
        %2607 = vmatprep.subr.mxu0 0.0
        %2608 = vmatpush1.xpose.msra.mxu0 0.0
        %2609 = vmatprep.subr.mxu0 0.0
        %2610 = vmatpush1.xpose.msra.mxu0 0.0
        %2611 = vmatprep.subr.mxu0 0.0
        %2612 = vmatpush1.xpose.msra.mxu0 0.0
        %2613 = vmatprep.subr.mxu0 0.0
        %2614 = vmatpush1.xpose.msra.mxu0 0.0
        %2615 = vmatprep.subr.mxu0 0.0
        %2616 = vmatpush1.xpose.msra.mxu0 0.0
        %2617 = vmatprep.subr.mxu0 0.0
        %2618 = vmatpush1.xpose.msra.mxu0 0.0
        %2619 = vmatprep.subr.mxu0 0.0
        %2620 = vmatpush1.xpose.msra.mxu0 0.0
        %2621 = vmatprep.subr.mxu0 0.0
        %2622 = vmatpush1.xpose.msra.mxu0 0.0
        %2623 = vmatprep.mubr.f32.mxu0 0.0
        %2624 = vmatmul.mubr.f32.gmra.mrb[0].mxu0 %v2555
        %v2625 = vpop.f32.mrb[0].mxu0
        %v2626 = vadd.f32 0.0, %v2625
        %v2627 = vpop.f32.mrb[0].mxu0
        %2628 = vdwg.mxu0
        %2630 = vrot.lane.b32.xlu0 %v2097, 96
        %v2631 = vpop.permute.xlu0 %2630
        %2632 = vrot.lane.b32.xlu0 %v2097, 64
        %v2633 = vpop.permute.xlu0 %2632
        %v2634 = vsel %vm426, %v2631, 0
        %v2636 = vsel %vm426, %v2633, 0
        %2638 = vmatprep.subr.mxu0 0.0
        %2639 = vmatpush1.xpose.msra.mxu0 %v2636
        %2640 = vmatprep.subr.mxu0 0.0
        %2641 = vmatpush1.xpose.msra.mxu0 0.0
        %2642 = vmatprep.subr.mxu0 0.0
        %2643 = vmatpush1.xpose.msra.mxu0 0.0
        %2644 = vmatprep.subr.mxu0 0.0
        %2645 = vmatpush1.xpose.msra.mxu0 0.0
        %2646 = vmatprep.subr.mxu0 0.0
        %2647 = vmatpush1.xpose.msra.mxu0 0.0
        %2648 = vmatprep.subr.mxu0 0.0
        %2649 = vmatpush1.xpose.msra.mxu0 0.0
        %2650 = vmatprep.subr.mxu0 0.0
        %2651 = vmatpush1.xpose.msra.mxu0 0.0
        %2652 = vmatprep.subr.mxu0 0.0
        %2653 = vmatpush1.xpose.msra.mxu0 0.0
        %2654 = vmatprep.subr.mxu0 0.0
        %2655 = vmatpush1.xpose.msra.mxu0 0.0
        %2656 = vmatprep.subr.mxu0 0.0
        %2657 = vmatpush1.xpose.msra.mxu0 0.0
        %2658 = vmatprep.subr.mxu0 0.0
        %2659 = vmatpush1.xpose.msra.mxu0 0.0
        %2660 = vmatprep.subr.mxu0 0.0
        %2661 = vmatpush1.xpose.msra.mxu0 0.0
        %2662 = vmatprep.subr.mxu0 0.0
        %2663 = vmatpush1.xpose.msra.mxu0 0.0
        %2664 = vmatprep.subr.mxu0 0.0
        %2665 = vmatpush1.xpose.msra.mxu0 0.0
        %2666 = vmatprep.subr.mxu0 0.0
        %2667 = vmatpush1.xpose.msra.mxu0 0.0
        %2668 = vmatprep.subr.mxu0 0.0
        %2669 = vmatpush1.xpose.msra.mxu0 0.0
        %2670 = vmatprep.subr.mxu0 0.0
        %2671 = vmatpush1.xpose.msra.mxu0 0.0
        %2672 = vmatprep.subr.mxu0 0.0
        %2673 = vmatpush1.xpose.msra.mxu0 0.0
        %2674 = vmatprep.subr.mxu0 0.0
        %2675 = vmatpush1.xpose.msra.mxu0 0.0
        %2676 = vmatprep.subr.mxu0 0.0
        %2677 = vmatpush1.xpose.msra.mxu0 0.0
        %2678 = vmatprep.subr.mxu0 0.0
        %2679 = vmatpush1.xpose.msra.mxu0 0.0
        %2680 = vmatprep.subr.mxu0 0.0
        %2681 = vmatpush1.xpose.msra.mxu0 0.0
        %2682 = vmatprep.subr.mxu0 0.0
        %2683 = vmatpush1.xpose.msra.mxu0 0.0
        %2684 = vmatprep.subr.mxu0 0.0
        %2685 = vmatpush1.xpose.msra.mxu0 0.0
        %2686 = vmatprep.subr.mxu0 0.0
        %2687 = vmatpush1.xpose.msra.mxu0 0.0
        %2688 = vmatprep.subr.mxu0 0.0
        %2689 = vmatpush1.xpose.msra.mxu0 0.0
        %2690 = vmatprep.subr.mxu0 0.0
        %2691 = vmatpush1.xpose.msra.mxu0 0.0
        %2692 = vmatprep.subr.mxu0 0.0
        %2693 = vmatpush1.xpose.msra.mxu0 0.0
        %2694 = vmatprep.subr.mxu0 0.0
        %2695 = vmatpush1.xpose.msra.mxu0 0.0
        %2696 = vmatprep.subr.mxu0 0.0
        %2697 = vmatpush1.xpose.msra.mxu0 0.0
        %2698 = vmatprep.subr.mxu0 0.0
        %2699 = vmatpush1.xpose.msra.mxu0 0.0
        %2700 = vmatprep.subr.mxu0 0.0
        %2701 = vmatpush1.xpose.msra.mxu0 0.0
        %2702 = vmatprep.mubr.f32.mxu0 0.0
        %2703 = vmatmul.mubr.f32.gmra.mrb[0].mxu0 %v2634
        %v2704 = vpop.f32.mrb[0].mxu0
        %v2705 = vadd.f32 0.0, %v2704
        %v2706 = vpop.f32.mrb[0].mxu0
        %2707 = vdwg.mxu0
        %2709 = vrot.lane.b32.xlu0 %v2098, 96
        %v2710 = vpop.permute.xlu0 %2709
        %2711 = vrot.lane.b32.xlu0 %v2098, 64
        %v2712 = vpop.permute.xlu0 %2711
        %v2713 = vsel %vm426, %v2710, 0
        %v2715 = vsel %vm426, %v2712, 0
        %2717 = vmatprep.subr.mxu0 0.0
        %2718 = vmatpush1.xpose.msra.mxu0 %v2715
        %2719 = vmatprep.subr.mxu0 0.0
        %2720 = vmatpush1.xpose.msra.mxu0 0.0
        %2721 = vmatprep.subr.mxu0 0.0
        %2722 = vmatpush1.xpose.msra.mxu0 0.0
        %2723 = vmatprep.subr.mxu0 0.0
        %2724 = vmatpush1.xpose.msra.mxu0 0.0
        %2725 = vmatprep.subr.mxu0 0.0
        %2726 = vmatpush1.xpose.msra.mxu0 0.0
        %2727 = vmatprep.subr.mxu0 0.0
        %2728 = vmatpush1.xpose.msra.mxu0 0.0
        %2729 = vmatprep.subr.mxu0 0.0
        %2730 = vmatpush1.xpose.msra.mxu0 0.0
        %2731 = vmatprep.subr.mxu0 0.0
        %2732 = vmatpush1.xpose.msra.mxu0 0.0
        %2733 = vmatprep.subr.mxu0 0.0
        %2734 = vmatpush1.xpose.msra.mxu0 0.0
        %2735 = vmatprep.subr.mxu0 0.0
        %2736 = vmatpush1.xpose.msra.mxu0 0.0
        %2737 = vmatprep.subr.mxu0 0.0
        %2738 = vmatpush1.xpose.msra.mxu0 0.0
        %2739 = vmatprep.subr.mxu0 0.0
        %2740 = vmatpush1.xpose.msra.mxu0 0.0
        %2741 = vmatprep.subr.mxu0 0.0
        %2742 = vmatpush1.xpose.msra.mxu0 0.0
        %2743 = vmatprep.subr.mxu0 0.0
        %2744 = vmatpush1.xpose.msra.mxu0 0.0
        %2745 = vmatprep.subr.mxu0 0.0
        %2746 = vmatpush1.xpose.msra.mxu0 0.0
        %2747 = vmatprep.subr.mxu0 0.0
        %2748 = vmatpush1.xpose.msra.mxu0 0.0
        %2749 = vmatprep.subr.mxu0 0.0
        %2750 = vmatpush1.xpose.msra.mxu0 0.0
        %2751 = vmatprep.subr.mxu0 0.0
        %2752 = vmatpush1.xpose.msra.mxu0 0.0
        %2753 = vmatprep.subr.mxu0 0.0
        %2754 = vmatpush1.xpose.msra.mxu0 0.0
        %2755 = vmatprep.subr.mxu0 0.0
        %2756 = vmatpush1.xpose.msra.mxu0 0.0
        %2757 = vmatprep.subr.mxu0 0.0
        %2758 = vmatpush1.xpose.msra.mxu0 0.0
        %2759 = vmatprep.subr.mxu0 0.0
        %2760 = vmatpush1.xpose.msra.mxu0 0.0
        %2761 = vmatprep.subr.mxu0 0.0
        %2762 = vmatpush1.xpose.msra.mxu0 0.0
        %2763 = vmatprep.subr.mxu0 0.0
        %2764 = vmatpush1.xpose.msra.mxu0 0.0
        %2765 = vmatprep.subr.mxu0 0.0
        %2766 = vmatpush1.xpose.msra.mxu0 0.0
        %2767 = vmatprep.subr.mxu0 0.0
        %2768 = vmatpush1.xpose.msra.mxu0 0.0
        %2769 = vmatprep.subr.mxu0 0.0
        %2770 = vmatpush1.xpose.msra.mxu0 0.0
        %2771 = vmatprep.subr.mxu0 0.0
        %2772 = vmatpush1.xpose.msra.mxu0 0.0
        %2773 = vmatprep.subr.mxu0 0.0
        %2774 = vmatpush1.xpose.msra.mxu0 0.0
        %2775 = vmatprep.subr.mxu0 0.0
        %2776 = vmatpush1.xpose.msra.mxu0 0.0
        %2777 = vmatprep.subr.mxu0 0.0
        %2778 = vmatpush1.xpose.msra.mxu0 0.0
        %2779 = vmatprep.subr.mxu0 0.0
        %2780 = vmatpush1.xpose.msra.mxu0 0.0
        %2781 = vmatprep.mubr.f32.mxu0 0.0
        %2782 = vmatmul.mubr.f32.gmra.mrb[0].mxu0 %v2713
        %v2783 = vpop.f32.mrb[0].mxu0
        %v2784 = vadd.f32 0.0, %v2783
        %v2785 = vpop.f32.mrb[0].mxu0
        %2786 = vdwg.mxu0
        %2788 = vrot.lane.b32.xlu0 %v2099, 96
        %v2789 = vpop.permute.xlu0 %2788
        %2790 = vrot.lane.b32.xlu0 %v2099, 64
        %v2791 = vpop.permute.xlu0 %2790
        %v2792 = vsel %vm426, %v2789, 0
        %v2794 = vsel %vm426, %v2791, 0
        %2796 = vmatprep.subr.mxu0 0.0
        %2797 = vmatpush1.xpose.msra.mxu0 %v2794
        %2798 = vmatprep.subr.mxu0 0.0
        %2799 = vmatpush1.xpose.msra.mxu0 0.0
        %2800 = vmatprep.subr.mxu0 0.0
        %2801 = vmatpush1.xpose.msra.mxu0 0.0
        %2802 = vmatprep.subr.mxu0 0.0
        %2803 = vmatpush1.xpose.msra.mxu0 0.0
        %2804 = vmatprep.subr.mxu0 0.0
        %2805 = vmatpush1.xpose.msra.mxu0 0.0
        %2806 = vmatprep.subr.mxu0 0.0
        %2807 = vmatpush1.xpose.msra.mxu0 0.0
        %2808 = vmatprep.subr.mxu0 0.0
        %2809 = vmatpush1.xpose.msra.mxu0 0.0
        %2810 = vmatprep.subr.mxu0 0.0
        %2811 = vmatpush1.xpose.msra.mxu0 0.0
        %2812 = vmatprep.subr.mxu0 0.0
        %2813 = vmatpush1.xpose.msra.mxu0 0.0
        %2814 = vmatprep.subr.mxu0 0.0
        %2815 = vmatpush1.xpose.msra.mxu0 0.0
        %2816 = vmatprep.subr.mxu0 0.0
        %2817 = vmatpush1.xpose.msra.mxu0 0.0
        %2818 = vmatprep.subr.mxu0 0.0
        %2819 = vmatpush1.xpose.msra.mxu0 0.0
        %2820 = vmatprep.subr.mxu0 0.0
        %2821 = vmatpush1.xpose.msra.mxu0 0.0
        %2822 = vmatprep.subr.mxu0 0.0
        %2823 = vmatpush1.xpose.msra.mxu0 0.0
        %2824 = vmatprep.subr.mxu0 0.0
        %2825 = vmatpush1.xpose.msra.mxu0 0.0
        %2826 = vmatprep.subr.mxu0 0.0
        %2827 = vmatpush1.xpose.msra.mxu0 0.0
        %2828 = vmatprep.subr.mxu0 0.0
        %2829 = vmatpush1.xpose.msra.mxu0 0.0
        %2830 = vmatprep.subr.mxu0 0.0
        %2831 = vmatpush1.xpose.msra.mxu0 0.0
        %2832 = vmatprep.subr.mxu0 0.0
        %2833 = vmatpush1.xpose.msra.mxu0 0.0
        %2834 = vmatprep.subr.mxu0 0.0
        %2835 = vmatpush1.xpose.msra.mxu0 0.0
        %2836 = vmatprep.subr.mxu0 0.0
        %2837 = vmatpush1.xpose.msra.mxu0 0.0
        %2838 = vmatprep.subr.mxu0 0.0
        %2839 = vmatpush1.xpose.msra.mxu0 0.0
        %2840 = vmatprep.subr.mxu0 0.0
        %2841 = vmatpush1.xpose.msra.mxu0 0.0
        %2842 = vmatprep.subr.mxu0 0.0
        %2843 = vmatpush1.xpose.msra.mxu0 0.0
        %2844 = vmatprep.subr.mxu0 0.0
        %2845 = vmatpush1.xpose.msra.mxu0 0.0
        %2846 = vmatprep.subr.mxu0 0.0
        %2847 = vmatpush1.xpose.msra.mxu0 0.0
        %2848 = vmatprep.subr.mxu0 0.0
        %2849 = vmatpush1.xpose.msra.mxu0 0.0
        %2850 = vmatprep.subr.mxu0 0.0
        %2851 = vmatpush1.xpose.msra.mxu0 0.0
        %2852 = vmatprep.subr.mxu0 0.0
        %2853 = vmatpush1.xpose.msra.mxu0 0.0
        %2854 = vmatprep.subr.mxu0 0.0
        %2855 = vmatpush1.xpose.msra.mxu0 0.0
        %2856 = vmatprep.subr.mxu0 0.0
        %2857 = vmatpush1.xpose.msra.mxu0 0.0
        %2858 = vmatprep.subr.mxu0 0.0
        %2859 = vmatpush1.xpose.msra.mxu0 0.0
        %2860 = vmatprep.mubr.f32.mxu0 0.0
        %2861 = vmatmul.mubr.f32.gmra.mrb[0].mxu0 %v2792
        %v2862 = vpop.f32.mrb[0].mxu0
        %v2863 = vadd.f32 0.0, %v2862
        %v2864 = vpop.f32.mrb[0].mxu0
        %2865 = vdwg.mxu0
        %2867 = vrot.lane.b32.xlu0 %v2100, 96
        %v2868 = vpop.permute.xlu0 %2867
        %2869 = vrot.lane.b32.xlu0 %v2100, 64
        %v2870 = vpop.permute.xlu0 %2869
        %v2871 = vsel %vm426, %v2868, 0
        %v2873 = vsel %vm426, %v2870, 0
        %2875 = vmatprep.subr.mxu0 0.0
        %2876 = vmatpush1.xpose.msra.mxu0 %v2873
        %2877 = vmatprep.subr.mxu0 0.0
        %2878 = vmatpush1.xpose.msra.mxu0 0.0
        %2879 = vmatprep.subr.mxu0 0.0
        %2880 = vmatpush1.xpose.msra.mxu0 0.0
        %2881 = vmatprep.subr.mxu0 0.0
        %2882 = vmatpush1.xpose.msra.mxu0 0.0
        %2883 = vmatprep.subr.mxu0 0.0
        %2884 = vmatpush1.xpose.msra.mxu0 0.0
        %2885 = vmatprep.subr.mxu0 0.0
        %2886 = vmatpush1.xpose.msra.mxu0 0.0
        %2887 = vmatprep.subr.mxu0 0.0
        %2888 = vmatpush1.xpose.msra.mxu0 0.0
        %2889 = vmatprep.subr.mxu0 0.0
        %2890 = vmatpush1.xpose.msra.mxu0 0.0
        %2891 = vmatprep.subr.mxu0 0.0
        %2892 = vmatpush1.xpose.msra.mxu0 0.0
        %2893 = vmatprep.subr.mxu0 0.0
        %2894 = vmatpush1.xpose.msra.mxu0 0.0
        %2895 = vmatprep.subr.mxu0 0.0
        %2896 = vmatpush1.xpose.msra.mxu0 0.0
        %2897 = vmatprep.subr.mxu0 0.0
        %2898 = vmatpush1.xpose.msra.mxu0 0.0
        %2899 = vmatprep.subr.mxu0 0.0
        %2900 = vmatpush1.xpose.msra.mxu0 0.0
        %2901 = vmatprep.subr.mxu0 0.0
        %2902 = vmatpush1.xpose.msra.mxu0 0.0
        %2903 = vmatprep.subr.mxu0 0.0
        %2904 = vmatpush1.xpose.msra.mxu0 0.0
        %2905 = vmatprep.subr.mxu0 0.0
        %2906 = vmatpush1.xpose.msra.mxu0 0.0
        %2907 = vmatprep.subr.mxu0 0.0
        %2908 = vmatpush1.xpose.msra.mxu0 0.0
        %2909 = vmatprep.subr.mxu0 0.0
        %2910 = vmatpush1.xpose.msra.mxu0 0.0
        %2911 = vmatprep.subr.mxu0 0.0
        %2912 = vmatpush1.xpose.msra.mxu0 0.0
        %2913 = vmatprep.subr.mxu0 0.0
        %2914 = vmatpush1.xpose.msra.mxu0 0.0
        %2915 = vmatprep.subr.mxu0 0.0
        %2916 = vmatpush1.xpose.msra.mxu0 0.0
        %2917 = vmatprep.subr.mxu0 0.0
        %2918 = vmatpush1.xpose.msra.mxu0 0.0
        %2919 = vmatprep.subr.mxu0 0.0
        %2920 = vmatpush1.xpose.msra.mxu0 0.0
        %2921 = vmatprep.subr.mxu0 0.0
        %2922 = vmatpush1.xpose.msra.mxu0 0.0
        %2923 = vmatprep.subr.mxu0 0.0
        %2924 = vmatpush1.xpose.msra.mxu0 0.0
        %2925 = vmatprep.subr.mxu0 0.0
        %2926 = vmatpush1.xpose.msra.mxu0 0.0
        %2927 = vmatprep.subr.mxu0 0.0
        %2928 = vmatpush1.xpose.msra.mxu0 0.0
        %2929 = vmatprep.subr.mxu0 0.0
        %2930 = vmatpush1.xpose.msra.mxu0 0.0
        %2931 = vmatprep.subr.mxu0 0.0
        %2932 = vmatpush1.xpose.msra.mxu0 0.0
        %2933 = vmatprep.subr.mxu0 0.0
        %2934 = vmatpush1.xpose.msra.mxu0 0.0
        %2935 = vmatprep.subr.mxu0 0.0
        %2936 = vmatpush1.xpose.msra.mxu0 0.0
        %2937 = vmatprep.subr.mxu0 0.0
        %2938 = vmatpush1.xpose.msra.mxu0 0.0
        %2939 = vmatprep.mubr.f32.mxu0 0.0
        %2940 = vmatmul.mubr.f32.gmra.mrb[0].mxu0 %v2871
        %v2941 = vpop.f32.mrb[0].mxu0
        %v2942 = vadd.f32 0.0, %v2941
        %v2943 = vpop.f32.mrb[0].mxu0
        %2944 = vdwg.mxu0
        %2946 = vrot.lane.b32.xlu0 %v2101, 96
        %v2947 = vpop.permute.xlu0 %2946
        %2948 = vrot.lane.b32.xlu0 %v2101, 64
        %v2949 = vpop.permute.xlu0 %2948
        %v2950 = vsel %vm426, %v2947, 0
        %v2952 = vsel %vm426, %v2949, 0
        %2954 = vmatprep.subr.mxu0 0.0
        %2955 = vmatpush1.xpose.msra.mxu0 %v2952
        %2956 = vmatprep.subr.mxu0 0.0
        %2957 = vmatpush1.xpose.msra.mxu0 0.0
        %2958 = vmatprep.subr.mxu0 0.0
        %2959 = vmatpush1.xpose.msra.mxu0 0.0
        %2960 = vmatprep.subr.mxu0 0.0
        %2961 = vmatpush1.xpose.msra.mxu0 0.0
        %2962 = vmatprep.subr.mxu0 0.0
        %2963 = vmatpush1.xpose.msra.mxu0 0.0
        %2964 = vmatprep.subr.mxu0 0.0
        %2965 = vmatpush1.xpose.msra.mxu0 0.0
        %2966 = vmatprep.subr.mxu0 0.0
        %2967 = vmatpush1.xpose.msra.mxu0 0.0
        %2968 = vmatprep.subr.mxu0 0.0
        %2969 = vmatpush1.xpose.msra.mxu0 0.0
        %2970 = vmatprep.subr.mxu0 0.0
        %2971 = vmatpush1.xpose.msra.mxu0 0.0
        %2972 = vmatprep.subr.mxu0 0.0
        %2973 = vmatpush1.xpose.msra.mxu0 0.0
        %2974 = vmatprep.subr.mxu0 0.0
        %2975 = vmatpush1.xpose.msra.mxu0 0.0
        %2976 = vmatprep.subr.mxu0 0.0
        %2977 = vmatpush1.xpose.msra.mxu0 0.0
        %2978 = vmatprep.subr.mxu0 0.0
        %2979 = vmatpush1.xpose.msra.mxu0 0.0
        %2980 = vmatprep.subr.mxu0 0.0
        %2981 = vmatpush1.xpose.msra.mxu0 0.0
        %2982 = vmatprep.subr.mxu0 0.0
        %2983 = vmatpush1.xpose.msra.mxu0 0.0
        %2984 = vmatprep.subr.mxu0 0.0
        %2985 = vmatpush1.xpose.msra.mxu0 0.0
        %2986 = vmatprep.subr.mxu0 0.0
        %2987 = vmatpush1.xpose.msra.mxu0 0.0
        %2988 = vmatprep.subr.mxu0 0.0
        %2989 = vmatpush1.xpose.msra.mxu0 0.0
        %2990 = vmatprep.subr.mxu0 0.0
        %2991 = vmatpush1.xpose.msra.mxu0 0.0
        %2992 = vmatprep.subr.mxu0 0.0
        %2993 = vmatpush1.xpose.msra.mxu0 0.0
        %2994 = vmatprep.subr.mxu0 0.0
        %2995 = vmatpush1.xpose.msra.mxu0 0.0
        %2996 = vmatprep.subr.mxu0 0.0
        %2997 = vmatpush1.xpose.msra.mxu0 0.0
        %2998 = vmatprep.subr.mxu0 0.0
        %2999 = vmatpush1.xpose.msra.mxu0 0.0
        %3000 = vmatprep.subr.mxu0 0.0
        %3001 = vmatpush1.xpose.msra.mxu0 0.0
        %3002 = vmatprep.subr.mxu0 0.0
        %3003 = vmatpush1.xpose.msra.mxu0 0.0
        %3004 = vmatprep.subr.mxu0 0.0
        %3005 = vmatpush1.xpose.msra.mxu0 0.0
        %3006 = vmatprep.subr.mxu0 0.0
        %3007 = vmatpush1.xpose.msra.mxu0 0.0
        %3008 = vmatprep.subr.mxu0 0.0
        %3009 = vmatpush1.xpose.msra.mxu0 0.0
        %3010 = vmatprep.subr.mxu0 0.0
        %3011 = vmatpush1.xpose.msra.mxu0 0.0
        %3012 = vmatprep.subr.mxu0 0.0
        %3013 = vmatpush1.xpose.msra.mxu0 0.0
        %3014 = vmatprep.subr.mxu0 0.0
        %3015 = vmatpush1.xpose.msra.mxu0 0.0
        %3016 = vmatprep.subr.mxu0 0.0
        %3017 = vmatpush1.xpose.msra.mxu0 0.0
        %3018 = vmatprep.mubr.f32.mxu0 0.0
        %3019 = vmatmul.mubr.f32.gmra.mrb[0].mxu0 %v2950
        %v3020 = vpop.f32.mrb[0].mxu0
        %v3021 = vadd.f32 0.0, %v3020
        %v3022 = vpop.f32.mrb[0].mxu0
        %3023 = vdwg.mxu0
        %3025 = vrot.lane.b32.xlu0 %v2102, 96
        %v3026 = vpop.permute.xlu0 %3025
        %3027 = vrot.lane.b32.xlu0 %v2102, 64
        %v3028 = vpop.permute.xlu0 %3027
        %v3029 = vsel %vm426, %v3026, 0
        %v3031 = vsel %vm426, %v3028, 0
        %3033 = vmatprep.subr.mxu0 0.0
        %3034 = vmatpush1.xpose.msra.mxu0 %v3031
        %3035 = vmatprep.subr.mxu0 0.0
        %3036 = vmatpush1.xpose.msra.mxu0 0.0
        %3037 = vmatprep.subr.mxu0 0.0
        %3038 = vmatpush1.xpose.msra.mxu0 0.0
        %3039 = vmatprep.subr.mxu0 0.0
        %3040 = vmatpush1.xpose.msra.mxu0 0.0
        %3041 = vmatprep.subr.mxu0 0.0
        %3042 = vmatpush1.xpose.msra.mxu0 0.0
        %3043 = vmatprep.subr.mxu0 0.0
        %3044 = vmatpush1.xpose.msra.mxu0 0.0
        %3045 = vmatprep.subr.mxu0 0.0
        %3046 = vmatpush1.xpose.msra.mxu0 0.0
        %3047 = vmatprep.subr.mxu0 0.0
        %3048 = vmatpush1.xpose.msra.mxu0 0.0
        %3049 = vmatprep.subr.mxu0 0.0
        %3050 = vmatpush1.xpose.msra.mxu0 0.0
        %3051 = vmatprep.subr.mxu0 0.0
        %3052 = vmatpush1.xpose.msra.mxu0 0.0
        %3053 = vmatprep.subr.mxu0 0.0
        %3054 = vmatpush1.xpose.msra.mxu0 0.0
        %3055 = vmatprep.subr.mxu0 0.0
        %3056 = vmatpush1.xpose.msra.mxu0 0.0
        %3057 = vmatprep.subr.mxu0 0.0
        %3058 = vmatpush1.xpose.msra.mxu0 0.0
        %3059 = vmatprep.subr.mxu0 0.0
        %3060 = vmatpush1.xpose.msra.mxu0 0.0
        %3061 = vmatprep.subr.mxu0 0.0
        %3062 = vmatpush1.xpose.msra.mxu0 0.0
        %3063 = vmatprep.subr.mxu0 0.0
        %3064 = vmatpush1.xpose.msra.mxu0 0.0
        %3065 = vmatprep.subr.mxu0 0.0
        %3066 = vmatpush1.xpose.msra.mxu0 0.0
        %3067 = vmatprep.subr.mxu0 0.0
        %3068 = vmatpush1.xpose.msra.mxu0 0.0
        %3069 = vmatprep.subr.mxu0 0.0
        %3070 = vmatpush1.xpose.msra.mxu0 0.0
        %3071 = vmatprep.subr.mxu0 0.0
        %3072 = vmatpush1.xpose.msra.mxu0 0.0
        %3073 = vmatprep.subr.mxu0 0.0
        %3074 = vmatpush1.xpose.msra.mxu0 0.0
        %3075 = vmatprep.subr.mxu0 0.0
        %3076 = vmatpush1.xpose.msra.mxu0 0.0
        %3077 = vmatprep.subr.mxu0 0.0
        %3078 = vmatpush1.xpose.msra.mxu0 0.0
        %3079 = vmatprep.subr.mxu0 0.0
        %3080 = vmatpush1.xpose.msra.mxu0 0.0
        %3081 = vmatprep.subr.mxu0 0.0
        %3082 = vmatpush1.xpose.msra.mxu0 0.0
        %3083 = vmatprep.subr.mxu0 0.0
        %3084 = vmatpush1.xpose.msra.mxu0 0.0
        %3085 = vmatprep.subr.mxu0 0.0
        %3086 = vmatpush1.xpose.msra.mxu0 0.0
        %3087 = vmatprep.subr.mxu0 0.0
        %3088 = vmatpush1.xpose.msra.mxu0 0.0
        %3089 = vmatprep.subr.mxu0 0.0
        %3090 = vmatpush1.xpose.msra.mxu0 0.0
        %3091 = vmatprep.subr.mxu0 0.0
        %3092 = vmatpush1.xpose.msra.mxu0 0.0
        %3093 = vmatprep.subr.mxu0 0.0
        %3094 = vmatpush1.xpose.msra.mxu0 0.0
        %3095 = vmatprep.subr.mxu0 0.0
        %3096 = vmatpush1.xpose.msra.mxu0 0.0
        %3097 = vmatprep.mubr.f32.mxu0 0.0
        %3098 = vmatmul.mubr.f32.gmra.mrb[0].mxu0 %v3029
        %v3099 = vpop.f32.mrb[0].mxu0
        %v3100 = vadd.f32 0.0, %v3099
        %v3101 = vpop.f32.mrb[0].mxu0
        %3102 = vdwg.mxu0
        %3104 = vrot.lane.b32.xlu0 %v2103, 96
        %v3105 = vpop.permute.xlu0 %3104
        %3106 = vrot.lane.b32.xlu0 %v2103, 64
        %v3107 = vpop.permute.xlu0 %3106
        %v3108 = vsel %vm426, %v3105, 0
        %v3110 = vsel %vm426, %v3107, 0
        %3112 = vmatprep.subr.mxu0 0.0
        %3113 = vmatpush1.xpose.msra.mxu0 %v3110
        %3114 = vmatprep.subr.mxu0 0.0
        %3115 = vmatpush1.xpose.msra.mxu0 0.0
        %3116 = vmatprep.subr.mxu0 0.0
        %3117 = vmatpush1.xpose.msra.mxu0 0.0
        %3118 = vmatprep.subr.mxu0 0.0
        %3119 = vmatpush1.xpose.msra.mxu0 0.0
        %3120 = vmatprep.subr.mxu0 0.0
        %3121 = vmatpush1.xpose.msra.mxu0 0.0
        %3122 = vmatprep.subr.mxu0 0.0
        %3123 = vmatpush1.xpose.msra.mxu0 0.0
        %3124 = vmatprep.subr.mxu0 0.0
        %3125 = vmatpush1.xpose.msra.mxu0 0.0
        %3126 = vmatprep.subr.mxu0 0.0
        %3127 = vmatpush1.xpose.msra.mxu0 0.0
        %3128 = vmatprep.subr.mxu0 0.0
        %3129 = vmatpush1.xpose.msra.mxu0 0.0
        %3130 = vmatprep.subr.mxu0 0.0
        %3131 = vmatpush1.xpose.msra.mxu0 0.0
        %3132 = vmatprep.subr.mxu0 0.0
        %3133 = vmatpush1.xpose.msra.mxu0 0.0
        %3134 = vmatprep.subr.mxu0 0.0
        %3135 = vmatpush1.xpose.msra.mxu0 0.0
        %3136 = vmatprep.subr.mxu0 0.0
        %3137 = vmatpush1.xpose.msra.mxu0 0.0
        %3138 = vmatprep.subr.mxu0 0.0
        %3139 = vmatpush1.xpose.msra.mxu0 0.0
        %3140 = vmatprep.subr.mxu0 0.0
        %3141 = vmatpush1.xpose.msra.mxu0 0.0
        %3142 = vmatprep.subr.mxu0 0.0
        %3143 = vmatpush1.xpose.msra.mxu0 0.0
        %3144 = vmatprep.subr.mxu0 0.0
        %3145 = vmatpush1.xpose.msra.mxu0 0.0
        %3146 = vmatprep.subr.mxu0 0.0
        %3147 = vmatpush1.xpose.msra.mxu0 0.0
        %3148 = vmatprep.subr.mxu0 0.0
        %3149 = vmatpush1.xpose.msra.mxu0 0.0
        %3150 = vmatprep.subr.mxu0 0.0
        %3151 = vmatpush1.xpose.msra.mxu0 0.0
        %3152 = vmatprep.subr.mxu0 0.0
        %3153 = vmatpush1.xpose.msra.mxu0 0.0
        %3154 = vmatprep.subr.mxu0 0.0
        %3155 = vmatpush1.xpose.msra.mxu0 0.0
        %3156 = vmatprep.subr.mxu0 0.0
        %3157 = vmatpush1.xpose.msra.mxu0 0.0
        %3158 = vmatprep.subr.mxu0 0.0
        %3159 = vmatpush1.xpose.msra.mxu0 0.0
        %3160 = vmatprep.subr.mxu0 0.0
        %3161 = vmatpush1.xpose.msra.mxu0 0.0
        %3162 = vmatprep.subr.mxu0 0.0
        %3163 = vmatpush1.xpose.msra.mxu0 0.0
        %3164 = vmatprep.subr.mxu0 0.0
        %3165 = vmatpush1.xpose.msra.mxu0 0.0
        %3166 = vmatprep.subr.mxu0 0.0
        %3167 = vmatpush1.xpose.msra.mxu0 0.0
        %3168 = vmatprep.subr.mxu0 0.0
        %3169 = vmatpush1.xpose.msra.mxu0 0.0
        %3170 = vmatprep.subr.mxu0 0.0
        %3171 = vmatpush1.xpose.msra.mxu0 0.0
        %3172 = vmatprep.subr.mxu0 0.0
        %3173 = vmatpush1.xpose.msra.mxu0 0.0
        %3174 = vmatprep.subr.mxu0 0.0
        %3175 = vmatpush1.xpose.msra.mxu0 0.0
        %3176 = vmatprep.mubr.f32.mxu0 0.0
        %3177 = vmatmul.mubr.f32.gmra.mrb[0].mxu0 %v3108
        %v3178 = vpop.f32.mrb[0].mxu0
        %v3179 = vadd.f32 0.0, %v3178
        %v3180 = vpop.f32.mrb[0].mxu0
        %3181 = vdwg.mxu0
        %3183 = vrot.lane.b32.xlu0 %v2104, 96
        %v3184 = vpop.permute.xlu0 %3183
        %3185 = vrot.lane.b32.xlu0 %v2104, 64
        %v3186 = vpop.permute.xlu0 %3185
        %v3187 = vsel %vm426, %v3184, 0
        %v3189 = vsel %vm426, %v3186, 0
        %3191 = vmatprep.subr.mxu0 0.0
        %3192 = vmatpush1.xpose.msra.mxu0 %v3189
        %3193 = vmatprep.subr.mxu0 0.0
        %3194 = vmatpush1.xpose.msra.mxu0 0.0
        %3195 = vmatprep.subr.mxu0 0.0
        %3196 = vmatpush1.xpose.msra.mxu0 0.0
        %3197 = vmatprep.subr.mxu0 0.0
        %3198 = vmatpush1.xpose.msra.mxu0 0.0
        %3199 = vmatprep.subr.mxu0 0.0
        %3200 = vmatpush1.xpose.msra.mxu0 0.0
        %3201 = vmatprep.subr.mxu0 0.0
        %3202 = vmatpush1.xpose.msra.mxu0 0.0
        %3203 = vmatprep.subr.mxu0 0.0
        %3204 = vmatpush1.xpose.msra.mxu0 0.0
        %3205 = vmatprep.subr.mxu0 0.0
        %3206 = vmatpush1.xpose.msra.mxu0 0.0
        %3207 = vmatprep.subr.mxu0 0.0
        %3208 = vmatpush1.xpose.msra.mxu0 0.0
        %3209 = vmatprep.subr.mxu0 0.0
        %3210 = vmatpush1.xpose.msra.mxu0 0.0
        %3211 = vmatprep.subr.mxu0 0.0
        %3212 = vmatpush1.xpose.msra.mxu0 0.0
        %3213 = vmatprep.subr.mxu0 0.0
        %3214 = vmatpush1.xpose.msra.mxu0 0.0
        %3215 = vmatprep.subr.mxu0 0.0
        %3216 = vmatpush1.xpose.msra.mxu0 0.0
        %3217 = vmatprep.subr.mxu0 0.0
        %3218 = vmatpush1.xpose.msra.mxu0 0.0
        %3219 = vmatprep.subr.mxu0 0.0
        %3220 = vmatpush1.xpose.msra.mxu0 0.0
        %3221 = vmatprep.subr.mxu0 0.0
        %3222 = vmatpush1.xpose.msra.mxu0 0.0
        %3223 = vmatprep.subr.mxu0 0.0
        %3224 = vmatpush1.xpose.msra.mxu0 0.0
        %3225 = vmatprep.subr.mxu0 0.0
        %3226 = vmatpush1.xpose.msra.mxu0 0.0
        %3227 = vmatprep.subr.mxu0 0.0
        %3228 = vmatpush1.xpose.msra.mxu0 0.0
        %3229 = vmatprep.subr.mxu0 0.0
        %3230 = vmatpush1.xpose.msra.mxu0 0.0
        %3231 = vmatprep.subr.mxu0 0.0
        %3232 = vmatpush1.xpose.msra.mxu0 0.0
        %3233 = vmatprep.subr.mxu0 0.0
        %3234 = vmatpush1.xpose.msra.mxu0 0.0
        %3235 = vmatprep.subr.mxu0 0.0
        %3236 = vmatpush1.xpose.msra.mxu0 0.0
        %3237 = vmatprep.subr.mxu0 0.0
        %3238 = vmatpush1.xpose.msra.mxu0 0.0
        %3239 = vmatprep.subr.mxu0 0.0
        %3240 = vmatpush1.xpose.msra.mxu0 0.0
        %3241 = vmatprep.subr.mxu0 0.0
        %3242 = vmatpush1.xpose.msra.mxu0 0.0
        %3243 = vmatprep.subr.mxu0 0.0
        %3244 = vmatpush1.xpose.msra.mxu0 0.0
        %3245 = vmatprep.subr.mxu0 0.0
        %3246 = vmatpush1.xpose.msra.mxu0 0.0
        %3247 = vmatprep.subr.mxu0 0.0
        %3248 = vmatpush1.xpose.msra.mxu0 0.0
        %3249 = vmatprep.subr.mxu0 0.0
        %3250 = vmatpush1.xpose.msra.mxu0 0.0
        %3251 = vmatprep.subr.mxu0 0.0
        %3252 = vmatpush1.xpose.msra.mxu0 0.0
        %3253 = vmatprep.subr.mxu0 0.0
        %3254 = vmatpush1.xpose.msra.mxu0 0.0
        %3255 = vmatprep.mubr.f32.mxu0 0.0
        %3256 = vmatmul.mubr.f32.gmra.mrb[0].mxu0 %v3187
        %v3257 = vpop.f32.mrb[0].mxu0
        %v3258 = vadd.f32 0.0, %v3257
        %v3259 = vpop.f32.mrb[0].mxu0
        %3260 = vdwg.mxu0
        %3262 = vrot.lane.b32.xlu0 %v2105, 96
        %v3263 = vpop.permute.xlu0 %3262
        %3264 = vrot.lane.b32.xlu0 %v2105, 64
        %v3265 = vpop.permute.xlu0 %3264
        %v3266 = vsel %vm426, %v3263, 0
        %v3268 = vsel %vm426, %v3265, 0
        %3270 = vmatprep.subr.mxu0 0.0
        %3271 = vmatpush1.xpose.msra.mxu0 %v3268
        %3272 = vmatprep.subr.mxu0 0.0
        %3273 = vmatpush1.xpose.msra.mxu0 0.0
        %3274 = vmatprep.subr.mxu0 0.0
        %3275 = vmatpush1.xpose.msra.mxu0 0.0
        %3276 = vmatprep.subr.mxu0 0.0
        %3277 = vmatpush1.xpose.msra.mxu0 0.0
        %3278 = vmatprep.subr.mxu0 0.0
        %3279 = vmatpush1.xpose.msra.mxu0 0.0
        %3280 = vmatprep.subr.mxu0 0.0
        %3281 = vmatpush1.xpose.msra.mxu0 0.0
        %3282 = vmatprep.subr.mxu0 0.0
        %3283 = vmatpush1.xpose.msra.mxu0 0.0
        %3284 = vmatprep.subr.mxu0 0.0
        %3285 = vmatpush1.xpose.msra.mxu0 0.0
        %3286 = vmatprep.subr.mxu0 0.0
        %3287 = vmatpush1.xpose.msra.mxu0 0.0
        %3288 = vmatprep.subr.mxu0 0.0
        %3289 = vmatpush1.xpose.msra.mxu0 0.0
        %3290 = vmatprep.subr.mxu0 0.0
        %3291 = vmatpush1.xpose.msra.mxu0 0.0
        %3292 = vmatprep.subr.mxu0 0.0
        %3293 = vmatpush1.xpose.msra.mxu0 0.0
        %3294 = vmatprep.subr.mxu0 0.0
        %3295 = vmatpush1.xpose.msra.mxu0 0.0
        %3296 = vmatprep.subr.mxu0 0.0
        %3297 = vmatpush1.xpose.msra.mxu0 0.0
        %3298 = vmatprep.subr.mxu0 0.0
        %3299 = vmatpush1.xpose.msra.mxu0 0.0
        %3300 = vmatprep.subr.mxu0 0.0
        %3301 = vmatpush1.xpose.msra.mxu0 0.0
        %3302 = vmatprep.subr.mxu0 0.0
        %3303 = vmatpush1.xpose.msra.mxu0 0.0
        %3304 = vmatprep.subr.mxu0 0.0
        %3305 = vmatpush1.xpose.msra.mxu0 0.0
        %3306 = vmatprep.subr.mxu0 0.0
        %3307 = vmatpush1.xpose.msra.mxu0 0.0
        %3308 = vmatprep.subr.mxu0 0.0
        %3309 = vmatpush1.xpose.msra.mxu0 0.0
        %3310 = vmatprep.subr.mxu0 0.0
        %3311 = vmatpush1.xpose.msra.mxu0 0.0
        %3312 = vmatprep.subr.mxu0 0.0
        %3313 = vmatpush1.xpose.msra.mxu0 0.0
        %3314 = vmatprep.subr.mxu0 0.0
        %3315 = vmatpush1.xpose.msra.mxu0 0.0
        %3316 = vmatprep.subr.mxu0 0.0
        %3317 = vmatpush1.xpose.msra.mxu0 0.0
        %3318 = vmatprep.subr.mxu0 0.0
        %3319 = vmatpush1.xpose.msra.mxu0 0.0
        %3320 = vmatprep.subr.mxu0 0.0
        %3321 = vmatpush1.xpose.msra.mxu0 0.0
        %3322 = vmatprep.subr.mxu0 0.0
        %3323 = vmatpush1.xpose.msra.mxu0 0.0
        %3324 = vmatprep.subr.mxu0 0.0
        %3325 = vmatpush1.xpose.msra.mxu0 0.0
        %3326 = vmatprep.subr.mxu0 0.0
        %3327 = vmatpush1.xpose.msra.mxu0 0.0
        %3328 = vmatprep.subr.mxu0 0.0
        %3329 = vmatpush1.xpose.msra.mxu0 0.0
        %3330 = vmatprep.subr.mxu0 0.0
        %3331 = vmatpush1.xpose.msra.mxu0 0.0
        %3332 = vmatprep.subr.mxu0 0.0
        %3333 = vmatpush1.xpose.msra.mxu0 0.0
        %3334 = vmatprep.mubr.f32.mxu0 0.0
        %3335 = vmatmul.mubr.f32.gmra.mrb[0].mxu0 %v3266
        %v3336 = vpop.f32.mrb[0].mxu0
        %v3337 = vadd.f32 0.0, %v3336
        %v3338 = vpop.f32.mrb[0].mxu0
        %3339 = vdwg.mxu0
        %3341 = vrot.lane.b32.xlu0 %v2106, 96
        %v3342 = vpop.permute.xlu0 %3341
        %3343 = vrot.lane.b32.xlu0 %v2106, 64
        %v3344 = vpop.permute.xlu0 %3343
        %v3345 = vsel %vm426, %v3342, 0
        %v3347 = vsel %vm426, %v3344, 0
        %3349 = vmatprep.subr.mxu0 0.0
        %3350 = vmatpush1.xpose.msra.mxu0 %v3347
        %3351 = vmatprep.subr.mxu0 0.0
        %3352 = vmatpush1.xpose.msra.mxu0 0.0
        %3353 = vmatprep.subr.mxu0 0.0
        %3354 = vmatpush1.xpose.msra.mxu0 0.0
        %3355 = vmatprep.subr.mxu0 0.0
        %3356 = vmatpush1.xpose.msra.mxu0 0.0
        %3357 = vmatprep.subr.mxu0 0.0
        %3358 = vmatpush1.xpose.msra.mxu0 0.0
        %3359 = vmatprep.subr.mxu0 0.0
        %3360 = vmatpush1.xpose.msra.mxu0 0.0
        %3361 = vmatprep.subr.mxu0 0.0
        %3362 = vmatpush1.xpose.msra.mxu0 0.0
        %3363 = vmatprep.subr.mxu0 0.0
        %3364 = vmatpush1.xpose.msra.mxu0 0.0
        %3365 = vmatprep.subr.mxu0 0.0
        %3366 = vmatpush1.xpose.msra.mxu0 0.0
        %3367 = vmatprep.subr.mxu0 0.0
        %3368 = vmatpush1.xpose.msra.mxu0 0.0
        %3369 = vmatprep.subr.mxu0 0.0
        %3370 = vmatpush1.xpose.msra.mxu0 0.0
        %3371 = vmatprep.subr.mxu0 0.0
        %3372 = vmatpush1.xpose.msra.mxu0 0.0
        %3373 = vmatprep.subr.mxu0 0.0
        %3374 = vmatpush1.xpose.msra.mxu0 0.0
        %3375 = vmatprep.subr.mxu0 0.0
        %3376 = vmatpush1.xpose.msra.mxu0 0.0
        %3377 = vmatprep.subr.mxu0 0.0
        %3378 = vmatpush1.xpose.msra.mxu0 0.0
        %3379 = vmatprep.subr.mxu0 0.0
        %3380 = vmatpush1.xpose.msra.mxu0 0.0
        %3381 = vmatprep.subr.mxu0 0.0
        %3382 = vmatpush1.xpose.msra.mxu0 0.0
        %3383 = vmatprep.subr.mxu0 0.0
        %3384 = vmatpush1.xpose.msra.mxu0 0.0
        %3385 = vmatprep.subr.mxu0 0.0
        %3386 = vmatpush1.xpose.msra.mxu0 0.0
        %3387 = vmatprep.subr.mxu0 0.0
        %3388 = vmatpush1.xpose.msra.mxu0 0.0
        %3389 = vmatprep.subr.mxu0 0.0
        %3390 = vmatpush1.xpose.msra.mxu0 0.0
        %3391 = vmatprep.subr.mxu0 0.0
        %3392 = vmatpush1.xpose.msra.mxu0 0.0
        %3393 = vmatprep.subr.mxu0 0.0
        %3394 = vmatpush1.xpose.msra.mxu0 0.0
        %3395 = vmatprep.subr.mxu0 0.0
        %3396 = vmatpush1.xpose.msra.mxu0 0.0
        %3397 = vmatprep.subr.mxu0 0.0
        %3398 = vmatpush1.xpose.msra.mxu0 0.0
        %3399 = vmatprep.subr.mxu0 0.0
        %3400 = vmatpush1.xpose.msra.mxu0 0.0
        %3401 = vmatprep.subr.mxu0 0.0
        %3402 = vmatpush1.xpose.msra.mxu0 0.0
        %3403 = vmatprep.subr.mxu0 0.0
        %3404 = vmatpush1.xpose.msra.mxu0 0.0
        %3405 = vmatprep.subr.mxu0 0.0
        %3406 = vmatpush1.xpose.msra.mxu0 0.0
        %3407 = vmatprep.subr.mxu0 0.0
        %3408 = vmatpush1.xpose.msra.mxu0 0.0
        %3409 = vmatprep.subr.mxu0 0.0
        %3410 = vmatpush1.xpose.msra.mxu0 0.0
        %3411 = vmatprep.subr.mxu0 0.0
        %3412 = vmatpush1.xpose.msra.mxu0 0.0
        %3413 = vmatprep.mubr.f32.mxu0 0.0
        %3414 = vmatmul.mubr.f32.gmra.mrb[0].mxu0 %v3345
        %v3415 = vpop.f32.mrb[0].mxu0
        %v3416 = vadd.f32 0.0, %v3415
        %v3417 = vpop.f32.mrb[0].mxu0
        %3418 = vdwg.mxu0
        %3420 = vrot.lane.b32.xlu0 %v2107, 96
        %v3421 = vpop.permute.xlu0 %3420
        %3422 = vrot.lane.b32.xlu0 %v2107, 64
        %v3423 = vpop.permute.xlu0 %3422
        %v3424 = vsel %vm426, %v3421, 0
        %v3426 = vsel %vm426, %v3423, 0
        %3428 = vmatprep.subr.mxu0 0.0
        %3429 = vmatpush1.xpose.msra.mxu0 %v3426
        %3430 = vmatprep.subr.mxu0 0.0
        %3431 = vmatpush1.xpose.msra.mxu0 0.0
        %3432 = vmatprep.subr.mxu0 0.0
        %3433 = vmatpush1.xpose.msra.mxu0 0.0
        %3434 = vmatprep.subr.mxu0 0.0
        %3435 = vmatpush1.xpose.msra.mxu0 0.0
        %3436 = vmatprep.subr.mxu0 0.0
        %3437 = vmatpush1.xpose.msra.mxu0 0.0
        %3438 = vmatprep.subr.mxu0 0.0
        %3439 = vmatpush1.xpose.msra.mxu0 0.0
        %3440 = vmatprep.subr.mxu0 0.0
        %3441 = vmatpush1.xpose.msra.mxu0 0.0
        %3442 = vmatprep.subr.mxu0 0.0
        %3443 = vmatpush1.xpose.msra.mxu0 0.0
        %3444 = vmatprep.subr.mxu0 0.0
        %3445 = vmatpush1.xpose.msra.mxu0 0.0
        %3446 = vmatprep.subr.mxu0 0.0
        %3447 = vmatpush1.xpose.msra.mxu0 0.0
        %3448 = vmatprep.subr.mxu0 0.0
        %3449 = vmatpush1.xpose.msra.mxu0 0.0
        %3450 = vmatprep.subr.mxu0 0.0
        %3451 = vmatpush1.xpose.msra.mxu0 0.0
        %3452 = vmatprep.subr.mxu0 0.0
        %3453 = vmatpush1.xpose.msra.mxu0 0.0
        %3454 = vmatprep.subr.mxu0 0.0
        %3455 = vmatpush1.xpose.msra.mxu0 0.0
        %3456 = vmatprep.subr.mxu0 0.0
        %3457 = vmatpush1.xpose.msra.mxu0 0.0
        %3458 = vmatprep.subr.mxu0 0.0
        %3459 = vmatpush1.xpose.msra.mxu0 0.0
        %3460 = vmatprep.subr.mxu0 0.0
        %3461 = vmatpush1.xpose.msra.mxu0 0.0
        %3462 = vmatprep.subr.mxu0 0.0
        %3463 = vmatpush1.xpose.msra.mxu0 0.0
        %3464 = vmatprep.subr.mxu0 0.0
        %3465 = vmatpush1.xpose.msra.mxu0 0.0
        %3466 = vmatprep.subr.mxu0 0.0
        %3467 = vmatpush1.xpose.msra.mxu0 0.0
        %3468 = vmatprep.subr.mxu0 0.0
        %3469 = vmatpush1.xpose.msra.mxu0 0.0
        %3470 = vmatprep.subr.mxu0 0.0
        %3471 = vmatpush1.xpose.msra.mxu0 0.0
        %3472 = vmatprep.subr.mxu0 0.0
        %3473 = vmatpush1.xpose.msra.mxu0 0.0
        %3474 = vmatprep.subr.mxu0 0.0
        %3475 = vmatpush1.xpose.msra.mxu0 0.0
        %3476 = vmatprep.subr.mxu0 0.0
        %3477 = vmatpush1.xpose.msra.mxu0 0.0
        %3478 = vmatprep.subr.mxu0 0.0
        %3479 = vmatpush1.xpose.msra.mxu0 0.0
        %3480 = vmatprep.subr.mxu0 0.0
        %3481 = vmatpush1.xpose.msra.mxu0 0.0
        %3482 = vmatprep.subr.mxu0 0.0
        %3483 = vmatpush1.xpose.msra.mxu0 0.0
        %3484 = vmatprep.subr.mxu0 0.0
        %3485 = vmatpush1.xpose.msra.mxu0 0.0
        %3486 = vmatprep.subr.mxu0 0.0
        %3487 = vmatpush1.xpose.msra.mxu0 0.0
        %3488 = vmatprep.subr.mxu0 0.0
        %3489 = vmatpush1.xpose.msra.mxu0 0.0
        %3490 = vmatprep.subr.mxu0 0.0
        %3491 = vmatpush1.xpose.msra.mxu0 0.0
        %3492 = vmatprep.mubr.f32.mxu0 0.0
        %3493 = vmatmul.mubr.f32.gmra.mrb[0].mxu0 %v3424
        %v3494 = vpop.f32.mrb[0].mxu0
        %v3495 = vadd.f32 0.0, %v3494
        %v3496 = vpop.f32.mrb[0].mxu0
        %3497 = vdwg.mxu0
        %3499 = vrot.lane.b32.xlu0 %v2108, 96
        %v3500 = vpop.permute.xlu0 %3499
        %3501 = vrot.lane.b32.xlu0 %v2108, 64
        %v3502 = vpop.permute.xlu0 %3501
        %v3503 = vsel %vm426, %v3500, 0
        %v3505 = vsel %vm426, %v3502, 0
        %3507 = vmatprep.subr.mxu0 0.0
        %3508 = vmatpush1.xpose.msra.mxu0 %v3505
        %3509 = vmatprep.subr.mxu0 0.0
        %3510 = vmatpush1.xpose.msra.mxu0 0.0
        %3511 = vmatprep.subr.mxu0 0.0
        %3512 = vmatpush1.xpose.msra.mxu0 0.0
        %3513 = vmatprep.subr.mxu0 0.0
        %3514 = vmatpush1.xpose.msra.mxu0 0.0
        %3515 = vmatprep.subr.mxu0 0.0
        %3516 = vmatpush1.xpose.msra.mxu0 0.0
        %3517 = vmatprep.subr.mxu0 0.0
        %3518 = vmatpush1.xpose.msra.mxu0 0.0
        %3519 = vmatprep.subr.mxu0 0.0
        %3520 = vmatpush1.xpose.msra.mxu0 0.0
        %3521 = vmatprep.subr.mxu0 0.0
        %3522 = vmatpush1.xpose.msra.mxu0 0.0
        %3523 = vmatprep.subr.mxu0 0.0
        %3524 = vmatpush1.xpose.msra.mxu0 0.0
        %3525 = vmatprep.subr.mxu0 0.0
        %3526 = vmatpush1.xpose.msra.mxu0 0.0
        %3527 = vmatprep.subr.mxu0 0.0
        %3528 = vmatpush1.xpose.msra.mxu0 0.0
        %3529 = vmatprep.subr.mxu0 0.0
        %3530 = vmatpush1.xpose.msra.mxu0 0.0
        %3531 = vmatprep.subr.mxu0 0.0
        %3532 = vmatpush1.xpose.msra.mxu0 0.0
        %3533 = vmatprep.subr.mxu0 0.0
        %3534 = vmatpush1.xpose.msra.mxu0 0.0
        %3535 = vmatprep.subr.mxu0 0.0
        %3536 = vmatpush1.xpose.msra.mxu0 0.0
        %3537 = vmatprep.subr.mxu0 0.0
        %3538 = vmatpush1.xpose.msra.mxu0 0.0
        %3539 = vmatprep.subr.mxu0 0.0
        %3540 = vmatpush1.xpose.msra.mxu0 0.0
        %3541 = vmatprep.subr.mxu0 0.0
        %3542 = vmatpush1.xpose.msra.mxu0 0.0
        %3543 = vmatprep.subr.mxu0 0.0
        %3544 = vmatpush1.xpose.msra.mxu0 0.0
        %3545 = vmatprep.subr.mxu0 0.0
        %3546 = vmatpush1.xpose.msra.mxu0 0.0
        %3547 = vmatprep.subr.mxu0 0.0
        %3548 = vmatpush1.xpose.msra.mxu0 0.0
        %3549 = vmatprep.subr.mxu0 0.0
        %3550 = vmatpush1.xpose.msra.mxu0 0.0
        %3551 = vmatprep.subr.mxu0 0.0
        %3552 = vmatpush1.xpose.msra.mxu0 0.0
        %3553 = vmatprep.subr.mxu0 0.0
        %3554 = vmatpush1.xpose.msra.mxu0 0.0
        %3555 = vmatprep.subr.mxu0 0.0
        %3556 = vmatpush1.xpose.msra.mxu0 0.0
        %3557 = vmatprep.subr.mxu0 0.0
        %3558 = vmatpush1.xpose.msra.mxu0 0.0
        %3559 = vmatprep.subr.mxu0 0.0
        %3560 = vmatpush1.xpose.msra.mxu0 0.0
        %3561 = vmatprep.subr.mxu0 0.0
        %3562 = vmatpush1.xpose.msra.mxu0 0.0
        %3563 = vmatprep.subr.mxu0 0.0
        %3564 = vmatpush1.xpose.msra.mxu0 0.0
        %3565 = vmatprep.subr.mxu0 0.0
        %3566 = vmatpush1.xpose.msra.mxu0 0.0
        %3567 = vmatprep.subr.mxu0 0.0
        %3568 = vmatpush1.xpose.msra.mxu0 0.0
        %3569 = vmatprep.subr.mxu0 0.0
        %3570 = vmatpush1.xpose.msra.mxu0 0.0
        %3571 = vmatprep.mubr.f32.mxu0 0.0
        %3572 = vmatmul.mubr.f32.gmra.mrb[0].mxu0 %v3503
        %v3573 = vpop.f32.mrb[0].mxu0
        %v3574 = vadd.f32 0.0, %v3573
        %v3575 = vpop.f32.mrb[0].mxu0
        %3576 = vdwg.mxu0
        %3578 = vrot.lane.b32.xlu0 %v2109, 96
        %v3579 = vpop.permute.xlu0 %3578
        %3580 = vrot.lane.b32.xlu0 %v2109, 64
        %v3581 = vpop.permute.xlu0 %3580
        %v3582 = vsel %vm426, %v3579, 0
        %v3584 = vsel %vm426, %v3581, 0
        %3586 = vmatprep.subr.mxu0 0.0
        %3587 = vmatpush1.xpose.msra.mxu0 %v3584
        %3588 = vmatprep.subr.mxu0 0.0
        %3589 = vmatpush1.xpose.msra.mxu0 0.0
        %3590 = vmatprep.subr.mxu0 0.0
        %3591 = vmatpush1.xpose.msra.mxu0 0.0
        %3592 = vmatprep.subr.mxu0 0.0
        %3593 = vmatpush1.xpose.msra.mxu0 0.0
        %3594 = vmatprep.subr.mxu0 0.0
        %3595 = vmatpush1.xpose.msra.mxu0 0.0
        %3596 = vmatprep.subr.mxu0 0.0
        %3597 = vmatpush1.xpose.msra.mxu0 0.0
        %3598 = vmatprep.subr.mxu0 0.0
        %3599 = vmatpush1.xpose.msra.mxu0 0.0
        %3600 = vmatprep.subr.mxu0 0.0
        %3601 = vmatpush1.xpose.msra.mxu0 0.0
        %3602 = vmatprep.subr.mxu0 0.0
        %3603 = vmatpush1.xpose.msra.mxu0 0.0
        %3604 = vmatprep.subr.mxu0 0.0
        %3605 = vmatpush1.xpose.msra.mxu0 0.0
        %3606 = vmatprep.subr.mxu0 0.0
        %3607 = vmatpush1.xpose.msra.mxu0 0.0
        %3608 = vmatprep.subr.mxu0 0.0
        %3609 = vmatpush1.xpose.msra.mxu0 0.0
        %3610 = vmatprep.subr.mxu0 0.0
        %3611 = vmatpush1.xpose.msra.mxu0 0.0
        %3612 = vmatprep.subr.mxu0 0.0
        %3613 = vmatpush1.xpose.msra.mxu0 0.0
        %3614 = vmatprep.subr.mxu0 0.0
        %3615 = vmatpush1.xpose.msra.mxu0 0.0
        %3616 = vmatprep.subr.mxu0 0.0
        %3617 = vmatpush1.xpose.msra.mxu0 0.0
        %3618 = vmatprep.subr.mxu0 0.0
        %3619 = vmatpush1.xpose.msra.mxu0 0.0
        %3620 = vmatprep.subr.mxu0 0.0
        %3621 = vmatpush1.xpose.msra.mxu0 0.0
        %3622 = vmatprep.subr.mxu0 0.0
        %3623 = vmatpush1.xpose.msra.mxu0 0.0
        %3624 = vmatprep.subr.mxu0 0.0
        %3625 = vmatpush1.xpose.msra.mxu0 0.0
        %3626 = vmatprep.subr.mxu0 0.0
        %3627 = vmatpush1.xpose.msra.mxu0 0.0
        %3628 = vmatprep.subr.mxu0 0.0
        %3629 = vmatpush1.xpose.msra.mxu0 0.0
        %3630 = vmatprep.subr.mxu0 0.0
        %3631 = vmatpush1.xpose.msra.mxu0 0.0
        %3632 = vmatprep.subr.mxu0 0.0
        %3633 = vmatpush1.xpose.msra.mxu0 0.0
        %3634 = vmatprep.subr.mxu0 0.0
        %3635 = vmatpush1.xpose.msra.mxu0 0.0
        %3636 = vmatprep.subr.mxu0 0.0
        %3637 = vmatpush1.xpose.msra.mxu0 0.0
        %3638 = vmatprep.subr.mxu0 0.0
        %3639 = vmatpush1.xpose.msra.mxu0 0.0
        %3640 = vmatprep.subr.mxu0 0.0
        %3641 = vmatpush1.xpose.msra.mxu0 0.0
        %3642 = vmatprep.subr.mxu0 0.0
        %3643 = vmatpush1.xpose.msra.mxu0 0.0
        %3644 = vmatprep.subr.mxu0 0.0
        %3645 = vmatpush1.xpose.msra.mxu0 0.0
        %3646 = vmatprep.subr.mxu0 0.0
        %3647 = vmatpush1.xpose.msra.mxu0 0.0
        %3648 = vmatprep.subr.mxu0 0.0
        %3649 = vmatpush1.xpose.msra.mxu0 0.0
        %3650 = vmatprep.mubr.f32.mxu0 0.0
        %3651 = vmatmul.mubr.f32.gmra.mrb[0].mxu0 %v3582
        %v3652 = vpop.f32.mrb[0].mxu0
        %v3653 = vadd.f32 0.0, %v3652
        %v3654 = vpop.f32.mrb[0].mxu0
        %3655 = vdwg.mxu0
        %3657 = vrot.lane.b32.xlu0 %v2110, 96
        %v3658 = vpop.permute.xlu0 %3657
        %3659 = vrot.lane.b32.xlu0 %v2110, 64
        %v3660 = vpop.permute.xlu0 %3659
        %v3661 = vsel %vm426, %v3658, 0
        %v3663 = vsel %vm426, %v3660, 0
        %3665 = vmatprep.subr.mxu0 0.0
        %3666 = vmatpush1.xpose.msra.mxu0 %v3663
        %3667 = vmatprep.subr.mxu0 0.0
        %3668 = vmatpush1.xpose.msra.mxu0 0.0
        %3669 = vmatprep.subr.mxu0 0.0
        %3670 = vmatpush1.xpose.msra.mxu0 0.0
        %3671 = vmatprep.subr.mxu0 0.0
        %3672 = vmatpush1.xpose.msra.mxu0 0.0
        %3673 = vmatprep.subr.mxu0 0.0
        %3674 = vmatpush1.xpose.msra.mxu0 0.0
        %3675 = vmatprep.subr.mxu0 0.0
        %3676 = vmatpush1.xpose.msra.mxu0 0.0
        %3677 = vmatprep.subr.mxu0 0.0
        %3678 = vmatpush1.xpose.msra.mxu0 0.0
        %3679 = vmatprep.subr.mxu0 0.0
        %3680 = vmatpush1.xpose.msra.mxu0 0.0
        %3681 = vmatprep.subr.mxu0 0.0
        %3682 = vmatpush1.xpose.msra.mxu0 0.0
        %3683 = vmatprep.subr.mxu0 0.0
        %3684 = vmatpush1.xpose.msra.mxu0 0.0
        %3685 = vmatprep.subr.mxu0 0.0
        %3686 = vmatpush1.xpose.msra.mxu0 0.0
        %3687 = vmatprep.subr.mxu0 0.0
        %3688 = vmatpush1.xpose.msra.mxu0 0.0
        %3689 = vmatprep.subr.mxu0 0.0
        %3690 = vmatpush1.xpose.msra.mxu0 0.0
        %3691 = vmatprep.subr.mxu0 0.0
        %3692 = vmatpush1.xpose.msra.mxu0 0.0
        %3693 = vmatprep.subr.mxu0 0.0
        %3694 = vmatpush1.xpose.msra.mxu0 0.0
        %3695 = vmatprep.subr.mxu0 0.0
        %3696 = vmatpush1.xpose.msra.mxu0 0.0
        %3697 = vmatprep.subr.mxu0 0.0
        %3698 = vmatpush1.xpose.msra.mxu0 0.0
        %3699 = vmatprep.subr.mxu0 0.0
        %3700 = vmatpush1.xpose.msra.mxu0 0.0
        %3701 = vmatprep.subr.mxu0 0.0
        %3702 = vmatpush1.xpose.msra.mxu0 0.0
        %3703 = vmatprep.subr.mxu0 0.0
        %3704 = vmatpush1.xpose.msra.mxu0 0.0
        %3705 = vmatprep.subr.mxu0 0.0
        %3706 = vmatpush1.xpose.msra.mxu0 0.0
        %3707 = vmatprep.subr.mxu0 0.0
        %3708 = vmatpush1.xpose.msra.mxu0 0.0
        %3709 = vmatprep.subr.mxu0 0.0
        %3710 = vmatpush1.xpose.msra.mxu0 0.0
        %3711 = vmatprep.subr.mxu0 0.0
        %3712 = vmatpush1.xpose.msra.mxu0 0.0
        %3713 = vmatprep.subr.mxu0 0.0
        %3714 = vmatpush1.xpose.msra.mxu0 0.0
        %3715 = vmatprep.subr.mxu0 0.0
        %3716 = vmatpush1.xpose.msra.mxu0 0.0
        %3717 = vmatprep.subr.mxu0 0.0
        %3718 = vmatpush1.xpose.msra.mxu0 0.0
        %3719 = vmatprep.subr.mxu0 0.0
        %3720 = vmatpush1.xpose.msra.mxu0 0.0
        %3721 = vmatprep.subr.mxu0 0.0
        %3722 = vmatpush1.xpose.msra.mxu0 0.0
        %3723 = vmatprep.subr.mxu0 0.0
        %3724 = vmatpush1.xpose.msra.mxu0 0.0
        %3725 = vmatprep.subr.mxu0 0.0
        %3726 = vmatpush1.xpose.msra.mxu0 0.0
        %3727 = vmatprep.subr.mxu0 0.0
        %3728 = vmatpush1.xpose.msra.mxu0 0.0
        %3729 = vmatprep.mubr.f32.mxu0 0.0
        %3730 = vmatmul.mubr.f32.gmra.mrb[0].mxu0 %v3661
        %v3731 = vpop.f32.mrb[0].mxu0
        %v3732 = vadd.f32 0.0, %v3731
        %v3733 = vpop.f32.mrb[0].mxu0
        %3734 = vdwg.mxu0
        %3736 = vrot.lane.b32.xlu0 %v2111, 96
        %v3737 = vpop.permute.xlu0 %3736
        %3738 = vrot.lane.b32.xlu0 %v2111, 64
        %v3739 = vpop.permute.xlu0 %3738
        %v3740 = vsel %vm426, %v3737, 0
        %v3742 = vsel %vm426, %v3739, 0
        %3744 = vmatprep.subr.mxu0 0.0
        %3745 = vmatpush1.xpose.msra.mxu0 %v3742
        %3746 = vmatprep.subr.mxu0 0.0
        %3747 = vmatpush1.xpose.msra.mxu0 0.0
        %3748 = vmatprep.subr.mxu0 0.0
        %3749 = vmatpush1.xpose.msra.mxu0 0.0
        %3750 = vmatprep.subr.mxu0 0.0
        %3751 = vmatpush1.xpose.msra.mxu0 0.0
        %3752 = vmatprep.subr.mxu0 0.0
        %3753 = vmatpush1.xpose.msra.mxu0 0.0
        %3754 = vmatprep.subr.mxu0 0.0
        %3755 = vmatpush1.xpose.msra.mxu0 0.0
        %3756 = vmatprep.subr.mxu0 0.0
        %3757 = vmatpush1.xpose.msra.mxu0 0.0
        %3758 = vmatprep.subr.mxu0 0.0
        %3759 = vmatpush1.xpose.msra.mxu0 0.0
        %3760 = vmatprep.subr.mxu0 0.0
        %3761 = vmatpush1.xpose.msra.mxu0 0.0
        %3762 = vmatprep.subr.mxu0 0.0
        %3763 = vmatpush1.xpose.msra.mxu0 0.0
        %3764 = vmatprep.subr.mxu0 0.0
        %3765 = vmatpush1.xpose.msra.mxu0 0.0
        %3766 = vmatprep.subr.mxu0 0.0
        %3767 = vmatpush1.xpose.msra.mxu0 0.0
        %3768 = vmatprep.subr.mxu0 0.0
        %3769 = vmatpush1.xpose.msra.mxu0 0.0
        %3770 = vmatprep.subr.mxu0 0.0
        %3771 = vmatpush1.xpose.msra.mxu0 0.0
        %3772 = vmatprep.subr.mxu0 0.0
        %3773 = vmatpush1.xpose.msra.mxu0 0.0
        %3774 = vmatprep.subr.mxu0 0.0
        %3775 = vmatpush1.xpose.msra.mxu0 0.0
        %3776 = vmatprep.subr.mxu0 0.0
        %3777 = vmatpush1.xpose.msra.mxu0 0.0
        %3778 = vmatprep.subr.mxu0 0.0
        %3779 = vmatpush1.xpose.msra.mxu0 0.0
        %3780 = vmatprep.subr.mxu0 0.0
        %3781 = vmatpush1.xpose.msra.mxu0 0.0
        %3782 = vmatprep.subr.mxu0 0.0
        %3783 = vmatpush1.xpose.msra.mxu0 0.0
        %3784 = vmatprep.subr.mxu0 0.0
        %3785 = vmatpush1.xpose.msra.mxu0 0.0
        %3786 = vmatprep.subr.mxu0 0.0
        %3787 = vmatpush1.xpose.msra.mxu0 0.0
        %3788 = vmatprep.subr.mxu0 0.0
        %3789 = vmatpush1.xpose.msra.mxu0 0.0
        %3790 = vmatprep.subr.mxu0 0.0
        %3791 = vmatpush1.xpose.msra.mxu0 0.0
        %3792 = vmatprep.subr.mxu0 0.0
        %3793 = vmatpush1.xpose.msra.mxu0 0.0
        %3794 = vmatprep.subr.mxu0 0.0
        %3795 = vmatpush1.xpose.msra.mxu0 0.0
        %3796 = vmatprep.subr.mxu0 0.0
        %3797 = vmatpush1.xpose.msra.mxu0 0.0
        %3798 = vmatprep.subr.mxu0 0.0
        %3799 = vmatpush1.xpose.msra.mxu0 0.0
        %3800 = vmatprep.subr.mxu0 0.0
        %3801 = vmatpush1.xpose.msra.mxu0 0.0
        %3802 = vmatprep.subr.mxu0 0.0
        %3803 = vmatpush1.xpose.msra.mxu0 0.0
        %3804 = vmatprep.subr.mxu0 0.0
        %3805 = vmatpush1.xpose.msra.mxu0 0.0
        %3806 = vmatprep.subr.mxu0 0.0
        %3807 = vmatpush1.xpose.msra.mxu0 0.0
        %3808 = vmatprep.mubr.f32.mxu0 0.0
        %3809 = vmatmul.mubr.f32.gmra.mrb[0].mxu0 %v3740
        %v3810 = vpop.f32.mrb[0].mxu0
        %v3811 = vadd.f32 0.0, %v3810
        %v3812 = vpop.f32.mrb[0].mxu0
        %3813 = vdwg.mxu0
        %3815 = vrot.lane.b32.xlu0 %v2112, 96
        %v3816 = vpop.permute.xlu0 %3815
        %3817 = vrot.lane.b32.xlu0 %v2112, 64
        %v3818 = vpop.permute.xlu0 %3817
        %v3819 = vsel %vm426, %v3816, 0
        %v3821 = vsel %vm426, %v3818, 0
        %3823 = vmatprep.subr.mxu0 0.0
        %3824 = vmatpush1.xpose.msra.mxu0 %v3821
        %3825 = vmatprep.subr.mxu0 0.0
        %3826 = vmatpush1.xpose.msra.mxu0 0.0
        %3827 = vmatprep.subr.mxu0 0.0
        %3828 = vmatpush1.xpose.msra.mxu0 0.0
        %3829 = vmatprep.subr.mxu0 0.0
        %3830 = vmatpush1.xpose.msra.mxu0 0.0
        %3831 = vmatprep.subr.mxu0 0.0
        %3832 = vmatpush1.xpose.msra.mxu0 0.0
        %3833 = vmatprep.subr.mxu0 0.0
        %3834 = vmatpush1.xpose.msra.mxu0 0.0
        %3835 = vmatprep.subr.mxu0 0.0
        %3836 = vmatpush1.xpose.msra.mxu0 0.0
        %3837 = vmatprep.subr.mxu0 0.0
        %3838 = vmatpush1.xpose.msra.mxu0 0.0
        %3839 = vmatprep.subr.mxu0 0.0
        %3840 = vmatpush1.xpose.msra.mxu0 0.0
        %3841 = vmatprep.subr.mxu0 0.0
        %3842 = vmatpush1.xpose.msra.mxu0 0.0
        %3843 = vmatprep.subr.mxu0 0.0
        %3844 = vmatpush1.xpose.msra.mxu0 0.0
        %3845 = vmatprep.subr.mxu0 0.0
        %3846 = vmatpush1.xpose.msra.mxu0 0.0
        %3847 = vmatprep.subr.mxu0 0.0
        %3848 = vmatpush1.xpose.msra.mxu0 0.0
        %3849 = vmatprep.subr.mxu0 0.0
        %3850 = vmatpush1.xpose.msra.mxu0 0.0
        %3851 = vmatprep.subr.mxu0 0.0
        %3852 = vmatpush1.xpose.msra.mxu0 0.0
        %3853 = vmatprep.subr.mxu0 0.0
        %3854 = vmatpush1.xpose.msra.mxu0 0.0
        %3855 = vmatprep.subr.mxu0 0.0
        %3856 = vmatpush1.xpose.msra.mxu0 0.0
        %3857 = vmatprep.subr.mxu0 0.0
        %3858 = vmatpush1.xpose.msra.mxu0 0.0
        %3859 = vmatprep.subr.mxu0 0.0
        %3860 = vmatpush1.xpose.msra.mxu0 0.0
        %3861 = vmatprep.subr.mxu0 0.0
        %3862 = vmatpush1.xpose.msra.mxu0 0.0
        %3863 = vmatprep.subr.mxu0 0.0
        %3864 = vmatpush1.xpose.msra.mxu0 0.0
        %3865 = vmatprep.subr.mxu0 0.0
        %3866 = vmatpush1.xpose.msra.mxu0 0.0
        %3867 = vmatprep.subr.mxu0 0.0
        %3868 = vmatpush1.xpose.msra.mxu0 0.0
        %3869 = vmatprep.subr.mxu0 0.0
        %3870 = vmatpush1.xpose.msra.mxu0 0.0
        %3871 = vmatprep.subr.mxu0 0.0
        %3872 = vmatpush1.xpose.msra.mxu0 0.0
        %3873 = vmatprep.subr.mxu0 0.0
        %3874 = vmatpush1.xpose.msra.mxu0 0.0
        %3875 = vmatprep.subr.mxu0 0.0
        %3876 = vmatpush1.xpose.msra.mxu0 0.0
        %3877 = vmatprep.subr.mxu0 0.0
        %3878 = vmatpush1.xpose.msra.mxu0 0.0
        %3879 = vmatprep.subr.mxu0 0.0
        %3880 = vmatpush1.xpose.msra.mxu0 0.0
        %3881 = vmatprep.subr.mxu0 0.0
        %3882 = vmatpush1.xpose.msra.mxu0 0.0
        %3883 = vmatprep.subr.mxu0 0.0
        %3884 = vmatpush1.xpose.msra.mxu0 0.0
        %3885 = vmatprep.subr.mxu0 0.0
        %3886 = vmatpush1.xpose.msra.mxu0 0.0
        %3887 = vmatprep.mubr.f32.mxu0 0.0
        %3888 = vmatmul.mubr.f32.gmra.mrb[0].mxu0 %v3819
        %v3889 = vpop.f32.mrb[0].mxu0
        %v3890 = vadd.f32 0.0, %v3889
        %v3891 = vpop.f32.mrb[0].mxu0
        %3892 = vdwg.mxu0
        %3894 = vrot.lane.b32.xlu0 %v2113, 96
        %v3895 = vpop.permute.xlu0 %3894
        %3896 = vrot.lane.b32.xlu0 %v2113, 64
        %v3897 = vpop.permute.xlu0 %3896
        %v3898 = vsel %vm426, %v3895, 0
        %v3900 = vsel %vm426, %v3897, 0
        %3902 = vmatprep.subr.mxu0 0.0
        %3903 = vmatpush1.xpose.msra.mxu0 %v3900
        %3904 = vmatprep.subr.mxu0 0.0
        %3905 = vmatpush1.xpose.msra.mxu0 0.0
        %3906 = vmatprep.subr.mxu0 0.0
        %3907 = vmatpush1.xpose.msra.mxu0 0.0
        %3908 = vmatprep.subr.mxu0 0.0
        %3909 = vmatpush1.xpose.msra.mxu0 0.0
        %3910 = vmatprep.subr.mxu0 0.0
        %3911 = vmatpush1.xpose.msra.mxu0 0.0
        %3912 = vmatprep.subr.mxu0 0.0
        %3913 = vmatpush1.xpose.msra.mxu0 0.0
        %3914 = vmatprep.subr.mxu0 0.0
        %3915 = vmatpush1.xpose.msra.mxu0 0.0
        %3916 = vmatprep.subr.mxu0 0.0
        %3917 = vmatpush1.xpose.msra.mxu0 0.0
        %3918 = vmatprep.subr.mxu0 0.0
        %3919 = vmatpush1.xpose.msra.mxu0 0.0
        %3920 = vmatprep.subr.mxu0 0.0
        %3921 = vmatpush1.xpose.msra.mxu0 0.0
        %3922 = vmatprep.subr.mxu0 0.0
        %3923 = vmatpush1.xpose.msra.mxu0 0.0
        %3924 = vmatprep.subr.mxu0 0.0
        %3925 = vmatpush1.xpose.msra.mxu0 0.0
        %3926 = vmatprep.subr.mxu0 0.0
        %3927 = vmatpush1.xpose.msra.mxu0 0.0
        %3928 = vmatprep.subr.mxu0 0.0
        %3929 = vmatpush1.xpose.msra.mxu0 0.0
        %3930 = vmatprep.subr.mxu0 0.0
        %3931 = vmatpush1.xpose.msra.mxu0 0.0
        %3932 = vmatprep.subr.mxu0 0.0
        %3933 = vmatpush1.xpose.msra.mxu0 0.0
        %3934 = vmatprep.subr.mxu0 0.0
        %3935 = vmatpush1.xpose.msra.mxu0 0.0
        %3936 = vmatprep.subr.mxu0 0.0
        %3937 = vmatpush1.xpose.msra.mxu0 0.0
        %3938 = vmatprep.subr.mxu0 0.0
        %3939 = vmatpush1.xpose.msra.mxu0 0.0
        %3940 = vmatprep.subr.mxu0 0.0
        %3941 = vmatpush1.xpose.msra.mxu0 0.0
        %3942 = vmatprep.subr.mxu0 0.0
        %3943 = vmatpush1.xpose.msra.mxu0 0.0
        %3944 = vmatprep.subr.mxu0 0.0
        %3945 = vmatpush1.xpose.msra.mxu0 0.0
        %3946 = vmatprep.subr.mxu0 0.0
        %3947 = vmatpush1.xpose.msra.mxu0 0.0
        %3948 = vmatprep.subr.mxu0 0.0
        %3949 = vmatpush1.xpose.msra.mxu0 0.0
        %3950 = vmatprep.subr.mxu0 0.0
        %3951 = vmatpush1.xpose.msra.mxu0 0.0
        %3952 = vmatprep.subr.mxu0 0.0
        %3953 = vmatpush1.xpose.msra.mxu0 0.0
        %3954 = vmatprep.subr.mxu0 0.0
        %3955 = vmatpush1.xpose.msra.mxu0 0.0
        %3956 = vmatprep.subr.mxu0 0.0
        %3957 = vmatpush1.xpose.msra.mxu0 0.0
        %3958 = vmatprep.subr.mxu0 0.0
        %3959 = vmatpush1.xpose.msra.mxu0 0.0
        %3960 = vmatprep.subr.mxu0 0.0
        %3961 = vmatpush1.xpose.msra.mxu0 0.0
        %3962 = vmatprep.subr.mxu0 0.0
        %3963 = vmatpush1.xpose.msra.mxu0 0.0
        %3964 = vmatprep.subr.mxu0 0.0
        %3965 = vmatpush1.xpose.msra.mxu0 0.0
        %3966 = vmatprep.mubr.f32.mxu0 0.0
        %3967 = vmatmul.mubr.f32.gmra.mrb[0].mxu0 %v3898
        %v3968 = vpop.f32.mrb[0].mxu0
        %v3969 = vadd.f32 0.0, %v3968
        %v3970 = vpop.f32.mrb[0].mxu0
        %3971 = vdwg.mxu0
        %3973 = vrot.lane.b32.xlu0 %v2114, 96
        %v3974 = vpop.permute.xlu0 %3973
        %3975 = vrot.lane.b32.xlu0 %v2114, 64
        %v3976 = vpop.permute.xlu0 %3975
        %v3977 = vsel %vm426, %v3974, 0
        %v3979 = vsel %vm426, %v3976, 0
        %3981 = vmatprep.subr.mxu0 0.0
        %3982 = vmatpush1.xpose.msra.mxu0 %v3979
        %3983 = vmatprep.subr.mxu0 0.0
        %3984 = vmatpush1.xpose.msra.mxu0 0.0
        %3985 = vmatprep.subr.mxu0 0.0
        %3986 = vmatpush1.xpose.msra.mxu0 0.0
        %3987 = vmatprep.subr.mxu0 0.0
        %3988 = vmatpush1.xpose.msra.mxu0 0.0
        %3989 = vmatprep.subr.mxu0 0.0
        %3990 = vmatpush1.xpose.msra.mxu0 0.0
        %3991 = vmatprep.subr.mxu0 0.0
        %3992 = vmatpush1.xpose.msra.mxu0 0.0
        %3993 = vmatprep.subr.mxu0 0.0
        %3994 = vmatpush1.xpose.msra.mxu0 0.0
        %3995 = vmatprep.subr.mxu0 0.0
        %3996 = vmatpush1.xpose.msra.mxu0 0.0
        %3997 = vmatprep.subr.mxu0 0.0
        %3998 = vmatpush1.xpose.msra.mxu0 0.0
        %3999 = vmatprep.subr.mxu0 0.0
        %4000 = vmatpush1.xpose.msra.mxu0 0.0
        %4001 = vmatprep.subr.mxu0 0.0
        %4002 = vmatpush1.xpose.msra.mxu0 0.0
        %4003 = vmatprep.subr.mxu0 0.0
        %4004 = vmatpush1.xpose.msra.mxu0 0.0
        %4005 = vmatprep.subr.mxu0 0.0
        %4006 = vmatpush1.xpose.msra.mxu0 0.0
        %4007 = vmatprep.subr.mxu0 0.0
        %4008 = vmatpush1.xpose.msra.mxu0 0.0
        %4009 = vmatprep.subr.mxu0 0.0
        %4010 = vmatpush1.xpose.msra.mxu0 0.0
        %4011 = vmatprep.subr.mxu0 0.0
        %4012 = vmatpush1.xpose.msra.mxu0 0.0
        %4013 = vmatprep.subr.mxu0 0.0
        %4014 = vmatpush1.xpose.msra.mxu0 0.0
        %4015 = vmatprep.subr.mxu0 0.0
        %4016 = vmatpush1.xpose.msra.mxu0 0.0
        %4017 = vmatprep.subr.mxu0 0.0
        %4018 = vmatpush1.xpose.msra.mxu0 0.0
        %4019 = vmatprep.subr.mxu0 0.0
        %4020 = vmatpush1.xpose.msra.mxu0 0.0
        %4021 = vmatprep.subr.mxu0 0.0
        %4022 = vmatpush1.xpose.msra.mxu0 0.0
        %4023 = vmatprep.subr.mxu0 0.0
        %4024 = vmatpush1.xpose.msra.mxu0 0.0
        %4025 = vmatprep.subr.mxu0 0.0
        %4026 = vmatpush1.xpose.msra.mxu0 0.0
        %4027 = vmatprep.subr.mxu0 0.0
        %4028 = vmatpush1.xpose.msra.mxu0 0.0
        %4029 = vmatprep.subr.mxu0 0.0
        %4030 = vmatpush1.xpose.msra.mxu0 0.0
        %4031 = vmatprep.subr.mxu0 0.0
        %4032 = vmatpush1.xpose.msra.mxu0 0.0
        %4033 = vmatprep.subr.mxu0 0.0
        %4034 = vmatpush1.xpose.msra.mxu0 0.0
        %4035 = vmatprep.subr.mxu0 0.0
        %4036 = vmatpush1.xpose.msra.mxu0 0.0
        %4037 = vmatprep.subr.mxu0 0.0
        %4038 = vmatpush1.xpose.msra.mxu0 0.0
        %4039 = vmatprep.subr.mxu0 0.0
        %4040 = vmatpush1.xpose.msra.mxu0 0.0
        %4041 = vmatprep.subr.mxu0 0.0
        %4042 = vmatpush1.xpose.msra.mxu0 0.0
        %4043 = vmatprep.subr.mxu0 0.0
        %4044 = vmatpush1.xpose.msra.mxu0 0.0
        %4045 = vmatprep.mubr.f32.mxu0 0.0
        %4046 = vmatmul.mubr.f32.gmra.mrb[0].mxu0 %v3977
        %v4047 = vpop.f32.mrb[0].mxu0
        %v4048 = vadd.f32 0.0, %v4047
        %v4049 = vpop.f32.mrb[0].mxu0
        %4050 = vdwg.mxu0
        %4052 = vrot.lane.b32.xlu0 %v2115, 96
        %v4053 = vpop.permute.xlu0 %4052
        %4054 = vrot.lane.b32.xlu0 %v2115, 64
        %v4055 = vpop.permute.xlu0 %4054
        %v4056 = vsel %vm426, %v4053, 0
        %v4058 = vsel %vm426, %v4055, 0
        %4060 = vmatprep.subr.mxu0 0.0
        %4061 = vmatpush1.xpose.msra.mxu0 %v4058
        %4062 = vmatprep.subr.mxu0 0.0
        %4063 = vmatpush1.xpose.msra.mxu0 0.0
        %4064 = vmatprep.subr.mxu0 0.0
        %4065 = vmatpush1.xpose.msra.mxu0 0.0
        %4066 = vmatprep.subr.mxu0 0.0
        %4067 = vmatpush1.xpose.msra.mxu0 0.0
        %4068 = vmatprep.subr.mxu0 0.0
        %4069 = vmatpush1.xpose.msra.mxu0 0.0
        %4070 = vmatprep.subr.mxu0 0.0
        %4071 = vmatpush1.xpose.msra.mxu0 0.0
        %4072 = vmatprep.subr.mxu0 0.0
        %4073 = vmatpush1.xpose.msra.mxu0 0.0
        %4074 = vmatprep.subr.mxu0 0.0
        %4075 = vmatpush1.xpose.msra.mxu0 0.0
        %4076 = vmatprep.subr.mxu0 0.0
        %4077 = vmatpush1.xpose.msra.mxu0 0.0
        %4078 = vmatprep.subr.mxu0 0.0
        %4079 = vmatpush1.xpose.msra.mxu0 0.0
        %4080 = vmatprep.subr.mxu0 0.0
        %4081 = vmatpush1.xpose.msra.mxu0 0.0
        %4082 = vmatprep.subr.mxu0 0.0
        %4083 = vmatpush1.xpose.msra.mxu0 0.0
        %4084 = vmatprep.subr.mxu0 0.0
        %4085 = vmatpush1.xpose.msra.mxu0 0.0
        %4086 = vmatprep.subr.mxu0 0.0
        %4087 = vmatpush1.xpose.msra.mxu0 0.0
        %4088 = vmatprep.subr.mxu0 0.0
        %4089 = vmatpush1.xpose.msra.mxu0 0.0
        %4090 = vmatprep.subr.mxu0 0.0
        %4091 = vmatpush1.xpose.msra.mxu0 0.0
        %4092 = vmatprep.subr.mxu0 0.0
        %4093 = vmatpush1.xpose.msra.mxu0 0.0
        %4094 = vmatprep.subr.mxu0 0.0
        %4095 = vmatpush1.xpose.msra.mxu0 0.0
        %4096 = vmatprep.subr.mxu0 0.0
        %4097 = vmatpush1.xpose.msra.mxu0 0.0
        %4098 = vmatprep.subr.mxu0 0.0
        %4099 = vmatpush1.xpose.msra.mxu0 0.0
        %4100 = vmatprep.subr.mxu0 0.0
        %4101 = vmatpush1.xpose.msra.mxu0 0.0
        %4102 = vmatprep.subr.mxu0 0.0
        %4103 = vmatpush1.xpose.msra.mxu0 0.0
        %4104 = vmatprep.subr.mxu0 0.0
        %4105 = vmatpush1.xpose.msra.mxu0 0.0
        %4106 = vmatprep.subr.mxu0 0.0
        %4107 = vmatpush1.xpose.msra.mxu0 0.0
        %4108 = vmatprep.subr.mxu0 0.0
        %4109 = vmatpush1.xpose.msra.mxu0 0.0
        %4110 = vmatprep.subr.mxu0 0.0
        %4111 = vmatpush1.xpose.msra.mxu0 0.0
        %4112 = vmatprep.subr.mxu0 0.0
        %4113 = vmatpush1.xpose.msra.mxu0 0.0
        %4114 = vmatprep.subr.mxu0 0.0
        %4115 = vmatpush1.xpose.msra.mxu0 0.0
        %4116 = vmatprep.subr.mxu0 0.0
        %4117 = vmatpush1.xpose.msra.mxu0 0.0
        %4118 = vmatprep.subr.mxu0 0.0
        %4119 = vmatpush1.xpose.msra.mxu0 0.0
        %4120 = vmatprep.subr.mxu0 0.0
        %4121 = vmatpush1.xpose.msra.mxu0 0.0
        %4122 = vmatprep.subr.mxu0 0.0
        %4123 = vmatpush1.xpose.msra.mxu0 0.0
        %4124 = vmatprep.mubr.f32.mxu0 0.0
        %4125 = vmatmul.mubr.f32.gmra.mrb[0].mxu0 %v4056
        %v4126 = vpop.f32.mrb[0].mxu0
        %v4127 = vadd.f32 0.0, %v4126
        %v4128 = vpop.f32.mrb[0].mxu0
        %4129 = vdwg.mxu0
        %4131 = vrot.lane.b32.xlu0 %v2116, 96
        %v4132 = vpop.permute.xlu0 %4131
        %4133 = vrot.lane.b32.xlu0 %v2116, 64
        %v4134 = vpop.permute.xlu0 %4133
        %v4135 = vsel %vm426, %v4132, 0
        %v4137 = vsel %vm426, %v4134, 0
        %4139 = vmatprep.subr.mxu0 0.0
        %4140 = vmatpush1.xpose.msra.mxu0 %v4137
        %4141 = vmatprep.subr.mxu0 0.0
        %4142 = vmatpush1.xpose.msra.mxu0 0.0
        %4143 = vmatprep.subr.mxu0 0.0
        %4144 = vmatpush1.xpose.msra.mxu0 0.0
        %4145 = vmatprep.subr.mxu0 0.0
        %4146 = vmatpush1.xpose.msra.mxu0 0.0
        %4147 = vmatprep.subr.mxu0 0.0
        %4148 = vmatpush1.xpose.msra.mxu0 0.0
        %4149 = vmatprep.subr.mxu0 0.0
        %4150 = vmatpush1.xpose.msra.mxu0 0.0
        %4151 = vmatprep.subr.mxu0 0.0
        %4152 = vmatpush1.xpose.msra.mxu0 0.0
        %4153 = vmatprep.subr.mxu0 0.0
        %4154 = vmatpush1.xpose.msra.mxu0 0.0
        %4155 = vmatprep.subr.mxu0 0.0
        %4156 = vmatpush1.xpose.msra.mxu0 0.0
        %4157 = vmatprep.subr.mxu0 0.0
        %4158 = vmatpush1.xpose.msra.mxu0 0.0
        %4159 = vmatprep.subr.mxu0 0.0
        %4160 = vmatpush1.xpose.msra.mxu0 0.0
        %4161 = vmatprep.subr.mxu0 0.0
        %4162 = vmatpush1.xpose.msra.mxu0 0.0
        %4163 = vmatprep.subr.mxu0 0.0
        %4164 = vmatpush1.xpose.msra.mxu0 0.0
        %4165 = vmatprep.subr.mxu0 0.0
        %4166 = vmatpush1.xpose.msra.mxu0 0.0
        %4167 = vmatprep.subr.mxu0 0.0
        %4168 = vmatpush1.xpose.msra.mxu0 0.0
        %4169 = vmatprep.subr.mxu0 0.0
        %4170 = vmatpush1.xpose.msra.mxu0 0.0
        %4171 = vmatprep.subr.mxu0 0.0
        %4172 = vmatpush1.xpose.msra.mxu0 0.0
        %4173 = vmatprep.subr.mxu0 0.0
        %4174 = vmatpush1.xpose.msra.mxu0 0.0
        %4175 = vmatprep.subr.mxu0 0.0
        %4176 = vmatpush1.xpose.msra.mxu0 0.0
        %4177 = vmatprep.subr.mxu0 0.0
        %4178 = vmatpush1.xpose.msra.mxu0 0.0
        %4179 = vmatprep.subr.mxu0 0.0
        %4180 = vmatpush1.xpose.msra.mxu0 0.0
        %4181 = vmatprep.subr.mxu0 0.0
        %4182 = vmatpush1.xpose.msra.mxu0 0.0
        %4183 = vmatprep.subr.mxu0 0.0
        %4184 = vmatpush1.xpose.msra.mxu0 0.0
        %4185 = vmatprep.subr.mxu0 0.0
        %4186 = vmatpush1.xpose.msra.mxu0 0.0
        %4187 = vmatprep.subr.mxu0 0.0
        %4188 = vmatpush1.xpose.msra.mxu0 0.0
        %4189 = vmatprep.subr.mxu0 0.0
        %4190 = vmatpush1.xpose.msra.mxu0 0.0
        %4191 = vmatprep.subr.mxu0 0.0
        %4192 = vmatpush1.xpose.msra.mxu0 0.0
        %4193 = vmatprep.subr.mxu0 0.0
        %4194 = vmatpush1.xpose.msra.mxu0 0.0
        %4195 = vmatprep.subr.mxu0 0.0
        %4196 = vmatpush1.xpose.msra.mxu0 0.0
        %4197 = vmatprep.subr.mxu0 0.0
        %4198 = vmatpush1.xpose.msra.mxu0 0.0
        %4199 = vmatprep.subr.mxu0 0.0
        %4200 = vmatpush1.xpose.msra.mxu0 0.0
        %4201 = vmatprep.subr.mxu0 0.0
        %4202 = vmatpush1.xpose.msra.mxu0 0.0
        %4203 = vmatprep.mubr.f32.mxu0 0.0
        %4204 = vmatmul.mubr.f32.gmra.mrb[0].mxu0 %v4135
        %v4205 = vpop.f32.mrb[0].mxu0
        %v4206 = vadd.f32 0.0, %v4205
        %v4207 = vpop.f32.mrb[0].mxu0
        %4208 = vdwg.mxu0
        %4210 = vrot.lane.b32.xlu0 %v2117, 96
        %v4211 = vpop.permute.xlu0 %4210
        %4212 = vrot.lane.b32.xlu0 %v2117, 64
        %v4213 = vpop.permute.xlu0 %4212
        %v4214 = vsel %vm426, %v4211, 0
        %v4216 = vsel %vm426, %v4213, 0
        %4218 = vmatprep.subr.mxu0 0.0
        %4219 = vmatpush1.xpose.msra.mxu0 %v4216
        %4220 = vmatprep.subr.mxu0 0.0
        %4221 = vmatpush1.xpose.msra.mxu0 0.0
        %4222 = vmatprep.subr.mxu0 0.0
        %4223 = vmatpush1.xpose.msra.mxu0 0.0
        %4224 = vmatprep.subr.mxu0 0.0
        %4225 = vmatpush1.xpose.msra.mxu0 0.0
        %4226 = vmatprep.subr.mxu0 0.0
        %4227 = vmatpush1.xpose.msra.mxu0 0.0
        %4228 = vmatprep.subr.mxu0 0.0
        %4229 = vmatpush1.xpose.msra.mxu0 0.0
        %4230 = vmatprep.subr.mxu0 0.0
        %4231 = vmatpush1.xpose.msra.mxu0 0.0
        %4232 = vmatprep.subr.mxu0 0.0
        %4233 = vmatpush1.xpose.msra.mxu0 0.0
        %4234 = vmatprep.subr.mxu0 0.0
        %4235 = vmatpush1.xpose.msra.mxu0 0.0
        %4236 = vmatprep.subr.mxu0 0.0
        %4237 = vmatpush1.xpose.msra.mxu0 0.0
        %4238 = vmatprep.subr.mxu0 0.0
        %4239 = vmatpush1.xpose.msra.mxu0 0.0
        %4240 = vmatprep.subr.mxu0 0.0
        %4241 = vmatpush1.xpose.msra.mxu0 0.0
        %4242 = vmatprep.subr.mxu0 0.0
        %4243 = vmatpush1.xpose.msra.mxu0 0.0
        %4244 = vmatprep.subr.mxu0 0.0
        %4245 = vmatpush1.xpose.msra.mxu0 0.0
        %4246 = vmatprep.subr.mxu0 0.0
        %4247 = vmatpush1.xpose.msra.mxu0 0.0
        %4248 = vmatprep.subr.mxu0 0.0
        %4249 = vmatpush1.xpose.msra.mxu0 0.0
        %4250 = vmatprep.subr.mxu0 0.0
        %4251 = vmatpush1.xpose.msra.mxu0 0.0
        %4252 = vmatprep.subr.mxu0 0.0
        %4253 = vmatpush1.xpose.msra.mxu0 0.0
        %4254 = vmatprep.subr.mxu0 0.0
        %4255 = vmatpush1.xpose.msra.mxu0 0.0
        %4256 = vmatprep.subr.mxu0 0.0
        %4257 = vmatpush1.xpose.msra.mxu0 0.0
        %4258 = vmatprep.subr.mxu0 0.0
        %4259 = vmatpush1.xpose.msra.mxu0 0.0
        %4260 = vmatprep.subr.mxu0 0.0
        %4261 = vmatpush1.xpose.msra.mxu0 0.0
        %4262 = vmatprep.subr.mxu0 0.0
        %4263 = vmatpush1.xpose.msra.mxu0 0.0
        %4264 = vmatprep.subr.mxu0 0.0
        %4265 = vmatpush1.xpose.msra.mxu0 0.0
        %4266 = vmatprep.subr.mxu0 0.0
        %4267 = vmatpush1.xpose.msra.mxu0 0.0
        %4268 = vmatprep.subr.mxu0 0.0
        %4269 = vmatpush1.xpose.msra.mxu0 0.0
        %4270 = vmatprep.subr.mxu0 0.0
        %4271 = vmatpush1.xpose.msra.mxu0 0.0
        %4272 = vmatprep.subr.mxu0 0.0
        %4273 = vmatpush1.xpose.msra.mxu0 0.0
        %4274 = vmatprep.subr.mxu0 0.0
        %4275 = vmatpush1.xpose.msra.mxu0 0.0
        %4276 = vmatprep.subr.mxu0 0.0
        %4277 = vmatpush1.xpose.msra.mxu0 0.0
        %4278 = vmatprep.subr.mxu0 0.0
        %4279 = vmatpush1.xpose.msra.mxu0 0.0
        %4280 = vmatprep.subr.mxu0 0.0
        %4281 = vmatpush1.xpose.msra.mxu0 0.0
        %4282 = vmatprep.mubr.f32.mxu0 0.0
        %4283 = vmatmul.mubr.f32.gmra.mrb[0].mxu0 %v4214
        %v4284 = vpop.f32.mrb[0].mxu0
        %v4285 = vadd.f32 0.0, %v4284
        %v4286 = vpop.f32.mrb[0].mxu0
        %4287 = vdwg.mxu0
        %4289 = vrot.lane.b32.xlu0 %v2118, 96
        %v4290 = vpop.permute.xlu0 %4289
        %4291 = vrot.lane.b32.xlu0 %v2118, 64
        %v4292 = vpop.permute.xlu0 %4291
        %v4293 = vsel %vm426, %v4290, 0
        %v4295 = vsel %vm426, %v4292, 0
        %4297 = vmatprep.subr.mxu0 0.0
        %4298 = vmatpush1.xpose.msra.mxu0 %v4295
        %4299 = vmatprep.subr.mxu0 0.0
        %4300 = vmatpush1.xpose.msra.mxu0 0.0
        %4301 = vmatprep.subr.mxu0 0.0
        %4302 = vmatpush1.xpose.msra.mxu0 0.0
        %4303 = vmatprep.subr.mxu0 0.0
        %4304 = vmatpush1.xpose.msra.mxu0 0.0
        %4305 = vmatprep.subr.mxu0 0.0
        %4306 = vmatpush1.xpose.msra.mxu0 0.0
        %4307 = vmatprep.subr.mxu0 0.0
        %4308 = vmatpush1.xpose.msra.mxu0 0.0
        %4309 = vmatprep.subr.mxu0 0.0
        %4310 = vmatpush1.xpose.msra.mxu0 0.0
        %4311 = vmatprep.subr.mxu0 0.0
        %4312 = vmatpush1.xpose.msra.mxu0 0.0
        %4313 = vmatprep.subr.mxu0 0.0
        %4314 = vmatpush1.xpose.msra.mxu0 0.0
        %4315 = vmatprep.subr.mxu0 0.0
        %4316 = vmatpush1.xpose.msra.mxu0 0.0
        %4317 = vmatprep.subr.mxu0 0.0
        %4318 = vmatpush1.xpose.msra.mxu0 0.0
        %4319 = vmatprep.subr.mxu0 0.0
        %4320 = vmatpush1.xpose.msra.mxu0 0.0
        %4321 = vmatprep.subr.mxu0 0.0
        %4322 = vmatpush1.xpose.msra.mxu0 0.0
        %4323 = vmatprep.subr.mxu0 0.0
        %4324 = vmatpush1.xpose.msra.mxu0 0.0
        %4325 = vmatprep.subr.mxu0 0.0
        %4326 = vmatpush1.xpose.msra.mxu0 0.0
        %4327 = vmatprep.subr.mxu0 0.0
        %4328 = vmatpush1.xpose.msra.mxu0 0.0
        %4329 = vmatprep.subr.mxu0 0.0
        %4330 = vmatpush1.xpose.msra.mxu0 0.0
        %4331 = vmatprep.subr.mxu0 0.0
        %4332 = vmatpush1.xpose.msra.mxu0 0.0
        %4333 = vmatprep.subr.mxu0 0.0
        %4334 = vmatpush1.xpose.msra.mxu0 0.0
        %4335 = vmatprep.subr.mxu0 0.0
        %4336 = vmatpush1.xpose.msra.mxu0 0.0
        %4337 = vmatprep.subr.mxu0 0.0
        %4338 = vmatpush1.xpose.msra.mxu0 0.0
        %4339 = vmatprep.subr.mxu0 0.0
        %4340 = vmatpush1.xpose.msra.mxu0 0.0
        %4341 = vmatprep.subr.mxu0 0.0
        %4342 = vmatpush1.xpose.msra.mxu0 0.0
        %4343 = vmatprep.subr.mxu0 0.0
        %4344 = vmatpush1.xpose.msra.mxu0 0.0
        %4345 = vmatprep.subr.mxu0 0.0
        %4346 = vmatpush1.xpose.msra.mxu0 0.0
        %4347 = vmatprep.subr.mxu0 0.0
        %4348 = vmatpush1.xpose.msra.mxu0 0.0
        %4349 = vmatprep.subr.mxu0 0.0
        %4350 = vmatpush1.xpose.msra.mxu0 0.0
        %4351 = vmatprep.subr.mxu0 0.0
        %4352 = vmatpush1.xpose.msra.mxu0 0.0
        %4353 = vmatprep.subr.mxu0 0.0
        %4354 = vmatpush1.xpose.msra.mxu0 0.0
        %4355 = vmatprep.subr.mxu0 0.0
        %4356 = vmatpush1.xpose.msra.mxu0 0.0
        %4357 = vmatprep.subr.mxu0 0.0
        %4358 = vmatpush1.xpose.msra.mxu0 0.0
        %4359 = vmatprep.subr.mxu0 0.0
        %4360 = vmatpush1.xpose.msra.mxu0 0.0
        %4361 = vmatprep.mubr.f32.mxu0 0.0
        %4362 = vmatmul.mubr.f32.gmra.mrb[0].mxu0 %v4293
        %v4363 = vpop.f32.mrb[0].mxu0
        %v4364 = vadd.f32 0.0, %v4363
        %v4365 = vpop.f32.mrb[0].mxu0
        %4366 = vdwg.mxu0
        %4368 = vrot.lane.b32.xlu0 %v2119, 96
        %v4369 = vpop.permute.xlu0 %4368
        %4370 = vrot.lane.b32.xlu0 %v2119, 64
        %v4371 = vpop.permute.xlu0 %4370
        %v4372 = vsel %vm426, %v4369, 0
        %v4374 = vsel %vm426, %v4371, 0
        %4376 = vmatprep.subr.mxu0 0.0
        %4377 = vmatpush1.xpose.msra.mxu0 %v4374
        %4378 = vmatprep.subr.mxu0 0.0
        %4379 = vmatpush1.xpose.msra.mxu0 0.0
        %4380 = vmatprep.subr.mxu0 0.0
        %4381 = vmatpush1.xpose.msra.mxu0 0.0
        %4382 = vmatprep.subr.mxu0 0.0
        %4383 = vmatpush1.xpose.msra.mxu0 0.0
        %4384 = vmatprep.subr.mxu0 0.0
        %4385 = vmatpush1.xpose.msra.mxu0 0.0
        %4386 = vmatprep.subr.mxu0 0.0
        %4387 = vmatpush1.xpose.msra.mxu0 0.0
        %4388 = vmatprep.subr.mxu0 0.0
        %4389 = vmatpush1.xpose.msra.mxu0 0.0
        %4390 = vmatprep.subr.mxu0 0.0
        %4391 = vmatpush1.xpose.msra.mxu0 0.0
        %4392 = vmatprep.subr.mxu0 0.0
        %4393 = vmatpush1.xpose.msra.mxu0 0.0
        %4394 = vmatprep.subr.mxu0 0.0
        %4395 = vmatpush1.xpose.msra.mxu0 0.0
        %4396 = vmatprep.subr.mxu0 0.0
        %4397 = vmatpush1.xpose.msra.mxu0 0.0
        %4398 = vmatprep.subr.mxu0 0.0
        %4399 = vmatpush1.xpose.msra.mxu0 0.0
        %4400 = vmatprep.subr.mxu0 0.0
        %4401 = vmatpush1.xpose.msra.mxu0 0.0
        %4402 = vmatprep.subr.mxu0 0.0
        %4403 = vmatpush1.xpose.msra.mxu0 0.0
        %4404 = vmatprep.subr.mxu0 0.0
        %4405 = vmatpush1.xpose.msra.mxu0 0.0
        %4406 = vmatprep.subr.mxu0 0.0
        %4407 = vmatpush1.xpose.msra.mxu0 0.0
        %4408 = vmatprep.subr.mxu0 0.0
        %4409 = vmatpush1.xpose.msra.mxu0 0.0
        %4410 = vmatprep.subr.mxu0 0.0
        %4411 = vmatpush1.xpose.msra.mxu0 0.0
        %4412 = vmatprep.subr.mxu0 0.0
        %4413 = vmatpush1.xpose.msra.mxu0 0.0
        %4414 = vmatprep.subr.mxu0 0.0
        %4415 = vmatpush1.xpose.msra.mxu0 0.0
        %4416 = vmatprep.subr.mxu0 0.0
        %4417 = vmatpush1.xpose.msra.mxu0 0.0
        %4418 = vmatprep.subr.mxu0 0.0
        %4419 = vmatpush1.xpose.msra.mxu0 0.0
        %4420 = vmatprep.subr.mxu0 0.0
        %4421 = vmatpush1.xpose.msra.mxu0 0.0
        %4422 = vmatprep.subr.mxu0 0.0
        %4423 = vmatpush1.xpose.msra.mxu0 0.0
        %4424 = vmatprep.subr.mxu0 0.0
        %4425 = vmatpush1.xpose.msra.mxu0 0.0
        %4426 = vmatprep.subr.mxu0 0.0
        %4427 = vmatpush1.xpose.msra.mxu0 0.0
        %4428 = vmatprep.subr.mxu0 0.0
        %4429 = vmatpush1.xpose.msra.mxu0 0.0
        %4430 = vmatprep.subr.mxu0 0.0
        %4431 = vmatpush1.xpose.msra.mxu0 0.0
        %4432 = vmatprep.subr.mxu0 0.0
        %4433 = vmatpush1.xpose.msra.mxu0 0.0
        %4434 = vmatprep.subr.mxu0 0.0
        %4435 = vmatpush1.xpose.msra.mxu0 0.0
        %4436 = vmatprep.subr.mxu0 0.0
        %4437 = vmatpush1.xpose.msra.mxu0 0.0
        %4438 = vmatprep.subr.mxu0 0.0
        %4439 = vmatpush1.xpose.msra.mxu0 0.0
        %4440 = vmatprep.mubr.f32.mxu0 0.0
        %4441 = vmatmul.mubr.f32.gmra.mrb[0].mxu0 %v4372
        %v4442 = vpop.f32.mrb[0].mxu0
        %v4443 = vadd.f32 0.0, %v4442
        %v4444 = vpop.f32.mrb[0].mxu0
        %4445 = vdwg.mxu0
        %4447 = vrot.lane.b32.xlu0 %v2120, 96
        %v4448 = vpop.permute.xlu0 %4447
        %4449 = vrot.lane.b32.xlu0 %v2120, 64
        %v4450 = vpop.permute.xlu0 %4449
        %v4451 = vsel %vm426, %v4448, 0
        %v4453 = vsel %vm426, %v4450, 0
        %4455 = vmatprep.subr.mxu0 0.0
        %4456 = vmatpush1.xpose.msra.mxu0 %v4453
        %4457 = vmatprep.subr.mxu0 0.0
        %4458 = vmatpush1.xpose.msra.mxu0 0.0
        %4459 = vmatprep.subr.mxu0 0.0
        %4460 = vmatpush1.xpose.msra.mxu0 0.0
        %4461 = vmatprep.subr.mxu0 0.0
        %4462 = vmatpush1.xpose.msra.mxu0 0.0
        %4463 = vmatprep.subr.mxu0 0.0
        %4464 = vmatpush1.xpose.msra.mxu0 0.0
        %4465 = vmatprep.subr.mxu0 0.0
        %4466 = vmatpush1.xpose.msra.mxu0 0.0
        %4467 = vmatprep.subr.mxu0 0.0
        %4468 = vmatpush1.xpose.msra.mxu0 0.0
        %4469 = vmatprep.subr.mxu0 0.0
        %4470 = vmatpush1.xpose.msra.mxu0 0.0
        %4471 = vmatprep.subr.mxu0 0.0
        %4472 = vmatpush1.xpose.msra.mxu0 0.0
        %4473 = vmatprep.subr.mxu0 0.0
        %4474 = vmatpush1.xpose.msra.mxu0 0.0
        %4475 = vmatprep.subr.mxu0 0.0
        %4476 = vmatpush1.xpose.msra.mxu0 0.0
        %4477 = vmatprep.subr.mxu0 0.0
        %4478 = vmatpush1.xpose.msra.mxu0 0.0
        %4479 = vmatprep.subr.mxu0 0.0
        %4480 = vmatpush1.xpose.msra.mxu0 0.0
        %4481 = vmatprep.subr.mxu0 0.0
        %4482 = vmatpush1.xpose.msra.mxu0 0.0
        %4483 = vmatprep.subr.mxu0 0.0
        %4484 = vmatpush1.xpose.msra.mxu0 0.0
        %4485 = vmatprep.subr.mxu0 0.0
        %4486 = vmatpush1.xpose.msra.mxu0 0.0
        %4487 = vmatprep.subr.mxu0 0.0
        %4488 = vmatpush1.xpose.msra.mxu0 0.0
        %4489 = vmatprep.subr.mxu0 0.0
        %4490 = vmatpush1.xpose.msra.mxu0 0.0
        %4491 = vmatprep.subr.mxu0 0.0
        %4492 = vmatpush1.xpose.msra.mxu0 0.0
        %4493 = vmatprep.subr.mxu0 0.0
        %4494 = vmatpush1.xpose.msra.mxu0 0.0
        %4495 = vmatprep.subr.mxu0 0.0
        %4496 = vmatpush1.xpose.msra.mxu0 0.0
        %4497 = vmatprep.subr.mxu0 0.0
        %4498 = vmatpush1.xpose.msra.mxu0 0.0
        %4499 = vmatprep.subr.mxu0 0.0
        %4500 = vmatpush1.xpose.msra.mxu0 0.0
        %4501 = vmatprep.subr.mxu0 0.0
        %4502 = vmatpush1.xpose.msra.mxu0 0.0
        %4503 = vmatprep.subr.mxu0 0.0
        %4504 = vmatpush1.xpose.msra.mxu0 0.0
        %4505 = vmatprep.subr.mxu0 0.0
        %4506 = vmatpush1.xpose.msra.mxu0 0.0
        %4507 = vmatprep.subr.mxu0 0.0
        %4508 = vmatpush1.xpose.msra.mxu0 0.0
        %4509 = vmatprep.subr.mxu0 0.0
        %4510 = vmatpush1.xpose.msra.mxu0 0.0
        %4511 = vmatprep.subr.mxu0 0.0
        %4512 = vmatpush1.xpose.msra.mxu0 0.0
        %4513 = vmatprep.subr.mxu0 0.0
        %4514 = vmatpush1.xpose.msra.mxu0 0.0
        %4515 = vmatprep.subr.mxu0 0.0
        %4516 = vmatpush1.xpose.msra.mxu0 0.0
        %4517 = vmatprep.subr.mxu0 0.0
        %4518 = vmatpush1.xpose.msra.mxu0 0.0
        %4519 = vmatprep.mubr.f32.mxu0 0.0
        %4520 = vmatmul.mubr.f32.gmra.mrb[0].mxu0 %v4451
        %v4521 = vpop.f32.mrb[0].mxu0
        %v4522 = vadd.f32 0.0, %v4521
        %v4523 = vpop.f32.mrb[0].mxu0
        %4524 = vdwg.mxu0
        %4526 = vrot.lane.b32.xlu0 %v2121, 96
        %v4527 = vpop.permute.xlu0 %4526
        %4528 = vrot.lane.b32.xlu0 %v2121, 64
        %v4529 = vpop.permute.xlu0 %4528
        %v4530 = vsel %vm426, %v4527, 0
        %v4532 = vsel %vm426, %v4529, 0
        %4534 = vmatprep.subr.mxu0 0.0
        %4535 = vmatpush1.xpose.msra.mxu0 %v4532
        %4536 = vmatprep.subr.mxu0 0.0
        %4537 = vmatpush1.xpose.msra.mxu0 0.0
        %4538 = vmatprep.subr.mxu0 0.0
        %4539 = vmatpush1.xpose.msra.mxu0 0.0
        %4540 = vmatprep.subr.mxu0 0.0
        %4541 = vmatpush1.xpose.msra.mxu0 0.0
        %4542 = vmatprep.subr.mxu0 0.0
        %4543 = vmatpush1.xpose.msra.mxu0 0.0
        %4544 = vmatprep.subr.mxu0 0.0
        %4545 = vmatpush1.xpose.msra.mxu0 0.0
        %4546 = vmatprep.subr.mxu0 0.0
        %4547 = vmatpush1.xpose.msra.mxu0 0.0
        %4548 = vmatprep.subr.mxu0 0.0
        %4549 = vmatpush1.xpose.msra.mxu0 0.0
        %4550 = vmatprep.subr.mxu0 0.0
        %4551 = vmatpush1.xpose.msra.mxu0 0.0
        %4552 = vmatprep.subr.mxu0 0.0
        %4553 = vmatpush1.xpose.msra.mxu0 0.0
        %4554 = vmatprep.subr.mxu0 0.0
        %4555 = vmatpush1.xpose.msra.mxu0 0.0
        %4556 = vmatprep.subr.mxu0 0.0
        %4557 = vmatpush1.xpose.msra.mxu0 0.0
        %4558 = vmatprep.subr.mxu0 0.0
        %4559 = vmatpush1.xpose.msra.mxu0 0.0
        %4560 = vmatprep.subr.mxu0 0.0
        %4561 = vmatpush1.xpose.msra.mxu0 0.0
        %4562 = vmatprep.subr.mxu0 0.0
        %4563 = vmatpush1.xpose.msra.mxu0 0.0
        %4564 = vmatprep.subr.mxu0 0.0
        %4565 = vmatpush1.xpose.msra.mxu0 0.0
        %4566 = vmatprep.subr.mxu0 0.0
        %4567 = vmatpush1.xpose.msra.mxu0 0.0
        %4568 = vmatprep.subr.mxu0 0.0
        %4569 = vmatpush1.xpose.msra.mxu0 0.0
        %4570 = vmatprep.subr.mxu0 0.0
        %4571 = vmatpush1.xpose.msra.mxu0 0.0
        %4572 = vmatprep.subr.mxu0 0.0
        %4573 = vmatpush1.xpose.msra.mxu0 0.0
        %4574 = vmatprep.subr.mxu0 0.0
        %4575 = vmatpush1.xpose.msra.mxu0 0.0
        %4576 = vmatprep.subr.mxu0 0.0
        %4577 = vmatpush1.xpose.msra.mxu0 0.0
        %4578 = vmatprep.subr.mxu0 0.0
        %4579 = vmatpush1.xpose.msra.mxu0 0.0
        %4580 = vmatprep.subr.mxu0 0.0
        %4581 = vmatpush1.xpose.msra.mxu0 0.0
        %4582 = vmatprep.subr.mxu0 0.0
        %4583 = vmatpush1.xpose.msra.mxu0 0.0
        %4584 = vmatprep.subr.mxu0 0.0
        %4585 = vmatpush1.xpose.msra.mxu0 0.0
        %4586 = vmatprep.subr.mxu0 0.0
        %4587 = vmatpush1.xpose.msra.mxu0 0.0
        %4588 = vmatprep.subr.mxu0 0.0
        %4589 = vmatpush1.xpose.msra.mxu0 0.0
        %4590 = vmatprep.subr.mxu0 0.0
        %4591 = vmatpush1.xpose.msra.mxu0 0.0
        %4592 = vmatprep.subr.mxu0 0.0
        %4593 = vmatpush1.xpose.msra.mxu0 0.0
        %4594 = vmatprep.subr.mxu0 0.0
        %4595 = vmatpush1.xpose.msra.mxu0 0.0
        %4596 = vmatprep.subr.mxu0 0.0
        %4597 = vmatpush1.xpose.msra.mxu0 0.0
        %4598 = vmatprep.mubr.f32.mxu0 0.0
        %4599 = vmatmul.mubr.f32.gmra.mrb[0].mxu0 %v4530
        %v4600 = vpop.f32.mrb[0].mxu0
        %v4601 = vadd.f32 0.0, %v4600
        %v4602 = vpop.f32.mrb[0].mxu0
        %4603 = vdwg.mxu0
        %4605 = vrot.lane.b32.xlu0 %v2122, 96
        %v4606 = vpop.permute.xlu0 %4605
        %4607 = vrot.lane.b32.xlu0 %v2122, 64
        %v4608 = vpop.permute.xlu0 %4607
        %v4609 = vsel %vm426, %v4606, 0
        %v4611 = vsel %vm426, %v4608, 0
        %4613 = vmatprep.subr.mxu0 0.0
        %4614 = vmatpush1.xpose.msra.mxu0 %v4611
        %4615 = vmatprep.subr.mxu0 0.0
        %4616 = vmatpush1.xpose.msra.mxu0 0.0
        %4617 = vmatprep.subr.mxu0 0.0
        %4618 = vmatpush1.xpose.msra.mxu0 0.0
        %4619 = vmatprep.subr.mxu0 0.0
        %4620 = vmatpush1.xpose.msra.mxu0 0.0
        %4621 = vmatprep.subr.mxu0 0.0
        %4622 = vmatpush1.xpose.msra.mxu0 0.0
        %4623 = vmatprep.subr.mxu0 0.0
        %4624 = vmatpush1.xpose.msra.mxu0 0.0
        %4625 = vmatprep.subr.mxu0 0.0
        %4626 = vmatpush1.xpose.msra.mxu0 0.0
        %4627 = vmatprep.subr.mxu0 0.0
        %4628 = vmatpush1.xpose.msra.mxu0 0.0
        %4629 = vmatprep.subr.mxu0 0.0
        %4630 = vmatpush1.xpose.msra.mxu0 0.0
        %4631 = vmatprep.subr.mxu0 0.0
        %4632 = vmatpush1.xpose.msra.mxu0 0.0
        %4633 = vmatprep.subr.mxu0 0.0
        %4634 = vmatpush1.xpose.msra.mxu0 0.0
        %4635 = vmatprep.subr.mxu0 0.0
        %4636 = vmatpush1.xpose.msra.mxu0 0.0
        %4637 = vmatprep.subr.mxu0 0.0
        %4638 = vmatpush1.xpose.msra.mxu0 0.0
        %4639 = vmatprep.subr.mxu0 0.0
        %4640 = vmatpush1.xpose.msra.mxu0 0.0
        %4641 = vmatprep.subr.mxu0 0.0
        %4642 = vmatpush1.xpose.msra.mxu0 0.0
        %4643 = vmatprep.subr.mxu0 0.0
        %4644 = vmatpush1.xpose.msra.mxu0 0.0
        %4645 = vmatprep.subr.mxu0 0.0
        %4646 = vmatpush1.xpose.msra.mxu0 0.0
        %4647 = vmatprep.subr.mxu0 0.0
        %4648 = vmatpush1.xpose.msra.mxu0 0.0
        %4649 = vmatprep.subr.mxu0 0.0
        %4650 = vmatpush1.xpose.msra.mxu0 0.0
        %4651 = vmatprep.subr.mxu0 0.0
        %4652 = vmatpush1.xpose.msra.mxu0 0.0
        %4653 = vmatprep.subr.mxu0 0.0
        %4654 = vmatpush1.xpose.msra.mxu0 0.0
        %4655 = vmatprep.subr.mxu0 0.0
        %4656 = vmatpush1.xpose.msra.mxu0 0.0
        %4657 = vmatprep.subr.mxu0 0.0
        %4658 = vmatpush1.xpose.msra.mxu0 0.0
        %4659 = vmatprep.subr.mxu0 0.0
        %4660 = vmatpush1.xpose.msra.mxu0 0.0
        %4661 = vmatprep.subr.mxu0 0.0
        %4662 = vmatpush1.xpose.msra.mxu0 0.0
        %4663 = vmatprep.subr.mxu0 0.0
        %4664 = vmatpush1.xpose.msra.mxu0 0.0
        %4665 = vmatprep.subr.mxu0 0.0
        %4666 = vmatpush1.xpose.msra.mxu0 0.0
        %4667 = vmatprep.subr.mxu0 0.0
        %4668 = vmatpush1.xpose.msra.mxu0 0.0
        %4669 = vmatprep.subr.mxu0 0.0
        %4670 = vmatpush1.xpose.msra.mxu0 0.0
        %4671 = vmatprep.subr.mxu0 0.0
        %4672 = vmatpush1.xpose.msra.mxu0 0.0
        %4673 = vmatprep.subr.mxu0 0.0
        %4674 = vmatpush1.xpose.msra.mxu0 0.0
        %4675 = vmatprep.subr.mxu0 0.0
        %4676 = vmatpush1.xpose.msra.mxu0 0.0
        %4677 = vmatprep.mubr.f32.mxu0 0.0
        %4678 = vmatmul.mubr.f32.gmra.mrb[0].mxu0 %v4609
        %v4679 = vpop.f32.mrb[0].mxu0
        %v4680 = vadd.f32 0.0, %v4679
        %v4681 = vpop.f32.mrb[0].mxu0
        %4682 = vdwg.mxu0
        %v4683 = vmul.f32 %v2231, %v2123
        %v4684 = vmul.f32 %v2310, %v2124
        %v4685 = vmul.f32 %v2389, %v2125
        %v4686 = vmul.f32 %v2468, %v2126
        %v4687 = vmul.f32 %v2547, %v2127
        %v4688 = vmul.f32 %v2626, %v2128
        %v4689 = vmul.f32 %v2705, %v2129
        %v4690 = vmul.f32 %v2784, %v2130
        %v4691 = vmul.f32 %v2863, %v2131
        %v4692 = vmul.f32 %v2942, %v2132
        %v4693 = vmul.f32 %v3021, %v2133
        %v4694 = vmul.f32 %v3100, %v2134
        %v4695 = vmul.f32 %v3179, %v2135
        %v4696 = vmul.f32 %v3258, %v2136
        %v4697 = vmul.f32 %v3337, %v2137
        %v4698 = vmul.f32 %v3416, %v2138
        %v4699 = vmul.f32 %v3495, %v2139
        %v4700 = vmul.f32 %v3574, %v2140
        %v4701 = vmul.f32 %v3653, %v2141
        %v4702 = vmul.f32 %v3732, %v2142
        %v4703 = vmul.f32 %v3811, %v2143
        %v4704 = vmul.f32 %v3890, %v2144
        %v4705 = vmul.f32 %v3969, %v2145
        %v4706 = vmul.f32 %v4048, %v2146
        %v4707 = vmul.f32 %v4127, %v2147
        %v4708 = vmul.f32 %v4206, %v2148
        %v4709 = vmul.f32 %v4285, %v2149
        %v4710 = vmul.f32 %v4364, %v2150
        %v4711 = vmul.f32 %v4443, %v2151
        %v4712 = vmul.f32 %v4522, %v2152
        %v4713 = vmul.f32 %v4601, %v2153
        %v4714 = vmul.f32 %v4680, %v2154
        %v4715 = vmax.f32 %v4683, 0.0
        %v4716 = vmax.f32 %v4684, 0.0
        %v4717 = vmax.f32 %v4685, 0.0
        %v4718 = vmax.f32 %v4686, 0.0
        %v4719 = vmax.f32 %v4687, 0.0
        %v4720 = vmax.f32 %v4688, 0.0
        %v4721 = vmax.f32 %v4689, 0.0
        %v4722 = vmax.f32 %v4690, 0.0
        %v4723 = vmax.f32 %v4691, 0.0
        %v4724 = vmax.f32 %v4692, 0.0
        %v4725 = vmax.f32 %v4693, 0.0
        %v4726 = vmax.f32 %v4694, 0.0
        %v4727 = vmax.f32 %v4695, 0.0
        %v4728 = vmax.f32 %v4696, 0.0
        %v4729 = vmax.f32 %v4697, 0.0
        %v4730 = vmax.f32 %v4698, 0.0
        %v4731 = vmax.f32 %v4699, 0.0
        %v4732 = vmax.f32 %v4700, 0.0
        %v4733 = vmax.f32 %v4701, 0.0
        %v4734 = vmax.f32 %v4702, 0.0
        %v4735 = vmax.f32 %v4703, 0.0
        %v4736 = vmax.f32 %v4704, 0.0
        %v4737 = vmax.f32 %v4705, 0.0
        %v4738 = vmax.f32 %v4706, 0.0
        %v4739 = vmax.f32 %v4707, 0.0
        %v4740 = vmax.f32 %v4708, 0.0
        %v4741 = vmax.f32 %v4709, 0.0
        %v4742 = vmax.f32 %v4710, 0.0
        %v4743 = vmax.f32 %v4711, 0.0
        %v4744 = vmax.f32 %v4712, 0.0
        %v4745 = vmax.f32 %v4713, 0.0
        %v4746 = vmax.f32 %v4714, 0.0
        %v4747 = vmin.f32 %v4715, 9e+13
        %v4748 = vmin.f32 %v4716, 9e+13
        %v4749 = vmin.f32 %v4717, 9e+13
        %v4750 = vmin.f32 %v4718, 9e+13
        %v4751 = vmin.f32 %v4719, 9e+13
        %v4752 = vmin.f32 %v4720, 9e+13
        %v4753 = vmin.f32 %v4721, 9e+13
        %v4754 = vmin.f32 %v4722, 9e+13
        %v4755 = vmin.f32 %v4723, 9e+13
        %v4756 = vmin.f32 %v4724, 9e+13
        %v4757 = vmin.f32 %v4725, 9e+13
        %v4758 = vmin.f32 %v4726, 9e+13
        %v4759 = vmin.f32 %v4727, 9e+13
        %v4760 = vmin.f32 %v4728, 9e+13
        %v4761 = vmin.f32 %v4729, 9e+13
        %v4762 = vmin.f32 %v4730, 9e+13
        %v4763 = vmin.f32 %v4731, 9e+13
        %v4764 = vmin.f32 %v4732, 9e+13
        %v4765 = vmin.f32 %v4733, 9e+13
        %v4766 = vmin.f32 %v4734, 9e+13
        %v4767 = vmin.f32 %v4735, 9e+13
        %v4768 = vmin.f32 %v4736, 9e+13
        %v4769 = vmin.f32 %v4737, 9e+13
        %v4770 = vmin.f32 %v4738, 9e+13
        %v4771 = vmin.f32 %v4739, 9e+13
        %v4772 = vmin.f32 %v4740, 9e+13
        %v4773 = vmin.f32 %v4741, 9e+13
        %v4774 = vmin.f32 %v4742, 9e+13
        %v4775 = vmin.f32 %v4743, 9e+13
        %v4776 = vmin.f32 %v4744, 9e+13
        %v4777 = vmin.f32 %v4745, 9e+13
        %v4778 = vmin.f32 %v4746, 9e+13
        %v4779 = vsub.f32 1.0, %v2123
        %v4780 = vsub.f32 1.0, %v2124
        %v4781 = vsub.f32 1.0, %v2125
        %v4782 = vsub.f32 1.0, %v2126
        %v4783 = vsub.f32 1.0, %v2127
        %v4784 = vsub.f32 1.0, %v2128
        %v4785 = vsub.f32 1.0, %v2129
        %v4786 = vsub.f32 1.0, %v2130
        %v4787 = vsub.f32 1.0, %v2131
        %v4788 = vsub.f32 1.0, %v2132
        %v4789 = vsub.f32 1.0, %v2133
        %v4790 = vsub.f32 1.0, %v2134
        %v4791 = vsub.f32 1.0, %v2135
        %v4792 = vsub.f32 1.0, %v2136
        %v4793 = vsub.f32 1.0, %v2137
        %v4794 = vsub.f32 1.0, %v2138
        %v4795 = vsub.f32 1.0, %v2139
        %v4796 = vsub.f32 1.0, %v2140
        %v4797 = vsub.f32 1.0, %v2141
        %v4798 = vsub.f32 1.0, %v2142
        %v4799 = vsub.f32 1.0, %v2143
        %v4800 = vsub.f32 1.0, %v2144
        %v4801 = vsub.f32 1.0, %v2145
        %v4802 = vsub.f32 1.0, %v2146
        %v4803 = vsub.f32 1.0, %v2147
        %v4804 = vsub.f32 1.0, %v2148
        %v4805 = vsub.f32 1.0, %v2149
        %v4806 = vsub.f32 1.0, %v2150
        %v4807 = vsub.f32 1.0, %v2151
        %v4808 = vsub.f32 1.0, %v2152
        %v4809 = vsub.f32 1.0, %v2153
        %v4810 = vsub.f32 1.0, %v2154
        %v4811 = vmul.f32 %v4779, 9e+15
        %v4812 = vmul.f32 %v4780, 9e+15
        %v4813 = vmul.f32 %v4781, 9e+15
        %v4814 = vmul.f32 %v4782, 9e+15
        %v4815 = vmul.f32 %v4783, 9e+15
        %v4816 = vmul.f32 %v4784, 9e+15
        %v4817 = vmul.f32 %v4785, 9e+15
        %v4818 = vmul.f32 %v4786, 9e+15
        %v4819 = vmul.f32 %v4787, 9e+15
        %v4820 = vmul.f32 %v4788, 9e+15
        %v4821 = vmul.f32 %v4789, 9e+15
        %v4822 = vmul.f32 %v4790, 9e+15
        %v4823 = vmul.f32 %v4791, 9e+15
        %v4824 = vmul.f32 %v4792, 9e+15
        %v4825 = vmul.f32 %v4793, 9e+15
        %v4826 = vmul.f32 %v4794, 9e+15
        %v4827 = vmul.f32 %v4795, 9e+15
        %v4828 = vmul.f32 %v4796, 9e+15
        %v4829 = vmul.f32 %v4797, 9e+15
        %v4830 = vmul.f32 %v4798, 9e+15
        %v4831 = vmul.f32 %v4799, 9e+15
        %v4832 = vmul.f32 %v4800, 9e+15
        %v4833 = vmul.f32 %v4801, 9e+15
        %v4834 = vmul.f32 %v4802, 9e+15
        %v4835 = vmul.f32 %v4803, 9e+15
        %v4836 = vmul.f32 %v4804, 9e+15
        %v4837 = vmul.f32 %v4805, 9e+15
        %v4838 = vmul.f32 %v4806, 9e+15
        %v4839 = vmul.f32 %v4807, 9e+15
        %v4840 = vmul.f32 %v4808, 9e+15
        %v4841 = vmul.f32 %v4809, 9e+15
        %v4842 = vmul.f32 %v4810, 9e+15
        %v4843 = vsub.f32 %v4747, %v4811
        %v4844 = vsub.f32 %v4748, %v4812
        %v4845 = vsub.f32 %v4749, %v4813
        %v4846 = vsub.f32 %v4750, %v4814
        %v4847 = vsub.f32 %v4751, %v4815
        %v4848 = vsub.f32 %v4752, %v4816
        %v4849 = vsub.f32 %v4753, %v4817
        %v4850 = vsub.f32 %v4754, %v4818
        %v4851 = vsub.f32 %v4755, %v4819
        %v4852 = vsub.f32 %v4756, %v4820
        %v4853 = vsub.f32 %v4757, %v4821
        %v4854 = vsub.f32 %v4758, %v4822
        %v4855 = vsub.f32 %v4759, %v4823
        %v4856 = vsub.f32 %v4760, %v4824
        %v4857 = vsub.f32 %v4761, %v4825
        %v4858 = vsub.f32 %v4762, %v4826
        %v4859 = vsub.f32 %v4763, %v4827
        %v4860 = vsub.f32 %v4764, %v4828
        %v4861 = vsub.f32 %v4765, %v4829
        %v4862 = vsub.f32 %v4766, %v4830
        %v4863 = vsub.f32 %v4767, %v4831
        %v4864 = vsub.f32 %v4768, %v4832
        %v4865 = vsub.f32 %v4769, %v4833
        %v4866 = vsub.f32 %v4770, %v4834
        %v4867 = vsub.f32 %v4771, %v4835
        %v4868 = vsub.f32 %v4772, %v4836
        %v4869 = vsub.f32 %v4773, %v4837
        %v4870 = vsub.f32 %v4774, %v4838
        %v4871 = vsub.f32 %v4775, %v4839
        %v4872 = vsub.f32 %v4776, %v4840
        %v4873 = vsub.f32 %v4777, %v4841
        %v4874 = vsub.f32 %v4778, %v4842
        %vm4875 = vcmask 64512
        %v4876 = vsel %vm4875, %v4843, -inf
        %4877 = vmax.xlane.f32.xlu0 %v4876
        %v4878 = vpop.xlane.xlu0 %4877
        %v4879 = vsel %vm4875, %v4844, -inf
        %4880 = vmax.xlane.f32.xlu0 %v4879
        %v4881 = vpop.xlane.xlu0 %4880
        %v4882 = vsel %vm4875, %v4845, -inf
        %4883 = vmax.xlane.f32.xlu0 %v4882
        %v4884 = vpop.xlane.xlu0 %4883
        %v4885 = vsel %vm4875, %v4846, -inf
        %4886 = vmax.xlane.f32.xlu0 %v4885
        %v4887 = vpop.xlane.xlu0 %4886
        %v4888 = vsel %vm4875, %v4847, -inf
        %4889 = vmax.xlane.f32.xlu0 %v4888
        %v4890 = vpop.xlane.xlu0 %4889
        %v4891 = vsel %vm4875, %v4848, -inf
        %4892 = vmax.xlane.f32.xlu0 %v4891
        %v4893 = vpop.xlane.xlu0 %4892
        %v4894 = vsel %vm4875, %v4849, -inf
        %4895 = vmax.xlane.f32.xlu0 %v4894
        %v4896 = vpop.xlane.xlu0 %4895
        %v4897 = vsel %vm4875, %v4850, -inf
        %4898 = vmax.xlane.f32.xlu0 %v4897
        %v4899 = vpop.xlane.xlu0 %4898
        %v4900 = vsel %vm4875, %v4851, -inf
        %4901 = vmax.xlane.f32.xlu0 %v4900
        %v4902 = vpop.xlane.xlu0 %4901
        %v4903 = vsel %vm4875, %v4852, -inf
        %4904 = vmax.xlane.f32.xlu0 %v4903
        %v4905 = vpop.xlane.xlu0 %4904
        %v4906 = vsel %vm4875, %v4853, -inf
        %4907 = vmax.xlane.f32.xlu0 %v4906
        %v4908 = vpop.xlane.xlu0 %4907
        %v4909 = vsel %vm4875, %v4854, -inf
        %4910 = vmax.xlane.f32.xlu0 %v4909
        %v4911 = vpop.xlane.xlu0 %4910
        %v4912 = vsel %vm4875, %v4855, -inf
        %4913 = vmax.xlane.f32.xlu0 %v4912
        %v4914 = vpop.xlane.xlu0 %4913
        %v4915 = vsel %vm4875, %v4856, -inf
        %4916 = vmax.xlane.f32.xlu0 %v4915
        %v4917 = vpop.xlane.xlu0 %4916
        %v4918 = vsel %vm4875, %v4857, -inf
        %4919 = vmax.xlane.f32.xlu0 %v4918
        %v4920 = vpop.xlane.xlu0 %4919
        %v4921 = vsel %vm4875, %v4858, -inf
        %4922 = vmax.xlane.f32.xlu0 %v4921
        %v4923 = vpop.xlane.xlu0 %4922
        %v4924 = vsel %vm4875, %v4859, -inf
        %4925 = vmax.xlane.f32.xlu0 %v4924
        %v4926 = vpop.xlane.xlu0 %4925
        %v4927 = vsel %vm4875, %v4860, -inf
        %4928 = vmax.xlane.f32.xlu0 %v4927
        %v4929 = vpop.xlane.xlu0 %4928
        %v4930 = vsel %vm4875, %v4861, -inf
        %4931 = vmax.xlane.f32.xlu0 %v4930
        %v4932 = vpop.xlane.xlu0 %4931
        %v4933 = vsel %vm4875, %v4862, -inf
        %4934 = vmax.xlane.f32.xlu0 %v4933
        %v4935 = vpop.xlane.xlu0 %4934
        %v4936 = vsel %vm4875, %v4863, -inf
        %4937 = vmax.xlane.f32.xlu0 %v4936
        %v4938 = vpop.xlane.xlu0 %4937
        %v4939 = vsel %vm4875, %v4864, -inf
        %4940 = vmax.xlane.f32.xlu0 %v4939
        %v4941 = vpop.xlane.xlu0 %4940
        %v4942 = vsel %vm4875, %v4865, -inf
        %4943 = vmax.xlane.f32.xlu0 %v4942
        %v4944 = vpop.xlane.xlu0 %4943
        %v4945 = vsel %vm4875, %v4866, -inf
        %4946 = vmax.xlane.f32.xlu0 %v4945
        %v4947 = vpop.xlane.xlu0 %4946
        %v4948 = vsel %vm4875, %v4867, -inf
        %4949 = vmax.xlane.f32.xlu0 %v4948
        %v4950 = vpop.xlane.xlu0 %4949
        %v4951 = vsel %vm4875, %v4868, -inf
        %4952 = vmax.xlane.f32.xlu0 %v4951
        %v4953 = vpop.xlane.xlu0 %4952
        %v4954 = vsel %vm4875, %v4869, -inf
        %4955 = vmax.xlane.f32.xlu0 %v4954
        %v4956 = vpop.xlane.xlu0 %4955
        %v4957 = vsel %vm4875, %v4870, -inf
        %4958 = vmax.xlane.f32.xlu0 %v4957
        %v4959 = vpop.xlane.xlu0 %4958
        %v4960 = vsel %vm4875, %v4871, -inf
        %4961 = vmax.xlane.f32.xlu0 %v4960
        %v4962 = vpop.xlane.xlu0 %4961
        %v4963 = vsel %vm4875, %v4872, -inf
        %4964 = vmax.xlane.f32.xlu0 %v4963
        %v4965 = vpop.xlane.xlu0 %4964
        %v4966 = vsel %vm4875, %v4873, -inf
        %4967 = vmax.xlane.f32.xlu0 %v4966
        %v4968 = vpop.xlane.xlu0 %4967
        %v4969 = vsel %vm4875, %v4874, -inf
        %4970 = vmax.xlane.f32.xlu0 %v4969
        %v4971 = vpop.xlane.xlu0 %4970
        %v4972 = vsub.f32 %v4843, %v4878
        %v4973 = vsub.f32 %v4844, %v4881
        %v4974 = vsub.f32 %v4845, %v4884
        %v4975 = vsub.f32 %v4846, %v4887
        %v4976 = vsub.f32 %v4847, %v4890
        %v4977 = vsub.f32 %v4848, %v4893
        %v4978 = vsub.f32 %v4849, %v4896
        %v4979 = vsub.f32 %v4850, %v4899
        %v4980 = vsub.f32 %v4851, %v4902
        %v4981 = vsub.f32 %v4852, %v4905
        %v4982 = vsub.f32 %v4853, %v4908
        %v4983 = vsub.f32 %v4854, %v4911
        %v4984 = vsub.f32 %v4855, %v4914
        %v4985 = vsub.f32 %v4856, %v4917
        %v4986 = vsub.f32 %v4857, %v4920
        %v4987 = vsub.f32 %v4858, %v4923
        %v4988 = vsub.f32 %v4859, %v4926
        %v4989 = vsub.f32 %v4860, %v4929
        %v4990 = vsub.f32 %v4861, %v4932
        %v4991 = vsub.f32 %v4862, %v4935
        %v4992 = vsub.f32 %v4863, %v4938
        %v4993 = vsub.f32 %v4864, %v4941
        %v4994 = vsub.f32 %v4865, %v4944
        %v4995 = vsub.f32 %v4866, %v4947
        %v4996 = vsub.f32 %v4867, %v4950
        %v4997 = vsub.f32 %v4868, %v4953
        %v4998 = vsub.f32 %v4869, %v4956
        %v4999 = vsub.f32 %v4870, %v4959
        %v5000 = vsub.f32 %v4871, %v4962
        %v5001 = vsub.f32 %v4872, %v4965
        %v5002 = vsub.f32 %v4873, %v4968
        %v5003 = vsub.f32 %v4874, %v4971
        %v5004 = vmul.f32 %v4972, 1.442695
        %v5005 = vpow.pop %v5004
        %v5006 = vmul.f32 %v4973, 1.442695
        %v5007 = vpow.pop %v5006
        %v5008 = vmul.f32 %v4974, 1.442695
        %v5009 = vpow.pop %v5008
        %v5010 = vmul.f32 %v4975, 1.442695
        %v5011 = vpow.pop %v5010
        %v5012 = vmul.f32 %v4976, 1.442695
        %v5013 = vpow.pop %v5012
        %v5014 = vmul.f32 %v4977, 1.442695
        %v5015 = vpow.pop %v5014
        %v5016 = vmul.f32 %v4978, 1.442695
        %v5017 = vpow.pop %v5016
        %v5018 = vmul.f32 %v4979, 1.442695
        %v5019 = vpow.pop %v5018
        %v5020 = vmul.f32 %v4980, 1.442695
        %v5021 = vpow.pop %v5020
        %v5022 = vmul.f32 %v4981, 1.442695
        %v5023 = vpow.pop %v5022
        %v5024 = vmul.f32 %v4982, 1.442695
        %v5025 = vpow.pop %v5024
        %v5026 = vmul.f32 %v4983, 1.442695
        %v5027 = vpow.pop %v5026
        %v5028 = vmul.f32 %v4984, 1.442695
        %v5029 = vpow.pop %v5028
        %v5030 = vmul.f32 %v4985, 1.442695
        %v5031 = vpow.pop %v5030
        %v5032 = vmul.f32 %v4986, 1.442695
        %v5033 = vpow.pop %v5032
        %v5034 = vmul.f32 %v4987, 1.442695
        %v5035 = vpow.pop %v5034
        %v5036 = vmul.f32 %v4988, 1.442695
        %v5037 = vpow.pop %v5036
        %v5038 = vmul.f32 %v4989, 1.442695
        %v5039 = vpow.pop %v5038
        %v5040 = vmul.f32 %v4990, 1.442695
        %v5041 = vpow.pop %v5040
        %v5042 = vmul.f32 %v4991, 1.442695
        %v5043 = vpow.pop %v5042
        %v5044 = vmul.f32 %v4992, 1.442695
        %v5045 = vpow.pop %v5044
        %v5046 = vmul.f32 %v4993, 1.442695
        %v5047 = vpow.pop %v5046
        %v5048 = vmul.f32 %v4994, 1.442695
        %v5049 = vpow.pop %v5048
        %v5050 = vmul.f32 %v4995, 1.442695
        %v5051 = vpow.pop %v5050
        %v5052 = vmul.f32 %v4996, 1.442695
        %v5053 = vpow.pop %v5052
        %v5054 = vmul.f32 %v4997, 1.442695
        %v5055 = vpow.pop %v5054
        %v5056 = vmul.f32 %v4998, 1.442695
        %v5057 = vpow.pop %v5056
        %v5058 = vmul.f32 %v4999, 1.442695
        %v5059 = vpow.pop %v5058
        %v5060 = vmul.f32 %v5000, 1.442695
        %v5061 = vpow.pop %v5060
        %v5062 = vmul.f32 %v5001, 1.442695
        %v5063 = vpow.pop %v5062
        %v5064 = vmul.f32 %v5002, 1.442695
        %v5065 = vpow.pop %v5064
        %v5066 = vmul.f32 %v5003, 1.442695
        %v5067 = vpow.pop %v5066
        %v5068 = vsel %vm4875, %v5005, 0.0
        %5069 = vadd.xlane.f32.xlu0 %v5068
        %v5070 = vpop.xlane.xlu0 %5069
        %v5071 = vsel %vm4875, %v5007, 0.0
        %5072 = vadd.xlane.f32.xlu0 %v5071
        %v5073 = vpop.xlane.xlu0 %5072
        %v5074 = vsel %vm4875, %v5009, 0.0
        %5075 = vadd.xlane.f32.xlu0 %v5074
        %v5076 = vpop.xlane.xlu0 %5075
        %v5077 = vsel %vm4875, %v5011, 0.0
        %5078 = vadd.xlane.f32.xlu0 %v5077
        %v5079 = vpop.xlane.xlu0 %5078
        %v5080 = vsel %vm4875, %v5013, 0.0
        %5081 = vadd.xlane.f32.xlu0 %v5080
        %v5082 = vpop.xlane.xlu0 %5081
        %v5083 = vsel %vm4875, %v5015, 0.0
        %5084 = vadd.xlane.f32.xlu0 %v5083
        %v5085 = vpop.xlane.xlu0 %5084
        %v5086 = vsel %vm4875, %v5017, 0.0
        %5087 = vadd.xlane.f32.xlu0 %v5086
        %v5088 = vpop.xlane.xlu0 %5087
        %v5089 = vsel %vm4875, %v5019, 0.0
        %5090 = vadd.xlane.f32.xlu0 %v5089
        %v5091 = vpop.xlane.xlu0 %5090
        %v5092 = vsel %vm4875, %v5021, 0.0
        %5093 = vadd.xlane.f32.xlu0 %v5092
        %v5094 = vpop.xlane.xlu0 %5093
        %v5095 = vsel %vm4875, %v5023, 0.0
        %5096 = vadd.xlane.f32.xlu0 %v5095
        %v5097 = vpop.xlane.xlu0 %5096
        %v5098 = vsel %vm4875, %v5025, 0.0
        %5099 = vadd.xlane.f32.xlu0 %v5098
        %v5100 = vpop.xlane.xlu0 %5099
        %v5101 = vsel %vm4875, %v5027, 0.0
        %5102 = vadd.xlane.f32.xlu0 %v5101
        %v5103 = vpop.xlane.xlu0 %5102
        %v5104 = vsel %vm4875, %v5029, 0.0
        %5105 = vadd.xlane.f32.xlu0 %v5104
        %v5106 = vpop.xlane.xlu0 %5105
        %v5107 = vsel %vm4875, %v5031, 0.0
        %5108 = vadd.xlane.f32.xlu0 %v5107
        %v5109 = vpop.xlane.xlu0 %5108
        %v5110 = vsel %vm4875, %v5033, 0.0
        %5111 = vadd.xlane.f32.xlu0 %v5110
        %v5112 = vpop.xlane.xlu0 %5111
        %v5113 = vsel %vm4875, %v5035, 0.0
        %5114 = vadd.xlane.f32.xlu0 %v5113
        %v5115 = vpop.xlane.xlu0 %5114
        %v5116 = vsel %vm4875, %v5037, 0.0
        %5117 = vadd.xlane.f32.xlu0 %v5116
        %v5118 = vpop.xlane.xlu0 %5117
        %v5119 = vsel %vm4875, %v5039, 0.0
        %5120 = vadd.xlane.f32.xlu0 %v5119
        %v5121 = vpop.xlane.xlu0 %5120
        %v5122 = vsel %vm4875, %v5041, 0.0
        %5123 = vadd.xlane.f32.xlu0 %v5122
        %v5124 = vpop.xlane.xlu0 %5123
        %v5125 = vsel %vm4875, %v5043, 0.0
        %5126 = vadd.xlane.f32.xlu0 %v5125
        %v5127 = vpop.xlane.xlu0 %5126
        %v5128 = vsel %vm4875, %v5045, 0.0
        %5129 = vadd.xlane.f32.xlu0 %v5128
        %v5130 = vpop.xlane.xlu0 %5129
        %v5131 = vsel %vm4875, %v5047, 0.0
        %5132 = vadd.xlane.f32.xlu0 %v5131
        %v5133 = vpop.xlane.xlu0 %5132
        %v5134 = vsel %vm4875, %v5049, 0.0
        %5135 = vadd.xlane.f32.xlu0 %v5134
        %v5136 = vpop.xlane.xlu0 %5135
        %v5137 = vsel %vm4875, %v5051, 0.0
        %5138 = vadd.xlane.f32.xlu0 %v5137
        %v5139 = vpop.xlane.xlu0 %5138
        %v5140 = vsel %vm4875, %v5053, 0.0
        %5141 = vadd.xlane.f32.xlu0 %v5140
        %v5142 = vpop.xlane.xlu0 %5141
        %v5143 = vsel %vm4875, %v5055, 0.0
        %5144 = vadd.xlane.f32.xlu0 %v5143
        %v5145 = vpop.xlane.xlu0 %5144
        %v5146 = vsel %vm4875, %v5057, 0.0
        %5147 = vadd.xlane.f32.xlu0 %v5146
        %v5148 = vpop.xlane.xlu0 %5147
        %v5149 = vsel %vm4875, %v5059, 0.0
        %5150 = vadd.xlane.f32.xlu0 %v5149
        %v5151 = vpop.xlane.xlu0 %5150
        %v5152 = vsel %vm4875, %v5061, 0.0
        %5153 = vadd.xlane.f32.xlu0 %v5152
        %v5154 = vpop.xlane.xlu0 %5153
        %v5155 = vsel %vm4875, %v5063, 0.0
        %5156 = vadd.xlane.f32.xlu0 %v5155
        %v5157 = vpop.xlane.xlu0 %5156
        %v5158 = vsel %vm4875, %v5065, 0.0
        %5159 = vadd.xlane.f32.xlu0 %v5158
        %v5160 = vpop.xlane.xlu0 %5159
        %v5161 = vsel %vm4875, %v5067, 0.0
        %5162 = vadd.xlane.f32.xlu0 %v5161
        %v5163 = vpop.xlane.xlu0 %5162
        %v5164 = vrcp.pop %v5070
        %v5165 = vrcp.pop %v5073
        %v5166 = vrcp.pop %v5076
        %v5167 = vrcp.pop %v5079
        %v5168 = vrcp.pop %v5082
        %v5169 = vrcp.pop %v5085
        %v5170 = vrcp.pop %v5088
        %v5171 = vrcp.pop %v5091
        %v5172 = vrcp.pop %v5094
        %v5173 = vrcp.pop %v5097
        %v5174 = vrcp.pop %v5100
        %v5175 = vrcp.pop %v5103
        %v5176 = vrcp.pop %v5106
        %v5177 = vrcp.pop %v5109
        %v5178 = vrcp.pop %v5112
        %v5179 = vrcp.pop %v5115
        %v5180 = vrcp.pop %v5118
        %v5181 = vrcp.pop %v5121
        %v5182 = vrcp.pop %v5124
        %v5183 = vrcp.pop %v5127
        %v5184 = vrcp.pop %v5130
        %v5185 = vrcp.pop %v5133
        %v5186 = vrcp.pop %v5136
        %v5187 = vrcp.pop %v5139
        %v5188 = vrcp.pop %v5142
        %v5189 = vrcp.pop %v5145
        %v5190 = vrcp.pop %v5148
        %v5191 = vrcp.pop %v5151
        %v5192 = vrcp.pop %v5154
        %v5193 = vrcp.pop %v5157
        %v5194 = vrcp.pop %v5160
        %v5195 = vrcp.pop %v5163
        %v5196 = vmul.f32 %v5005, %v5164
        %v5197 = vmul.f32 %v5007, %v5165
        %v5198 = vmul.f32 %v5009, %v5166
        %v5199 = vmul.f32 %v5011, %v5167
        %v5200 = vmul.f32 %v5013, %v5168
        %v5201 = vmul.f32 %v5015, %v5169
        %v5202 = vmul.f32 %v5017, %v5170
        %v5203 = vmul.f32 %v5019, %v5171
        %v5204 = vmul.f32 %v5021, %v5172
        %v5205 = vmul.f32 %v5023, %v5173
        %v5206 = vmul.f32 %v5025, %v5174
        %v5207 = vmul.f32 %v5027, %v5175
        %v5208 = vmul.f32 %v5029, %v5176
        %v5209 = vmul.f32 %v5031, %v5177
        %v5210 = vmul.f32 %v5033, %v5178
        %v5211 = vmul.f32 %v5035, %v5179
        %v5212 = vmul.f32 %v5037, %v5180
        %v5213 = vmul.f32 %v5039, %v5181
        %v5214 = vmul.f32 %v5041, %v5182
        %v5215 = vmul.f32 %v5043, %v5183
        %v5216 = vmul.f32 %v5045, %v5184
        %v5217 = vmul.f32 %v5047, %v5185
        %v5218 = vmul.f32 %v5049, %v5186
        %v5219 = vmul.f32 %v5051, %v5187
        %v5220 = vmul.f32 %v5053, %v5188
        %v5221 = vmul.f32 %v5055, %v5189
        %v5222 = vmul.f32 %v5057, %v5190
        %v5223 = vmul.f32 %v5059, %v5191
        %v5224 = vmul.f32 %v5061, %v5192
        %v5225 = vmul.f32 %v5063, %v5193
        %v5226 = vmul.f32 %v5065, %v5194
        %v5227 = vmul.f32 %v5067, %v5195
        %v5229 = vsel %vm4875, %v5196, 0
        %5231 = vmatprep.subr.mxu0 0.0
        %5232 = vmatpush1.msra.mxu0 %v2091
        %5233 = vmatprep.subr.mxu0 0.0
        %5234 = vmatpush1.msra.mxu0 0.0
        %5235 = vmatprep.subr.mxu0 0.0
        %5236 = vmatpush1.msra.mxu0 0.0
        %5237 = vmatprep.subr.mxu0 0.0
        %5238 = vmatpush1.msra.mxu0 0.0
        %5239 = vmatprep.subr.mxu0 0.0
        %5240 = vmatpush1.msra.mxu0 0.0
        %5241 = vmatprep.subr.mxu0 0.0
        %5242 = vmatpush1.msra.mxu0 0.0
        %5243 = vmatprep.subr.mxu0 0.0
        %5244 = vmatpush1.msra.mxu0 0.0
        %5245 = vmatprep.subr.mxu0 0.0
        %5246 = vmatpush1.msra.mxu0 0.0
        %5247 = vmatprep.subr.mxu0 0.0
        %5248 = vmatpush1.msra.mxu0 0.0
        %5249 = vmatprep.subr.mxu0 0.0
        %5250 = vmatpush1.msra.mxu0 0.0
        %5251 = vmatprep.subr.mxu0 0.0
        %5252 = vmatpush1.msra.mxu0 0.0
        %5253 = vmatprep.subr.mxu0 0.0
        %5254 = vmatpush1.msra.mxu0 0.0
        %5255 = vmatprep.subr.mxu0 0.0
        %5256 = vmatpush1.msra.mxu0 0.0
        %5257 = vmatprep.subr.mxu0 0.0
        %5258 = vmatpush1.msra.mxu0 0.0
        %5259 = vmatprep.subr.mxu0 0.0
        %5260 = vmatpush1.msra.mxu0 0.0
        %5261 = vmatprep.subr.mxu0 0.0
        %5262 = vmatpush1.msra.mxu0 0.0
        %5263 = vmatprep.subr.mxu0 0.0
        %5264 = vmatpush1.msra.mxu0 0.0
        %5265 = vmatprep.subr.mxu0 0.0
        %5266 = vmatpush1.msra.mxu0 0.0
        %5267 = vmatprep.subr.mxu0 0.0
        %5268 = vmatpush1.msra.mxu0 0.0
        %5269 = vmatprep.subr.mxu0 0.0
        %5270 = vmatpush1.msra.mxu0 0.0
        %5271 = vmatprep.subr.mxu0 0.0
        %5272 = vmatpush1.msra.mxu0 0.0
        %5273 = vmatprep.subr.mxu0 0.0
        %5274 = vmatpush1.msra.mxu0 0.0
        %5275 = vmatprep.subr.mxu0 0.0
        %5276 = vmatpush1.msra.mxu0 0.0
        %5277 = vmatprep.subr.mxu0 0.0
        %5278 = vmatpush1.msra.mxu0 0.0
        %5279 = vmatprep.subr.mxu0 0.0
        %5280 = vmatpush1.msra.mxu0 0.0
        %5281 = vmatprep.subr.mxu0 0.0
        %5282 = vmatpush1.msra.mxu0 0.0
        %5283 = vmatprep.subr.mxu0 0.0
        %5284 = vmatpush1.msra.mxu0 0.0
        %5285 = vmatprep.subr.mxu0 0.0
        %5286 = vmatpush1.msra.mxu0 0.0
        %5287 = vmatprep.subr.mxu0 0.0
        %5288 = vmatpush1.msra.mxu0 0.0
        %5289 = vmatprep.subr.mxu0 0.0
        %5290 = vmatpush1.msra.mxu0 0.0
        %5291 = vmatprep.subr.mxu0 0.0
        %5292 = vmatpush1.msra.mxu0 0.0
        %5293 = vmatprep.subr.mxu0 0.0
        %5294 = vmatpush1.msra.mxu0 0.0
        %5295 = vmatprep.mubr.f32.mxu0 0.0
        %5296 = vmatmul.mubr.f32.gmra.mrb[0].mxu0 %v5229
        %v5297 = vpop.f32.mrb[0].mxu0
        %v5298 = vadd.f32 0.0, %v5297
        %v5299 = vpop.f32.mrb[0].mxu0
        %5300 = vdwg.mxu0
        %v5302 = vsel %vm4875, %v5197, 0
        %5304 = vmatprep.subr.mxu0 0.0
        %5305 = vmatpush1.msra.mxu0 %v2092
        %5306 = vmatprep.subr.mxu0 0.0
        %5307 = vmatpush1.msra.mxu0 0.0
        %5308 = vmatprep.subr.mxu0 0.0
        %5309 = vmatpush1.msra.mxu0 0.0
        %5310 = vmatprep.subr.mxu0 0.0
        %5311 = vmatpush1.msra.mxu0 0.0
        %5312 = vmatprep.subr.mxu0 0.0
        %5313 = vmatpush1.msra.mxu0 0.0
        %5314 = vmatprep.subr.mxu0 0.0
        %5315 = vmatpush1.msra.mxu0 0.0
        %5316 = vmatprep.subr.mxu0 0.0
        %5317 = vmatpush1.msra.mxu0 0.0
        %5318 = vmatprep.subr.mxu0 0.0
        %5319 = vmatpush1.msra.mxu0 0.0
        %5320 = vmatprep.subr.mxu0 0.0
        %5321 = vmatpush1.msra.mxu0 0.0
        %5322 = vmatprep.subr.mxu0 0.0
        %5323 = vmatpush1.msra.mxu0 0.0
        %5324 = vmatprep.subr.mxu0 0.0
        %5325 = vmatpush1.msra.mxu0 0.0
        %5326 = vmatprep.subr.mxu0 0.0
        %5327 = vmatpush1.msra.mxu0 0.0
        %5328 = vmatprep.subr.mxu0 0.0
        %5329 = vmatpush1.msra.mxu0 0.0
        %5330 = vmatprep.subr.mxu0 0.0
        %5331 = vmatpush1.msra.mxu0 0.0
        %5332 = vmatprep.subr.mxu0 0.0
        %5333 = vmatpush1.msra.mxu0 0.0
        %5334 = vmatprep.subr.mxu0 0.0
        %5335 = vmatpush1.msra.mxu0 0.0
        %5336 = vmatprep.subr.mxu0 0.0
        %5337 = vmatpush1.msra.mxu0 0.0
        %5338 = vmatprep.subr.mxu0 0.0
        %5339 = vmatpush1.msra.mxu0 0.0
        %5340 = vmatprep.subr.mxu0 0.0
        %5341 = vmatpush1.msra.mxu0 0.0
        %5342 = vmatprep.subr.mxu0 0.0
        %5343 = vmatpush1.msra.mxu0 0.0
        %5344 = vmatprep.subr.mxu0 0.0
        %5345 = vmatpush1.msra.mxu0 0.0
        %5346 = vmatprep.subr.mxu0 0.0
        %5347 = vmatpush1.msra.mxu0 0.0
        %5348 = vmatprep.subr.mxu0 0.0
        %5349 = vmatpush1.msra.mxu0 0.0
        %5350 = vmatprep.subr.mxu0 0.0
        %5351 = vmatpush1.msra.mxu0 0.0
        %5352 = vmatprep.subr.mxu0 0.0
        %5353 = vmatpush1.msra.mxu0 0.0
        %5354 = vmatprep.subr.mxu0 0.0
        %5355 = vmatpush1.msra.mxu0 0.0
        %5356 = vmatprep.subr.mxu0 0.0
        %5357 = vmatpush1.msra.mxu0 0.0
        %5358 = vmatprep.subr.mxu0 0.0
        %5359 = vmatpush1.msra.mxu0 0.0
        %5360 = vmatprep.subr.mxu0 0.0
        %5361 = vmatpush1.msra.mxu0 0.0
        %5362 = vmatprep.subr.mxu0 0.0
        %5363 = vmatpush1.msra.mxu0 0.0
        %5364 = vmatprep.subr.mxu0 0.0
        %5365 = vmatpush1.msra.mxu0 0.0
        %5366 = vmatprep.subr.mxu0 0.0
        %5367 = vmatpush1.msra.mxu0 0.0
        %5368 = vmatprep.mubr.f32.mxu0 0.0
        %5369 = vmatmul.mubr.f32.gmra.mrb[0].mxu0 %v5302
        %v5370 = vpop.f32.mrb[0].mxu0
        %v5371 = vadd.f32 0.0, %v5370
        %v5372 = vpop.f32.mrb[0].mxu0
        %5373 = vdwg.mxu0
        %v5375 = vsel %vm4875, %v5198, 0
        %5377 = vmatprep.subr.mxu0 0.0
        %5378 = vmatpush1.msra.mxu0 %v2093
        %5379 = vmatprep.subr.mxu0 0.0
        %5380 = vmatpush1.msra.mxu0 0.0
        %5381 = vmatprep.subr.mxu0 0.0
        %5382 = vmatpush1.msra.mxu0 0.0
        %5383 = vmatprep.subr.mxu0 0.0
        %5384 = vmatpush1.msra.mxu0 0.0
        %5385 = vmatprep.subr.mxu0 0.0
        %5386 = vmatpush1.msra.mxu0 0.0
        %5387 = vmatprep.subr.mxu0 0.0
        %5388 = vmatpush1.msra.mxu0 0.0
        %5389 = vmatprep.subr.mxu0 0.0
        %5390 = vmatpush1.msra.mxu0 0.0
        %5391 = vmatprep.subr.mxu0 0.0
        %5392 = vmatpush1.msra.mxu0 0.0
        %5393 = vmatprep.subr.mxu0 0.0
        %5394 = vmatpush1.msra.mxu0 0.0
        %5395 = vmatprep.subr.mxu0 0.0
        %5396 = vmatpush1.msra.mxu0 0.0
        %5397 = vmatprep.subr.mxu0 0.0
        %5398 = vmatpush1.msra.mxu0 0.0
        %5399 = vmatprep.subr.mxu0 0.0
        %5400 = vmatpush1.msra.mxu0 0.0
        %5401 = vmatprep.subr.mxu0 0.0
        %5402 = vmatpush1.msra.mxu0 0.0
        %5403 = vmatprep.subr.mxu0 0.0
        %5404 = vmatpush1.msra.mxu0 0.0
        %5405 = vmatprep.subr.mxu0 0.0
        %5406 = vmatpush1.msra.mxu0 0.0
        %5407 = vmatprep.subr.mxu0 0.0
        %5408 = vmatpush1.msra.mxu0 0.0
        %5409 = vmatprep.subr.mxu0 0.0
        %5410 = vmatpush1.msra.mxu0 0.0
        %5411 = vmatprep.subr.mxu0 0.0
        %5412 = vmatpush1.msra.mxu0 0.0
        %5413 = vmatprep.subr.mxu0 0.0
        %5414 = vmatpush1.msra.mxu0 0.0
        %5415 = vmatprep.subr.mxu0 0.0
        %5416 = vmatpush1.msra.mxu0 0.0
        %5417 = vmatprep.subr.mxu0 0.0
        %5418 = vmatpush1.msra.mxu0 0.0
        %5419 = vmatprep.subr.mxu0 0.0
        %5420 = vmatpush1.msra.mxu0 0.0
        %5421 = vmatprep.subr.mxu0 0.0
        %5422 = vmatpush1.msra.mxu0 0.0
        %5423 = vmatprep.subr.mxu0 0.0
        %5424 = vmatpush1.msra.mxu0 0.0
        %5425 = vmatprep.subr.mxu0 0.0
        %5426 = vmatpush1.msra.mxu0 0.0
        %5427 = vmatprep.subr.mxu0 0.0
        %5428 = vmatpush1.msra.mxu0 0.0
        %5429 = vmatprep.subr.mxu0 0.0
        %5430 = vmatpush1.msra.mxu0 0.0
        %5431 = vmatprep.subr.mxu0 0.0
        %5432 = vmatpush1.msra.mxu0 0.0
        %5433 = vmatprep.subr.mxu0 0.0
        %5434 = vmatpush1.msra.mxu0 0.0
        %5435 = vmatprep.subr.mxu0 0.0
        %5436 = vmatpush1.msra.mxu0 0.0
        %5437 = vmatprep.subr.mxu0 0.0
        %5438 = vmatpush1.msra.mxu0 0.0
        %5439 = vmatprep.subr.mxu0 0.0
        %5440 = vmatpush1.msra.mxu0 0.0
        %5441 = vmatprep.mubr.f32.mxu0 0.0
        %5442 = vmatmul.mubr.f32.gmra.mrb[0].mxu0 %v5375
        %v5443 = vpop.f32.mrb[0].mxu0
        %v5444 = vadd.f32 0.0, %v5443
        %v5445 = vpop.f32.mrb[0].mxu0
        %5446 = vdwg.mxu0
        %v5448 = vsel %vm4875, %v5199, 0
        %5450 = vmatprep.subr.mxu0 0.0
        %5451 = vmatpush1.msra.mxu0 %v2094
        %5452 = vmatprep.subr.mxu0 0.0
        %5453 = vmatpush1.msra.mxu0 0.0
        %5454 = vmatprep.subr.mxu0 0.0
        %5455 = vmatpush1.msra.mxu0 0.0
        %5456 = vmatprep.subr.mxu0 0.0
        %5457 = vmatpush1.msra.mxu0 0.0
        %5458 = vmatprep.subr.mxu0 0.0
        %5459 = vmatpush1.msra.mxu0 0.0
        %5460 = vmatprep.subr.mxu0 0.0
        %5461 = vmatpush1.msra.mxu0 0.0
        %5462 = vmatprep.subr.mxu0 0.0
        %5463 = vmatpush1.msra.mxu0 0.0
        %5464 = vmatprep.subr.mxu0 0.0
        %5465 = vmatpush1.msra.mxu0 0.0
        %5466 = vmatprep.subr.mxu0 0.0
        %5467 = vmatpush1.msra.mxu0 0.0
        %5468 = vmatprep.subr.mxu0 0.0
        %5469 = vmatpush1.msra.mxu0 0.0
        %5470 = vmatprep.subr.mxu0 0.0
        %5471 = vmatpush1.msra.mxu0 0.0
        %5472 = vmatprep.subr.mxu0 0.0
        %5473 = vmatpush1.msra.mxu0 0.0
        %5474 = vmatprep.subr.mxu0 0.0
        %5475 = vmatpush1.msra.mxu0 0.0
        %5476 = vmatprep.subr.mxu0 0.0
        %5477 = vmatpush1.msra.mxu0 0.0
        %5478 = vmatprep.subr.mxu0 0.0
        %5479 = vmatpush1.msra.mxu0 0.0
        %5480 = vmatprep.subr.mxu0 0.0
        %5481 = vmatpush1.msra.mxu0 0.0
        %5482 = vmatprep.subr.mxu0 0.0
        %5483 = vmatpush1.msra.mxu0 0.0
        %5484 = vmatprep.subr.mxu0 0.0
        %5485 = vmatpush1.msra.mxu0 0.0
        %5486 = vmatprep.subr.mxu0 0.0
        %5487 = vmatpush1.msra.mxu0 0.0
        %5488 = vmatprep.subr.mxu0 0.0
        %5489 = vmatpush1.msra.mxu0 0.0
        %5490 = vmatprep.subr.mxu0 0.0
        %5491 = vmatpush1.msra.mxu0 0.0
        %5492 = vmatprep.subr.mxu0 0.0
        %5493 = vmatpush1.msra.mxu0 0.0
        %5494 = vmatprep.subr.mxu0 0.0
        %5495 = vmatpush1.msra.mxu0 0.0
        %5496 = vmatprep.subr.mxu0 0.0
        %5497 = vmatpush1.msra.mxu0 0.0
        %5498 = vmatprep.subr.mxu0 0.0
        %5499 = vmatpush1.msra.mxu0 0.0
        %5500 = vmatprep.subr.mxu0 0.0
        %5501 = vmatpush1.msra.mxu0 0.0
        %5502 = vmatprep.subr.mxu0 0.0
        %5503 = vmatpush1.msra.mxu0 0.0
        %5504 = vmatprep.subr.mxu0 0.0
        %5505 = vmatpush1.msra.mxu0 0.0
        %5506 = vmatprep.subr.mxu0 0.0
        %5507 = vmatpush1.msra.mxu0 0.0
        %5508 = vmatprep.subr.mxu0 0.0
        %5509 = vmatpush1.msra.mxu0 0.0
        %5510 = vmatprep.subr.mxu0 0.0
        %5511 = vmatpush1.msra.mxu0 0.0
        %5512 = vmatprep.subr.mxu0 0.0
        %5513 = vmatpush1.msra.mxu0 0.0
        %5514 = vmatprep.mubr.f32.mxu0 0.0
        %5515 = vmatmul.mubr.f32.gmra.mrb[0].mxu0 %v5448
        %v5516 = vpop.f32.mrb[0].mxu0
        %v5517 = vadd.f32 0.0, %v5516
        %v5518 = vpop.f32.mrb[0].mxu0
        %5519 = vdwg.mxu0
        %v5521 = vsel %vm4875, %v5200, 0
        %5523 = vmatprep.subr.mxu0 0.0
        %5524 = vmatpush1.msra.mxu0 %v2095
        %5525 = vmatprep.subr.mxu0 0.0
        %5526 = vmatpush1.msra.mxu0 0.0
        %5527 = vmatprep.subr.mxu0 0.0
        %5528 = vmatpush1.msra.mxu0 0.0
        %5529 = vmatprep.subr.mxu0 0.0
        %5530 = vmatpush1.msra.mxu0 0.0
        %5531 = vmatprep.subr.mxu0 0.0
        %5532 = vmatpush1.msra.mxu0 0.0
        %5533 = vmatprep.subr.mxu0 0.0
        %5534 = vmatpush1.msra.mxu0 0.0
        %5535 = vmatprep.subr.mxu0 0.0
        %5536 = vmatpush1.msra.mxu0 0.0
        %5537 = vmatprep.subr.mxu0 0.0
        %5538 = vmatpush1.msra.mxu0 0.0
        %5539 = vmatprep.subr.mxu0 0.0
        %5540 = vmatpush1.msra.mxu0 0.0
        %5541 = vmatprep.subr.mxu0 0.0
        %5542 = vmatpush1.msra.mxu0 0.0
        %5543 = vmatprep.subr.mxu0 0.0
        %5544 = vmatpush1.msra.mxu0 0.0
        %5545 = vmatprep.subr.mxu0 0.0
        %5546 = vmatpush1.msra.mxu0 0.0
        %5547 = vmatprep.subr.mxu0 0.0
        %5548 = vmatpush1.msra.mxu0 0.0
        %5549 = vmatprep.subr.mxu0 0.0
        %5550 = vmatpush1.msra.mxu0 0.0
        %5551 = vmatprep.subr.mxu0 0.0
        %5552 = vmatpush1.msra.mxu0 0.0
        %5553 = vmatprep.subr.mxu0 0.0
        %5554 = vmatpush1.msra.mxu0 0.0
        %5555 = vmatprep.subr.mxu0 0.0
        %5556 = vmatpush1.msra.mxu0 0.0
        %5557 = vmatprep.subr.mxu0 0.0
        %5558 = vmatpush1.msra.mxu0 0.0
        %5559 = vmatprep.subr.mxu0 0.0
        %5560 = vmatpush1.msra.mxu0 0.0
        %5561 = vmatprep.subr.mxu0 0.0
        %5562 = vmatpush1.msra.mxu0 0.0
        %5563 = vmatprep.subr.mxu0 0.0
        %5564 = vmatpush1.msra.mxu0 0.0
        %5565 = vmatprep.subr.mxu0 0.0
        %5566 = vmatpush1.msra.mxu0 0.0
        %5567 = vmatprep.subr.mxu0 0.0
        %5568 = vmatpush1.msra.mxu0 0.0
        %5569 = vmatprep.subr.mxu0 0.0
        %5570 = vmatpush1.msra.mxu0 0.0
        %5571 = vmatprep.subr.mxu0 0.0
        %5572 = vmatpush1.msra.mxu0 0.0
        %5573 = vmatprep.subr.mxu0 0.0
        %5574 = vmatpush1.msra.mxu0 0.0
        %5575 = vmatprep.subr.mxu0 0.0
        %5576 = vmatpush1.msra.mxu0 0.0
        %5577 = vmatprep.subr.mxu0 0.0
        %5578 = vmatpush1.msra.mxu0 0.0
        %5579 = vmatprep.subr.mxu0 0.0
        %5580 = vmatpush1.msra.mxu0 0.0
        %5581 = vmatprep.subr.mxu0 0.0
        %5582 = vmatpush1.msra.mxu0 0.0
        %5583 = vmatprep.subr.mxu0 0.0
        %5584 = vmatpush1.msra.mxu0 0.0
        %5585 = vmatprep.subr.mxu0 0.0
        %5586 = vmatpush1.msra.mxu0 0.0
        %5587 = vmatprep.mubr.f32.mxu0 0.0
        %5588 = vmatmul.mubr.f32.gmra.mrb[0].mxu0 %v5521
        %v5589 = vpop.f32.mrb[0].mxu0
        %v5590 = vadd.f32 0.0, %v5589
        %v5591 = vpop.f32.mrb[0].mxu0
        %5592 = vdwg.mxu0
        %v5594 = vsel %vm4875, %v5201, 0
        %5596 = vmatprep.subr.mxu0 0.0
        %5597 = vmatpush1.msra.mxu0 %v2096
        %5598 = vmatprep.subr.mxu0 0.0
        %5599 = vmatpush1.msra.mxu0 0.0
        %5600 = vmatprep.subr.mxu0 0.0
        %5601 = vmatpush1.msra.mxu0 0.0
        %5602 = vmatprep.subr.mxu0 0.0
        %5603 = vmatpush1.msra.mxu0 0.0
        %5604 = vmatprep.subr.mxu0 0.0
        %5605 = vmatpush1.msra.mxu0 0.0
        %5606 = vmatprep.subr.mxu0 0.0
        %5607 = vmatpush1.msra.mxu0 0.0
        %5608 = vmatprep.subr.mxu0 0.0
        %5609 = vmatpush1.msra.mxu0 0.0
        %5610 = vmatprep.subr.mxu0 0.0
        %5611 = vmatpush1.msra.mxu0 0.0
        %5612 = vmatprep.subr.mxu0 0.0
        %5613 = vmatpush1.msra.mxu0 0.0
        %5614 = vmatprep.subr.mxu0 0.0
        %5615 = vmatpush1.msra.mxu0 0.0
        %5616 = vmatprep.subr.mxu0 0.0
        %5617 = vmatpush1.msra.mxu0 0.0
        %5618 = vmatprep.subr.mxu0 0.0
        %5619 = vmatpush1.msra.mxu0 0.0
        %5620 = vmatprep.subr.mxu0 0.0
        %5621 = vmatpush1.msra.mxu0 0.0
        %5622 = vmatprep.subr.mxu0 0.0
        %5623 = vmatpush1.msra.mxu0 0.0
        %5624 = vmatprep.subr.mxu0 0.0
        %5625 = vmatpush1.msra.mxu0 0.0
        %5626 = vmatprep.subr.mxu0 0.0
        %5627 = vmatpush1.msra.mxu0 0.0
        %5628 = vmatprep.subr.mxu0 0.0
        %5629 = vmatpush1.msra.mxu0 0.0
        %5630 = vmatprep.subr.mxu0 0.0
        %5631 = vmatpush1.msra.mxu0 0.0
        %5632 = vmatprep.subr.mxu0 0.0
        %5633 = vmatpush1.msra.mxu0 0.0
        %5634 = vmatprep.subr.mxu0 0.0
        %5635 = vmatpush1.msra.mxu0 0.0
        %5636 = vmatprep.subr.mxu0 0.0
        %5637 = vmatpush1.msra.mxu0 0.0
        %5638 = vmatprep.subr.mxu0 0.0
        %5639 = vmatpush1.msra.mxu0 0.0
        %5640 = vmatprep.subr.mxu0 0.0
        %5641 = vmatpush1.msra.mxu0 0.0
        %5642 = vmatprep.subr.mxu0 0.0
        %5643 = vmatpush1.msra.mxu0 0.0
        %5644 = vmatprep.subr.mxu0 0.0
        %5645 = vmatpush1.msra.mxu0 0.0
        %5646 = vmatprep.subr.mxu0 0.0
        %5647 = vmatpush1.msra.mxu0 0.0
        %5648 = vmatprep.subr.mxu0 0.0
        %5649 = vmatpush1.msra.mxu0 0.0
        %5650 = vmatprep.subr.mxu0 0.0
        %5651 = vmatpush1.msra.mxu0 0.0
        %5652 = vmatprep.subr.mxu0 0.0
        %5653 = vmatpush1.msra.mxu0 0.0
        %5654 = vmatprep.subr.mxu0 0.0
        %5655 = vmatpush1.msra.mxu0 0.0
        %5656 = vmatprep.subr.mxu0 0.0
        %5657 = vmatpush1.msra.mxu0 0.0
        %5658 = vmatprep.subr.mxu0 0.0
        %5659 = vmatpush1.msra.mxu0 0.0
        %5660 = vmatprep.mubr.f32.mxu0 0.0
        %5661 = vmatmul.mubr.f32.gmra.mrb[0].mxu0 %v5594
        %v5662 = vpop.f32.mrb[0].mxu0
        %v5663 = vadd.f32 0.0, %v5662
        %v5664 = vpop.f32.mrb[0].mxu0
        %5665 = vdwg.mxu0
        %v5667 = vsel %vm4875, %v5202, 0
        %5669 = vmatprep.subr.mxu0 0.0
        %5670 = vmatpush1.msra.mxu0 %v2097
        %5671 = vmatprep.subr.mxu0 0.0
        %5672 = vmatpush1.msra.mxu0 0.0
        %5673 = vmatprep.subr.mxu0 0.0
        %5674 = vmatpush1.msra.mxu0 0.0
        %5675 = vmatprep.subr.mxu0 0.0
        %5676 = vmatpush1.msra.mxu0 0.0
        %5677 = vmatprep.subr.mxu0 0.0
        %5678 = vmatpush1.msra.mxu0 0.0
        %5679 = vmatprep.subr.mxu0 0.0
        %5680 = vmatpush1.msra.mxu0 0.0
        %5681 = vmatprep.subr.mxu0 0.0
        %5682 = vmatpush1.msra.mxu0 0.0
        %5683 = vmatprep.subr.mxu0 0.0
        %5684 = vmatpush1.msra.mxu0 0.0
        %5685 = vmatprep.subr.mxu0 0.0
        %5686 = vmatpush1.msra.mxu0 0.0
        %5687 = vmatprep.subr.mxu0 0.0
        %5688 = vmatpush1.msra.mxu0 0.0
        %5689 = vmatprep.subr.mxu0 0.0
        %5690 = vmatpush1.msra.mxu0 0.0
        %5691 = vmatprep.subr.mxu0 0.0
        %5692 = vmatpush1.msra.mxu0 0.0
        %5693 = vmatprep.subr.mxu0 0.0
        %5694 = vmatpush1.msra.mxu0 0.0
        %5695 = vmatprep.subr.mxu0 0.0
        %5696 = vmatpush1.msra.mxu0 0.0
        %5697 = vmatprep.subr.mxu0 0.0
        %5698 = vmatpush1.msra.mxu0 0.0
        %5699 = vmatprep.subr.mxu0 0.0
        %5700 = vmatpush1.msra.mxu0 0.0
        %5701 = vmatprep.subr.mxu0 0.0
        %5702 = vmatpush1.msra.mxu0 0.0
        %5703 = vmatprep.subr.mxu0 0.0
        %5704 = vmatpush1.msra.mxu0 0.0
        %5705 = vmatprep.subr.mxu0 0.0
        %5706 = vmatpush1.msra.mxu0 0.0
        %5707 = vmatprep.subr.mxu0 0.0
        %5708 = vmatpush1.msra.mxu0 0.0
        %5709 = vmatprep.subr.mxu0 0.0
        %5710 = vmatpush1.msra.mxu0 0.0
        %5711 = vmatprep.subr.mxu0 0.0
        %5712 = vmatpush1.msra.mxu0 0.0
        %5713 = vmatprep.subr.mxu0 0.0
        %5714 = vmatpush1.msra.mxu0 0.0
        %5715 = vmatprep.subr.mxu0 0.0
        %5716 = vmatpush1.msra.mxu0 0.0
        %5717 = vmatprep.subr.mxu0 0.0
        %5718 = vmatpush1.msra.mxu0 0.0
        %5719 = vmatprep.subr.mxu0 0.0
        %5720 = vmatpush1.msra.mxu0 0.0
        %5721 = vmatprep.subr.mxu0 0.0
        %5722 = vmatpush1.msra.mxu0 0.0
        %5723 = vmatprep.subr.mxu0 0.0
        %5724 = vmatpush1.msra.mxu0 0.0
        %5725 = vmatprep.subr.mxu0 0.0
        %5726 = vmatpush1.msra.mxu0 0.0
        %5727 = vmatprep.subr.mxu0 0.0
        %5728 = vmatpush1.msra.mxu0 0.0
        %5729 = vmatprep.subr.mxu0 0.0
        %5730 = vmatpush1.msra.mxu0 0.0
        %5731 = vmatprep.subr.mxu0 0.0
        %5732 = vmatpush1.msra.mxu0 0.0
        %5733 = vmatprep.mubr.f32.mxu0 0.0
        %5734 = vmatmul.mubr.f32.gmra.mrb[0].mxu0 %v5667
        %v5735 = vpop.f32.mrb[0].mxu0
        %v5736 = vadd.f32 0.0, %v5735
        %v5737 = vpop.f32.mrb[0].mxu0
        %5738 = vdwg.mxu0
        %v5740 = vsel %vm4875, %v5203, 0
        %5742 = vmatprep.subr.mxu0 0.0
        %5743 = vmatpush1.msra.mxu0 %v2098
        %5744 = vmatprep.subr.mxu0 0.0
        %5745 = vmatpush1.msra.mxu0 0.0
        %5746 = vmatprep.subr.mxu0 0.0
        %5747 = vmatpush1.msra.mxu0 0.0
        %5748 = vmatprep.subr.mxu0 0.0
        %5749 = vmatpush1.msra.mxu0 0.0
        %5750 = vmatprep.subr.mxu0 0.0
        %5751 = vmatpush1.msra.mxu0 0.0
        %5752 = vmatprep.subr.mxu0 0.0
        %5753 = vmatpush1.msra.mxu0 0.0
        %5754 = vmatprep.subr.mxu0 0.0
        %5755 = vmatpush1.msra.mxu0 0.0
        %5756 = vmatprep.subr.mxu0 0.0
        %5757 = vmatpush1.msra.mxu0 0.0
        %5758 = vmatprep.subr.mxu0 0.0
        %5759 = vmatpush1.msra.mxu0 0.0
        %5760 = vmatprep.subr.mxu0 0.0
        %5761 = vmatpush1.msra.mxu0 0.0
        %5762 = vmatprep.subr.mxu0 0.0
        %5763 = vmatpush1.msra.mxu0 0.0
        %5764 = vmatprep.subr.mxu0 0.0
        %5765 = vmatpush1.msra.mxu0 0.0
        %5766 = vmatprep.subr.mxu0 0.0
        %5767 = vmatpush1.msra.mxu0 0.0
        %5768 = vmatprep.subr.mxu0 0.0
        %5769 = vmatpush1.msra.mxu0 0.0
        %5770 = vmatprep.subr.mxu0 0.0
        %5771 = vmatpush1.msra.mxu0 0.0
        %5772 = vmatprep.subr.mxu0 0.0
        %5773 = vmatpush1.msra.mxu0 0.0
        %5774 = vmatprep.subr.mxu0 0.0
        %5775 = vmatpush1.msra.mxu0 0.0
        %5776 = vmatprep.subr.mxu0 0.0
        %5777 = vmatpush1.msra.mxu0 0.0
        %5778 = vmatprep.subr.mxu0 0.0
        %5779 = vmatpush1.msra.mxu0 0.0
        %5780 = vmatprep.subr.mxu0 0.0
        %5781 = vmatpush1.msra.mxu0 0.0
        %5782 = vmatprep.subr.mxu0 0.0
        %5783 = vmatpush1.msra.mxu0 0.0
        %5784 = vmatprep.subr.mxu0 0.0
        %5785 = vmatpush1.msra.mxu0 0.0
        %5786 = vmatprep.subr.mxu0 0.0
        %5787 = vmatpush1.msra.mxu0 0.0
        %5788 = vmatprep.subr.mxu0 0.0
        %5789 = vmatpush1.msra.mxu0 0.0
        %5790 = vmatprep.subr.mxu0 0.0
        %5791 = vmatpush1.msra.mxu0 0.0
        %5792 = vmatprep.subr.mxu0 0.0
        %5793 = vmatpush1.msra.mxu0 0.0
        %5794 = vmatprep.subr.mxu0 0.0
        %5795 = vmatpush1.msra.mxu0 0.0
        %5796 = vmatprep.subr.mxu0 0.0
        %5797 = vmatpush1.msra.mxu0 0.0
        %5798 = vmatprep.subr.mxu0 0.0
        %5799 = vmatpush1.msra.mxu0 0.0
        %5800 = vmatprep.subr.mxu0 0.0
        %5801 = vmatpush1.msra.mxu0 0.0
        %5802 = vmatprep.subr.mxu0 0.0
        %5803 = vmatpush1.msra.mxu0 0.0
        %5804 = vmatprep.subr.mxu0 0.0
        %5805 = vmatpush1.msra.mxu0 0.0
        %5806 = vmatprep.mubr.f32.mxu0 0.0
        %5807 = vmatmul.mubr.f32.gmra.mrb[0].mxu0 %v5740
        %v5808 = vpop.f32.mrb[0].mxu0
        %v5809 = vadd.f32 0.0, %v5808
        %v5810 = vpop.f32.mrb[0].mxu0
        %5811 = vdwg.mxu0
        %v5813 = vsel %vm4875, %v5204, 0
        %5815 = vmatprep.subr.mxu0 0.0
        %5816 = vmatpush1.msra.mxu0 %v2099
        %5817 = vmatprep.subr.mxu0 0.0
        %5818 = vmatpush1.msra.mxu0 0.0
        %5819 = vmatprep.subr.mxu0 0.0
        %5820 = vmatpush1.msra.mxu0 0.0
        %5821 = vmatprep.subr.mxu0 0.0
        %5822 = vmatpush1.msra.mxu0 0.0
        %5823 = vmatprep.subr.mxu0 0.0
        %5824 = vmatpush1.msra.mxu0 0.0
        %5825 = vmatprep.subr.mxu0 0.0
        %5826 = vmatpush1.msra.mxu0 0.0
        %5827 = vmatprep.subr.mxu0 0.0
        %5828 = vmatpush1.msra.mxu0 0.0
        %5829 = vmatprep.subr.mxu0 0.0
        %5830 = vmatpush1.msra.mxu0 0.0
        %5831 = vmatprep.subr.mxu0 0.0
        %5832 = vmatpush1.msra.mxu0 0.0
        %5833 = vmatprep.subr.mxu0 0.0
        %5834 = vmatpush1.msra.mxu0 0.0
        %5835 = vmatprep.subr.mxu0 0.0
        %5836 = vmatpush1.msra.mxu0 0.0
        %5837 = vmatprep.subr.mxu0 0.0
        %5838 = vmatpush1.msra.mxu0 0.0
        %5839 = vmatprep.subr.mxu0 0.0
        %5840 = vmatpush1.msra.mxu0 0.0
        %5841 = vmatprep.subr.mxu0 0.0
        %5842 = vmatpush1.msra.mxu0 0.0
        %5843 = vmatprep.subr.mxu0 0.0
        %5844 = vmatpush1.msra.mxu0 0.0
        %5845 = vmatprep.subr.mxu0 0.0
        %5846 = vmatpush1.msra.mxu0 0.0
        %5847 = vmatprep.subr.mxu0 0.0
        %5848 = vmatpush1.msra.mxu0 0.0
        %5849 = vmatprep.subr.mxu0 0.0
        %5850 = vmatpush1.msra.mxu0 0.0
        %5851 = vmatprep.subr.mxu0 0.0
        %5852 = vmatpush1.msra.mxu0 0.0
        %5853 = vmatprep.subr.mxu0 0.0
        %5854 = vmatpush1.msra.mxu0 0.0
        %5855 = vmatprep.subr.mxu0 0.0
        %5856 = vmatpush1.msra.mxu0 0.0
        %5857 = vmatprep.subr.mxu0 0.0
        %5858 = vmatpush1.msra.mxu0 0.0
        %5859 = vmatprep.subr.mxu0 0.0
        %5860 = vmatpush1.msra.mxu0 0.0
        %5861 = vmatprep.subr.mxu0 0.0
        %5862 = vmatpush1.msra.mxu0 0.0
        %5863 = vmatprep.subr.mxu0 0.0
        %5864 = vmatpush1.msra.mxu0 0.0
        %5865 = vmatprep.subr.mxu0 0.0
        %5866 = vmatpush1.msra.mxu0 0.0
        %5867 = vmatprep.subr.mxu0 0.0
        %5868 = vmatpush1.msra.mxu0 0.0
        %5869 = vmatprep.subr.mxu0 0.0
        %5870 = vmatpush1.msra.mxu0 0.0
        %5871 = vmatprep.subr.mxu0 0.0
        %5872 = vmatpush1.msra.mxu0 0.0
        %5873 = vmatprep.subr.mxu0 0.0
        %5874 = vmatpush1.msra.mxu0 0.0
        %5875 = vmatprep.subr.mxu0 0.0
        %5876 = vmatpush1.msra.mxu0 0.0
        %5877 = vmatprep.subr.mxu0 0.0
        %5878 = vmatpush1.msra.mxu0 0.0
        %5879 = vmatprep.mubr.f32.mxu0 0.0
        %5880 = vmatmul.mubr.f32.gmra.mrb[0].mxu0 %v5813
        %v5881 = vpop.f32.mrb[0].mxu0
        %v5882 = vadd.f32 0.0, %v5881
        %v5883 = vpop.f32.mrb[0].mxu0
        %5884 = vdwg.mxu0
        %v5886 = vsel %vm4875, %v5205, 0
        %5888 = vmatprep.subr.mxu0 0.0
        %5889 = vmatpush1.msra.mxu0 %v2100
        %5890 = vmatprep.subr.mxu0 0.0
        %5891 = vmatpush1.msra.mxu0 0.0
        %5892 = vmatprep.subr.mxu0 0.0
        %5893 = vmatpush1.msra.mxu0 0.0
        %5894 = vmatprep.subr.mxu0 0.0
        %5895 = vmatpush1.msra.mxu0 0.0
        %5896 = vmatprep.subr.mxu0 0.0
        %5897 = vmatpush1.msra.mxu0 0.0
        %5898 = vmatprep.subr.mxu0 0.0
        %5899 = vmatpush1.msra.mxu0 0.0
        %5900 = vmatprep.subr.mxu0 0.0
        %5901 = vmatpush1.msra.mxu0 0.0
        %5902 = vmatprep.subr.mxu0 0.0
        %5903 = vmatpush1.msra.mxu0 0.0
        %5904 = vmatprep.subr.mxu0 0.0
        %5905 = vmatpush1.msra.mxu0 0.0
        %5906 = vmatprep.subr.mxu0 0.0
        %5907 = vmatpush1.msra.mxu0 0.0
        %5908 = vmatprep.subr.mxu0 0.0
        %5909 = vmatpush1.msra.mxu0 0.0
        %5910 = vmatprep.subr.mxu0 0.0
        %5911 = vmatpush1.msra.mxu0 0.0
        %5912 = vmatprep.subr.mxu0 0.0
        %5913 = vmatpush1.msra.mxu0 0.0
        %5914 = vmatprep.subr.mxu0 0.0
        %5915 = vmatpush1.msra.mxu0 0.0
        %5916 = vmatprep.subr.mxu0 0.0
        %5917 = vmatpush1.msra.mxu0 0.0
        %5918 = vmatprep.subr.mxu0 0.0
        %5919 = vmatpush1.msra.mxu0 0.0
        %5920 = vmatprep.subr.mxu0 0.0
        %5921 = vmatpush1.msra.mxu0 0.0
        %5922 = vmatprep.subr.mxu0 0.0
        %5923 = vmatpush1.msra.mxu0 0.0
        %5924 = vmatprep.subr.mxu0 0.0
        %5925 = vmatpush1.msra.mxu0 0.0
        %5926 = vmatprep.subr.mxu0 0.0
        %5927 = vmatpush1.msra.mxu0 0.0
        %5928 = vmatprep.subr.mxu0 0.0
        %5929 = vmatpush1.msra.mxu0 0.0
        %5930 = vmatprep.subr.mxu0 0.0
        %5931 = vmatpush1.msra.mxu0 0.0
        %5932 = vmatprep.subr.mxu0 0.0
        %5933 = vmatpush1.msra.mxu0 0.0
        %5934 = vmatprep.subr.mxu0 0.0
        %5935 = vmatpush1.msra.mxu0 0.0
        %5936 = vmatprep.subr.mxu0 0.0
        %5937 = vmatpush1.msra.mxu0 0.0
        %5938 = vmatprep.subr.mxu0 0.0
        %5939 = vmatpush1.msra.mxu0 0.0
        %5940 = vmatprep.subr.mxu0 0.0
        %5941 = vmatpush1.msra.mxu0 0.0
        %5942 = vmatprep.subr.mxu0 0.0
        %5943 = vmatpush1.msra.mxu0 0.0
        %5944 = vmatprep.subr.mxu0 0.0
        %5945 = vmatpush1.msra.mxu0 0.0
        %5946 = vmatprep.subr.mxu0 0.0
        %5947 = vmatpush1.msra.mxu0 0.0
        %5948 = vmatprep.subr.mxu0 0.0
        %5949 = vmatpush1.msra.mxu0 0.0
        %5950 = vmatprep.subr.mxu0 0.0
        %5951 = vmatpush1.msra.mxu0 0.0
        %5952 = vmatprep.mubr.f32.mxu0 0.0
        %5953 = vmatmul.mubr.f32.gmra.mrb[0].mxu0 %v5886
        %v5954 = vpop.f32.mrb[0].mxu0
        %v5955 = vadd.f32 0.0, %v5954
        %v5956 = vpop.f32.mrb[0].mxu0
        %5957 = vdwg.mxu0
        %v5959 = vsel %vm4875, %v5206, 0
        %5961 = vmatprep.subr.mxu0 0.0
        %5962 = vmatpush1.msra.mxu0 %v2101
        %5963 = vmatprep.subr.mxu0 0.0
        %5964 = vmatpush1.msra.mxu0 0.0
        %5965 = vmatprep.subr.mxu0 0.0
        %5966 = vmatpush1.msra.mxu0 0.0
        %5967 = vmatprep.subr.mxu0 0.0
        %5968 = vmatpush1.msra.mxu0 0.0
        %5969 = vmatprep.subr.mxu0 0.0
        %5970 = vmatpush1.msra.mxu0 0.0
        %5971 = vmatprep.subr.mxu0 0.0
        %5972 = vmatpush1.msra.mxu0 0.0
        %5973 = vmatprep.subr.mxu0 0.0
        %5974 = vmatpush1.msra.mxu0 0.0
        %5975 = vmatprep.subr.mxu0 0.0
        %5976 = vmatpush1.msra.mxu0 0.0
        %5977 = vmatprep.subr.mxu0 0.0
        %5978 = vmatpush1.msra.mxu0 0.0
        %5979 = vmatprep.subr.mxu0 0.0
        %5980 = vmatpush1.msra.mxu0 0.0
        %5981 = vmatprep.subr.mxu0 0.0
        %5982 = vmatpush1.msra.mxu0 0.0
        %5983 = vmatprep.subr.mxu0 0.0
        %5984 = vmatpush1.msra.mxu0 0.0
        %5985 = vmatprep.subr.mxu0 0.0
        %5986 = vmatpush1.msra.mxu0 0.0
        %5987 = vmatprep.subr.mxu0 0.0
        %5988 = vmatpush1.msra.mxu0 0.0
        %5989 = vmatprep.subr.mxu0 0.0
        %5990 = vmatpush1.msra.mxu0 0.0
        %5991 = vmatprep.subr.mxu0 0.0
        %5992 = vmatpush1.msra.mxu0 0.0
        %5993 = vmatprep.subr.mxu0 0.0
        %5994 = vmatpush1.msra.mxu0 0.0
        %5995 = vmatprep.subr.mxu0 0.0
        %5996 = vmatpush1.msra.mxu0 0.0
        %5997 = vmatprep.subr.mxu0 0.0
        %5998 = vmatpush1.msra.mxu0 0.0
        %5999 = vmatprep.subr.mxu0 0.0
        %6000 = vmatpush1.msra.mxu0 0.0
        %6001 = vmatprep.subr.mxu0 0.0
        %6002 = vmatpush1.msra.mxu0 0.0
        %6003 = vmatprep.subr.mxu0 0.0
        %6004 = vmatpush1.msra.mxu0 0.0
        %6005 = vmatprep.subr.mxu0 0.0
        %6006 = vmatpush1.msra.mxu0 0.0
        %6007 = vmatprep.subr.mxu0 0.0
        %6008 = vmatpush1.msra.mxu0 0.0
        %6009 = vmatprep.subr.mxu0 0.0
        %6010 = vmatpush1.msra.mxu0 0.0
        %6011 = vmatprep.subr.mxu0 0.0
        %6012 = vmatpush1.msra.mxu0 0.0
        %6013 = vmatprep.subr.mxu0 0.0
        %6014 = vmatpush1.msra.mxu0 0.0
        %6015 = vmatprep.subr.mxu0 0.0
        %6016 = vmatpush1.msra.mxu0 0.0
        %6017 = vmatprep.subr.mxu0 0.0
        %6018 = vmatpush1.msra.mxu0 0.0
        %6019 = vmatprep.subr.mxu0 0.0
        %6020 = vmatpush1.msra.mxu0 0.0
        %6021 = vmatprep.subr.mxu0 0.0
        %6022 = vmatpush1.msra.mxu0 0.0
        %6023 = vmatprep.subr.mxu0 0.0
        %6024 = vmatpush1.msra.mxu0 0.0
        %6025 = vmatprep.mubr.f32.mxu0 0.0
        %6026 = vmatmul.mubr.f32.gmra.mrb[0].mxu0 %v5959
        %v6027 = vpop.f32.mrb[0].mxu0
        %v6028 = vadd.f32 0.0, %v6027
        %v6029 = vpop.f32.mrb[0].mxu0
        %6030 = vdwg.mxu0
        %v6032 = vsel %vm4875, %v5207, 0
        %6034 = vmatprep.subr.mxu0 0.0
        %6035 = vmatpush1.msra.mxu0 %v2102
        %6036 = vmatprep.subr.mxu0 0.0
        %6037 = vmatpush1.msra.mxu0 0.0
        %6038 = vmatprep.subr.mxu0 0.0
        %6039 = vmatpush1.msra.mxu0 0.0
        %6040 = vmatprep.subr.mxu0 0.0
        %6041 = vmatpush1.msra.mxu0 0.0
        %6042 = vmatprep.subr.mxu0 0.0
        %6043 = vmatpush1.msra.mxu0 0.0
        %6044 = vmatprep.subr.mxu0 0.0
        %6045 = vmatpush1.msra.mxu0 0.0
        %6046 = vmatprep.subr.mxu0 0.0
        %6047 = vmatpush1.msra.mxu0 0.0
        %6048 = vmatprep.subr.mxu0 0.0
        %6049 = vmatpush1.msra.mxu0 0.0
        %6050 = vmatprep.subr.mxu0 0.0
        %6051 = vmatpush1.msra.mxu0 0.0
        %6052 = vmatprep.subr.mxu0 0.0
        %6053 = vmatpush1.msra.mxu0 0.0
        %6054 = vmatprep.subr.mxu0 0.0
        %6055 = vmatpush1.msra.mxu0 0.0
        %6056 = vmatprep.subr.mxu0 0.0
        %6057 = vmatpush1.msra.mxu0 0.0
        %6058 = vmatprep.subr.mxu0 0.0
        %6059 = vmatpush1.msra.mxu0 0.0
        %6060 = vmatprep.subr.mxu0 0.0
        %6061 = vmatpush1.msra.mxu0 0.0
        %6062 = vmatprep.subr.mxu0 0.0
        %6063 = vmatpush1.msra.mxu0 0.0
        %6064 = vmatprep.subr.mxu0 0.0
        %6065 = vmatpush1.msra.mxu0 0.0
        %6066 = vmatprep.subr.mxu0 0.0
        %6067 = vmatpush1.msra.mxu0 0.0
        %6068 = vmatprep.subr.mxu0 0.0
        %6069 = vmatpush1.msra.mxu0 0.0
        %6070 = vmatprep.subr.mxu0 0.0
        %6071 = vmatpush1.msra.mxu0 0.0
        %6072 = vmatprep.subr.mxu0 0.0
        %6073 = vmatpush1.msra.mxu0 0.0
        %6074 = vmatprep.subr.mxu0 0.0
        %6075 = vmatpush1.msra.mxu0 0.0
        %6076 = vmatprep.subr.mxu0 0.0
        %6077 = vmatpush1.msra.mxu0 0.0
        %6078 = vmatprep.subr.mxu0 0.0
        %6079 = vmatpush1.msra.mxu0 0.0
        %6080 = vmatprep.subr.mxu0 0.0
        %6081 = vmatpush1.msra.mxu0 0.0
        %6082 = vmatprep.subr.mxu0 0.0
        %6083 = vmatpush1.msra.mxu0 0.0
        %6084 = vmatprep.subr.mxu0 0.0
        %6085 = vmatpush1.msra.mxu0 0.0
        %6086 = vmatprep.subr.mxu0 0.0
        %6087 = vmatpush1.msra.mxu0 0.0
        %6088 = vmatprep.subr.mxu0 0.0
        %6089 = vmatpush1.msra.mxu0 0.0
        %6090 = vmatprep.subr.mxu0 0.0
        %6091 = vmatpush1.msra.mxu0 0.0
        %6092 = vmatprep.subr.mxu0 0.0
        %6093 = vmatpush1.msra.mxu0 0.0
        %6094 = vmatprep.subr.mxu0 0.0
        %6095 = vmatpush1.msra.mxu0 0.0
        %6096 = vmatprep.subr.mxu0 0.0
        %6097 = vmatpush1.msra.mxu0 0.0
        %6098 = vmatprep.mubr.f32.mxu0 0.0
        %6099 = vmatmul.mubr.f32.gmra.mrb[0].mxu0 %v6032
        %v6100 = vpop.f32.mrb[0].mxu0
        %v6101 = vadd.f32 0.0, %v6100
        %v6102 = vpop.f32.mrb[0].mxu0
        %6103 = vdwg.mxu0
        %v6105 = vsel %vm4875, %v5208, 0
        %6107 = vmatprep.subr.mxu0 0.0
        %6108 = vmatpush1.msra.mxu0 %v2103
        %6109 = vmatprep.subr.mxu0 0.0
        %6110 = vmatpush1.msra.mxu0 0.0
        %6111 = vmatprep.subr.mxu0 0.0
        %6112 = vmatpush1.msra.mxu0 0.0
        %6113 = vmatprep.subr.mxu0 0.0
        %6114 = vmatpush1.msra.mxu0 0.0
        %6115 = vmatprep.subr.mxu0 0.0
        %6116 = vmatpush1.msra.mxu0 0.0
        %6117 = vmatprep.subr.mxu0 0.0
        %6118 = vmatpush1.msra.mxu0 0.0
        %6119 = vmatprep.subr.mxu0 0.0
        %6120 = vmatpush1.msra.mxu0 0.0
        %6121 = vmatprep.subr.mxu0 0.0
        %6122 = vmatpush1.msra.mxu0 0.0
        %6123 = vmatprep.subr.mxu0 0.0
        %6124 = vmatpush1.msra.mxu0 0.0
        %6125 = vmatprep.subr.mxu0 0.0
        %6126 = vmatpush1.msra.mxu0 0.0
        %6127 = vmatprep.subr.mxu0 0.0
        %6128 = vmatpush1.msra.mxu0 0.0
        %6129 = vmatprep.subr.mxu0 0.0
        %6130 = vmatpush1.msra.mxu0 0.0
        %6131 = vmatprep.subr.mxu0 0.0
        %6132 = vmatpush1.msra.mxu0 0.0
        %6133 = vmatprep.subr.mxu0 0.0
        %6134 = vmatpush1.msra.mxu0 0.0
        %6135 = vmatprep.subr.mxu0 0.0
        %6136 = vmatpush1.msra.mxu0 0.0
        %6137 = vmatprep.subr.mxu0 0.0
        %6138 = vmatpush1.msra.mxu0 0.0
        %6139 = vmatprep.subr.mxu0 0.0
        %6140 = vmatpush1.msra.mxu0 0.0
        %6141 = vmatprep.subr.mxu0 0.0
        %6142 = vmatpush1.msra.mxu0 0.0
        %6143 = vmatprep.subr.mxu0 0.0
        %6144 = vmatpush1.msra.mxu0 0.0
        %6145 = vmatprep.subr.mxu0 0.0
        %6146 = vmatpush1.msra.mxu0 0.0
        %6147 = vmatprep.subr.mxu0 0.0
        %6148 = vmatpush1.msra.mxu0 0.0
        %6149 = vmatprep.subr.mxu0 0.0
        %6150 = vmatpush1.msra.mxu0 0.0
        %6151 = vmatprep.subr.mxu0 0.0
        %6152 = vmatpush1.msra.mxu0 0.0
        %6153 = vmatprep.subr.mxu0 0.0
        %6154 = vmatpush1.msra.mxu0 0.0
        %6155 = vmatprep.subr.mxu0 0.0
        %6156 = vmatpush1.msra.mxu0 0.0
        %6157 = vmatprep.subr.mxu0 0.0
        %6158 = vmatpush1.msra.mxu0 0.0
        %6159 = vmatprep.subr.mxu0 0.0
        %6160 = vmatpush1.msra.mxu0 0.0
        %6161 = vmatprep.subr.mxu0 0.0
        %6162 = vmatpush1.msra.mxu0 0.0
        %6163 = vmatprep.subr.mxu0 0.0
        %6164 = vmatpush1.msra.mxu0 0.0
        %6165 = vmatprep.subr.mxu0 0.0
        %6166 = vmatpush1.msra.mxu0 0.0
        %6167 = vmatprep.subr.mxu0 0.0
        %6168 = vmatpush1.msra.mxu0 0.0
        %6169 = vmatprep.subr.mxu0 0.0
        %6170 = vmatpush1.msra.mxu0 0.0
        %6171 = vmatprep.mubr.f32.mxu0 0.0
        %6172 = vmatmul.mubr.f32.gmra.mrb[0].mxu0 %v6105
        %v6173 = vpop.f32.mrb[0].mxu0
        %v6174 = vadd.f32 0.0, %v6173
        %v6175 = vpop.f32.mrb[0].mxu0
        %6176 = vdwg.mxu0
        %v6178 = vsel %vm4875, %v5209, 0
        %6180 = vmatprep.subr.mxu0 0.0
        %6181 = vmatpush1.msra.mxu0 %v2104
        %6182 = vmatprep.subr.mxu0 0.0
        %6183 = vmatpush1.msra.mxu0 0.0
        %6184 = vmatprep.subr.mxu0 0.0
        %6185 = vmatpush1.msra.mxu0 0.0
        %6186 = vmatprep.subr.mxu0 0.0
        %6187 = vmatpush1.msra.mxu0 0.0
        %6188 = vmatprep.subr.mxu0 0.0
        %6189 = vmatpush1.msra.mxu0 0.0
        %6190 = vmatprep.subr.mxu0 0.0
        %6191 = vmatpush1.msra.mxu0 0.0
        %6192 = vmatprep.subr.mxu0 0.0
        %6193 = vmatpush1.msra.mxu0 0.0
        %6194 = vmatprep.subr.mxu0 0.0
        %6195 = vmatpush1.msra.mxu0 0.0
        %6196 = vmatprep.subr.mxu0 0.0
        %6197 = vmatpush1.msra.mxu0 0.0
        %6198 = vmatprep.subr.mxu0 0.0
        %6199 = vmatpush1.msra.mxu0 0.0
        %6200 = vmatprep.subr.mxu0 0.0
        %6201 = vmatpush1.msra.mxu0 0.0
        %6202 = vmatprep.subr.mxu0 0.0
        %6203 = vmatpush1.msra.mxu0 0.0
        %6204 = vmatprep.subr.mxu0 0.0
        %6205 = vmatpush1.msra.mxu0 0.0
        %6206 = vmatprep.subr.mxu0 0.0
        %6207 = vmatpush1.msra.mxu0 0.0
        %6208 = vmatprep.subr.mxu0 0.0
        %6209 = vmatpush1.msra.mxu0 0.0
        %6210 = vmatprep.subr.mxu0 0.0
        %6211 = vmatpush1.msra.mxu0 0.0
        %6212 = vmatprep.subr.mxu0 0.0
        %6213 = vmatpush1.msra.mxu0 0.0
        %6214 = vmatprep.subr.mxu0 0.0
        %6215 = vmatpush1.msra.mxu0 0.0
        %6216 = vmatprep.subr.mxu0 0.0
        %6217 = vmatpush1.msra.mxu0 0.0
        %6218 = vmatprep.subr.mxu0 0.0
        %6219 = vmatpush1.msra.mxu0 0.0
        %6220 = vmatprep.subr.mxu0 0.0
        %6221 = vmatpush1.msra.mxu0 0.0
        %6222 = vmatprep.subr.mxu0 0.0
        %6223 = vmatpush1.msra.mxu0 0.0
        %6224 = vmatprep.subr.mxu0 0.0
        %6225 = vmatpush1.msra.mxu0 0.0
        %6226 = vmatprep.subr.mxu0 0.0
        %6227 = vmatpush1.msra.mxu0 0.0
        %6228 = vmatprep.subr.mxu0 0.0
        %6229 = vmatpush1.msra.mxu0 0.0
        %6230 = vmatprep.subr.mxu0 0.0
        %6231 = vmatpush1.msra.mxu0 0.0
        %6232 = vmatprep.subr.mxu0 0.0
        %6233 = vmatpush1.msra.mxu0 0.0
        %6234 = vmatprep.subr.mxu0 0.0
        %6235 = vmatpush1.msra.mxu0 0.0
        %6236 = vmatprep.subr.mxu0 0.0
        %6237 = vmatpush1.msra.mxu0 0.0
        %6238 = vmatprep.subr.mxu0 0.0
        %6239 = vmatpush1.msra.mxu0 0.0
        %6240 = vmatprep.subr.mxu0 0.0
        %6241 = vmatpush1.msra.mxu0 0.0
        %6242 = vmatprep.subr.mxu0 0.0
        %6243 = vmatpush1.msra.mxu0 0.0
        %6244 = vmatprep.mubr.f32.mxu0 0.0
        %6245 = vmatmul.mubr.f32.gmra.mrb[0].mxu0 %v6178
        %v6246 = vpop.f32.mrb[0].mxu0
        %v6247 = vadd.f32 0.0, %v6246
        %v6248 = vpop.f32.mrb[0].mxu0
        %6249 = vdwg.mxu0
        %v6251 = vsel %vm4875, %v5210, 0
        %6253 = vmatprep.subr.mxu0 0.0
        %6254 = vmatpush1.msra.mxu0 %v2105
        %6255 = vmatprep.subr.mxu0 0.0
        %6256 = vmatpush1.msra.mxu0 0.0
        %6257 = vmatprep.subr.mxu0 0.0
        %6258 = vmatpush1.msra.mxu0 0.0
        %6259 = vmatprep.subr.mxu0 0.0
        %6260 = vmatpush1.msra.mxu0 0.0
        %6261 = vmatprep.subr.mxu0 0.0
        %6262 = vmatpush1.msra.mxu0 0.0
        %6263 = vmatprep.subr.mxu0 0.0
        %6264 = vmatpush1.msra.mxu0 0.0
        %6265 = vmatprep.subr.mxu0 0.0
        %6266 = vmatpush1.msra.mxu0 0.0
        %6267 = vmatprep.subr.mxu0 0.0
        %6268 = vmatpush1.msra.mxu0 0.0
        %6269 = vmatprep.subr.mxu0 0.0
        %6270 = vmatpush1.msra.mxu0 0.0
        %6271 = vmatprep.subr.mxu0 0.0
        %6272 = vmatpush1.msra.mxu0 0.0
        %6273 = vmatprep.subr.mxu0 0.0
        %6274 = vmatpush1.msra.mxu0 0.0
        %6275 = vmatprep.subr.mxu0 0.0
        %6276 = vmatpush1.msra.mxu0 0.0
        %6277 = vmatprep.subr.mxu0 0.0
        %6278 = vmatpush1.msra.mxu0 0.0
        %6279 = vmatprep.subr.mxu0 0.0
        %6280 = vmatpush1.msra.mxu0 0.0
        %6281 = vmatprep.subr.mxu0 0.0
        %6282 = vmatpush1.msra.mxu0 0.0
        %6283 = vmatprep.subr.mxu0 0.0
        %6284 = vmatpush1.msra.mxu0 0.0
        %6285 = vmatprep.subr.mxu0 0.0
        %6286 = vmatpush1.msra.mxu0 0.0
        %6287 = vmatprep.subr.mxu0 0.0
        %6288 = vmatpush1.msra.mxu0 0.0
        %6289 = vmatprep.subr.mxu0 0.0
        %6290 = vmatpush1.msra.mxu0 0.0
        %6291 = vmatprep.subr.mxu0 0.0
        %6292 = vmatpush1.msra.mxu0 0.0
        %6293 = vmatprep.subr.mxu0 0.0
        %6294 = vmatpush1.msra.mxu0 0.0
        %6295 = vmatprep.subr.mxu0 0.0
        %6296 = vmatpush1.msra.mxu0 0.0
        %6297 = vmatprep.subr.mxu0 0.0
        %6298 = vmatpush1.msra.mxu0 0.0
        %6299 = vmatprep.subr.mxu0 0.0
        %6300 = vmatpush1.msra.mxu0 0.0
        %6301 = vmatprep.subr.mxu0 0.0
        %6302 = vmatpush1.msra.mxu0 0.0
        %6303 = vmatprep.subr.mxu0 0.0
        %6304 = vmatpush1.msra.mxu0 0.0
        %6305 = vmatprep.subr.mxu0 0.0
        %6306 = vmatpush1.msra.mxu0 0.0
        %6307 = vmatprep.subr.mxu0 0.0
        %6308 = vmatpush1.msra.mxu0 0.0
        %6309 = vmatprep.subr.mxu0 0.0
        %6310 = vmatpush1.msra.mxu0 0.0
        %6311 = vmatprep.subr.mxu0 0.0
        %6312 = vmatpush1.msra.mxu0 0.0
        %6313 = vmatprep.subr.mxu0 0.0
        %6314 = vmatpush1.msra.mxu0 0.0
        %6315 = vmatprep.subr.mxu0 0.0
        %6316 = vmatpush1.msra.mxu0 0.0
        %6317 = vmatprep.mubr.f32.mxu0 0.0
        %6318 = vmatmul.mubr.f32.gmra.mrb[0].mxu0 %v6251
        %v6319 = vpop.f32.mrb[0].mxu0
        %v6320 = vadd.f32 0.0, %v6319
        %v6321 = vpop.f32.mrb[0].mxu0
        %6322 = vdwg.mxu0
        %v6324 = vsel %vm4875, %v5211, 0
        %6326 = vmatprep.subr.mxu0 0.0
        %6327 = vmatpush1.msra.mxu0 %v2106
        %6328 = vmatprep.subr.mxu0 0.0
        %6329 = vmatpush1.msra.mxu0 0.0
        %6330 = vmatprep.subr.mxu0 0.0
        %6331 = vmatpush1.msra.mxu0 0.0
        %6332 = vmatprep.subr.mxu0 0.0
        %6333 = vmatpush1.msra.mxu0 0.0
        %6334 = vmatprep.subr.mxu0 0.0
        %6335 = vmatpush1.msra.mxu0 0.0
        %6336 = vmatprep.subr.mxu0 0.0
        %6337 = vmatpush1.msra.mxu0 0.0
        %6338 = vmatprep.subr.mxu0 0.0
        %6339 = vmatpush1.msra.mxu0 0.0
        %6340 = vmatprep.subr.mxu0 0.0
        %6341 = vmatpush1.msra.mxu0 0.0
        %6342 = vmatprep.subr.mxu0 0.0
        %6343 = vmatpush1.msra.mxu0 0.0
        %6344 = vmatprep.subr.mxu0 0.0
        %6345 = vmatpush1.msra.mxu0 0.0
        %6346 = vmatprep.subr.mxu0 0.0
        %6347 = vmatpush1.msra.mxu0 0.0
        %6348 = vmatprep.subr.mxu0 0.0
        %6349 = vmatpush1.msra.mxu0 0.0
        %6350 = vmatprep.subr.mxu0 0.0
        %6351 = vmatpush1.msra.mxu0 0.0
        %6352 = vmatprep.subr.mxu0 0.0
        %6353 = vmatpush1.msra.mxu0 0.0
        %6354 = vmatprep.subr.mxu0 0.0
        %6355 = vmatpush1.msra.mxu0 0.0
        %6356 = vmatprep.subr.mxu0 0.0
        %6357 = vmatpush1.msra.mxu0 0.0
        %6358 = vmatprep.subr.mxu0 0.0
        %6359 = vmatpush1.msra.mxu0 0.0
        %6360 = vmatprep.subr.mxu0 0.0
        %6361 = vmatpush1.msra.mxu0 0.0
        %6362 = vmatprep.subr.mxu0 0.0
        %6363 = vmatpush1.msra.mxu0 0.0
        %6364 = vmatprep.subr.mxu0 0.0
        %6365 = vmatpush1.msra.mxu0 0.0
        %6366 = vmatprep.subr.mxu0 0.0
        %6367 = vmatpush1.msra.mxu0 0.0
        %6368 = vmatprep.subr.mxu0 0.0
        %6369 = vmatpush1.msra.mxu0 0.0
        %6370 = vmatprep.subr.mxu0 0.0
        %6371 = vmatpush1.msra.mxu0 0.0
        %6372 = vmatprep.subr.mxu0 0.0
        %6373 = vmatpush1.msra.mxu0 0.0
        %6374 = vmatprep.subr.mxu0 0.0
        %6375 = vmatpush1.msra.mxu0 0.0
        %6376 = vmatprep.subr.mxu0 0.0
        %6377 = vmatpush1.msra.mxu0 0.0
        %6378 = vmatprep.subr.mxu0 0.0
        %6379 = vmatpush1.msra.mxu0 0.0
        %6380 = vmatprep.subr.mxu0 0.0
        %6381 = vmatpush1.msra.mxu0 0.0
        %6382 = vmatprep.subr.mxu0 0.0
        %6383 = vmatpush1.msra.mxu0 0.0
        %6384 = vmatprep.subr.mxu0 0.0
        %6385 = vmatpush1.msra.mxu0 0.0
        %6386 = vmatprep.subr.mxu0 0.0
        %6387 = vmatpush1.msra.mxu0 0.0
        %6388 = vmatprep.subr.mxu0 0.0
        %6389 = vmatpush1.msra.mxu0 0.0
        %6390 = vmatprep.mubr.f32.mxu0 0.0
        %6391 = vmatmul.mubr.f32.gmra.mrb[0].mxu0 %v6324
        %v6392 = vpop.f32.mrb[0].mxu0
        %v6393 = vadd.f32 0.0, %v6392
        %v6394 = vpop.f32.mrb[0].mxu0
        %6395 = vdwg.mxu0
        %v6397 = vsel %vm4875, %v5212, 0
        %6399 = vmatprep.subr.mxu0 0.0
        %6400 = vmatpush1.msra.mxu0 %v2107
        %6401 = vmatprep.subr.mxu0 0.0
        %6402 = vmatpush1.msra.mxu0 0.0
        %6403 = vmatprep.subr.mxu0 0.0
        %6404 = vmatpush1.msra.mxu0 0.0
        %6405 = vmatprep.subr.mxu0 0.0
        %6406 = vmatpush1.msra.mxu0 0.0
        %6407 = vmatprep.subr.mxu0 0.0
        %6408 = vmatpush1.msra.mxu0 0.0
        %6409 = vmatprep.subr.mxu0 0.0
        %6410 = vmatpush1.msra.mxu0 0.0
        %6411 = vmatprep.subr.mxu0 0.0
        %6412 = vmatpush1.msra.mxu0 0.0
        %6413 = vmatprep.subr.mxu0 0.0
        %6414 = vmatpush1.msra.mxu0 0.0
        %6415 = vmatprep.subr.mxu0 0.0
        %6416 = vmatpush1.msra.mxu0 0.0
        %6417 = vmatprep.subr.mxu0 0.0
        %6418 = vmatpush1.msra.mxu0 0.0
        %6419 = vmatprep.subr.mxu0 0.0
        %6420 = vmatpush1.msra.mxu0 0.0
        %6421 = vmatprep.subr.mxu0 0.0
        %6422 = vmatpush1.msra.mxu0 0.0
        %6423 = vmatprep.subr.mxu0 0.0
        %6424 = vmatpush1.msra.mxu0 0.0
        %6425 = vmatprep.subr.mxu0 0.0
        %6426 = vmatpush1.msra.mxu0 0.0
        %6427 = vmatprep.subr.mxu0 0.0
        %6428 = vmatpush1.msra.mxu0 0.0
        %6429 = vmatprep.subr.mxu0 0.0
        %6430 = vmatpush1.msra.mxu0 0.0
        %6431 = vmatprep.subr.mxu0 0.0
        %6432 = vmatpush1.msra.mxu0 0.0
        %6433 = vmatprep.subr.mxu0 0.0
        %6434 = vmatpush1.msra.mxu0 0.0
        %6435 = vmatprep.subr.mxu0 0.0
        %6436 = vmatpush1.msra.mxu0 0.0
        %6437 = vmatprep.subr.mxu0 0.0
        %6438 = vmatpush1.msra.mxu0 0.0
        %6439 = vmatprep.subr.mxu0 0.0
        %6440 = vmatpush1.msra.mxu0 0.0
        %6441 = vmatprep.subr.mxu0 0.0
        %6442 = vmatpush1.msra.mxu0 0.0
        %6443 = vmatprep.subr.mxu0 0.0
        %6444 = vmatpush1.msra.mxu0 0.0
        %6445 = vmatprep.subr.mxu0 0.0
        %6446 = vmatpush1.msra.mxu0 0.0
        %6447 = vmatprep.subr.mxu0 0.0
        %6448 = vmatpush1.msra.mxu0 0.0
        %6449 = vmatprep.subr.mxu0 0.0
        %6450 = vmatpush1.msra.mxu0 0.0
        %6451 = vmatprep.subr.mxu0 0.0
        %6452 = vmatpush1.msra.mxu0 0.0
        %6453 = vmatprep.subr.mxu0 0.0
        %6454 = vmatpush1.msra.mxu0 0.0
        %6455 = vmatprep.subr.mxu0 0.0
        %6456 = vmatpush1.msra.mxu0 0.0
        %6457 = vmatprep.subr.mxu0 0.0
        %6458 = vmatpush1.msra.mxu0 0.0
        %6459 = vmatprep.subr.mxu0 0.0
        %6460 = vmatpush1.msra.mxu0 0.0
        %6461 = vmatprep.subr.mxu0 0.0
        %6462 = vmatpush1.msra.mxu0 0.0
        %6463 = vmatprep.mubr.f32.mxu0 0.0
        %6464 = vmatmul.mubr.f32.gmra.mrb[0].mxu0 %v6397
        %v6465 = vpop.f32.mrb[0].mxu0
        %v6466 = vadd.f32 0.0, %v6465
        %v6467 = vpop.f32.mrb[0].mxu0
        %6468 = vdwg.mxu0
        %v6470 = vsel %vm4875, %v5213, 0
        %6472 = vmatprep.subr.mxu0 0.0
        %6473 = vmatpush1.msra.mxu0 %v2108
        %6474 = vmatprep.subr.mxu0 0.0
        %6475 = vmatpush1.msra.mxu0 0.0
        %6476 = vmatprep.subr.mxu0 0.0
        %6477 = vmatpush1.msra.mxu0 0.0
        %6478 = vmatprep.subr.mxu0 0.0
        %6479 = vmatpush1.msra.mxu0 0.0
        %6480 = vmatprep.subr.mxu0 0.0
        %6481 = vmatpush1.msra.mxu0 0.0
        %6482 = vmatprep.subr.mxu0 0.0
        %6483 = vmatpush1.msra.mxu0 0.0
        %6484 = vmatprep.subr.mxu0 0.0
        %6485 = vmatpush1.msra.mxu0 0.0
        %6486 = vmatprep.subr.mxu0 0.0
        %6487 = vmatpush1.msra.mxu0 0.0
        %6488 = vmatprep.subr.mxu0 0.0
        %6489 = vmatpush1.msra.mxu0 0.0
        %6490 = vmatprep.subr.mxu0 0.0
        %6491 = vmatpush1.msra.mxu0 0.0
        %6492 = vmatprep.subr.mxu0 0.0
        %6493 = vmatpush1.msra.mxu0 0.0
        %6494 = vmatprep.subr.mxu0 0.0
        %6495 = vmatpush1.msra.mxu0 0.0
        %6496 = vmatprep.subr.mxu0 0.0
        %6497 = vmatpush1.msra.mxu0 0.0
        %6498 = vmatprep.subr.mxu0 0.0
        %6499 = vmatpush1.msra.mxu0 0.0
        %6500 = vmatprep.subr.mxu0 0.0
        %6501 = vmatpush1.msra.mxu0 0.0
        %6502 = vmatprep.subr.mxu0 0.0
        %6503 = vmatpush1.msra.mxu0 0.0
        %6504 = vmatprep.subr.mxu0 0.0
        %6505 = vmatpush1.msra.mxu0 0.0
        %6506 = vmatprep.subr.mxu0 0.0
        %6507 = vmatpush1.msra.mxu0 0.0
        %6508 = vmatprep.subr.mxu0 0.0
        %6509 = vmatpush1.msra.mxu0 0.0
        %6510 = vmatprep.subr.mxu0 0.0
        %6511 = vmatpush1.msra.mxu0 0.0
        %6512 = vmatprep.subr.mxu0 0.0
        %6513 = vmatpush1.msra.mxu0 0.0
        %6514 = vmatprep.subr.mxu0 0.0
        %6515 = vmatpush1.msra.mxu0 0.0
        %6516 = vmatprep.subr.mxu0 0.0
        %6517 = vmatpush1.msra.mxu0 0.0
        %6518 = vmatprep.subr.mxu0 0.0
        %6519 = vmatpush1.msra.mxu0 0.0
        %6520 = vmatprep.subr.mxu0 0.0
        %6521 = vmatpush1.msra.mxu0 0.0
        %6522 = vmatprep.subr.mxu0 0.0
        %6523 = vmatpush1.msra.mxu0 0.0
        %6524 = vmatprep.subr.mxu0 0.0
        %6525 = vmatpush1.msra.mxu0 0.0
        %6526 = vmatprep.subr.mxu0 0.0
        %6527 = vmatpush1.msra.mxu0 0.0
        %6528 = vmatprep.subr.mxu0 0.0
        %6529 = vmatpush1.msra.mxu0 0.0
        %6530 = vmatprep.subr.mxu0 0.0
        %6531 = vmatpush1.msra.mxu0 0.0
        %6532 = vmatprep.subr.mxu0 0.0
        %6533 = vmatpush1.msra.mxu0 0.0
        %6534 = vmatprep.subr.mxu0 0.0
        %6535 = vmatpush1.msra.mxu0 0.0
        %6536 = vmatprep.mubr.f32.mxu0 0.0
        %6537 = vmatmul.mubr.f32.gmra.mrb[0].mxu0 %v6470
        %v6538 = vpop.f32.mrb[0].mxu0
        %v6539 = vadd.f32 0.0, %v6538
        %v6540 = vpop.f32.mrb[0].mxu0
        %6541 = vdwg.mxu0
        %v6543 = vsel %vm4875, %v5214, 0
        %6545 = vmatprep.subr.mxu0 0.0
        %6546 = vmatpush1.msra.mxu0 %v2109
        %6547 = vmatprep.subr.mxu0 0.0
        %6548 = vmatpush1.msra.mxu0 0.0
        %6549 = vmatprep.subr.mxu0 0.0
        %6550 = vmatpush1.msra.mxu0 0.0
        %6551 = vmatprep.subr.mxu0 0.0
        %6552 = vmatpush1.msra.mxu0 0.0
        %6553 = vmatprep.subr.mxu0 0.0
        %6554 = vmatpush1.msra.mxu0 0.0
        %6555 = vmatprep.subr.mxu0 0.0
        %6556 = vmatpush1.msra.mxu0 0.0
        %6557 = vmatprep.subr.mxu0 0.0
        %6558 = vmatpush1.msra.mxu0 0.0
        %6559 = vmatprep.subr.mxu0 0.0
        %6560 = vmatpush1.msra.mxu0 0.0
        %6561 = vmatprep.subr.mxu0 0.0
        %6562 = vmatpush1.msra.mxu0 0.0
        %6563 = vmatprep.subr.mxu0 0.0
        %6564 = vmatpush1.msra.mxu0 0.0
        %6565 = vmatprep.subr.mxu0 0.0
        %6566 = vmatpush1.msra.mxu0 0.0
        %6567 = vmatprep.subr.mxu0 0.0
        %6568 = vmatpush1.msra.mxu0 0.0
        %6569 = vmatprep.subr.mxu0 0.0
        %6570 = vmatpush1.msra.mxu0 0.0
        %6571 = vmatprep.subr.mxu0 0.0
        %6572 = vmatpush1.msra.mxu0 0.0
        %6573 = vmatprep.subr.mxu0 0.0
        %6574 = vmatpush1.msra.mxu0 0.0
        %6575 = vmatprep.subr.mxu0 0.0
        %6576 = vmatpush1.msra.mxu0 0.0
        %6577 = vmatprep.subr.mxu0 0.0
        %6578 = vmatpush1.msra.mxu0 0.0
        %6579 = vmatprep.subr.mxu0 0.0
        %6580 = vmatpush1.msra.mxu0 0.0
        %6581 = vmatprep.subr.mxu0 0.0
        %6582 = vmatpush1.msra.mxu0 0.0
        %6583 = vmatprep.subr.mxu0 0.0
        %6584 = vmatpush1.msra.mxu0 0.0
        %6585 = vmatprep.subr.mxu0 0.0
        %6586 = vmatpush1.msra.mxu0 0.0
        %6587 = vmatprep.subr.mxu0 0.0
        %6588 = vmatpush1.msra.mxu0 0.0
        %6589 = vmatprep.subr.mxu0 0.0
        %6590 = vmatpush1.msra.mxu0 0.0
        %6591 = vmatprep.subr.mxu0 0.0
        %6592 = vmatpush1.msra.mxu0 0.0
        %6593 = vmatprep.subr.mxu0 0.0
        %6594 = vmatpush1.msra.mxu0 0.0
        %6595 = vmatprep.subr.mxu0 0.0
        %6596 = vmatpush1.msra.mxu0 0.0
        %6597 = vmatprep.subr.mxu0 0.0
        %6598 = vmatpush1.msra.mxu0 0.0
        %6599 = vmatprep.subr.mxu0 0.0
        %6600 = vmatpush1.msra.mxu0 0.0
        %6601 = vmatprep.subr.mxu0 0.0
        %6602 = vmatpush1.msra.mxu0 0.0
        %6603 = vmatprep.subr.mxu0 0.0
        %6604 = vmatpush1.msra.mxu0 0.0
        %6605 = vmatprep.subr.mxu0 0.0
        %6606 = vmatpush1.msra.mxu0 0.0
        %6607 = vmatprep.subr.mxu0 0.0
        %6608 = vmatpush1.msra.mxu0 0.0
        %6609 = vmatprep.mubr.f32.mxu0 0.0
        %6610 = vmatmul.mubr.f32.gmra.mrb[0].mxu0 %v6543
        %v6611 = vpop.f32.mrb[0].mxu0
        %v6612 = vadd.f32 0.0, %v6611
        %v6613 = vpop.f32.mrb[0].mxu0
        %6614 = vdwg.mxu0
        %v6616 = vsel %vm4875, %v5215, 0
        %6618 = vmatprep.subr.mxu0 0.0
        %6619 = vmatpush1.msra.mxu0 %v2110
        %6620 = vmatprep.subr.mxu0 0.0
        %6621 = vmatpush1.msra.mxu0 0.0
        %6622 = vmatprep.subr.mxu0 0.0
        %6623 = vmatpush1.msra.mxu0 0.0
        %6624 = vmatprep.subr.mxu0 0.0
        %6625 = vmatpush1.msra.mxu0 0.0
        %6626 = vmatprep.subr.mxu0 0.0
        %6627 = vmatpush1.msra.mxu0 0.0
        %6628 = vmatprep.subr.mxu0 0.0
        %6629 = vmatpush1.msra.mxu0 0.0
        %6630 = vmatprep.subr.mxu0 0.0
        %6631 = vmatpush1.msra.mxu0 0.0
        %6632 = vmatprep.subr.mxu0 0.0
        %6633 = vmatpush1.msra.mxu0 0.0
        %6634 = vmatprep.subr.mxu0 0.0
        %6635 = vmatpush1.msra.mxu0 0.0
        %6636 = vmatprep.subr.mxu0 0.0
        %6637 = vmatpush1.msra.mxu0 0.0
        %6638 = vmatprep.subr.mxu0 0.0
        %6639 = vmatpush1.msra.mxu0 0.0
        %6640 = vmatprep.subr.mxu0 0.0
        %6641 = vmatpush1.msra.mxu0 0.0
        %6642 = vmatprep.subr.mxu0 0.0
        %6643 = vmatpush1.msra.mxu0 0.0
        %6644 = vmatprep.subr.mxu0 0.0
        %6645 = vmatpush1.msra.mxu0 0.0
        %6646 = vmatprep.subr.mxu0 0.0
        %6647 = vmatpush1.msra.mxu0 0.0
        %6648 = vmatprep.subr.mxu0 0.0
        %6649 = vmatpush1.msra.mxu0 0.0
        %6650 = vmatprep.subr.mxu0 0.0
        %6651 = vmatpush1.msra.mxu0 0.0
        %6652 = vmatprep.subr.mxu0 0.0
        %6653 = vmatpush1.msra.mxu0 0.0
        %6654 = vmatprep.subr.mxu0 0.0
        %6655 = vmatpush1.msra.mxu0 0.0
        %6656 = vmatprep.subr.mxu0 0.0
        %6657 = vmatpush1.msra.mxu0 0.0
        %6658 = vmatprep.subr.mxu0 0.0
        %6659 = vmatpush1.msra.mxu0 0.0
        %6660 = vmatprep.subr.mxu0 0.0
        %6661 = vmatpush1.msra.mxu0 0.0
        %6662 = vmatprep.subr.mxu0 0.0
        %6663 = vmatpush1.msra.mxu0 0.0
        %6664 = vmatprep.subr.mxu0 0.0
        %6665 = vmatpush1.msra.mxu0 0.0
        %6666 = vmatprep.subr.mxu0 0.0
        %6667 = vmatpush1.msra.mxu0 0.0
        %6668 = vmatprep.subr.mxu0 0.0
        %6669 = vmatpush1.msra.mxu0 0.0
        %6670 = vmatprep.subr.mxu0 0.0
        %6671 = vmatpush1.msra.mxu0 0.0
        %6672 = vmatprep.subr.mxu0 0.0
        %6673 = vmatpush1.msra.mxu0 0.0
        %6674 = vmatprep.subr.mxu0 0.0
        %6675 = vmatpush1.msra.mxu0 0.0
        %6676 = vmatprep.subr.mxu0 0.0
        %6677 = vmatpush1.msra.mxu0 0.0
        %6678 = vmatprep.subr.mxu0 0.0
        %6679 = vmatpush1.msra.mxu0 0.0
        %6680 = vmatprep.subr.mxu0 0.0
        %6681 = vmatpush1.msra.mxu0 0.0
        %6682 = vmatprep.mubr.f32.mxu0 0.0
        %6683 = vmatmul.mubr.f32.gmra.mrb[0].mxu0 %v6616
        %v6684 = vpop.f32.mrb[0].mxu0
        %v6685 = vadd.f32 0.0, %v6684
        %v6686 = vpop.f32.mrb[0].mxu0
        %6687 = vdwg.mxu0
        %v6689 = vsel %vm4875, %v5216, 0
        %6691 = vmatprep.subr.mxu0 0.0
        %6692 = vmatpush1.msra.mxu0 %v2111
        %6693 = vmatprep.subr.mxu0 0.0
        %6694 = vmatpush1.msra.mxu0 0.0
        %6695 = vmatprep.subr.mxu0 0.0
        %6696 = vmatpush1.msra.mxu0 0.0
        %6697 = vmatprep.subr.mxu0 0.0
        %6698 = vmatpush1.msra.mxu0 0.0
        %6699 = vmatprep.subr.mxu0 0.0
        %6700 = vmatpush1.msra.mxu0 0.0
        %6701 = vmatprep.subr.mxu0 0.0
        %6702 = vmatpush1.msra.mxu0 0.0
        %6703 = vmatprep.subr.mxu0 0.0
        %6704 = vmatpush1.msra.mxu0 0.0
        %6705 = vmatprep.subr.mxu0 0.0
        %6706 = vmatpush1.msra.mxu0 0.0
        %6707 = vmatprep.subr.mxu0 0.0
        %6708 = vmatpush1.msra.mxu0 0.0
        %6709 = vmatprep.subr.mxu0 0.0
        %6710 = vmatpush1.msra.mxu0 0.0
        %6711 = vmatprep.subr.mxu0 0.0
        %6712 = vmatpush1.msra.mxu0 0.0
        %6713 = vmatprep.subr.mxu0 0.0
        %6714 = vmatpush1.msra.mxu0 0.0
        %6715 = vmatprep.subr.mxu0 0.0
        %6716 = vmatpush1.msra.mxu0 0.0
        %6717 = vmatprep.subr.mxu0 0.0
        %6718 = vmatpush1.msra.mxu0 0.0
        %6719 = vmatprep.subr.mxu0 0.0
        %6720 = vmatpush1.msra.mxu0 0.0
        %6721 = vmatprep.subr.mxu0 0.0
        %6722 = vmatpush1.msra.mxu0 0.0
        %6723 = vmatprep.subr.mxu0 0.0
        %6724 = vmatpush1.msra.mxu0 0.0
        %6725 = vmatprep.subr.mxu0 0.0
        %6726 = vmatpush1.msra.mxu0 0.0
        %6727 = vmatprep.subr.mxu0 0.0
        %6728 = vmatpush1.msra.mxu0 0.0
        %6729 = vmatprep.subr.mxu0 0.0
        %6730 = vmatpush1.msra.mxu0 0.0
        %6731 = vmatprep.subr.mxu0 0.0
        %6732 = vmatpush1.msra.mxu0 0.0
        %6733 = vmatprep.subr.mxu0 0.0
        %6734 = vmatpush1.msra.mxu0 0.0
        %6735 = vmatprep.subr.mxu0 0.0
        %6736 = vmatpush1.msra.mxu0 0.0
        %6737 = vmatprep.subr.mxu0 0.0
        %6738 = vmatpush1.msra.mxu0 0.0
        %6739 = vmatprep.subr.mxu0 0.0
        %6740 = vmatpush1.msra.mxu0 0.0
        %6741 = vmatprep.subr.mxu0 0.0
        %6742 = vmatpush1.msra.mxu0 0.0
        %6743 = vmatprep.subr.mxu0 0.0
        %6744 = vmatpush1.msra.mxu0 0.0
        %6745 = vmatprep.subr.mxu0 0.0
        %6746 = vmatpush1.msra.mxu0 0.0
        %6747 = vmatprep.subr.mxu0 0.0
        %6748 = vmatpush1.msra.mxu0 0.0
        %6749 = vmatprep.subr.mxu0 0.0
        %6750 = vmatpush1.msra.mxu0 0.0
        %6751 = vmatprep.subr.mxu0 0.0
        %6752 = vmatpush1.msra.mxu0 0.0
        %6753 = vmatprep.subr.mxu0 0.0
        %6754 = vmatpush1.msra.mxu0 0.0
        %6755 = vmatprep.mubr.f32.mxu0 0.0
        %6756 = vmatmul.mubr.f32.gmra.mrb[0].mxu0 %v6689
        %v6757 = vpop.f32.mrb[0].mxu0
        %v6758 = vadd.f32 0.0, %v6757
        %v6759 = vpop.f32.mrb[0].mxu0
        %6760 = vdwg.mxu0
        %v6762 = vsel %vm4875, %v5217, 0
        %6764 = vmatprep.subr.mxu0 0.0
        %6765 = vmatpush1.msra.mxu0 %v2112
        %6766 = vmatprep.subr.mxu0 0.0
        %6767 = vmatpush1.msra.mxu0 0.0
        %6768 = vmatprep.subr.mxu0 0.0
        %6769 = vmatpush1.msra.mxu0 0.0
        %6770 = vmatprep.subr.mxu0 0.0
        %6771 = vmatpush1.msra.mxu0 0.0
        %6772 = vmatprep.subr.mxu0 0.0
        %6773 = vmatpush1.msra.mxu0 0.0
        %6774 = vmatprep.subr.mxu0 0.0
        %6775 = vmatpush1.msra.mxu0 0.0
        %6776 = vmatprep.subr.mxu0 0.0
        %6777 = vmatpush1.msra.mxu0 0.0
        %6778 = vmatprep.subr.mxu0 0.0
        %6779 = vmatpush1.msra.mxu0 0.0
        %6780 = vmatprep.subr.mxu0 0.0
        %6781 = vmatpush1.msra.mxu0 0.0
        %6782 = vmatprep.subr.mxu0 0.0
        %6783 = vmatpush1.msra.mxu0 0.0
        %6784 = vmatprep.subr.mxu0 0.0
        %6785 = vmatpush1.msra.mxu0 0.0
        %6786 = vmatprep.subr.mxu0 0.0
        %6787 = vmatpush1.msra.mxu0 0.0
        %6788 = vmatprep.subr.mxu0 0.0
        %6789 = vmatpush1.msra.mxu0 0.0
        %6790 = vmatprep.subr.mxu0 0.0
        %6791 = vmatpush1.msra.mxu0 0.0
        %6792 = vmatprep.subr.mxu0 0.0
        %6793 = vmatpush1.msra.mxu0 0.0
        %6794 = vmatprep.subr.mxu0 0.0
        %6795 = vmatpush1.msra.mxu0 0.0
        %6796 = vmatprep.subr.mxu0 0.0
        %6797 = vmatpush1.msra.mxu0 0.0
        %6798 = vmatprep.subr.mxu0 0.0
        %6799 = vmatpush1.msra.mxu0 0.0
        %6800 = vmatprep.subr.mxu0 0.0
        %6801 = vmatpush1.msra.mxu0 0.0
        %6802 = vmatprep.subr.mxu0 0.0
        %6803 = vmatpush1.msra.mxu0 0.0
        %6804 = vmatprep.subr.mxu0 0.0
        %6805 = vmatpush1.msra.mxu0 0.0
        %6806 = vmatprep.subr.mxu0 0.0
        %6807 = vmatpush1.msra.mxu0 0.0
        %6808 = vmatprep.subr.mxu0 0.0
        %6809 = vmatpush1.msra.mxu0 0.0
        %6810 = vmatprep.subr.mxu0 0.0
        %6811 = vmatpush1.msra.mxu0 0.0
        %6812 = vmatprep.subr.mxu0 0.0
        %6813 = vmatpush1.msra.mxu0 0.0
        %6814 = vmatprep.subr.mxu0 0.0
        %6815 = vmatpush1.msra.mxu0 0.0
        %6816 = vmatprep.subr.mxu0 0.0
        %6817 = vmatpush1.msra.mxu0 0.0
        %6818 = vmatprep.subr.mxu0 0.0
        %6819 = vmatpush1.msra.mxu0 0.0
        %6820 = vmatprep.subr.mxu0 0.0
        %6821 = vmatpush1.msra.mxu0 0.0
        %6822 = vmatprep.subr.mxu0 0.0
        %6823 = vmatpush1.msra.mxu0 0.0
        %6824 = vmatprep.subr.mxu0 0.0
        %6825 = vmatpush1.msra.mxu0 0.0
        %6826 = vmatprep.subr.mxu0 0.0
        %6827 = vmatpush1.msra.mxu0 0.0
        %6828 = vmatprep.mubr.f32.mxu0 0.0
        %6829 = vmatmul.mubr.f32.gmra.mrb[0].mxu0 %v6762
        %v6830 = vpop.f32.mrb[0].mxu0
        %v6831 = vadd.f32 0.0, %v6830
        %v6832 = vpop.f32.mrb[0].mxu0
        %6833 = vdwg.mxu0
        %v6835 = vsel %vm4875, %v5218, 0
        %6837 = vmatprep.subr.mxu0 0.0
        %6838 = vmatpush1.msra.mxu0 %v2113
        %6839 = vmatprep.subr.mxu0 0.0
        %6840 = vmatpush1.msra.mxu0 0.0
        %6841 = vmatprep.subr.mxu0 0.0
        %6842 = vmatpush1.msra.mxu0 0.0
        %6843 = vmatprep.subr.mxu0 0.0
        %6844 = vmatpush1.msra.mxu0 0.0
        %6845 = vmatprep.subr.mxu0 0.0
        %6846 = vmatpush1.msra.mxu0 0.0
        %6847 = vmatprep.subr.mxu0 0.0
        %6848 = vmatpush1.msra.mxu0 0.0
        %6849 = vmatprep.subr.mxu0 0.0
        %6850 = vmatpush1.msra.mxu0 0.0
        %6851 = vmatprep.subr.mxu0 0.0
        %6852 = vmatpush1.msra.mxu0 0.0
        %6853 = vmatprep.subr.mxu0 0.0
        %6854 = vmatpush1.msra.mxu0 0.0
        %6855 = vmatprep.subr.mxu0 0.0
        %6856 = vmatpush1.msra.mxu0 0.0
        %6857 = vmatprep.subr.mxu0 0.0
        %6858 = vmatpush1.msra.mxu0 0.0
        %6859 = vmatprep.subr.mxu0 0.0
        %6860 = vmatpush1.msra.mxu0 0.0
        %6861 = vmatprep.subr.mxu0 0.0
        %6862 = vmatpush1.msra.mxu0 0.0
        %6863 = vmatprep.subr.mxu0 0.0
        %6864 = vmatpush1.msra.mxu0 0.0
        %6865 = vmatprep.subr.mxu0 0.0
        %6866 = vmatpush1.msra.mxu0 0.0
        %6867 = vmatprep.subr.mxu0 0.0
        %6868 = vmatpush1.msra.mxu0 0.0
        %6869 = vmatprep.subr.mxu0 0.0
        %6870 = vmatpush1.msra.mxu0 0.0
        %6871 = vmatprep.subr.mxu0 0.0
        %6872 = vmatpush1.msra.mxu0 0.0
        %6873 = vmatprep.subr.mxu0 0.0
        %6874 = vmatpush1.msra.mxu0 0.0
        %6875 = vmatprep.subr.mxu0 0.0
        %6876 = vmatpush1.msra.mxu0 0.0
        %6877 = vmatprep.subr.mxu0 0.0
        %6878 = vmatpush1.msra.mxu0 0.0
        %6879 = vmatprep.subr.mxu0 0.0
        %6880 = vmatpush1.msra.mxu0 0.0
        %6881 = vmatprep.subr.mxu0 0.0
        %6882 = vmatpush1.msra.mxu0 0.0
        %6883 = vmatprep.subr.mxu0 0.0
        %6884 = vmatpush1.msra.mxu0 0.0
        %6885 = vmatprep.subr.mxu0 0.0
        %6886 = vmatpush1.msra.mxu0 0.0
        %6887 = vmatprep.subr.mxu0 0.0
        %6888 = vmatpush1.msra.mxu0 0.0
        %6889 = vmatprep.subr.mxu0 0.0
        %6890 = vmatpush1.msra.mxu0 0.0
        %6891 = vmatprep.subr.mxu0 0.0
        %6892 = vmatpush1.msra.mxu0 0.0
        %6893 = vmatprep.subr.mxu0 0.0
        %6894 = vmatpush1.msra.mxu0 0.0
        %6895 = vmatprep.subr.mxu0 0.0
        %6896 = vmatpush1.msra.mxu0 0.0
        %6897 = vmatprep.subr.mxu0 0.0
        %6898 = vmatpush1.msra.mxu0 0.0
        %6899 = vmatprep.subr.mxu0 0.0
        %6900 = vmatpush1.msra.mxu0 0.0
        %6901 = vmatprep.mubr.f32.mxu0 0.0
        %6902 = vmatmul.mubr.f32.gmra.mrb[0].mxu0 %v6835
        %v6903 = vpop.f32.mrb[0].mxu0
        %v6904 = vadd.f32 0.0, %v6903
        %v6905 = vpop.f32.mrb[0].mxu0
        %6906 = vdwg.mxu0
        %v6908 = vsel %vm4875, %v5219, 0
        %6910 = vmatprep.subr.mxu0 0.0
        %6911 = vmatpush1.msra.mxu0 %v2114
        %6912 = vmatprep.subr.mxu0 0.0
        %6913 = vmatpush1.msra.mxu0 0.0
        %6914 = vmatprep.subr.mxu0 0.0
        %6915 = vmatpush1.msra.mxu0 0.0
        %6916 = vmatprep.subr.mxu0 0.0
        %6917 = vmatpush1.msra.mxu0 0.0
        %6918 = vmatprep.subr.mxu0 0.0
        %6919 = vmatpush1.msra.mxu0 0.0
        %6920 = vmatprep.subr.mxu0 0.0
        %6921 = vmatpush1.msra.mxu0 0.0
        %6922 = vmatprep.subr.mxu0 0.0
        %6923 = vmatpush1.msra.mxu0 0.0
        %6924 = vmatprep.subr.mxu0 0.0
        %6925 = vmatpush1.msra.mxu0 0.0
        %6926 = vmatprep.subr.mxu0 0.0
        %6927 = vmatpush1.msra.mxu0 0.0
        %6928 = vmatprep.subr.mxu0 0.0
        %6929 = vmatpush1.msra.mxu0 0.0
        %6930 = vmatprep.subr.mxu0 0.0
        %6931 = vmatpush1.msra.mxu0 0.0
        %6932 = vmatprep.subr.mxu0 0.0
        %6933 = vmatpush1.msra.mxu0 0.0
        %6934 = vmatprep.subr.mxu0 0.0
        %6935 = vmatpush1.msra.mxu0 0.0
        %6936 = vmatprep.subr.mxu0 0.0
        %6937 = vmatpush1.msra.mxu0 0.0
        %6938 = vmatprep.subr.mxu0 0.0
        %6939 = vmatpush1.msra.mxu0 0.0
        %6940 = vmatprep.subr.mxu0 0.0
        %6941 = vmatpush1.msra.mxu0 0.0
        %6942 = vmatprep.subr.mxu0 0.0
        %6943 = vmatpush1.msra.mxu0 0.0
        %6944 = vmatprep.subr.mxu0 0.0
        %6945 = vmatpush1.msra.mxu0 0.0
        %6946 = vmatprep.subr.mxu0 0.0
        %6947 = vmatpush1.msra.mxu0 0.0
        %6948 = vmatprep.subr.mxu0 0.0
        %6949 = vmatpush1.msra.mxu0 0.0
        %6950 = vmatprep.subr.mxu0 0.0
        %6951 = vmatpush1.msra.mxu0 0.0
        %6952 = vmatprep.subr.mxu0 0.0
        %6953 = vmatpush1.msra.mxu0 0.0
        %6954 = vmatprep.subr.mxu0 0.0
        %6955 = vmatpush1.msra.mxu0 0.0
        %6956 = vmatprep.subr.mxu0 0.0
        %6957 = vmatpush1.msra.mxu0 0.0
        %6958 = vmatprep.subr.mxu0 0.0
        %6959 = vmatpush1.msra.mxu0 0.0
        %6960 = vmatprep.subr.mxu0 0.0
        %6961 = vmatpush1.msra.mxu0 0.0
        %6962 = vmatprep.subr.mxu0 0.0
        %6963 = vmatpush1.msra.mxu0 0.0
        %6964 = vmatprep.subr.mxu0 0.0
        %6965 = vmatpush1.msra.mxu0 0.0
        %6966 = vmatprep.subr.mxu0 0.0
        %6967 = vmatpush1.msra.mxu0 0.0
        %6968 = vmatprep.subr.mxu0 0.0
        %6969 = vmatpush1.msra.mxu0 0.0
        %6970 = vmatprep.subr.mxu0 0.0
        %6971 = vmatpush1.msra.mxu0 0.0
        %6972 = vmatprep.subr.mxu0 0.0
        %6973 = vmatpush1.msra.mxu0 0.0
        %6974 = vmatprep.mubr.f32.mxu0 0.0
        %6975 = vmatmul.mubr.f32.gmra.mrb[0].mxu0 %v6908
        %v6976 = vpop.f32.mrb[0].mxu0
        %v6977 = vadd.f32 0.0, %v6976
        %v6978 = vpop.f32.mrb[0].mxu0
        %6979 = vdwg.mxu0
        %v6981 = vsel %vm4875, %v5220, 0
        %6983 = vmatprep.subr.mxu0 0.0
        %6984 = vmatpush1.msra.mxu0 %v2115
        %6985 = vmatprep.subr.mxu0 0.0
        %6986 = vmatpush1.msra.mxu0 0.0
        %6987 = vmatprep.subr.mxu0 0.0
        %6988 = vmatpush1.msra.mxu0 0.0
        %6989 = vmatprep.subr.mxu0 0.0
        %6990 = vmatpush1.msra.mxu0 0.0
        %6991 = vmatprep.subr.mxu0 0.0
        %6992 = vmatpush1.msra.mxu0 0.0
        %6993 = vmatprep.subr.mxu0 0.0
        %6994 = vmatpush1.msra.mxu0 0.0
        %6995 = vmatprep.subr.mxu0 0.0
        %6996 = vmatpush1.msra.mxu0 0.0
        %6997 = vmatprep.subr.mxu0 0.0
        %6998 = vmatpush1.msra.mxu0 0.0
        %6999 = vmatprep.subr.mxu0 0.0
        %7000 = vmatpush1.msra.mxu0 0.0
        %7001 = vmatprep.subr.mxu0 0.0
        %7002 = vmatpush1.msra.mxu0 0.0
        %7003 = vmatprep.subr.mxu0 0.0
        %7004 = vmatpush1.msra.mxu0 0.0
        %7005 = vmatprep.subr.mxu0 0.0
        %7006 = vmatpush1.msra.mxu0 0.0
        %7007 = vmatprep.subr.mxu0 0.0
        %7008 = vmatpush1.msra.mxu0 0.0
        %7009 = vmatprep.subr.mxu0 0.0
        %7010 = vmatpush1.msra.mxu0 0.0
        %7011 = vmatprep.subr.mxu0 0.0
        %7012 = vmatpush1.msra.mxu0 0.0
        %7013 = vmatprep.subr.mxu0 0.0
        %7014 = vmatpush1.msra.mxu0 0.0
        %7015 = vmatprep.subr.mxu0 0.0
        %7016 = vmatpush1.msra.mxu0 0.0
        %7017 = vmatprep.subr.mxu0 0.0
        %7018 = vmatpush1.msra.mxu0 0.0
        %7019 = vmatprep.subr.mxu0 0.0
        %7020 = vmatpush1.msra.mxu0 0.0
        %7021 = vmatprep.subr.mxu0 0.0
        %7022 = vmatpush1.msra.mxu0 0.0
        %7023 = vmatprep.subr.mxu0 0.0
        %7024 = vmatpush1.msra.mxu0 0.0
        %7025 = vmatprep.subr.mxu0 0.0
        %7026 = vmatpush1.msra.mxu0 0.0
        %7027 = vmatprep.subr.mxu0 0.0
        %7028 = vmatpush1.msra.mxu0 0.0
        %7029 = vmatprep.subr.mxu0 0.0
        %7030 = vmatpush1.msra.mxu0 0.0
        %7031 = vmatprep.subr.mxu0 0.0
        %7032 = vmatpush1.msra.mxu0 0.0
        %7033 = vmatprep.subr.mxu0 0.0
        %7034 = vmatpush1.msra.mxu0 0.0
        %7035 = vmatprep.subr.mxu0 0.0
        %7036 = vmatpush1.msra.mxu0 0.0
        %7037 = vmatprep.subr.mxu0 0.0
        %7038 = vmatpush1.msra.mxu0 0.0
        %7039 = vmatprep.subr.mxu0 0.0
        %7040 = vmatpush1.msra.mxu0 0.0
        %7041 = vmatprep.subr.mxu0 0.0
        %7042 = vmatpush1.msra.mxu0 0.0
        %7043 = vmatprep.subr.mxu0 0.0
        %7044 = vmatpush1.msra.mxu0 0.0
        %7045 = vmatprep.subr.mxu0 0.0
        %7046 = vmatpush1.msra.mxu0 0.0
        %7047 = vmatprep.mubr.f32.mxu0 0.0
        %7048 = vmatmul.mubr.f32.gmra.mrb[0].mxu0 %v6981
        %v7049 = vpop.f32.mrb[0].mxu0
        %v7050 = vadd.f32 0.0, %v7049
        %v7051 = vpop.f32.mrb[0].mxu0
        %7052 = vdwg.mxu0
        %v7054 = vsel %vm4875, %v5221, 0
        %7056 = vmatprep.subr.mxu0 0.0
        %7057 = vmatpush1.msra.mxu0 %v2116
        %7058 = vmatprep.subr.mxu0 0.0
        %7059 = vmatpush1.msra.mxu0 0.0
        %7060 = vmatprep.subr.mxu0 0.0
        %7061 = vmatpush1.msra.mxu0 0.0
        %7062 = vmatprep.subr.mxu0 0.0
        %7063 = vmatpush1.msra.mxu0 0.0
        %7064 = vmatprep.subr.mxu0 0.0
        %7065 = vmatpush1.msra.mxu0 0.0
        %7066 = vmatprep.subr.mxu0 0.0
        %7067 = vmatpush1.msra.mxu0 0.0
        %7068 = vmatprep.subr.mxu0 0.0
        %7069 = vmatpush1.msra.mxu0 0.0
        %7070 = vmatprep.subr.mxu0 0.0
        %7071 = vmatpush1.msra.mxu0 0.0
        %7072 = vmatprep.subr.mxu0 0.0
        %7073 = vmatpush1.msra.mxu0 0.0
        %7074 = vmatprep.subr.mxu0 0.0
        %7075 = vmatpush1.msra.mxu0 0.0
        %7076 = vmatprep.subr.mxu0 0.0
        %7077 = vmatpush1.msra.mxu0 0.0
        %7078 = vmatprep.subr.mxu0 0.0
        %7079 = vmatpush1.msra.mxu0 0.0
        %7080 = vmatprep.subr.mxu0 0.0
        %7081 = vmatpush1.msra.mxu0 0.0
        %7082 = vmatprep.subr.mxu0 0.0
        %7083 = vmatpush1.msra.mxu0 0.0
        %7084 = vmatprep.subr.mxu0 0.0
        %7085 = vmatpush1.msra.mxu0 0.0
        %7086 = vmatprep.subr.mxu0 0.0
        %7087 = vmatpush1.msra.mxu0 0.0
        %7088 = vmatprep.subr.mxu0 0.0
        %7089 = vmatpush1.msra.mxu0 0.0
        %7090 = vmatprep.subr.mxu0 0.0
        %7091 = vmatpush1.msra.mxu0 0.0
        %7092 = vmatprep.subr.mxu0 0.0
        %7093 = vmatpush1.msra.mxu0 0.0
        %7094 = vmatprep.subr.mxu0 0.0
        %7095 = vmatpush1.msra.mxu0 0.0
        %7096 = vmatprep.subr.mxu0 0.0
        %7097 = vmatpush1.msra.mxu0 0.0
        %7098 = vmatprep.subr.mxu0 0.0
        %7099 = vmatpush1.msra.mxu0 0.0
        %7100 = vmatprep.subr.mxu0 0.0
        %7101 = vmatpush1.msra.mxu0 0.0
        %7102 = vmatprep.subr.mxu0 0.0
        %7103 = vmatpush1.msra.mxu0 0.0
        %7104 = vmatprep.subr.mxu0 0.0
        %7105 = vmatpush1.msra.mxu0 0.0
        %7106 = vmatprep.subr.mxu0 0.0
        %7107 = vmatpush1.msra.mxu0 0.0
        %7108 = vmatprep.subr.mxu0 0.0
        %7109 = vmatpush1.msra.mxu0 0.0
        %7110 = vmatprep.subr.mxu0 0.0
        %7111 = vmatpush1.msra.mxu0 0.0
        %7112 = vmatprep.subr.mxu0 0.0
        %7113 = vmatpush1.msra.mxu0 0.0
        %7114 = vmatprep.subr.mxu0 0.0
        %7115 = vmatpush1.msra.mxu0 0.0
        %7116 = vmatprep.subr.mxu0 0.0
        %7117 = vmatpush1.msra.mxu0 0.0
        %7118 = vmatprep.subr.mxu0 0.0
        %7119 = vmatpush1.msra.mxu0 0.0
        %7120 = vmatprep.mubr.f32.mxu0 0.0
        %7121 = vmatmul.mubr.f32.gmra.mrb[0].mxu0 %v7054
        %v7122 = vpop.f32.mrb[0].mxu0
        %v7123 = vadd.f32 0.0, %v7122
        %v7124 = vpop.f32.mrb[0].mxu0
        %7125 = vdwg.mxu0
        %v7127 = vsel %vm4875, %v5222, 0
        %7129 = vmatprep.subr.mxu0 0.0
        %7130 = vmatpush1.msra.mxu0 %v2117
        %7131 = vmatprep.subr.mxu0 0.0
        %7132 = vmatpush1.msra.mxu0 0.0
        %7133 = vmatprep.subr.mxu0 0.0
        %7134 = vmatpush1.msra.mxu0 0.0
        %7135 = vmatprep.subr.mxu0 0.0
        %7136 = vmatpush1.msra.mxu0 0.0
        %7137 = vmatprep.subr.mxu0 0.0
        %7138 = vmatpush1.msra.mxu0 0.0
        %7139 = vmatprep.subr.mxu0 0.0
        %7140 = vmatpush1.msra.mxu0 0.0
        %7141 = vmatprep.subr.mxu0 0.0
        %7142 = vmatpush1.msra.mxu0 0.0
        %7143 = vmatprep.subr.mxu0 0.0
        %7144 = vmatpush1.msra.mxu0 0.0
        %7145 = vmatprep.subr.mxu0 0.0
        %7146 = vmatpush1.msra.mxu0 0.0
        %7147 = vmatprep.subr.mxu0 0.0
        %7148 = vmatpush1.msra.mxu0 0.0
        %7149 = vmatprep.subr.mxu0 0.0
        %7150 = vmatpush1.msra.mxu0 0.0
        %7151 = vmatprep.subr.mxu0 0.0
        %7152 = vmatpush1.msra.mxu0 0.0
        %7153 = vmatprep.subr.mxu0 0.0
        %7154 = vmatpush1.msra.mxu0 0.0
        %7155 = vmatprep.subr.mxu0 0.0
        %7156 = vmatpush1.msra.mxu0 0.0
        %7157 = vmatprep.subr.mxu0 0.0
        %7158 = vmatpush1.msra.mxu0 0.0
        %7159 = vmatprep.subr.mxu0 0.0
        %7160 = vmatpush1.msra.mxu0 0.0
        %7161 = vmatprep.subr.mxu0 0.0
        %7162 = vmatpush1.msra.mxu0 0.0
        %7163 = vmatprep.subr.mxu0 0.0
        %7164 = vmatpush1.msra.mxu0 0.0
        %7165 = vmatprep.subr.mxu0 0.0
        %7166 = vmatpush1.msra.mxu0 0.0
        %7167 = vmatprep.subr.mxu0 0.0
        %7168 = vmatpush1.msra.mxu0 0.0
        %7169 = vmatprep.subr.mxu0 0.0
        %7170 = vmatpush1.msra.mxu0 0.0
        %7171 = vmatprep.subr.mxu0 0.0
        %7172 = vmatpush1.msra.mxu0 0.0
        %7173 = vmatprep.subr.mxu0 0.0
        %7174 = vmatpush1.msra.mxu0 0.0
        %7175 = vmatprep.subr.mxu0 0.0
        %7176 = vmatpush1.msra.mxu0 0.0
        %7177 = vmatprep.subr.mxu0 0.0
        %7178 = vmatpush1.msra.mxu0 0.0
        %7179 = vmatprep.subr.mxu0 0.0
        %7180 = vmatpush1.msra.mxu0 0.0
        %7181 = vmatprep.subr.mxu0 0.0
        %7182 = vmatpush1.msra.mxu0 0.0
        %7183 = vmatprep.subr.mxu0 0.0
        %7184 = vmatpush1.msra.mxu0 0.0
        %7185 = vmatprep.subr.mxu0 0.0
        %7186 = vmatpush1.msra.mxu0 0.0
        %7187 = vmatprep.subr.mxu0 0.0
        %7188 = vmatpush1.msra.mxu0 0.0
        %7189 = vmatprep.subr.mxu0 0.0
        %7190 = vmatpush1.msra.mxu0 0.0
        %7191 = vmatprep.subr.mxu0 0.0
        %7192 = vmatpush1.msra.mxu0 0.0
        %7193 = vmatprep.mubr.f32.mxu0 0.0
        %7194 = vmatmul.mubr.f32.gmra.mrb[0].mxu0 %v7127
        %v7195 = vpop.f32.mrb[0].mxu0
        %v7196 = vadd.f32 0.0, %v7195
        %v7197 = vpop.f32.mrb[0].mxu0
        %7198 = vdwg.mxu0
        %v7200 = vsel %vm4875, %v5223, 0
        %7202 = vmatprep.subr.mxu0 0.0
        %7203 = vmatpush1.msra.mxu0 %v2118
        %7204 = vmatprep.subr.mxu0 0.0
        %7205 = vmatpush1.msra.mxu0 0.0
        %7206 = vmatprep.subr.mxu0 0.0
        %7207 = vmatpush1.msra.mxu0 0.0
        %7208 = vmatprep.subr.mxu0 0.0
        %7209 = vmatpush1.msra.mxu0 0.0
        %7210 = vmatprep.subr.mxu0 0.0
        %7211 = vmatpush1.msra.mxu0 0.0
        %7212 = vmatprep.subr.mxu0 0.0
        %7213 = vmatpush1.msra.mxu0 0.0
        %7214 = vmatprep.subr.mxu0 0.0
        %7215 = vmatpush1.msra.mxu0 0.0
        %7216 = vmatprep.subr.mxu0 0.0
        %7217 = vmatpush1.msra.mxu0 0.0
        %7218 = vmatprep.subr.mxu0 0.0
        %7219 = vmatpush1.msra.mxu0 0.0
        %7220 = vmatprep.subr.mxu0 0.0
        %7221 = vmatpush1.msra.mxu0 0.0
        %7222 = vmatprep.subr.mxu0 0.0
        %7223 = vmatpush1.msra.mxu0 0.0
        %7224 = vmatprep.subr.mxu0 0.0
        %7225 = vmatpush1.msra.mxu0 0.0
        %7226 = vmatprep.subr.mxu0 0.0
        %7227 = vmatpush1.msra.mxu0 0.0
        %7228 = vmatprep.subr.mxu0 0.0
        %7229 = vmatpush1.msra.mxu0 0.0
        %7230 = vmatprep.subr.mxu0 0.0
        %7231 = vmatpush1.msra.mxu0 0.0
        %7232 = vmatprep.subr.mxu0 0.0
        %7233 = vmatpush1.msra.mxu0 0.0
        %7234 = vmatprep.subr.mxu0 0.0
        %7235 = vmatpush1.msra.mxu0 0.0
        %7236 = vmatprep.subr.mxu0 0.0
        %7237 = vmatpush1.msra.mxu0 0.0
        %7238 = vmatprep.subr.mxu0 0.0
        %7239 = vmatpush1.msra.mxu0 0.0
        %7240 = vmatprep.subr.mxu0 0.0
        %7241 = vmatpush1.msra.mxu0 0.0
        %7242 = vmatprep.subr.mxu0 0.0
        %7243 = vmatpush1.msra.mxu0 0.0
        %7244 = vmatprep.subr.mxu0 0.0
        %7245 = vmatpush1.msra.mxu0 0.0
        %7246 = vmatprep.subr.mxu0 0.0
        %7247 = vmatpush1.msra.mxu0 0.0
        %7248 = vmatprep.subr.mxu0 0.0
        %7249 = vmatpush1.msra.mxu0 0.0
        %7250 = vmatprep.subr.mxu0 0.0
        %7251 = vmatpush1.msra.mxu0 0.0
        %7252 = vmatprep.subr.mxu0 0.0
        %7253 = vmatpush1.msra.mxu0 0.0
        %7254 = vmatprep.subr.mxu0 0.0
        %7255 = vmatpush1.msra.mxu0 0.0
        %7256 = vmatprep.subr.mxu0 0.0
        %7257 = vmatpush1.msra.mxu0 0.0
        %7258 = vmatprep.subr.mxu0 0.0
        %7259 = vmatpush1.msra.mxu0 0.0
        %7260 = vmatprep.subr.mxu0 0.0
        %7261 = vmatpush1.msra.mxu0 0.0
        %7262 = vmatprep.subr.mxu0 0.0
        %7263 = vmatpush1.msra.mxu0 0.0
        %7264 = vmatprep.subr.mxu0 0.0
        %7265 = vmatpush1.msra.mxu0 0.0
        %7266 = vmatprep.mubr.f32.mxu0 0.0
        %7267 = vmatmul.mubr.f32.gmra.mrb[0].mxu0 %v7200
        %v7268 = vpop.f32.mrb[0].mxu0
        %v7269 = vadd.f32 0.0, %v7268
        %v7270 = vpop.f32.mrb[0].mxu0
        %7271 = vdwg.mxu0
        %v7273 = vsel %vm4875, %v5224, 0
        %7275 = vmatprep.subr.mxu0 0.0
        %7276 = vmatpush1.msra.mxu0 %v2119
        %7277 = vmatprep.subr.mxu0 0.0
        %7278 = vmatpush1.msra.mxu0 0.0
        %7279 = vmatprep.subr.mxu0 0.0
        %7280 = vmatpush1.msra.mxu0 0.0
        %7281 = vmatprep.subr.mxu0 0.0
        %7282 = vmatpush1.msra.mxu0 0.0
        %7283 = vmatprep.subr.mxu0 0.0
        %7284 = vmatpush1.msra.mxu0 0.0
        %7285 = vmatprep.subr.mxu0 0.0
        %7286 = vmatpush1.msra.mxu0 0.0
        %7287 = vmatprep.subr.mxu0 0.0
        %7288 = vmatpush1.msra.mxu0 0.0
        %7289 = vmatprep.subr.mxu0 0.0
        %7290 = vmatpush1.msra.mxu0 0.0
        %7291 = vmatprep.subr.mxu0 0.0
        %7292 = vmatpush1.msra.mxu0 0.0
        %7293 = vmatprep.subr.mxu0 0.0
        %7294 = vmatpush1.msra.mxu0 0.0
        %7295 = vmatprep.subr.mxu0 0.0
        %7296 = vmatpush1.msra.mxu0 0.0
        %7297 = vmatprep.subr.mxu0 0.0
        %7298 = vmatpush1.msra.mxu0 0.0
        %7299 = vmatprep.subr.mxu0 0.0
        %7300 = vmatpush1.msra.mxu0 0.0
        %7301 = vmatprep.subr.mxu0 0.0
        %7302 = vmatpush1.msra.mxu0 0.0
        %7303 = vmatprep.subr.mxu0 0.0
        %7304 = vmatpush1.msra.mxu0 0.0
        %7305 = vmatprep.subr.mxu0 0.0
        %7306 = vmatpush1.msra.mxu0 0.0
        %7307 = vmatprep.subr.mxu0 0.0
        %7308 = vmatpush1.msra.mxu0 0.0
        %7309 = vmatprep.subr.mxu0 0.0
        %7310 = vmatpush1.msra.mxu0 0.0
        %7311 = vmatprep.subr.mxu0 0.0
        %7312 = vmatpush1.msra.mxu0 0.0
        %7313 = vmatprep.subr.mxu0 0.0
        %7314 = vmatpush1.msra.mxu0 0.0
        %7315 = vmatprep.subr.mxu0 0.0
        %7316 = vmatpush1.msra.mxu0 0.0
        %7317 = vmatprep.subr.mxu0 0.0
        %7318 = vmatpush1.msra.mxu0 0.0
        %7319 = vmatprep.subr.mxu0 0.0
        %7320 = vmatpush1.msra.mxu0 0.0
        %7321 = vmatprep.subr.mxu0 0.0
        %7322 = vmatpush1.msra.mxu0 0.0
        %7323 = vmatprep.subr.mxu0 0.0
        %7324 = vmatpush1.msra.mxu0 0.0
        %7325 = vmatprep.subr.mxu0 0.0
        %7326 = vmatpush1.msra.mxu0 0.0
        %7327 = vmatprep.subr.mxu0 0.0
        %7328 = vmatpush1.msra.mxu0 0.0
        %7329 = vmatprep.subr.mxu0 0.0
        %7330 = vmatpush1.msra.mxu0 0.0
        %7331 = vmatprep.subr.mxu0 0.0
        %7332 = vmatpush1.msra.mxu0 0.0
        %7333 = vmatprep.subr.mxu0 0.0
        %7334 = vmatpush1.msra.mxu0 0.0
        %7335 = vmatprep.subr.mxu0 0.0
        %7336 = vmatpush1.msra.mxu0 0.0
        %7337 = vmatprep.subr.mxu0 0.0
        %7338 = vmatpush1.msra.mxu0 0.0
        %7339 = vmatprep.mubr.f32.mxu0 0.0
        %7340 = vmatmul.mubr.f32.gmra.mrb[0].mxu0 %v7273
        %v7341 = vpop.f32.mrb[0].mxu0
        %v7342 = vadd.f32 0.0, %v7341
        %v7343 = vpop.f32.mrb[0].mxu0
        %7344 = vdwg.mxu0
        %v7346 = vsel %vm4875, %v5225, 0
        %7348 = vmatprep.subr.mxu0 0.0
        %7349 = vmatpush1.msra.mxu0 %v2120
        %7350 = vmatprep.subr.mxu0 0.0
        %7351 = vmatpush1.msra.mxu0 0.0
        %7352 = vmatprep.subr.mxu0 0.0
        %7353 = vmatpush1.msra.mxu0 0.0
        %7354 = vmatprep.subr.mxu0 0.0
        %7355 = vmatpush1.msra.mxu0 0.0
        %7356 = vmatprep.subr.mxu0 0.0
        %7357 = vmatpush1.msra.mxu0 0.0
        %7358 = vmatprep.subr.mxu0 0.0
        %7359 = vmatpush1.msra.mxu0 0.0
        %7360 = vmatprep.subr.mxu0 0.0
        %7361 = vmatpush1.msra.mxu0 0.0
        %7362 = vmatprep.subr.mxu0 0.0
        %7363 = vmatpush1.msra.mxu0 0.0
        %7364 = vmatprep.subr.mxu0 0.0
        %7365 = vmatpush1.msra.mxu0 0.0
        %7366 = vmatprep.subr.mxu0 0.0
        %7367 = vmatpush1.msra.mxu0 0.0
        %7368 = vmatprep.subr.mxu0 0.0
        %7369 = vmatpush1.msra.mxu0 0.0
        %7370 = vmatprep.subr.mxu0 0.0
        %7371 = vmatpush1.msra.mxu0 0.0
        %7372 = vmatprep.subr.mxu0 0.0
        %7373 = vmatpush1.msra.mxu0 0.0
        %7374 = vmatprep.subr.mxu0 0.0
        %7375 = vmatpush1.msra.mxu0 0.0
        %7376 = vmatprep.subr.mxu0 0.0
        %7377 = vmatpush1.msra.mxu0 0.0
        %7378 = vmatprep.subr.mxu0 0.0
        %7379 = vmatpush1.msra.mxu0 0.0
        %7380 = vmatprep.subr.mxu0 0.0
        %7381 = vmatpush1.msra.mxu0 0.0
        %7382 = vmatprep.subr.mxu0 0.0
        %7383 = vmatpush1.msra.mxu0 0.0
        %7384 = vmatprep.subr.mxu0 0.0
        %7385 = vmatpush1.msra.mxu0 0.0
        %7386 = vmatprep.subr.mxu0 0.0
        %7387 = vmatpush1.msra.mxu0 0.0
        %7388 = vmatprep.subr.mxu0 0.0
        %7389 = vmatpush1.msra.mxu0 0.0
        %7390 = vmatprep.subr.mxu0 0.0
        %7391 = vmatpush1.msra.mxu0 0.0
        %7392 = vmatprep.subr.mxu0 0.0
        %7393 = vmatpush1.msra.mxu0 0.0
        %7394 = vmatprep.subr.mxu0 0.0
        %7395 = vmatpush1.msra.mxu0 0.0
        %7396 = vmatprep.subr.mxu0 0.0
        %7397 = vmatpush1.msra.mxu0 0.0
        %7398 = vmatprep.subr.mxu0 0.0
        %7399 = vmatpush1.msra.mxu0 0.0
        %7400 = vmatprep.subr.mxu0 0.0
        %7401 = vmatpush1.msra.mxu0 0.0
        %7402 = vmatprep.subr.mxu0 0.0
        %7403 = vmatpush1.msra.mxu0 0.0
        %7404 = vmatprep.subr.mxu0 0.0
        %7405 = vmatpush1.msra.mxu0 0.0
        %7406 = vmatprep.subr.mxu0 0.0
        %7407 = vmatpush1.msra.mxu0 0.0
        %7408 = vmatprep.subr.mxu0 0.0
        %7409 = vmatpush1.msra.mxu0 0.0
        %7410 = vmatprep.subr.mxu0 0.0
        %7411 = vmatpush1.msra.mxu0 0.0
        %7412 = vmatprep.mubr.f32.mxu0 0.0
        %7413 = vmatmul.mubr.f32.gmra.mrb[0].mxu0 %v7346
        %v7414 = vpop.f32.mrb[0].mxu0
        %v7415 = vadd.f32 0.0, %v7414
        %v7416 = vpop.f32.mrb[0].mxu0
        %7417 = vdwg.mxu0
        %v7419 = vsel %vm4875, %v5226, 0
        %7421 = vmatprep.subr.mxu0 0.0
        %7422 = vmatpush1.msra.mxu0 %v2121
        %7423 = vmatprep.subr.mxu0 0.0
        %7424 = vmatpush1.msra.mxu0 0.0
        %7425 = vmatprep.subr.mxu0 0.0
        %7426 = vmatpush1.msra.mxu0 0.0
        %7427 = vmatprep.subr.mxu0 0.0
        %7428 = vmatpush1.msra.mxu0 0.0
        %7429 = vmatprep.subr.mxu0 0.0
        %7430 = vmatpush1.msra.mxu0 0.0
        %7431 = vmatprep.subr.mxu0 0.0
        %7432 = vmatpush1.msra.mxu0 0.0
        %7433 = vmatprep.subr.mxu0 0.0
        %7434 = vmatpush1.msra.mxu0 0.0
        %7435 = vmatprep.subr.mxu0 0.0
        %7436 = vmatpush1.msra.mxu0 0.0
        %7437 = vmatprep.subr.mxu0 0.0
        %7438 = vmatpush1.msra.mxu0 0.0
        %7439 = vmatprep.subr.mxu0 0.0
        %7440 = vmatpush1.msra.mxu0 0.0
        %7441 = vmatprep.subr.mxu0 0.0
        %7442 = vmatpush1.msra.mxu0 0.0
        %7443 = vmatprep.subr.mxu0 0.0
        %7444 = vmatpush1.msra.mxu0 0.0
        %7445 = vmatprep.subr.mxu0 0.0
        %7446 = vmatpush1.msra.mxu0 0.0
        %7447 = vmatprep.subr.mxu0 0.0
        %7448 = vmatpush1.msra.mxu0 0.0
        %7449 = vmatprep.subr.mxu0 0.0
        %7450 = vmatpush1.msra.mxu0 0.0
        %7451 = vmatprep.subr.mxu0 0.0
        %7452 = vmatpush1.msra.mxu0 0.0
        %7453 = vmatprep.subr.mxu0 0.0
        %7454 = vmatpush1.msra.mxu0 0.0
        %7455 = vmatprep.subr.mxu0 0.0
        %7456 = vmatpush1.msra.mxu0 0.0
        %7457 = vmatprep.subr.mxu0 0.0
        %7458 = vmatpush1.msra.mxu0 0.0
        %7459 = vmatprep.subr.mxu0 0.0
        %7460 = vmatpush1.msra.mxu0 0.0
        %7461 = vmatprep.subr.mxu0 0.0
        %7462 = vmatpush1.msra.mxu0 0.0
        %7463 = vmatprep.subr.mxu0 0.0
        %7464 = vmatpush1.msra.mxu0 0.0
        %7465 = vmatprep.subr.mxu0 0.0
        %7466 = vmatpush1.msra.mxu0 0.0
        %7467 = vmatprep.subr.mxu0 0.0
        %7468 = vmatpush1.msra.mxu0 0.0
        %7469 = vmatprep.subr.mxu0 0.0
        %7470 = vmatpush1.msra.mxu0 0.0
        %7471 = vmatprep.subr.mxu0 0.0
        %7472 = vmatpush1.msra.mxu0 0.0
        %7473 = vmatprep.subr.mxu0 0.0
        %7474 = vmatpush1.msra.mxu0 0.0
        %7475 = vmatprep.subr.mxu0 0.0
        %7476 = vmatpush1.msra.mxu0 0.0
        %7477 = vmatprep.subr.mxu0 0.0
        %7478 = vmatpush1.msra.mxu0 0.0
        %7479 = vmatprep.subr.mxu0 0.0
        %7480 = vmatpush1.msra.mxu0 0.0
        %7481 = vmatprep.subr.mxu0 0.0
        %7482 = vmatpush1.msra.mxu0 0.0
        %7483 = vmatprep.subr.mxu0 0.0
        %7484 = vmatpush1.msra.mxu0 0.0
        %7485 = vmatprep.mubr.f32.mxu0 0.0
        %7486 = vmatmul.mubr.f32.gmra.mrb[0].mxu0 %v7419
        %v7487 = vpop.f32.mrb[0].mxu0
        %v7488 = vadd.f32 0.0, %v7487
        %v7489 = vpop.f32.mrb[0].mxu0
        %7490 = vdwg.mxu0
        %v7492 = vsel %vm4875, %v5227, 0
        %7494 = vmatprep.subr.mxu0 0.0
        %7495 = vmatpush1.msra.mxu0 %v2122
        %7496 = vmatprep.subr.mxu0 0.0
        %7497 = vmatpush1.msra.mxu0 0.0
        %7498 = vmatprep.subr.mxu0 0.0
        %7499 = vmatpush1.msra.mxu0 0.0
        %7500 = vmatprep.subr.mxu0 0.0
        %7501 = vmatpush1.msra.mxu0 0.0
        %7502 = vmatprep.subr.mxu0 0.0
        %7503 = vmatpush1.msra.mxu0 0.0
        %7504 = vmatprep.subr.mxu0 0.0
        %7505 = vmatpush1.msra.mxu0 0.0
        %7506 = vmatprep.subr.mxu0 0.0
        %7507 = vmatpush1.msra.mxu0 0.0
        %7508 = vmatprep.subr.mxu0 0.0
        %7509 = vmatpush1.msra.mxu0 0.0
        %7510 = vmatprep.subr.mxu0 0.0
        %7511 = vmatpush1.msra.mxu0 0.0
        %7512 = vmatprep.subr.mxu0 0.0
        %7513 = vmatpush1.msra.mxu0 0.0
        %7514 = vmatprep.subr.mxu0 0.0
        %7515 = vmatpush1.msra.mxu0 0.0
        %7516 = vmatprep.subr.mxu0 0.0
        %7517 = vmatpush1.msra.mxu0 0.0
        %7518 = vmatprep.subr.mxu0 0.0
        %7519 = vmatpush1.msra.mxu0 0.0
        %7520 = vmatprep.subr.mxu0 0.0
        %7521 = vmatpush1.msra.mxu0 0.0
        %7522 = vmatprep.subr.mxu0 0.0
        %7523 = vmatpush1.msra.mxu0 0.0
        %7524 = vmatprep.subr.mxu0 0.0
        %7525 = vmatpush1.msra.mxu0 0.0
        %7526 = vmatprep.subr.mxu0 0.0
        %7527 = vmatpush1.msra.mxu0 0.0
        %7528 = vmatprep.subr.mxu0 0.0
        %7529 = vmatpush1.msra.mxu0 0.0
        %7530 = vmatprep.subr.mxu0 0.0
        %7531 = vmatpush1.msra.mxu0 0.0
        %7532 = vmatprep.subr.mxu0 0.0
        %7533 = vmatpush1.msra.mxu0 0.0
        %7534 = vmatprep.subr.mxu0 0.0
        %7535 = vmatpush1.msra.mxu0 0.0
        %7536 = vmatprep.subr.mxu0 0.0
        %7537 = vmatpush1.msra.mxu0 0.0
        %7538 = vmatprep.subr.mxu0 0.0
        %7539 = vmatpush1.msra.mxu0 0.0
        %7540 = vmatprep.subr.mxu0 0.0
        %7541 = vmatpush1.msra.mxu0 0.0
        %7542 = vmatprep.subr.mxu0 0.0
        %7543 = vmatpush1.msra.mxu0 0.0
        %7544 = vmatprep.subr.mxu0 0.0
        %7545 = vmatpush1.msra.mxu0 0.0
        %7546 = vmatprep.subr.mxu0 0.0
        %7547 = vmatpush1.msra.mxu0 0.0
        %7548 = vmatprep.subr.mxu0 0.0
        %7549 = vmatpush1.msra.mxu0 0.0
        %7550 = vmatprep.subr.mxu0 0.0
        %7551 = vmatpush1.msra.mxu0 0.0
        %7552 = vmatprep.subr.mxu0 0.0
        %7553 = vmatpush1.msra.mxu0 0.0
        %7554 = vmatprep.subr.mxu0 0.0
        %7555 = vmatpush1.msra.mxu0 0.0
        %7556 = vmatprep.subr.mxu0 0.0
        %7557 = vmatpush1.msra.mxu0 0.0
        %7558 = vmatprep.mubr.f32.mxu0 0.0
        %7559 = vmatmul.mubr.f32.gmra.mrb[0].mxu0 %v7492
        %v7560 = vpop.f32.mrb[0].mxu0
        %v7561 = vadd.f32 0.0, %v7560
        %v7562 = vpop.f32.mrb[0].mxu0
        %7563 = vdwg.mxu0
        %v7564 = vld [vmem:[%s8] sm:$0xff]
        %v7565 = vld [vmem:[%s8 + $0x8] sm:$0xff]
        %v7566 = vld [vmem:[%s8 + $0x10] sm:$0xff]
        %v7567 = vld [vmem:[%s8 + $0x18] sm:$0xff]
        %v7569 = vsel %vm426, %v5298, 0
        %v7572 = vsel %vm426, %v5371, 0
        %v7575 = vsel %vm426, %v5444, 0
        %v7578 = vsel %vm426, %v5517, 0
        %v7581 = vsel %vm426, %v5590, 0
        %v7584 = vsel %vm426, %v5663, 0
        %v7587 = vsel %vm426, %v5736, 0
        %v7590 = vsel %vm426, %v5809, 0
        %v7593 = vsel %vm426, %v5882, 0
        %v7596 = vsel %vm426, %v5955, 0
        %v7599 = vsel %vm426, %v6028, 0
        %v7602 = vsel %vm426, %v6101, 0
        %v7605 = vsel %vm426, %v6174, 0
        %v7608 = vsel %vm426, %v6247, 0
        %v7611 = vsel %vm426, %v6320, 0
        %v7614 = vsel %vm426, %v6393, 0
        %v7617 = vsel %vm426, %v6466, 0
        %v7620 = vsel %vm426, %v6539, 0
        %v7623 = vsel %vm426, %v6612, 0
        %v7626 = vsel %vm426, %v6685, 0
        %v7629 = vsel %vm426, %v6758, 0
        %v7632 = vsel %vm426, %v6831, 0
        %v7635 = vsel %vm426, %v6904, 0
        %v7638 = vsel %vm426, %v6977, 0
        %v7641 = vsel %vm426, %v7050, 0
        %v7644 = vsel %vm426, %v7123, 0
        %v7647 = vsel %vm426, %v7196, 0
        %v7650 = vsel %vm426, %v7269, 0
        %v7653 = vsel %vm426, %v7342, 0
        %v7656 = vsel %vm426, %v7415, 0
        %v7659 = vsel %vm426, %v7488, 0
        %v7662 = vsel %vm426, %v7561, 0
        %7664 = vmatprep.subr.mxu0 0.0
        %7665 = vmatpush1.msra.mxu0 %v7564
        %7666 = vmatprep.subr.mxu0 0.0
        %7667 = vmatpush1.msra.mxu0 %v7565
        %7668 = vmatprep.subr.mxu0 0.0
        %7669 = vmatpush1.msra.mxu0 %v7566
        %7670 = vmatprep.subr.mxu0 0.0
        %7671 = vmatpush1.msra.mxu0 %v7567
        %7672 = vmatprep.subr.mxu0 0.0
        %7673 = vmatpush1.msra.mxu0 0.0
        %7674 = vmatprep.subr.mxu0 0.0
        %7675 = vmatpush1.msra.mxu0 0.0
        %7676 = vmatprep.subr.mxu0 0.0
        %7677 = vmatpush1.msra.mxu0 0.0
        %7678 = vmatprep.subr.mxu0 0.0
        %7679 = vmatpush1.msra.mxu0 0.0
        %7680 = vmatprep.subr.mxu0 0.0
        %7681 = vmatpush1.msra.mxu0 0.0
        %7682 = vmatprep.subr.mxu0 0.0
        %7683 = vmatpush1.msra.mxu0 0.0
        %7684 = vmatprep.subr.mxu0 0.0
        %7685 = vmatpush1.msra.mxu0 0.0
        %7686 = vmatprep.subr.mxu0 0.0
        %7687 = vmatpush1.msra.mxu0 0.0
        %7688 = vmatprep.subr.mxu0 0.0
        %7689 = vmatpush1.msra.mxu0 0.0
        %7690 = vmatprep.subr.mxu0 0.0
        %7691 = vmatpush1.msra.mxu0 0.0
        %7692 = vmatprep.subr.mxu0 0.0
        %7693 = vmatpush1.msra.mxu0 0.0
        %7694 = vmatprep.subr.mxu0 0.0
        %7695 = vmatpush1.msra.mxu0 0.0
        %7696 = vmatprep.subr.mxu0 0.0
        %7697 = vmatpush1.msra.mxu0 0.0
        %7698 = vmatprep.subr.mxu0 0.0
        %7699 = vmatpush1.msra.mxu0 0.0
        %7700 = vmatprep.subr.mxu0 0.0
        %7701 = vmatpush1.msra.mxu0 0.0
        %7702 = vmatprep.subr.mxu0 0.0
        %7703 = vmatpush1.msra.mxu0 0.0
        %7704 = vmatprep.subr.mxu0 0.0
        %7705 = vmatpush1.msra.mxu0 0.0
        %7706 = vmatprep.subr.mxu0 0.0
        %7707 = vmatpush1.msra.mxu0 0.0
        %7708 = vmatprep.subr.mxu0 0.0
        %7709 = vmatpush1.msra.mxu0 0.0
        %7710 = vmatprep.subr.mxu0 0.0
        %7711 = vmatpush1.msra.mxu0 0.0
        %7712 = vmatprep.subr.mxu0 0.0
        %7713 = vmatpush1.msra.mxu0 0.0
        %7714 = vmatprep.subr.mxu0 0.0
        %7715 = vmatpush1.msra.mxu0 0.0
        %7716 = vmatprep.subr.mxu0 0.0
        %7717 = vmatpush1.msra.mxu0 0.0
        %7718 = vmatprep.subr.mxu0 0.0
        %7719 = vmatpush1.msra.mxu0 0.0
        %7720 = vmatprep.subr.mxu0 0.0
        %7721 = vmatpush1.msra.mxu0 0.0
        %7722 = vmatprep.subr.mxu0 0.0
        %7723 = vmatpush1.msra.mxu0 0.0
        %7724 = vmatprep.subr.mxu0 0.0
        %7725 = vmatpush1.msra.mxu0 0.0
        %7726 = vmatprep.subr.mxu0 0.0
        %7727 = vmatpush1.msra.mxu0 0.0
        %7728 = vmatprep.mubr.f32.mxu0 0.0
        %7729 = vmatmul.mubr.f32.gmra.mrb[0].mxu0 %v7569
        %v7730 = vpop.f32.mrb[0].mxu0
        %v7731 = vadd.f32 0.0, %v7730
        %v7732 = vpop.f32.mrb[0].mxu0
        %7733 = vmatprep.mubr.f32.mxu0 0.0
        %7734 = vmatmul.mubr.f32.gmra.mrb[0].mxu0 %v7572
        %v7735 = vpop.f32.mrb[0].mxu0
        %v7736 = vadd.f32 0.0, %v7735
        %v7737 = vpop.f32.mrb[0].mxu0
        %7738 = vmatprep.mubr.f32.mxu0 0.0
        %7739 = vmatmul.mubr.f32.gmra.mrb[0].mxu0 %v7575
        %v7740 = vpop.f32.mrb[0].mxu0
        %v7741 = vadd.f32 0.0, %v7740
        %v7742 = vpop.f32.mrb[0].mxu0
        %7743 = vmatprep.mubr.f32.mxu0 0.0
        %7744 = vmatmul.mubr.f32.gmra.mrb[0].mxu0 %v7578
        %v7745 = vpop.f32.mrb[0].mxu0
        %v7746 = vadd.f32 0.0, %v7745
        %v7747 = vpop.f32.mrb[0].mxu0
        %7748 = vmatprep.mubr.f32.mxu0 0.0
        %7749 = vmatmul.mubr.f32.gmra.mrb[0].mxu0 %v7581
        %v7750 = vpop.f32.mrb[0].mxu0
        %v7751 = vadd.f32 0.0, %v7750
        %v7752 = vpop.f32.mrb[0].mxu0
        %7753 = vmatprep.mubr.f32.mxu0 0.0
        %7754 = vmatmul.mubr.f32.gmra.mrb[0].mxu0 %v7584
        %v7755 = vpop.f32.mrb[0].mxu0
        %v7756 = vadd.f32 0.0, %v7755
        %v7757 = vpop.f32.mrb[0].mxu0
        %7758 = vmatprep.mubr.f32.mxu0 0.0
        %7759 = vmatmul.mubr.f32.gmra.mrb[0].mxu0 %v7587
        %v7760 = vpop.f32.mrb[0].mxu0
        %v7761 = vadd.f32 0.0, %v7760
        %v7762 = vpop.f32.mrb[0].mxu0
        %7763 = vmatprep.mubr.f32.mxu0 0.0
        %7764 = vmatmul.mubr.f32.gmra.mrb[0].mxu0 %v7590
        %v7765 = vpop.f32.mrb[0].mxu0
        %v7766 = vadd.f32 0.0, %v7765
        %v7767 = vpop.f32.mrb[0].mxu0
        %7768 = vmatprep.mubr.f32.mxu0 0.0
        %7769 = vmatmul.mubr.f32.gmra.mrb[0].mxu0 %v7593
        %v7770 = vpop.f32.mrb[0].mxu0
        %v7771 = vadd.f32 0.0, %v7770
        %v7772 = vpop.f32.mrb[0].mxu0
        %7773 = vmatprep.mubr.f32.mxu0 0.0
        %7774 = vmatmul.mubr.f32.gmra.mrb[0].mxu0 %v7596
        %v7775 = vpop.f32.mrb[0].mxu0
        %v7776 = vadd.f32 0.0, %v7775
        %v7777 = vpop.f32.mrb[0].mxu0
        %7778 = vmatprep.mubr.f32.mxu0 0.0
        %7779 = vmatmul.mubr.f32.gmra.mrb[0].mxu0 %v7599
        %v7780 = vpop.f32.mrb[0].mxu0
        %v7781 = vadd.f32 0.0, %v7780
        %v7782 = vpop.f32.mrb[0].mxu0
        %7783 = vmatprep.mubr.f32.mxu0 0.0
        %7784 = vmatmul.mubr.f32.gmra.mrb[0].mxu0 %v7602
        %v7785 = vpop.f32.mrb[0].mxu0
        %v7786 = vadd.f32 0.0, %v7785
        %v7787 = vpop.f32.mrb[0].mxu0
        %7788 = vmatprep.mubr.f32.mxu0 0.0
        %7789 = vmatmul.mubr.f32.gmra.mrb[0].mxu0 %v7605
        %v7790 = vpop.f32.mrb[0].mxu0
        %v7791 = vadd.f32 0.0, %v7790
        %v7792 = vpop.f32.mrb[0].mxu0
        %7793 = vmatprep.mubr.f32.mxu0 0.0
        %7794 = vmatmul.mubr.f32.gmra.mrb[0].mxu0 %v7608
        %v7795 = vpop.f32.mrb[0].mxu0
        %v7796 = vadd.f32 0.0, %v7795
        %v7797 = vpop.f32.mrb[0].mxu0
        %7798 = vmatprep.mubr.f32.mxu0 0.0
        %7799 = vmatmul.mubr.f32.gmra.mrb[0].mxu0 %v7611
        %v7800 = vpop.f32.mrb[0].mxu0
        %v7801 = vadd.f32 0.0, %v7800
        %v7802 = vpop.f32.mrb[0].mxu0
        %7803 = vmatprep.mubr.f32.mxu0 0.0
        %7804 = vmatmul.mubr.f32.gmra.mrb[0].mxu0 %v7614
        %v7805 = vpop.f32.mrb[0].mxu0
        %v7806 = vadd.f32 0.0, %v7805
        %v7807 = vpop.f32.mrb[0].mxu0
        %7808 = vmatprep.mubr.f32.mxu0 0.0
        %7809 = vmatmul.mubr.f32.gmra.mrb[0].mxu0 %v7617
        %v7810 = vpop.f32.mrb[0].mxu0
        %v7811 = vadd.f32 0.0, %v7810
        %v7812 = vpop.f32.mrb[0].mxu0
        %7813 = vmatprep.mubr.f32.mxu0 0.0
        %7814 = vmatmul.mubr.f32.gmra.mrb[0].mxu0 %v7620
        %v7815 = vpop.f32.mrb[0].mxu0
        %v7816 = vadd.f32 0.0, %v7815
        %v7817 = vpop.f32.mrb[0].mxu0
        %7818 = vmatprep.mubr.f32.mxu0 0.0
        %7819 = vmatmul.mubr.f32.gmra.mrb[0].mxu0 %v7623
        %v7820 = vpop.f32.mrb[0].mxu0
        %v7821 = vadd.f32 0.0, %v7820
        %v7822 = vpop.f32.mrb[0].mxu0
        %7823 = vmatprep.mubr.f32.mxu0 0.0
        %7824 = vmatmul.mubr.f32.gmra.mrb[0].mxu0 %v7626
        %v7825 = vpop.f32.mrb[0].mxu0
        %v7826 = vadd.f32 0.0, %v7825
        %v7827 = vpop.f32.mrb[0].mxu0
        %7828 = vmatprep.mubr.f32.mxu0 0.0
        %7829 = vmatmul.mubr.f32.gmra.mrb[0].mxu0 %v7629
        %v7830 = vpop.f32.mrb[0].mxu0
        %v7831 = vadd.f32 0.0, %v7830
        %v7832 = vpop.f32.mrb[0].mxu0
        %7833 = vmatprep.mubr.f32.mxu0 0.0
        %7834 = vmatmul.mubr.f32.gmra.mrb[0].mxu0 %v7632
        %v7835 = vpop.f32.mrb[0].mxu0
        %v7836 = vadd.f32 0.0, %v7835
        %v7837 = vpop.f32.mrb[0].mxu0
        %7838 = vmatprep.mubr.f32.mxu0 0.0
        %7839 = vmatmul.mubr.f32.gmra.mrb[0].mxu0 %v7635
        %v7840 = vpop.f32.mrb[0].mxu0
        %v7841 = vadd.f32 0.0, %v7840
        %v7842 = vpop.f32.mrb[0].mxu0
        %7843 = vmatprep.mubr.f32.mxu0 0.0
        %7844 = vmatmul.mubr.f32.gmra.mrb[0].mxu0 %v7638
        %v7845 = vpop.f32.mrb[0].mxu0
        %v7846 = vadd.f32 0.0, %v7845
        %v7847 = vpop.f32.mrb[0].mxu0
        %7848 = vmatprep.mubr.f32.mxu0 0.0
        %7849 = vmatmul.mubr.f32.gmra.mrb[0].mxu0 %v7641
        %v7850 = vpop.f32.mrb[0].mxu0
        %v7851 = vadd.f32 0.0, %v7850
        %v7852 = vpop.f32.mrb[0].mxu0
        %7853 = vmatprep.mubr.f32.mxu0 0.0
        %7854 = vmatmul.mubr.f32.gmra.mrb[0].mxu0 %v7644
        %v7855 = vpop.f32.mrb[0].mxu0
        %v7856 = vadd.f32 0.0, %v7855
        %v7857 = vpop.f32.mrb[0].mxu0
        %7858 = vmatprep.mubr.f32.mxu0 0.0
        %7859 = vmatmul.mubr.f32.gmra.mrb[0].mxu0 %v7647
        %v7860 = vpop.f32.mrb[0].mxu0
        %v7861 = vadd.f32 0.0, %v7860
        %v7862 = vpop.f32.mrb[0].mxu0
        %7863 = vmatprep.mubr.f32.mxu0 0.0
        %7864 = vmatmul.mubr.f32.gmra.mrb[0].mxu0 %v7650
        %v7865 = vpop.f32.mrb[0].mxu0
        %v7866 = vadd.f32 0.0, %v7865
        %v7867 = vpop.f32.mrb[0].mxu0
        %7868 = vmatprep.mubr.f32.mxu0 0.0
        %7869 = vmatmul.mubr.f32.gmra.mrb[0].mxu0 %v7653
        %v7870 = vpop.f32.mrb[0].mxu0
        %v7871 = vadd.f32 0.0, %v7870
        %v7872 = vpop.f32.mrb[0].mxu0
        %7873 = vmatprep.mubr.f32.mxu0 0.0
        %7874 = vmatmul.mubr.f32.gmra.mrb[0].mxu0 %v7656
        %v7875 = vpop.f32.mrb[0].mxu0
        %v7876 = vadd.f32 0.0, %v7875
        %v7877 = vpop.f32.mrb[0].mxu0
        %7878 = vmatprep.mubr.f32.mxu0 0.0
        %7879 = vmatmul.mubr.f32.gmra.mrb[0].mxu0 %v7659
        %v7880 = vpop.f32.mrb[0].mxu0
        %v7881 = vadd.f32 0.0, %v7880
        %v7882 = vpop.f32.mrb[0].mxu0
        %7883 = vmatprep.mubr.f32.mxu0 0.0
        %7884 = vmatmul.mubr.f32.gmra.mrb[0].mxu0 %v7662
        %v7885 = vpop.f32.mrb[0].mxu0
        %v7886 = vadd.f32 0.0, %v7885
        %v7887 = vpop.f32.mrb[0].mxu0
        %7888 = vdwg.mxu0
        %v7889 = vadd.f32 %v1901, %v7731
        %v7890 = vadd.f32 %v1907, %v7736
        %v7891 = vadd.f32 %v1913, %v7741
        %v7892 = vadd.f32 %v1919, %v7746
        %v7893 = vadd.f32 %v1925, %v7751
        %v7894 = vadd.f32 %v1931, %v7756
        %v7895 = vadd.f32 %v1937, %v7761
        %v7896 = vadd.f32 %v1943, %v7766
        %v7897 = vadd.f32 %v1949, %v7771
        %v7898 = vadd.f32 %v1955, %v7776
        %v7899 = vadd.f32 %v1961, %v7781
        %v7900 = vadd.f32 %v1967, %v7786
        %v7901 = vadd.f32 %v1973, %v7791
        %v7902 = vadd.f32 %v1979, %v7796
        %v7903 = vadd.f32 %v1985, %v7801
        %v7904 = vadd.f32 %v1991, %v7806
        %v7905 = vadd.f32 %v1997, %v7811
        %v7906 = vadd.f32 %v2003, %v7816
        %v7907 = vadd.f32 %v2009, %v7821
        %v7908 = vadd.f32 %v2015, %v7826
        %v7909 = vadd.f32 %v2021, %v7831
        %v7910 = vadd.f32 %v2027, %v7836
        %v7911 = vadd.f32 %v2033, %v7841
        %v7912 = vadd.f32 %v2039, %v7846
        %v7913 = vadd.f32 %v2045, %v7851
        %v7914 = vadd.f32 %v2051, %v7856
        %v7915 = vadd.f32 %v2057, %v7861
        %v7916 = vadd.f32 %v2063, %v7866
        %v7917 = vadd.f32 %v2069, %v7871
        %v7918 = vadd.f32 %v2075, %v7876
        %v7919 = vadd.f32 %v2081, %v7881
        %v7920 = vadd.f32 %v2087, %v7886
        %7921 = vst [vmem:[%s342] sm:$0xff] %v7889
        %7922 = vst [vmem:[%s342 + $0x8] sm:$0xff] %v7890
        %7923 = vst [vmem:[%s342 + $0x10] sm:$0xff] %v7891
        %7924 = vst [vmem:[%s342 + $0x18] sm:$0xff] %v7892
        %7925 = vst [vmem:[%s342 + $0x20] sm:$0xff] %v7893
        %7926 = vst [vmem:[%s342 + $0x28] sm:$0xff] %v7894
        %7927 = vst [vmem:[%s342 + $0x30] sm:$0xff] %v7895
        %7928 = vst [vmem:[%s342 + $0x38] sm:$0xff] %v7896
        %7929 = vst [vmem:[%s342 + $0x40] sm:$0xff] %v7897
        %7930 = vst [vmem:[%s342 + $0x48] sm:$0xff] %v7898
        %7931 = vst [vmem:[%s342 + $0x50] sm:$0xff] %v7899
        %7932 = vst [vmem:[%s342 + $0x58] sm:$0xff] %v7900
        %7933 = vst [vmem:[%s342 + $0x60] sm:$0xff] %v7901
        %7934 = vst [vmem:[%s342 + $0x68] sm:$0xff] %v7902
        %7935 = vst [vmem:[%s342 + $0x70] sm:$0xff] %v7903
        %7936 = vst [vmem:[%s342 + $0x78] sm:$0xff] %v7904
        %7937 = vst [vmem:[%s342 + $0x80] sm:$0xff] %v7905
        %7938 = vst [vmem:[%s342 + $0x88] sm:$0xff] %v7906
        %7939 = vst [vmem:[%s342 + $0x90] sm:$0xff] %v7907
        %7940 = vst [vmem:[%s342 + $0x98] sm:$0xff] %v7908
        %7941 = vst [vmem:[%s342 + $0xa0] sm:$0xff] %v7909
        %7942 = vst [vmem:[%s342 + $0xa8] sm:$0xff] %v7910
        %7943 = vst [vmem:[%s342 + $0xb0] sm:$0xff] %v7911
        %7944 = vst [vmem:[%s342 + $0xb8] sm:$0xff] %v7912
        %7945 = vst [vmem:[%s342 + $0xc0] sm:$0xff] %v7913
        %7946 = vst [vmem:[%s342 + $0xc8] sm:$0xff] %v7914
        %7947 = vst [vmem:[%s342 + $0xd0] sm:$0xff] %v7915
        %7948 = vst [vmem:[%s342 + $0xd8] sm:$0xff] %v7916
        %7949 = vst [vmem:[%s342 + $0xe0] sm:$0xff] %v7917
        %7950 = vst [vmem:[%s342 + $0xe8] sm:$0xff] %v7918
        %7951 = vst [vmem:[%s342 + $0xf0] sm:$0xff] %v7919
        %7952 = vst [vmem:[%s342 + $0xf8] sm:$0xff] %v7920
        %s7953 = sand.u32 %s230, 1
        %s7954 = scalar_lea.sflag [#allocation3], %s7953
        %s7955 = sand.u32 %s230, 1
        %s7956 = smul.addr %s7955, 256
        %s7957 = scalar_lea.vmem [#allocation2], %s7956
        // Predicated region
        $region57: #{tpu_custom_call.1} parent=55 // pred_check
          %p7958 = pneg %p240
        $region58: #{tpu_custom_call.1} parent=55 // pred_check_branch
          %7960 = sbr.rel (%p7958) target = $region60
        $region59: #{tpu_custom_call.1} parent=55 // pred_region
          %s7961 = smul.u32 32, %s23
          %s7963 = ssub.s32 4096, 4096
          %7964 = vsyncadd %s7954, %s7963
          %s7965 = smul.addr %s7961, 128
          %s7966 = scalar_lea.hbm %s9, %s7965
          %s7967 = sshll.u32 %s7957, 4
          %s7968 = int_to_ptr.vmem [resolvable:$true] %s7967
          %7973 = dma.vmem_to_hbm [thread:$0]  %s7968, 4096, %s7966, %s7954, 128, 128, 8
        $region60: #{tpu_custom_call.1} parent=55 // pred_fallthru
          _
      $region56: #{tpu_custom_call.1} parent=5 // pred_fallthru
        _
      %p7974 = scmp.le.s32.totalorder 2, %s18
      // Predicated region
      $region61: #{tpu_custom_call.1} parent=5 // pred_check
        %p7975 = pneg %p7974
      $region62: #{tpu_custom_call.1} parent=5 // pred_check_branch
        %7977 = sbr.rel (%p7975) target = $region64
      $region63: #{tpu_custom_call.1} parent=5 // pred_region
        %s7978 = ssub.s32 %s18, 2
        // Predicated region
        $region65: #{tpu_custom_call.1} parent=63 // pred_check
          %p7979 = pneg %p246
        $region66: #{tpu_custom_call.1} parent=63 // pred_check_branch
          %7981 = sbr.rel (%p7979) target = $region68
        $region67: #{tpu_custom_call.1} parent=63 // pred_region
          %s7982 = sand.u32 %s231, 1
          %s7983 = scalar_lea.sflag [#allocation3], %s7982
          %s7984 = sand.u32 %s231, 1
          %s7985 = smul.addr %s7984, 256
          %s7986 = scalar_lea.vmem [#allocation2], %s7985
          %7987 = dma.done %s7983, 4096
        $region68: #{tpu_custom_call.1} parent=63 // pred_fallthru
          _
      $region64: #{tpu_custom_call.1} parent=5 // pred_fallthru
        _
    $region6: #{tpu_custom_call.1} parent=1 // loop_footer
      %s22 = sadd.s32 1, %s18
    $region7: #{tpu_custom_call.1} parent=1 // loop_footer_branch
      %17 = sbr.rel target = $region3
    $region8: #{tpu_custom_call.1} parent=1 // loop_exit
      _
    %7988 = vsyncpa [#allocation3], 1
    %s7989 = scalar_lea.sflag [#allocation3], 1
    %7990 = vsyncpa %s7989, 1

</llo_original>
